<compile_context>
chip_gen: v5e
topology: v5e:2x2
jax: 0.10.0
libtpu: 0.0.40
codegen_flags: <defaults>
</compile_context>

<pallas_src>
import math
import jax
import jax.numpy as jnp
from jax.experimental import pallas as pl
from jax.experimental.pallas import tpu as pltpu

# ---------------- config (small shapes consistent with the module) ----------------
B = 2                 # graphs in the batch
N = 16                # max nodes per graph (padded)
HDIM = 32             # params['hidden_dim']
NHEADS = 4            # params['n_heads']
HEAD_D = HDIM // NHEADS
NUM_ATOM_TYPE = 28    # params['num_atom_type']
NUM_BOND_TYPE = 4     # params['num_bond_type']
SELF_EDGE_ID = NUM_BOND_TYPE
NET = NUM_BOND_TYPE + 1     # edge-type vocabulary (incl. self-loop id)
NUMLAYERS = 1         # params['numlayers']
NUMREPS = 2           # params['L']
LN_EPS = 1e-5
R1 = HDIM // 2        # MLPReadout hidden sizes: 32 -> 16 -> 8 -> 1
R2 = HDIM // 4


def pick_graphs_per_block():
    # v7x has 2 TensorCores/chip -> keep a per-graph parallel grid there.
    # v5e / v6e are single-TC -> fold the whole batch into one grid step
    # (removes per-step grid + pipeline-prologue overhead, doubles matmul M).
    try:
        kind = jax.devices()[0].device_kind.lower()
    except Exception:
        kind = ""
    if "v7" in kind or "7x" in kind:
        return 1
    return B


# ---------------- Pallas kernel: fused LRTM stack + readout (one batch-block per grid step) ----------------
def lrtm_fused_kernel(h_ref, adj_ref, et_ref, mask_ref,
                      etab_ref, wpack_ref, vecpack_ref, pmat_ref, rpack_ref,
                      out_ref,
                      eb_scr, em_scr, ev_scr):
    bb = h_ref.shape[0]                                   # graphs handled in this grid step (B or 1)

    h = h_ref[...].reshape(bb * N, HDIM)                  # (bb*N, H) f32
    mask = mask_ref[...]                                  # (bb, N, 1)
    adj4 = adj_ref[...][:, :, :, None]                    # (bb, N, N, 1)

    # ---- in-kernel edge-embedding gather (loop-invariant; done once per grid step) ----
    # one-hot (bb*N*N, NET) @ (NET, 3H) on the MXU replaces three dense HBM (N,N,H) inputs.
    et4 = et_ref[...][:, :, :, None]                      # (bb, N, N, 1) int32
    iota_t = jax.lax.broadcasted_iota(jnp.int32, (bb, N, N, NET), 3)
    onehot = (et4 == iota_t).astype(jnp.float32)          # (bb, N, N, NET)
    e3 = jnp.dot(onehot.reshape(bb * N * N, NET), etab_ref[...],
                 preferred_element_type=jnp.float32)      # (bb*N*N, 3H)
    e3 = e3.reshape(bb, N, N, 3 * HDIM) * adj4            # zero non-edges (matches reference masking)
    eb_scr[...] = e3[..., :HDIM]                          # additive key bias
    em_scr[...] = e3[..., HDIM:2 * HDIM]                  # multiplicative key scale
    ev_scr[...] = e3[..., 2 * HDIM:]                      # additive value bias

    # ---- rep-invariant hoists ----
    pmat = pmat_ref[...]                                  # (H,H) per-head sum+broadcast selector, 1/sqrt(d) folded in
    bias = jnp.where(adj4 > 0.0, jnp.float32(0.0), jnp.float32(-1e9))   # additive attention mask (bb,N,N,1)
    maskb = jnp.broadcast_to(mask.reshape(bb * N, 1), (bb * N, HDIM))   # node-mask broadcast

    for li in range(NUMLAYERS):
        wl = wpack_ref[li]                                # (H, 4H) = [wq | wk | wv | wo]
        wqkv = wl[:, :3 * HDIM]
        wo = wl[:, 3 * HDIM:]
        vl = vecpack_ref[li]                              # (3, H) = [bo ; gamma ; beta]
        bo_b = jnp.broadcast_to(vl[0:1, :], (bb * N, HDIM))
        gamma_b = jnp.broadcast_to(vl[1:2, :], (bb * N, HDIM))
        beta_b = jnp.broadcast_to(vl[2:3, :], (bb * N, HDIM))

        for _ in range(NUMREPS):
            # fused QKV projection: ONE MXU matmul with M = bb*N
            qkv = jnp.dot(h, wqkv, preferred_element_type=jnp.float32)    # (bb*N, 3H)
            q = qkv[:, :HDIM].reshape(bb, N, HDIM)
            k = qkv[:, HDIM:2 * HDIM].reshape(bb, N, HDIM)
            v = qkv[:, 2 * HDIM:].reshape(bb, N, HDIM)

            # edge-modulated keys, all heads fused in the full-H lane layout
            kmod = k[:, None, :, :] * em_scr[...] + eb_scr[...]           # (bb, N, N, H)
            t = q[:, :, None, :] * kmod                                    # (bb, N, N, H)
            # per-head reduce over HEAD_D AND broadcast back over the head's lanes: one matmul with P
            scores = jnp.dot(t.reshape(bb * N * N, HDIM), pmat,
                             preferred_element_type=jnp.float32).reshape(bb, N, N, HDIM)
            scores = scores + bias

            # masked softmax over the source-node axis (per-head values replicated over their HEAD_D lanes)
            smax = jnp.max(scores, axis=2, keepdims=True)                  # (bb, N, 1, H)
            p = jnp.exp(scores - smax)
            denom = jnp.sum(p, axis=2, keepdims=True)
            attn = p * pl.reciprocal(denom, approx=True)                   # (bb, N, N, H)

            vmod = v[:, None, :, :] + ev_scr[...]                          # (bb, N, N, H)
            o = jnp.sum(attn * vmod, axis=2).reshape(bb * N, HDIM)         # (bb*N, H)
            # TODO(synk): at larger N, move this contraction onto per-head MXU dot_generals and keep only
            #             the ev correction on the VPU path.

            # output projection + residual + LayerNorm + node masking
            o = jnp.dot(o, wo, preferred_element_type=jnp.float32) + bo_b
            x = h + o
            mu = jnp.mean(x, axis=-1, keepdims=True)
            var = jnp.mean((x - mu) ** 2, axis=-1, keepdims=True)
            xn = (x - mu) * jax.lax.rsqrt(var + LN_EPS)
            h = (xn * gamma_b + beta_b) * maskb

    # ---- fused readout epilogue: masked mean over nodes ('mean') + MLPReadout (H -> H/2 -> H/4 -> 1) ----
    hsum = jnp.sum(h.reshape(bb, N, HDIM), axis=1)                         # (bb, H); padded rows already zeroed
    cnt = jnp.maximum(jnp.sum(mask, axis=1), 1.0)                          # (bb, 1), guard against empty graphs
    hg = hsum / cnt

    rp = rpack_ref[...]                                                    # packed MLPReadout weights
    w1 = rp[:HDIM, :R1];        b1 = rp[HDIM:HDIM + 1, :R1]
    w2 = rp[:R1, R1:R1 + R2];   b2 = rp[HDIM:HDIM + 1, R1:R1 + R2]
    w3 = rp[:R2, R1 + R2:];     b3 = rp[HDIM:HDIM + 1, R1 + R2:]
    y = jnp.maximum(jnp.dot(hg, w1, preferred_element_type=jnp.float32) + b1, 0.0)
    y = jnp.maximum(jnp.dot(y, w2, preferred_element_type=jnp.float32) + b2, 0.0)
    y = jnp.dot(y, w3, preferred_element_type=jnp.float32) + b3
    out_ref[...] = y.reshape(bb, 1, 1)


def lrtm_fused(h, adj, edge_types, mask, p, graphs_per_block):
    bb = graphs_per_block
    nblk = B // bb
    grid_spec = pltpu.PrefetchScalarGridSpec(
        num_scalar_prefetch=0,
        grid=(nblk,),
        in_specs=[
            pl.BlockSpec((bb, N, HDIM), lambda b: (b, 0, 0)),                # h
            pl.BlockSpec((bb, N, N), lambda b: (b, 0, 0)),                   # adjacency (f32)
            pl.BlockSpec((bb, N, N), lambda b: (b, 0, 0)),                   # edge type ids (int32)
            pl.BlockSpec((bb, N, 1), lambda b: (b, 0, 0)),                   # node mask
            # packed model weights: constant block index => VMEM-resident across grid steps
            pl.BlockSpec((NET, 3 * HDIM), lambda b: (0, 0)),                 # edge-embedding table
            pl.BlockSpec((NUMLAYERS, HDIM, 4 * HDIM), lambda b: (0, 0, 0)),  # [wq|wk|wv|wo]
            pl.BlockSpec((NUMLAYERS, 3, HDIM), lambda b: (0, 0, 0)),         # [bo;gamma;beta]
            pl.BlockSpec((HDIM, HDIM), lambda b: (0, 0)),                    # P head selector (1/sqrt(d) folded)
            pl.BlockSpec((HDIM + 1, R1 + R2 + 1), lambda b: (0, 0)),         # packed MLPReadout
        ],
        out_specs=pl.BlockSpec((bb, 1, 1), lambda b: (b, 0, 0)),
        scratch_shapes=[
            pltpu.VMEM((bb, N, N, HDIM), jnp.float32),   # eb (additive key bias)
            pltpu.VMEM((bb, N, N, HDIM), jnp.float32),   # em (multiplicative key scale)
            pltpu.VMEM((bb, N, N, HDIM), jnp.float32),   # ev (additive value bias)
        ],
    )
    out = pl.pallas_call(
        lrtm_fused_kernel,
        out_shape=jax.ShapeDtypeStruct((B, 1, 1), jnp.float32),
        grid_spec=grid_spec,
        compiler_params=pltpu.CompilerParams(
            dimension_semantics=("parallel",)),          # per-graph parallelism on v7x; single step elsewhere
    )(h, adj, edge_types, mask,
      p["etab"], p["wpack"], p["vecpack"], p["pmat"], p["rpack"])
    return out.reshape(B, 1)


# ---------------- parameter init (deterministic, synthetic) ----------------
def init_params(key):
    keys = jax.random.split(key, 16)
    p = {}
    # node embedding (num_atom_type, hdim)
    p["emb_h"] = 0.1 * jax.random.normal(keys[0], (NUM_ATOM_TYPE, HDIM), jnp.float32)

    # edge embedding table (num_bond_type + 1, 3 * hdim): [kaiming-uniform | ones | zeros]
    bound = 1.0 / math.sqrt(HDIM)
    e_add = jax.random.uniform(keys[1], (NET, HDIM), jnp.float32, minval=-bound, maxval=bound)
    e_mul = jnp.ones((NET, HDIM), jnp.float32)
    e_val = jnp.zeros((NET, HDIM), jnp.float32)
    p["etab"] = jnp.concatenate([e_add, e_mul, e_val], axis=-1)       # (NET, 3H)

    # LRTMCell layers: packed [wq|wk|wv|wo] and [bo;gamma;beta]
    s = 1.0 / math.sqrt(HDIM)
    wpack, vecpack = [], []
    for li in range(NUMLAYERS):
        k = jax.random.split(keys[2 + li], 4)
        wq = s * jax.random.normal(k[0], (HDIM, HDIM), jnp.float32)
        wk = s * jax.random.normal(k[1], (HDIM, HDIM), jnp.float32)
        wv = s * jax.random.normal(k[2], (HDIM, HDIM), jnp.float32)
        wo = s * jax.random.normal(k[3], (HDIM, HDIM), jnp.float32)
        wpack.append(jnp.concatenate([wq, wk, wv, wo], axis=-1))      # (H, 4H)
        bo = jnp.zeros((HDIM,), jnp.float32)
        gamma = jnp.ones((HDIM,), jnp.float32)
        beta = jnp.zeros((HDIM,), jnp.float32)
        vecpack.append(jnp.stack([bo, gamma, beta], axis=0))          # (3, H)
    p["wpack"] = jnp.stack(wpack)                                     # (L, H, 4H)
    p["vecpack"] = jnp.stack(vecpack)                                 # (L, 3, H)

    # P[d,d'] = 1/sqrt(HEAD_D) if lanes d,d' belong to the same head (sum + broadcast fused, scale folded)
    head_of_lane = jnp.arange(HDIM) // HEAD_D
    p["pmat"] = ((head_of_lane[:, None] == head_of_lane[None, :]).astype(jnp.float32)
                 / math.sqrt(HEAD_D))                                 # (H, H)

    # MLPReadout(hdim, 1, L=2): 32 -> 16 -> 8 -> 1, packed into one array; biases (last row) are zero
    d0, d1, d2 = HDIM, R1, R2
    w1 = (1.0 / math.sqrt(d0)) * jax.random.normal(keys[10], (d0, d1), jnp.float32)
    w2 = (1.0 / math.sqrt(d1)) * jax.random.normal(keys[11], (d1, d2), jnp.float32)
    w3 = (1.0 / math.sqrt(d2)) * jax.random.normal(keys[12], (d2, 1), jnp.float32)
    rpack = jnp.zeros((HDIM + 1, R1 + R2 + 1), jnp.float32)
    rpack = rpack.at[:d0, :R1].set(w1)
    rpack = rpack.at[:d1, R1:R1 + R2].set(w2)
    rpack = rpack.at[:d2, R1 + R2].set(w3[:, 0])
    p["rpack"] = rpack
    return p


# ---------------- full forward (glue in plain JAX, hot path in one Pallas call) ----------------
def lrtm_forward(params, node_types, adj, edge_types, node_mask, graphs_per_block):
    mask3 = node_mask[:, :, None].astype(jnp.float32)                 # (B, N, 1)
    adj_f = adj.astype(jnp.float32)                                   # (B, N, N)
    # h = embedding_h(h); in_feat_dropout is identity in eval mode
    h = jnp.take(params["emb_h"], node_types, axis=0) * mask3         # (B, N, H)
    # edge embeddings are gathered IN-KERNEL from edge_types + the table (no dense (N,N,3H) HBM tensors)
    return lrtm_fused(h, adj_f, edge_types.astype(jnp.int32), mask3, params, graphs_per_block)


# ---------------- example inputs ----------------
def make_example_graph(key):
    k1, k2, k3, _ = jax.random.split(key, 4)
    node_types = jax.random.randint(k1, (B, N), 0, NUM_ATOM_TYPE, dtype=jnp.int32)
    num_nodes = jnp.array([N - 4, N], dtype=jnp.int32)
    node_mask = (jnp.arange(N)[None, :] < num_nodes[:, None])                   # (B, N) bool

    rnd = jax.random.uniform(k2, (B, N, N))
    upper = (rnd > 0.6).astype(jnp.int32)
    adj = jnp.clip(upper + jnp.swapaxes(upper, 1, 2), 0, 1)
    valid_pair = (node_mask[:, :, None] & node_mask[:, None, :]).astype(jnp.int32)
    adj = adj * valid_pair
    # self loops (g.add_edges(nodeids, nodeids)) for valid nodes
    eye = jnp.eye(N, dtype=jnp.int32)[None, :, :] * node_mask[:, :, None].astype(jnp.int32)
    adj = jnp.clip(adj + eye, 0, 1)

    edge_types = jax.random.randint(k3, (B, N, N), 0, NUM_BOND_TYPE, dtype=jnp.int32)
    edge_types = jnp.where(jnp.eye(N, dtype=bool)[None, :, :], SELF_EDGE_ID, edge_types)
    return node_types, adj, edge_types, node_mask


if __name__ == "__main__":
    root = jax.random.PRNGKey(0)
    kp, kg = jax.random.split(root)
    params = init_params(kp)
    node_types, adj, edge_types, node_mask = make_example_graph(kg)

    gpb = pick_graphs_per_block()
    out = lrtm_forward(params, node_types, adj, edge_types, node_mask, gpb)
    out = jax.block_until_ready(out)
    assert out.shape == (B, 1)
    assert bool(jnp.all(jnp.isfinite(out)))
    print("KERNEL_OK")
</pallas_src>

<mosaic_0001>
module attributes {stable_mosaic.version = 11 : i64} {
  func.func @lrtm_fused_kernel(%arg0: i32, %arg1: memref<2x16x32xf32, #tpu.memory_space<vmem>>, %arg2: memref<2x16x16xf32, #tpu.memory_space<vmem>>, %arg3: memref<2x16x16xi32, #tpu.memory_space<vmem>>, %arg4: memref<2x16x1xf32, #tpu.memory_space<vmem>>, %arg5: memref<5x96xf32, #tpu.memory_space<vmem>>, %arg6: memref<1x32x128xf32, #tpu.memory_space<vmem>>, %arg7: memref<1x3x32xf32, #tpu.memory_space<vmem>>, %arg8: memref<32x32xf32, #tpu.memory_space<vmem>>, %arg9: memref<33x25xf32, #tpu.memory_space<vmem>>, %arg10: memref<2x1x1xf32, #tpu.memory_space<vmem>>, %arg11: memref<2x16x16x32xf32, #tpu.memory_space<vmem>>, %arg12: memref<2x16x16x32xf32, #tpu.memory_space<vmem>>, %arg13: memref<2x16x16x32xf32, #tpu.memory_space<vmem>>) attributes {dimension_semantics = [#tpu.dimension_semantics<parallel>], iteration_bounds = array<i64: 1>, scalar_prefetch = 0 : i64, scratch_operands = 3 : i64, tpu.core_type = #tpu.core_type<tc>, window_params = [{transform_indices = @transform_0, window_bounds = array<i64: 2, 16, 32>}, {transform_indices = @transform_1, window_bounds = array<i64: 2, 16, 16>}, {transform_indices = @transform_2, window_bounds = array<i64: 2, 16, 16>}, {transform_indices = @transform_3, window_bounds = array<i64: 2, 16, 1>}, {pipeline_mode = #tpu.pipeline_mode<synchronous>, transform_indices = @transform_4, window_bounds = array<i64: 5, 96>}, {pipeline_mode = #tpu.pipeline_mode<synchronous>, transform_indices = @transform_5, window_bounds = array<i64: 1, 32, 128>}, {pipeline_mode = #tpu.pipeline_mode<synchronous>, transform_indices = @transform_6, window_bounds = array<i64: 1, 3, 32>}, {pipeline_mode = #tpu.pipeline_mode<synchronous>, transform_indices = @transform_7, window_bounds = array<i64: 32, 32>}, {pipeline_mode = #tpu.pipeline_mode<synchronous>, transform_indices = @transform_8, window_bounds = array<i64: 33, 25>}, {transform_indices = @transform_9, window_bounds = array<i64: 2, 1, 1>}]} {
    %c0 = arith.constant 0 : index
    %c0_0 = arith.constant 0 : index
    %c0_1 = arith.constant 0 : index
    %0 = vector.load %arg1[%c0, %c0_0, %c0_1] : memref<2x16x32xf32, #tpu.memory_space<vmem>>, vector<2x16x32xf32>
    %1 = vector.shape_cast %0 : vector<2x16x32xf32> to vector<32x32xf32>
    %c0_2 = arith.constant 0 : index
    %c0_3 = arith.constant 0 : index
    %c0_4 = arith.constant 0 : index
    %2 = vector.load %arg4[%c0_2, %c0_3, %c0_4] : memref<2x16x1xf32, #tpu.memory_space<vmem>>, vector<2x16x1xf32>
    %c0_5 = arith.constant 0 : index
    %c0_6 = arith.constant 0 : index
    %c0_7 = arith.constant 0 : index
    %3 = vector.load %arg2[%c0_5, %c0_6, %c0_7] : memref<2x16x16xf32, #tpu.memory_space<vmem>>, vector<2x16x16xf32>
    %4 = vector.shape_cast %3 : vector<2x16x16xf32> to vector<2x16x16x1xf32>
    %c0_8 = arith.constant 0 : index
    %c0_9 = arith.constant 0 : index
    %c0_10 = arith.constant 0 : index
    %5 = vector.load %arg3[%c0_8, %c0_9, %c0_10] : memref<2x16x16xi32, #tpu.memory_space<vmem>>, vector<2x16x16xi32>
    %6 = vector.shape_cast %5 : vector<2x16x16xi32> to vector<2x16x16x1xi32>
    %7 = tpu.iota {dimensions = array<i32: 3>} : vector<2x16x16x5xi32>
    %8 = vector.broadcast %6 : vector<2x16x16x1xi32> to vector<2x16x16x5xi32>
    %9 = arith.cmpi eq, %8, %7 : vector<2x16x16x5xi32>
    %10 = arith.extui %9 : vector<2x16x16x5xi1> to vector<2x16x16x5xi32>
    %11 = arith.sitofp %10 : vector<2x16x16x5xi32> to vector<2x16x16x5xf32>
    %12 = vector.shape_cast %11 : vector<2x16x16x5xf32> to vector<512x5xf32>
    %c0_11 = arith.constant 0 : index
    %c0_12 = arith.constant 0 : index
    %13 = vector.load %arg5[%c0_11, %c0_12] : memref<5x96xf32, #tpu.memory_space<vmem>>, vector<5x96xf32>
    %cst = arith.constant dense<0.000000e+00> : vector<512x96xf32>
    %14 = tpu.matmul %12, %13, %cst {dimension_numbers = #tpu.dot_dimension_numbers<[1], [0], [0], [1], [0, 0, 1, 1], [], []>} : vector<512x5xf32>, vector<5x96xf32>, vector<512x96xf32> -> vector<512x96xf32>
    %15 = vector.shape_cast %14 : vector<512x96xf32> to vector<2x16x16x96xf32>
    %16 = vector.broadcast %4 : vector<2x16x16x1xf32> to vector<2x16x16x96xf32>
    %17 = arith.mulf %15, %16 : vector<2x16x16x96xf32>
    %18 = vector.extract_strided_slice %17 {offsets = [0, 0, 0, 0], sizes = [2, 16, 16, 32], strides = [1, 1, 1, 1]} : vector<2x16x16x96xf32> to vector<2x16x16x32xf32>
    %c0_13 = arith.constant 0 : index
    %c0_14 = arith.constant 0 : index
    %c0_15 = arith.constant 0 : index
    %c0_16 = arith.constant 0 : index
    %19 = vector.load %arg11[%c0_13, %c0_14, %c0_15, %c0_16] : memref<2x16x16x32xf32, #tpu.memory_space<vmem>>, vector<2x16x16x32xf32>
    tpu.vector_store %arg11[%c0_13, %c0_14, %c0_15, %c0_16], %18 {strides = array<i32>} : memref<2x16x16x32xf32, #tpu.memory_space<vmem>>, vector<2x16x16x32xf32>,
    %20 = vector.extract_strided_slice %17 {offsets = [0, 0, 0, 32], sizes = [2, 16, 16, 32], strides = [1, 1, 1, 1]} : vector<2x16x16x96xf32> to vector<2x16x16x32xf32>
    %c0_17 = arith.constant 0 : index
    %c0_18 = arith.constant 0 : index
    %c0_19 = arith.constant 0 : index
    %c0_20 = arith.constant 0 : index
    %21 = vector.load %arg12[%c0_17, %c0_18, %c0_19, %c0_20] : memref<2x16x16x32xf32, #tpu.memory_space<vmem>>, vector<2x16x16x32xf32>
    tpu.vector_store %arg12[%c0_17, %c0_18, %c0_19, %c0_20], %20 {strides = array<i32>} : memref<2x16x16x32xf32, #tpu.memory_space<vmem>>, vector<2x16x16x32xf32>,
    %22 = vector.extract_strided_slice %17 {offsets = [0, 0, 0, 64], sizes = [2, 16, 16, 32], strides = [1, 1, 1, 1]} : vector<2x16x16x96xf32> to vector<2x16x16x32xf32>
    %c0_21 = arith.constant 0 : index
    %c0_22 = arith.constant 0 : index
    %c0_23 = arith.constant 0 : index
    %c0_24 = arith.constant 0 : index
    %23 = vector.load %arg13[%c0_21, %c0_22, %c0_23, %c0_24] : memref<2x16x16x32xf32, #tpu.memory_space<vmem>>, vector<2x16x16x32xf32>
    tpu.vector_store %arg13[%c0_21, %c0_22, %c0_23, %c0_24], %22 {strides = array<i32>} : memref<2x16x16x32xf32, #tpu.memory_space<vmem>>, vector<2x16x16x32xf32>,
    %c0_25 = arith.constant 0 : index
    %c0_26 = arith.constant 0 : index
    %24 = vector.load %arg8[%c0_25, %c0_26] : memref<32x32xf32, #tpu.memory_space<vmem>>, vector<32x32xf32>
    %cst_27 = arith.constant 0.000000e+00 : f32
    %25 = vector.broadcast %cst_27 : f32 to vector<2x16x16x1xf32>
    %26 = arith.cmpf ogt, %4, %25 : vector<2x16x16x1xf32>
    %cst_28 = arith.constant 0.000000e+00 : f32
    %cst_29 = arith.constant -1.000000e+09 : f32
    %27 = vector.broadcast %cst_28 : f32 to vector<2x16x16x1xf32>
    %28 = vector.broadcast %cst_29 : f32 to vector<2x16x16x1xf32>
    %29 = arith.select %26, %27, %28 : vector<2x16x16x1xi1>, vector<2x16x16x1xf32>
    %30 = vector.shape_cast %2 : vector<2x16x1xf32> to vector<32x1xf32>
    %31 = vector.shape_cast %30 : vector<32x1xf32> to vector<32x1xf32>
    %32 = vector.broadcast %31 : vector<32x1xf32> to vector<32x32xf32>
    %c0_30 = arith.constant 0 : index
    %c0_31 = arith.constant 0 : index
    %c0_32 = arith.constant 0 : index
    %33 = vector.load %arg6[%c0_30, %c0_31, %c0_32] : memref<1x32x128xf32, #tpu.memory_space<vmem>>, vector<1x32x128xf32>
    %34 = vector.shape_cast %33 : vector<1x32x128xf32> to vector<32x128xf32>
    %35 = vector.extract_strided_slice %34 {offsets = [0, 0], sizes = [32, 96], strides = [1, 1]} : vector<32x128xf32> to vector<32x96xf32>
    %36 = vector.extract_strided_slice %34 {offsets = [0, 96], sizes = [32, 32], strides = [1, 1]} : vector<32x128xf32> to vector<32x32xf32>
    %c0_33 = arith.constant 0 : index
    %c0_34 = arith.constant 0 : index
    %c0_35 = arith.constant 0 : index
    %37 = vector.load %arg7[%c0_33, %c0_34, %c0_35] : memref<1x3x32xf32, #tpu.memory_space<vmem>>, vector<1x3x32xf32>
    %38 = vector.shape_cast %37 : vector<1x3x32xf32> to vector<3x32xf32>
    %39 = vector.extract_strided_slice %38 {offsets = [0, 0], sizes = [1, 32], strides = [1, 1]} : vector<3x32xf32> to vector<1x32xf32>
    %40 = vector.shape_cast %39 : vector<1x32xf32> to vector<1x32xf32>
    %41 = vector.broadcast %40 : vector<1x32xf32> to vector<32x32xf32>
    %42 = vector.extract_strided_slice %38 {offsets = [1, 0], sizes = [1, 32], strides = [1, 1]} : vector<3x32xf32> to vector<1x32xf32>
    %43 = vector.shape_cast %42 : vector<1x32xf32> to vector<1x32xf32>
    %44 = vector.broadcast %43 : vector<1x32xf32> to vector<32x32xf32>
    %45 = vector.extract_strided_slice %38 {offsets = [2, 0], sizes = [1, 32], strides = [1, 1]} : vector<3x32xf32> to vector<1x32xf32>
    %46 = vector.shape_cast %45 : vector<1x32xf32> to vector<1x32xf32>
    %47 = vector.broadcast %46 : vector<1x32xf32> to vector<32x32xf32>
    %cst_36 = arith.constant dense<0.000000e+00> : vector<32x96xf32>
    %48 = tpu.matmul %1, %35, %cst_36 {dimension_numbers = #tpu.dot_dimension_numbers<[1], [0], [0], [1], [0, 0, 1, 1], [], []>} : vector<32x32xf32>, vector<32x96xf32>, vector<32x96xf32> -> vector<32x96xf32>
    %49 = vector.extract_strided_slice %48 {offsets = [0, 0], sizes = [32, 32], strides = [1, 1]} : vector<32x96xf32> to vector<32x32xf32>
    %50 = vector.shape_cast %49 : vector<32x32xf32> to vector<2x16x32xf32>
    %51 = vector.extract_strided_slice %48 {offsets = [0, 32], sizes = [32, 32], strides = [1, 1]} : vector<32x96xf32> to vector<32x32xf32>
    %52 = vector.shape_cast %51 : vector<32x32xf32> to vector<2x16x32xf32>
    %53 = vector.extract_strided_slice %48 {offsets = [0, 64], sizes = [32, 32], strides = [1, 1]} : vector<32x96xf32> to vector<32x32xf32>
    %54 = vector.shape_cast %53 : vector<32x32xf32> to vector<2x16x32xf32>
    %55 = vector.shape_cast %52 : vector<2x16x32xf32> to vector<2x1x16x32xf32>
    %c0_37 = arith.constant 0 : index
    %c0_38 = arith.constant 0 : index
    %c0_39 = arith.constant 0 : index
    %c0_40 = arith.constant 0 : index
    %56 = vector.load %arg12[%c0_37, %c0_38, %c0_39, %c0_40] : memref<2x16x16x32xf32, #tpu.memory_space<vmem>>, vector<2x16x16x32xf32>
    %57 = vector.broadcast %55 : vector<2x1x16x32xf32> to vector<2x16x16x32xf32>
    %58 = arith.mulf %57, %56 : vector<2x16x16x32xf32>
    %c0_41 = arith.constant 0 : index
    %c0_42 = arith.constant 0 : index
    %c0_43 = arith.constant 0 : index
    %c0_44 = arith.constant 0 : index
    %59 = vector.load %arg11[%c0_41, %c0_42, %c0_43, %c0_44] : memref<2x16x16x32xf32, #tpu.memory_space<vmem>>, vector<2x16x16x32xf32>
    %60 = arith.addf %58, %59 : vector<2x16x16x32xf32>
    %61 = vector.shape_cast %50 : vector<2x16x32xf32> to vector<2x16x1x32xf32>
    %62 = vector.broadcast %61 : vector<2x16x1x32xf32> to vector<2x16x16x32xf32>
    %63 = arith.mulf %62, %60 : vector<2x16x16x32xf32>
    %64 = vector.shape_cast %63 : vector<2x16x16x32xf32> to vector<512x32xf32>
    %cst_45 = arith.constant dense<0.000000e+00> : vector<512x32xf32>
    %65 = tpu.matmul %64, %24, %cst_45 {dimension_numbers = #tpu.dot_dimension_numbers<[1], [0], [0], [1], [0, 0, 1, 1], [], []>} : vector<512x32xf32>, vector<32x32xf32>, vector<512x32xf32> -> vector<512x32xf32>
    %66 = vector.shape_cast %65 : vector<512x32xf32> to vector<2x16x16x32xf32>
    %67 = vector.broadcast %29 : vector<2x16x16x1xf32> to vector<2x16x16x32xf32>
    %68 = arith.addf %66, %67 : vector<2x16x16x32xf32>
    %cst_46 = arith.constant dense<0xFF800000> : vector<2x16x32xf32>
    %69 = vector.multi_reduction <maximumf>, %68, %cst_46 [2] : vector<2x16x16x32xf32> to vector<2x16x32xf32>
    %70 = vector.shape_cast %69 : vector<2x16x32xf32> to vector<2x16x1x32xf32>
    %71 = vector.broadcast %70 : vector<2x16x1x32xf32> to vector<2x16x16x32xf32>
    %72 = arith.subf %68, %71 : vector<2x16x16x32xf32>
    %73 = math.exp %72 : vector<2x16x16x32xf32>
    %cst_47 = arith.constant dense<0.000000e+00> : vector<2x16x32xf32>
    %74 = vector.multi_reduction <add>, %73, %cst_47 [2] : vector<2x16x16x32xf32> to vector<2x16x32xf32>
    %75 = vector.shape_cast %74 : vector<2x16x32xf32> to vector<2x16x1x32xf32>
    %76 = tpu.reciprocal %75 {approx = true} : vector<2x16x1x32xf32> -> vector<2x16x1x32xf32>
    %77 = vector.broadcast %76 : vector<2x16x1x32xf32> to vector<2x16x16x32xf32>
    %78 = arith.mulf %73, %77 : vector<2x16x16x32xf32>
    %79 = vector.shape_cast %54 : vector<2x16x32xf32> to vector<2x1x16x32xf32>
    %c0_48 = arith.constant 0 : index
    %c0_49 = arith.constant 0 : index
    %c0_50 = arith.constant 0 : index
    %c0_51 = arith.constant 0 : index
    %80 = vector.load %arg13[%c0_48, %c0_49, %c0_50, %c0_51] : memref<2x16x16x32xf32, #tpu.memory_space<vmem>>, vector<2x16x16x32xf32>
    %81 = vector.broadcast %79 : vector<2x1x16x32xf32> to vector<2x16x16x32xf32>
    %82 = arith.addf %81, %80 : vector<2x16x16x32xf32>
    %83 = arith.mulf %78, %82 : vector<2x16x16x32xf32>
    %cst_52 = arith.constant dense<0.000000e+00> : vector<2x16x32xf32>
    %84 = vector.multi_reduction <add>, %83, %cst_52 [2] : vector<2x16x16x32xf32> to vector<2x16x32xf32>
    %85 = vector.shape_cast %84 : vector<2x16x32xf32> to vector<32x32xf32>
    %cst_53 = arith.constant dense<0.000000e+00> : vector<32x32xf32>
    %86 = tpu.matmul %85, %36, %cst_53 {dimension_numbers = #tpu.dot_dimension_numbers<[1], [0], [0], [1], [0, 0, 1, 1], [], []>} : vector<32x32xf32>, vector<32x32xf32>, vector<32x32xf32> -> vector<32x32xf32>
    %87 = arith.addf %86, %41 : vector<32x32xf32>
    %88 = arith.addf %1, %87 : vector<32x32xf32>
    %cst_54 = arith.constant dense<0.000000e+00> : vector<32xf32>
    %89 = vector.multi_reduction <add>, %88, %cst_54 [1] : vector<32x32xf32> to vector<32xf32>
    %90 = vector.shape_cast %89 : vector<32xf32> to vector<32x1xf32>
    %cst_55 = arith.constant 3.200000e+01 : f32
    %91 = vector.broadcast %cst_55 : f32 to vector<32x1xf32>
    %92 = arith.divf %90, %91 : vector<32x1xf32>
    %93 = vector.broadcast %92 : vector<32x1xf32> to vector<32x32xf32>
    %94 = arith.subf %88, %93 : vector<32x32xf32>
    %95 = arith.mulf %94, %94 : vector<32x32xf32>
    %cst_56 = arith.constant dense<0.000000e+00> : vector<32xf32>
    %96 = vector.multi_reduction <add>, %95, %cst_56 [1] : vector<32x32xf32> to vector<32xf32>
    %97 = vector.shape_cast %96 : vector<32xf32> to vector<32x1xf32>
    %cst_57 = arith.constant 3.200000e+01 : f32
    %98 = vector.broadcast %cst_57 : f32 to vector<32x1xf32>
    %99 = arith.divf %97, %98 : vector<32x1xf32>
    %100 = vector.broadcast %92 : vector<32x1xf32> to vector<32x32xf32>
    %101 = arith.subf %88, %100 : vector<32x32xf32>
    %cst_58 = arith.constant 9.99999974E-6 : f32
    %102 = vector.broadcast %cst_58 : f32 to vector<32x1xf32>
    %103 = arith.addf %99, %102 : vector<32x1xf32>
    %104 = math.rsqrt %103 : vector<32x1xf32>
    %105 = vector.broadcast %104 : vector<32x1xf32> to vector<32x32xf32>
    %106 = arith.mulf %101, %105 : vector<32x32xf32>
    %107 = arith.mulf %106, %44 : vector<32x32xf32>
    %108 = arith.addf %107, %47 : vector<32x32xf32>
    %109 = arith.mulf %108, %32 : vector<32x32xf32>
    %cst_59 = arith.constant dense<0.000000e+00> : vector<32x96xf32>
    %110 = tpu.matmul %109, %35, %cst_59 {dimension_numbers = #tpu.dot_dimension_numbers<[1], [0], [0], [1], [0, 0, 1, 1], [], []>} : vector<32x32xf32>, vector<32x96xf32>, vector<32x96xf32> -> vector<32x96xf32>
    %111 = vector.extract_strided_slice %110 {offsets = [0, 0], sizes = [32, 32], strides = [1, 1]} : vector<32x96xf32> to vector<32x32xf32>
    %112 = vector.shape_cast %111 : vector<32x32xf32> to vector<2x16x32xf32>
    %113 = vector.extract_strided_slice %110 {offsets = [0, 32], sizes = [32, 32], strides = [1, 1]} : vector<32x96xf32> to vector<32x32xf32>
    %114 = vector.shape_cast %113 : vector<32x32xf32> to vector<2x16x32xf32>
    %115 = vector.extract_strided_slice %110 {offsets = [0, 64], sizes = [32, 32], strides = [1, 1]} : vector<32x96xf32> to vector<32x32xf32>
    %116 = vector.shape_cast %115 : vector<32x32xf32> to vector<2x16x32xf32>
    %117 = vector.shape_cast %114 : vector<2x16x32xf32> to vector<2x1x16x32xf32>
    %c0_60 = arith.constant 0 : index
    %c0_61 = arith.constant 0 : index
    %c0_62 = arith.constant 0 : index
    %c0_63 = arith.constant 0 : index
    %118 = vector.load %arg12[%c0_60, %c0_61, %c0_62, %c0_63] : memref<2x16x16x32xf32, #tpu.memory_space<vmem>>, vector<2x16x16x32xf32>
    %119 = vector.broadcast %117 : vector<2x1x16x32xf32> to vector<2x16x16x32xf32>
    %120 = arith.mulf %119, %118 : vector<2x16x16x32xf32>
    %c0_64 = arith.constant 0 : index
    %c0_65 = arith.constant 0 : index
    %c0_66 = arith.constant 0 : index
    %c0_67 = arith.constant 0 : index
    %121 = vector.load %arg11[%c0_64, %c0_65, %c0_66, %c0_67] : memref<2x16x16x32xf32, #tpu.memory_space<vmem>>, vector<2x16x16x32xf32>
    %122 = arith.addf %120, %121 : vector<2x16x16x32xf32>
    %123 = vector.shape_cast %112 : vector<2x16x32xf32> to vector<2x16x1x32xf32>
    %124 = vector.broadcast %123 : vector<2x16x1x32xf32> to vector<2x16x16x32xf32>
    %125 = arith.mulf %124, %122 : vector<2x16x16x32xf32>
    %126 = vector.shape_cast %125 : vector<2x16x16x32xf32> to vector<512x32xf32>
    %cst_68 = arith.constant dense<0.000000e+00> : vector<512x32xf32>
    %127 = tpu.matmul %126, %24, %cst_68 {dimension_numbers = #tpu.dot_dimension_numbers<[1], [0], [0], [1], [0, 0, 1, 1], [], []>} : vector<512x32xf32>, vector<32x32xf32>, vector<512x32xf32> -> vector<512x32xf32>
    %128 = vector.shape_cast %127 : vector<512x32xf32> to vector<2x16x16x32xf32>
    %129 = vector.broadcast %29 : vector<2x16x16x1xf32> to vector<2x16x16x32xf32>
    %130 = arith.addf %128, %129 : vector<2x16x16x32xf32>
    %cst_69 = arith.constant dense<0xFF800000> : vector<2x16x32xf32>
    %131 = vector.multi_reduction <maximumf>, %130, %cst_69 [2] : vector<2x16x16x32xf32> to vector<2x16x32xf32>
    %132 = vector.shape_cast %131 : vector<2x16x32xf32> to vector<2x16x1x32xf32>
    %133 = vector.broadcast %132 : vector<2x16x1x32xf32> to vector<2x16x16x32xf32>
    %134 = arith.subf %130, %133 : vector<2x16x16x32xf32>
    %135 = math.exp %134 : vector<2x16x16x32xf32>
    %cst_70 = arith.constant dense<0.000000e+00> : vector<2x16x32xf32>
    %136 = vector.multi_reduction <add>, %135, %cst_70 [2] : vector<2x16x16x32xf32> to vector<2x16x32xf32>
    %137 = vector.shape_cast %136 : vector<2x16x32xf32> to vector<2x16x1x32xf32>
    %138 = tpu.reciprocal %137 {approx = true} : vector<2x16x1x32xf32> -> vector<2x16x1x32xf32>
    %139 = vector.broadcast %138 : vector<2x16x1x32xf32> to vector<2x16x16x32xf32>
    %140 = arith.mulf %135, %139 : vector<2x16x16x32xf32>
    %141 = vector.shape_cast %116 : vector<2x16x32xf32> to vector<2x1x16x32xf32>
    %c0_71 = arith.constant 0 : index
    %c0_72 = arith.constant 0 : index
    %c0_73 = arith.constant 0 : index
    %c0_74 = arith.constant 0 : index
    %142 = vector.load %arg13[%c0_71, %c0_72, %c0_73, %c0_74] : memref<2x16x16x32xf32, #tpu.memory_space<vmem>>, vector<2x16x16x32xf32>
    %143 = vector.broadcast %141 : vector<2x1x16x32xf32> to vector<2x16x16x32xf32>
    %144 = arith.addf %143, %142 : vector<2x16x16x32xf32>
    %145 = arith.mulf %140, %144 : vector<2x16x16x32xf32>
    %cst_75 = arith.constant dense<0.000000e+00> : vector<2x16x32xf32>
    %146 = vector.multi_reduction <add>, %145, %cst_75 [2] : vector<2x16x16x32xf32> to vector<2x16x32xf32>
    %147 = vector.shape_cast %146 : vector<2x16x32xf32> to vector<32x32xf32>
    %cst_76 = arith.constant dense<0.000000e+00> : vector<32x32xf32>
    %148 = tpu.matmul %147, %36, %cst_76 {dimension_numbers = #tpu.dot_dimension_numbers<[1], [0], [0], [1], [0, 0, 1, 1], [], []>} : vector<32x32xf32>, vector<32x32xf32>, vector<32x32xf32> -> vector<32x32xf32>
    %149 = arith.addf %148, %41 : vector<32x32xf32>
    %150 = arith.addf %109, %149 : vector<32x32xf32>
    %cst_77 = arith.constant dense<0.000000e+00> : vector<32xf32>
    %151 = vector.multi_reduction <add>, %150, %cst_77 [1] : vector<32x32xf32> to vector<32xf32>
    %152 = vector.shape_cast %151 : vector<32xf32> to vector<32x1xf32>
    %cst_78 = arith.constant 3.200000e+01 : f32
    %153 = vector.broadcast %cst_78 : f32 to vector<32x1xf32>
    %154 = arith.divf %152, %153 : vector<32x1xf32>
    %155 = vector.broadcast %154 : vector<32x1xf32> to vector<32x32xf32>
    %156 = arith.subf %150, %155 : vector<32x32xf32>
    %157 = arith.mulf %156, %156 : vector<32x32xf32>
    %cst_79 = arith.constant dense<0.000000e+00> : vector<32xf32>
    %158 = vector.multi_reduction <add>, %157, %cst_79 [1] : vector<32x32xf32> to vector<32xf32>
    %159 = vector.shape_cast %158 : vector<32xf32> to vector<32x1xf32>
    %cst_80 = arith.constant 3.200000e+01 : f32
    %160 = vector.broadcast %cst_80 : f32 to vector<32x1xf32>
    %161 = arith.divf %159, %160 : vector<32x1xf32>
    %162 = vector.broadcast %154 : vector<32x1xf32> to vector<32x32xf32>
    %163 = arith.subf %150, %162 : vector<32x32xf32>
    %cst_81 = arith.constant 9.99999974E-6 : f32
    %164 = vector.broadcast %cst_81 : f32 to vector<32x1xf32>
    %165 = arith.addf %161, %164 : vector<32x1xf32>
    %166 = math.rsqrt %165 : vector<32x1xf32>
    %167 = vector.broadcast %166 : vector<32x1xf32> to vector<32x32xf32>
    %168 = arith.mulf %163, %167 : vector<32x32xf32>
    %169 = arith.mulf %168, %44 : vector<32x32xf32>
    %170 = arith.addf %169, %47 : vector<32x32xf32>
    %171 = arith.mulf %170, %32 : vector<32x32xf32>
    %172 = vector.shape_cast %171 : vector<32x32xf32> to vector<2x16x32xf32>
    %cst_82 = arith.constant dense<0.000000e+00> : vector<2x32xf32>
    %173 = vector.multi_reduction <add>, %172, %cst_82 [1] : vector<2x16x32xf32> to vector<2x32xf32>
    %cst_83 = arith.constant dense<0.000000e+00> : vector<2x1xf32>
    %174 = vector.multi_reduction <add>, %2, %cst_83 [1] : vector<2x16x1xf32> to vector<2x1xf32>
    %cst_84 = arith.constant 1.000000e+00 : f32
    %175 = vector.broadcast %cst_84 : f32 to vector<2x1xf32>
    %176 = arith.maximumf %174, %175 : vector<2x1xf32>
    %177 = vector.broadcast %176 : vector<2x1xf32> to vector<2x32xf32>
    %178 = arith.divf %173, %177 : vector<2x32xf32>
    %c0_85 = arith.constant 0 : index
    %c0_86 = arith.constant 0 : index
    %179 = vector.load %arg9[%c0_85, %c0_86] : memref<33x25xf32, #tpu.memory_space<vmem>>, vector<33x25xf32>
    %180 = vector.extract_strided_slice %179 {offsets = [0, 0], sizes = [32, 16], strides = [1, 1]} : vector<33x25xf32> to vector<32x16xf32>
    %181 = vector.extract_strided_slice %179 {offsets = [32, 0], sizes = [1, 16], strides = [1, 1]} : vector<33x25xf32> to vector<1x16xf32>
    %182 = vector.extract_strided_slice %179 {offsets = [0, 16], sizes = [16, 8], strides = [1, 1]} : vector<33x25xf32> to vector<16x8xf32>
    %183 = vector.extract_strided_slice %179 {offsets = [32, 16], sizes = [1, 8], strides = [1, 1]} : vector<33x25xf32> to vector<1x8xf32>
    %184 = vector.extract_strided_slice %179 {offsets = [0, 24], sizes = [8, 1], strides = [1, 1]} : vector<33x25xf32> to vector<8x1xf32>
    %185 = vector.extract_strided_slice %179 {offsets = [32, 24], sizes = [1, 1], strides = [1, 1]} : vector<33x25xf32> to vector<1x1xf32>
    %cst_87 = arith.constant dense<0.000000e+00> : vector<2x16xf32>
    %186 = tpu.matmul %178, %180, %cst_87 {dimension_numbers = #tpu.dot_dimension_numbers<[1], [0], [0], [1], [0, 0, 1, 1], [], []>} : vector<2x32xf32>, vector<32x16xf32>, vector<2x16xf32> -> vector<2x16xf32>
    %187 = vector.broadcast %181 : vector<1x16xf32> to vector<2x16xf32>
    %188 = arith.addf %186, %187 : vector<2x16xf32>
    %cst_88 = arith.constant 0.000000e+00 : f32
    %189 = vector.broadcast %cst_88 : f32 to vector<2x16xf32>
    %190 = arith.maximumf %188, %189 : vector<2x16xf32>
    %cst_89 = arith.constant dense<0.000000e+00> : vector<2x8xf32>
    %191 = tpu.matmul %190, %182, %cst_89 {dimension_numbers = #tpu.dot_dimension_numbers<[1], [0], [0], [1], [0, 0, 1, 1], [], []>} : vector<2x16xf32>, vector<16x8xf32>, vector<2x8xf32> -> vector<2x8xf32>
    %192 = vector.broadcast %183 : vector<1x8xf32> to vector<2x8xf32>
    %193 = arith.addf %191, %192 : vector<2x8xf32>
    %cst_90 = arith.constant 0.000000e+00 : f32
    %194 = vector.broadcast %cst_90 : f32 to vector<2x8xf32>
    %195 = arith.maximumf %193, %194 : vector<2x8xf32>
    %cst_91 = arith.constant dense<0.000000e+00> : vector<2x1xf32>
    %196 = tpu.matmul %195, %184, %cst_91 {dimension_numbers = #tpu.dot_dimension_numbers<[1], [0], [0], [1], [0, 0, 1, 1], [], []>} : vector<2x8xf32>, vector<8x1xf32>, vector<2x1xf32> -> vector<2x1xf32>
    %197 = vector.broadcast %185 : vector<1x1xf32> to vector<2x1xf32>
    %198 = arith.addf %196, %197 : vector<2x1xf32>
    %199 = vector.shape_cast %198 : vector<2x1xf32> to vector<2x1x1xf32>
    %c0_92 = arith.constant 0 : index
    %c0_93 = arith.constant 0 : index
    %c0_94 = arith.constant 0 : index
    %200 = vector.load %arg10[%c0_92, %c0_93, %c0_94] : memref<2x1x1xf32, #tpu.memory_space<vmem>>, vector<2x1x1xf32>
    tpu.vector_store %arg10[%c0_92, %c0_93, %c0_94], %199 {strides = array<i32>} : memref<2x1x1xf32, #tpu.memory_space<vmem>>, vector<2x1x1xf32>,
    return
  }
  func.func @transform_0(%arg0: i32) -> (i32, i32, i32) {
    %c0_i32 = arith.constant 0 : i32
    %c0_i32_0 = arith.constant 0 : i32
    %c0_i32_1 = arith.constant 0 : i32
    return %arg0, %c0_i32, %c0_i32_0 : i32, i32, i32
  }
  func.func @transform_1(%arg0: i32) -> (i32, i32, i32) {
    %c0_i32 = arith.constant 0 : i32
    %c0_i32_0 = arith.constant 0 : i32
    %c0_i32_1 = arith.constant 0 : i32
    return %arg0, %c0_i32, %c0_i32_0 : i32, i32, i32
  }
  func.func @transform_2(%arg0: i32) -> (i32, i32, i32) {
    %c0_i32 = arith.constant 0 : i32
    %c0_i32_0 = arith.constant 0 : i32
    %c0_i32_1 = arith.constant 0 : i32
    return %arg0, %c0_i32, %c0_i32_0 : i32, i32, i32
  }
  func.func @transform_3(%arg0: i32) -> (i32, i32, i32) {
    %c0_i32 = arith.constant 0 : i32
    %c0_i32_0 = arith.constant 0 : i32
    %c0_i32_1 = arith.constant 0 : i32
    return %arg0, %c0_i32, %c0_i32_0 : i32, i32, i32
  }
  func.func @transform_4(%arg0: i32) -> (i32, i32) {
    %c0_i32 = arith.constant 0 : i32
    %c0_i32_0 = arith.constant 0 : i32
    %c0_i32_1 = arith.constant 0 : i32
    return %c0_i32, %c0_i32_0 : i32, i32
  }
  func.func @transform_5(%arg0: i32) -> (i32, i32, i32) {
    %c0_i32 = arith.constant 0 : i32
    %c0_i32_0 = arith.constant 0 : i32
    %c0_i32_1 = arith.constant 0 : i32
    %c0_i32_2 = arith.constant 0 : i32
    return %c0_i32, %c0_i32_0, %c0_i32_1 : i32, i32, i32
  }
  func.func @transform_6(%arg0: i32) -> (i32, i32, i32) {
    %c0_i32 = arith.constant 0 : i32
    %c0_i32_0 = arith.constant 0 : i32
    %c0_i32_1 = arith.constant 0 : i32
    %c0_i32_2 = arith.constant 0 : i32
    return %c0_i32, %c0_i32_0, %c0_i32_1 : i32, i32, i32
  }
  func.func @transform_7(%arg0: i32) -> (i32, i32) {
    %c0_i32 = arith.constant 0 : i32
    %c0_i32_0 = arith.constant 0 : i32
    %c0_i32_1 = arith.constant 0 : i32
    return %c0_i32, %c0_i32_0 : i32, i32
  }
  func.func @transform_8(%arg0: i32) -> (i32, i32) {
    %c0_i32 = arith.constant 0 : i32
    %c0_i32_0 = arith.constant 0 : i32
    %c0_i32_1 = arith.constant 0 : i32
    return %c0_i32, %c0_i32_0 : i32, i32
  }
  func.func @transform_9(%arg0: i32) -> (i32, i32, i32) {
    %c0_i32 = arith.constant 0 : i32
    %c0_i32_0 = arith.constant 0 : i32
    %c0_i32_1 = arith.constant 0 : i32
    return %arg0, %c0_i32, %c0_i32_0 : i32, i32, i32
  }
}

</mosaic_0001>

<llo_original>
// kernel: tpu_custom_call.1
$region0: #{tpu_custom_call.1}
  #allocation0 [shape = 'u32[]', space=smem, size = 0x4, offset = 0x4, fixed_abs, tag = 'smem constant byte address 0x4 - core index']
  #allocation1 [shape = 'u32[72,128]{1,0:T(1,128)}', space=vmem, size = 0x9000, scoped, tag = 'internal scratch']
  #allocation2 [shape = 'f32[2,16,16,32]{3,2,1,0:T(8,128)}', space=vmem, size = 0x40000, scoped, tag = 'scratch operand']
  #allocation3 [shape = 'f32[2,16,16,32]{3,2,1,0:T(8,128)}', space=vmem, size = 0x40000, scoped, tag = 'scratch operand']
  #allocation4 [shape = 'f32[2,16,16,32]{3,2,1,0:T(8,128)}', space=vmem, size = 0x40000, scoped, tag = 'scratch operand']
  %s0 = inlined_call_operand.vmem [shape: f32[2,16,32], index: 0, kind: input, shape index: {}]
  %s1 = inlined_call_operand.vmem [shape: f32[2,16,16], index: 1, kind: input, shape index: {}]
  %s2 = inlined_call_operand.hbm [shape: s32[2,16,16], index: 2, kind: input, shape index: {}]
  %s3 = inlined_call_operand.vmem [shape: f32[2,16,1], index: 3, kind: input, shape index: {}]
  %s4 = inlined_call_operand.vmem [shape: f32[5,96], index: 4, kind: input, shape index: {}]
  %s5 = inlined_call_operand.hbm [shape: f32[1,32,128], index: 5, kind: input, shape index: {}]
  %s6 = inlined_call_operand.vmem [shape: f32[1,3,32], index: 6, kind: input, shape index: {}]
  %s7 = inlined_call_operand.hbm [shape: f32[32,32], index: 7, kind: input, shape index: {}]
  %s8 = inlined_call_operand.vmem [shape: f32[33,25], index: 8, kind: input, shape index: {}]
  %s9 = inlined_call_operand.vmem [shape: f32[2,1,1], index: 9, kind: output, shape index: {}]
  %s10 = sld [smem:[#allocation0]]
  $region58: #{tpu_custom_call.1} parent=0
    _
  %s12 = ssub.s32 1, %s10
  %s13 = scalar_select 0, %s12, %s10
  $region1: #{tpu_custom_call.1} parent=0
    #allocation5 [shape = 'u8[16384]{0}', space=vmem, size = 0x4000, scoped, tag = 'input window, operand 2, single buffered']
    #allocation6 [shape = 's32[1]{0}', space=sflag, size = 0x4, scoped, tag = 'scoped memory for tpu_custom_call.1']
    #allocation7 [shape = 'u8[16384]{0}', space=vmem, size = 0x4000, scoped, tag = 'input window, operand 5, single buffered']
    #allocation8 [shape = 's32[1]{0}', space=sflag, size = 0x4, scoped, tag = 'scoped memory for tpu_custom_call.1']
    #allocation9 [shape = 'u8[16384]{0}', space=vmem, size = 0x4000, scoped, tag = 'input window, operand 7, single buffered']
    %14 = vsyncpa [#allocation6], 0
    %15 = vsyncpa [#allocation8], 0
    // Predicated region
    $region2: #{tpu_custom_call.1} parent=1 // pred_check
      _
    $region3: #{tpu_custom_call.1} parent=1 // pred_check_branch
      %17 = sbr.rel (0) target = $region5
    $region4: #{tpu_custom_call.1} parent=1 // pred_region
      _
    $region5: #{tpu_custom_call.1} parent=1 // pred_fallthru
      _
    // Predicated region
    $region6: #{tpu_custom_call.1} parent=1 // pred_check
      _
    $region7: #{tpu_custom_call.1} parent=1 // pred_check_branch
      %19 = sbr.rel (0) target = $region9
    $region8: #{tpu_custom_call.1} parent=1 // pred_region
      _
    $region9: #{tpu_custom_call.1} parent=1 // pred_fallthru
      _
    // Predicated region
    $region10: #{tpu_custom_call.1} parent=1 // pred_check
      _
    $region11: #{tpu_custom_call.1} parent=1 // pred_check_branch
      %21 = sbr.rel (0) target = $region13
    $region12: #{tpu_custom_call.1} parent=1 // pred_region
      %23 = vsyncadd [#allocation6], 0
      %s24 = sshll.u32 %s2, 4
      %s25 = int_to_ptr.hbm [resolvable:$true] %s24
      %s26 = sshll.u32 [#allocation5], 4
      %s27 = int_to_ptr.vmem [resolvable:$true] %s26
      %32 = dma.hbm_to_vmem [thread:$0]  %s25, 512, %s27, [#allocation6], 128, 128, 8
    $region13: #{tpu_custom_call.1} parent=1 // pred_fallthru
      _
    // Predicated region
    $region14: #{tpu_custom_call.1} parent=1 // pred_check
      _
    $region15: #{tpu_custom_call.1} parent=1 // pred_check_branch
      %34 = sbr.rel (0) target = $region17
    $region16: #{tpu_custom_call.1} parent=1 // pred_region
      _
    $region17: #{tpu_custom_call.1} parent=1 // pred_fallthru
      _
    // Predicated region
    $region18: #{tpu_custom_call.1} parent=1 // pred_check
      _
    $region19: #{tpu_custom_call.1} parent=1 // pred_check_branch
      %36 = sbr.rel (0) target = $region21
    $region20: #{tpu_custom_call.1} parent=1 // pred_region
      _
    $region21: #{tpu_custom_call.1} parent=1 // pred_fallthru
      _
    // Predicated region
    $region22: #{tpu_custom_call.1} parent=1 // pred_check
      _
    $region23: #{tpu_custom_call.1} parent=1 // pred_check_branch
      %38 = sbr.rel (0) target = $region25
    $region24: #{tpu_custom_call.1} parent=1 // pred_region
      %40 = vsyncadd [#allocation8], 0
      %s41 = sshll.u32 %s5, 4
      %s42 = int_to_ptr.hbm [resolvable:$true] %s41
      %s43 = sshll.u32 [#allocation7], 4
      %s44 = int_to_ptr.vmem [resolvable:$true] %s43
      %49 = dma.hbm_to_vmem [thread:$0]  %s42, 512, %s44, [#allocation8], 128, 128, 8
    $region25: #{tpu_custom_call.1} parent=1 // pred_fallthru
      _
    // Predicated region
    $region26: #{tpu_custom_call.1} parent=1 // pred_check
      _
    $region27: #{tpu_custom_call.1} parent=1 // pred_check_branch
      %51 = sbr.rel (0) target = $region29
    $region28: #{tpu_custom_call.1} parent=1 // pred_region
      _
    $region29: #{tpu_custom_call.1} parent=1 // pred_fallthru
      _
    // Predicated region
    $region30: #{tpu_custom_call.1} parent=1 // pred_check
      _
    $region31: #{tpu_custom_call.1} parent=1 // pred_check_branch
      %53 = sbr.rel (0) target = $region33
    $region32: #{tpu_custom_call.1} parent=1 // pred_region
      %55 = vsyncadd [#allocation8], 0
      %s56 = sshll.u32 %s7, 4
      %s57 = int_to_ptr.hbm [resolvable:$true] %s56
      %s58 = sshll.u32 [#allocation9], 4
      %s59 = int_to_ptr.vmem [resolvable:$true] %s58
      %64 = dma.hbm_to_vmem [thread:$0]  %s57, 512, %s59, [#allocation8], 128, 128, 8
    $region33: #{tpu_custom_call.1} parent=1 // pred_fallthru
      _
    // Predicated region
    $region34: #{tpu_custom_call.1} parent=1 // pred_check
      _
    $region35: #{tpu_custom_call.1} parent=1 // pred_check_branch
      %66 = sbr.rel (0) target = $region37
    $region36: #{tpu_custom_call.1} parent=1 // pred_region
      _
    $region37: #{tpu_custom_call.1} parent=1 // pred_fallthru
      _
    // Predicated region
    $region38: #{tpu_custom_call.1} parent=1 // pred_check
      _
    $region39: #{tpu_custom_call.1} parent=1 // pred_check_branch
      %68 = sbr.rel (0) target = $region41
    $region40: #{tpu_custom_call.1} parent=1 // pred_region
      %70 = dma.done [#allocation6], 512
    $region41: #{tpu_custom_call.1} parent=1 // pred_fallthru
      _
    // Predicated region
    $region42: #{tpu_custom_call.1} parent=1 // pred_check
      _
    $region43: #{tpu_custom_call.1} parent=1 // pred_check_branch
      %72 = sbr.rel (0) target = $region45
    $region44: #{tpu_custom_call.1} parent=1 // pred_region
      %74 = dma.done [#allocation8], 512
    $region45: #{tpu_custom_call.1} parent=1 // pred_fallthru
      _
    // Predicated region
    $region46: #{tpu_custom_call.1} parent=1 // pred_check
      _
    $region47: #{tpu_custom_call.1} parent=1 // pred_check_branch
      %76 = sbr.rel (0) target = $region49
    $region48: #{tpu_custom_call.1} parent=1 // pred_region
      %78 = dma.done [#allocation8], 512
    $region49: #{tpu_custom_call.1} parent=1 // pred_fallthru
      _
    %v79 = vld [vmem:[%s0] sm:$0xff]
    %v80 = vld [vmem:[%s0 + $0x8] sm:$0xff]
    %v81 = vld [vmem:[%s0 + $0x10] sm:$0xff]
    %v82 = vld [vmem:[%s0 + $0x18] sm:$0xff]
    %v83 = vld [vmem:[%s3] sm:$0xff]
    %v84 = vld [vmem:[%s3 + $0x8] sm:$0xff]
    %v85 = vld [vmem:[%s3 + $0x10] sm:$0xff]
    %v86 = vld [vmem:[%s3 + $0x18] sm:$0xff]
    %v87 = vld [vmem:[%s1] sm:$0xff]
    %v88 = vld [vmem:[%s1 + $0x8] sm:$0xff]
    %v89 = vld [vmem:[%s1 + $0x10] sm:$0xff]
    %v90 = vld [vmem:[%s1 + $0x18] sm:$0xff]
    %v91 = vperm.slane %v87, 0
    %v92 = vlaneseq
    %v93 = vshrl.u32 %v92, 7
    %95 = vset.pattern.permute.xlu0 %v93
    %96 = vperm.xlu0 %95, %v91
    %v97 = vpop.permute.xlu0 %96
    %v98 = vlaneseq
    %v99 = vshrl.u32 %v98, 7
    %v100 = vadd.s32 %v99, 8
    %101 = vset.pattern.permute.xlu0 %v100
    %102 = vperm.xlu0 %101, %v91
    %v103 = vpop.permute.xlu0 %102
    %v104 = vperm.slane %v87, 1
    %v105 = vlaneseq
    %v106 = vshrl.u32 %v105, 7
    %108 = vset.pattern.permute.xlu0 %v106
    %109 = vperm.xlu0 %108, %v104
    %v110 = vpop.permute.xlu0 %109
    %v111 = vlaneseq
    %v112 = vshrl.u32 %v111, 7
    %v113 = vadd.s32 %v112, 8
    %114 = vset.pattern.permute.xlu0 %v113
    %115 = vperm.xlu0 %114, %v104
    %v116 = vpop.permute.xlu0 %115
    %v117 = vperm.slane %v87, 2
    %v118 = vlaneseq
    %v119 = vshrl.u32 %v118, 7
    %121 = vset.pattern.permute.xlu0 %v119
    %122 = vperm.xlu0 %121, %v117
    %v123 = vpop.permute.xlu0 %122
    %v124 = vlaneseq
    %v125 = vshrl.u32 %v124, 7
    %v126 = vadd.s32 %v125, 8
    %127 = vset.pattern.permute.xlu0 %v126
    %128 = vperm.xlu0 %127, %v117
    %v129 = vpop.permute.xlu0 %128
    %v130 = vperm.slane %v87, 3
    %v131 = vlaneseq
    %v132 = vshrl.u32 %v131, 7
    %134 = vset.pattern.permute.xlu0 %v132
    %135 = vperm.xlu0 %134, %v130
    %v136 = vpop.permute.xlu0 %135
    %v137 = vlaneseq
    %v138 = vshrl.u32 %v137, 7
    %v139 = vadd.s32 %v138, 8
    %140 = vset.pattern.permute.xlu0 %v139
    %141 = vperm.xlu0 %140, %v130
    %v142 = vpop.permute.xlu0 %141
    %v143 = vperm.slane %v87, 4
    %v144 = vlaneseq
    %v145 = vshrl.u32 %v144, 7
    %147 = vset.pattern.permute.xlu0 %v145
    %148 = vperm.xlu0 %147, %v143
    %v149 = vpop.permute.xlu0 %148
    %v150 = vlaneseq
    %v151 = vshrl.u32 %v150, 7
    %v152 = vadd.s32 %v151, 8
    %153 = vset.pattern.permute.xlu0 %v152
    %154 = vperm.xlu0 %153, %v143
    %v155 = vpop.permute.xlu0 %154
    %v156 = vperm.slane %v87, 5
    %v157 = vlaneseq
    %v158 = vshrl.u32 %v157, 7
    %160 = vset.pattern.permute.xlu0 %v158
    %161 = vperm.xlu0 %160, %v156
    %v162 = vpop.permute.xlu0 %161
    %v163 = vlaneseq
    %v164 = vshrl.u32 %v163, 7
    %v165 = vadd.s32 %v164, 8
    %166 = vset.pattern.permute.xlu0 %v165
    %167 = vperm.xlu0 %166, %v156
    %v168 = vpop.permute.xlu0 %167
    %v169 = vperm.slane %v87, 6
    %v170 = vlaneseq
    %v171 = vshrl.u32 %v170, 7
    %173 = vset.pattern.permute.xlu0 %v171
    %174 = vperm.xlu0 %173, %v169
    %v175 = vpop.permute.xlu0 %174
    %v176 = vlaneseq
    %v177 = vshrl.u32 %v176, 7
    %v178 = vadd.s32 %v177, 8
    %179 = vset.pattern.permute.xlu0 %v178
    %180 = vperm.xlu0 %179, %v169
    %v181 = vpop.permute.xlu0 %180
    %v182 = vperm.slane %v87, 7
    %v183 = vlaneseq
    %v184 = vshrl.u32 %v183, 7
    %186 = vset.pattern.permute.xlu0 %v184
    %187 = vperm.xlu0 %186, %v182
    %v188 = vpop.permute.xlu0 %187
    %v189 = vlaneseq
    %v190 = vshrl.u32 %v189, 7
    %v191 = vadd.s32 %v190, 8
    %192 = vset.pattern.permute.xlu0 %v191
    %193 = vperm.xlu0 %192, %v182
    %v194 = vpop.permute.xlu0 %193
    %v195 = vperm.slane %v88, 0
    %v196 = vlaneseq
    %v197 = vshrl.u32 %v196, 7
    %199 = vset.pattern.permute.xlu0 %v197
    %200 = vperm.xlu0 %199, %v195
    %v201 = vpop.permute.xlu0 %200
    %v202 = vlaneseq
    %v203 = vshrl.u32 %v202, 7
    %v204 = vadd.s32 %v203, 8
    %205 = vset.pattern.permute.xlu0 %v204
    %206 = vperm.xlu0 %205, %v195
    %v207 = vpop.permute.xlu0 %206
    %v208 = vperm.slane %v88, 1
    %v209 = vlaneseq
    %v210 = vshrl.u32 %v209, 7
    %212 = vset.pattern.permute.xlu0 %v210
    %213 = vperm.xlu0 %212, %v208
    %v214 = vpop.permute.xlu0 %213
    %v215 = vlaneseq
    %v216 = vshrl.u32 %v215, 7
    %v217 = vadd.s32 %v216, 8
    %218 = vset.pattern.permute.xlu0 %v217
    %219 = vperm.xlu0 %218, %v208
    %v220 = vpop.permute.xlu0 %219
    %v221 = vperm.slane %v88, 2
    %v222 = vlaneseq
    %v223 = vshrl.u32 %v222, 7
    %225 = vset.pattern.permute.xlu0 %v223
    %226 = vperm.xlu0 %225, %v221
    %v227 = vpop.permute.xlu0 %226
    %v228 = vlaneseq
    %v229 = vshrl.u32 %v228, 7
    %v230 = vadd.s32 %v229, 8
    %231 = vset.pattern.permute.xlu0 %v230
    %232 = vperm.xlu0 %231, %v221
    %v233 = vpop.permute.xlu0 %232
    %v234 = vperm.slane %v88, 3
    %v235 = vlaneseq
    %v236 = vshrl.u32 %v235, 7
    %238 = vset.pattern.permute.xlu0 %v236
    %239 = vperm.xlu0 %238, %v234
    %v240 = vpop.permute.xlu0 %239
    %v241 = vlaneseq
    %v242 = vshrl.u32 %v241, 7
    %v243 = vadd.s32 %v242, 8
    %244 = vset.pattern.permute.xlu0 %v243
    %245 = vperm.xlu0 %244, %v234
    %v246 = vpop.permute.xlu0 %245
    %v247 = vperm.slane %v88, 4
    %v248 = vlaneseq
    %v249 = vshrl.u32 %v248, 7
    %251 = vset.pattern.permute.xlu0 %v249
    %252 = vperm.xlu0 %251, %v247
    %v253 = vpop.permute.xlu0 %252
    %v254 = vlaneseq
    %v255 = vshrl.u32 %v254, 7
    %v256 = vadd.s32 %v255, 8
    %257 = vset.pattern.permute.xlu0 %v256
    %258 = vperm.xlu0 %257, %v247
    %v259 = vpop.permute.xlu0 %258
    %v260 = vperm.slane %v88, 5
    %v261 = vlaneseq
    %v262 = vshrl.u32 %v261, 7
    %264 = vset.pattern.permute.xlu0 %v262
    %265 = vperm.xlu0 %264, %v260
    %v266 = vpop.permute.xlu0 %265
    %v267 = vlaneseq
    %v268 = vshrl.u32 %v267, 7
    %v269 = vadd.s32 %v268, 8
    %270 = vset.pattern.permute.xlu0 %v269
    %271 = vperm.xlu0 %270, %v260
    %v272 = vpop.permute.xlu0 %271
    %v273 = vperm.slane %v88, 6
    %v274 = vlaneseq
    %v275 = vshrl.u32 %v274, 7
    %277 = vset.pattern.permute.xlu0 %v275
    %278 = vperm.xlu0 %277, %v273
    %v279 = vpop.permute.xlu0 %278
    %v280 = vlaneseq
    %v281 = vshrl.u32 %v280, 7
    %v282 = vadd.s32 %v281, 8
    %283 = vset.pattern.permute.xlu0 %v282
    %284 = vperm.xlu0 %283, %v273
    %v285 = vpop.permute.xlu0 %284
    %v286 = vperm.slane %v88, 7
    %v287 = vlaneseq
    %v288 = vshrl.u32 %v287, 7
    %290 = vset.pattern.permute.xlu0 %v288
    %291 = vperm.xlu0 %290, %v286
    %v292 = vpop.permute.xlu0 %291
    %v293 = vlaneseq
    %v294 = vshrl.u32 %v293, 7
    %v295 = vadd.s32 %v294, 8
    %296 = vset.pattern.permute.xlu0 %v295
    %297 = vperm.xlu0 %296, %v286
    %v298 = vpop.permute.xlu0 %297
    %v299 = vperm.slane %v89, 0
    %v300 = vlaneseq
    %v301 = vshrl.u32 %v300, 7
    %303 = vset.pattern.permute.xlu0 %v301
    %304 = vperm.xlu0 %303, %v299
    %v305 = vpop.permute.xlu0 %304
    %v306 = vlaneseq
    %v307 = vshrl.u32 %v306, 7
    %v308 = vadd.s32 %v307, 8
    %309 = vset.pattern.permute.xlu0 %v308
    %310 = vperm.xlu0 %309, %v299
    %v311 = vpop.permute.xlu0 %310
    %v312 = vperm.slane %v89, 1
    %v313 = vlaneseq
    %v314 = vshrl.u32 %v313, 7
    %316 = vset.pattern.permute.xlu0 %v314
    %317 = vperm.xlu0 %316, %v312
    %v318 = vpop.permute.xlu0 %317
    %v319 = vlaneseq
    %v320 = vshrl.u32 %v319, 7
    %v321 = vadd.s32 %v320, 8
    %322 = vset.pattern.permute.xlu0 %v321
    %323 = vperm.xlu0 %322, %v312
    %v324 = vpop.permute.xlu0 %323
    %v325 = vperm.slane %v89, 2
    %v326 = vlaneseq
    %v327 = vshrl.u32 %v326, 7
    %329 = vset.pattern.permute.xlu0 %v327
    %330 = vperm.xlu0 %329, %v325
    %v331 = vpop.permute.xlu0 %330
    %v332 = vlaneseq
    %v333 = vshrl.u32 %v332, 7
    %v334 = vadd.s32 %v333, 8
    %335 = vset.pattern.permute.xlu0 %v334
    %336 = vperm.xlu0 %335, %v325
    %v337 = vpop.permute.xlu0 %336
    %v338 = vperm.slane %v89, 3
    %v339 = vlaneseq
    %v340 = vshrl.u32 %v339, 7
    %342 = vset.pattern.permute.xlu0 %v340
    %343 = vperm.xlu0 %342, %v338
    %v344 = vpop.permute.xlu0 %343
    %v345 = vlaneseq
    %v346 = vshrl.u32 %v345, 7
    %v347 = vadd.s32 %v346, 8
    %348 = vset.pattern.permute.xlu0 %v347
    %349 = vperm.xlu0 %348, %v338
    %v350 = vpop.permute.xlu0 %349
    %v351 = vperm.slane %v89, 4
    %v352 = vlaneseq
    %v353 = vshrl.u32 %v352, 7
    %355 = vset.pattern.permute.xlu0 %v353
    %356 = vperm.xlu0 %355, %v351
    %v357 = vpop.permute.xlu0 %356
    %v358 = vlaneseq
    %v359 = vshrl.u32 %v358, 7
    %v360 = vadd.s32 %v359, 8
    %361 = vset.pattern.permute.xlu0 %v360
    %362 = vperm.xlu0 %361, %v351
    %v363 = vpop.permute.xlu0 %362
    %v364 = vperm.slane %v89, 5
    %v365 = vlaneseq
    %v366 = vshrl.u32 %v365, 7
    %368 = vset.pattern.permute.xlu0 %v366
    %369 = vperm.xlu0 %368, %v364
    %v370 = vpop.permute.xlu0 %369
    %v371 = vlaneseq
    %v372 = vshrl.u32 %v371, 7
    %v373 = vadd.s32 %v372, 8
    %374 = vset.pattern.permute.xlu0 %v373
    %375 = vperm.xlu0 %374, %v364
    %v376 = vpop.permute.xlu0 %375
    %v377 = vperm.slane %v89, 6
    %v378 = vlaneseq
    %v379 = vshrl.u32 %v378, 7
    %381 = vset.pattern.permute.xlu0 %v379
    %382 = vperm.xlu0 %381, %v377
    %v383 = vpop.permute.xlu0 %382
    %v384 = vlaneseq
    %v385 = vshrl.u32 %v384, 7
    %v386 = vadd.s32 %v385, 8
    %387 = vset.pattern.permute.xlu0 %v386
    %388 = vperm.xlu0 %387, %v377
    %v389 = vpop.permute.xlu0 %388
    %v390 = vperm.slane %v89, 7
    %v391 = vlaneseq
    %v392 = vshrl.u32 %v391, 7
    %394 = vset.pattern.permute.xlu0 %v392
    %395 = vperm.xlu0 %394, %v390
    %v396 = vpop.permute.xlu0 %395
    %v397 = vlaneseq
    %v398 = vshrl.u32 %v397, 7
    %v399 = vadd.s32 %v398, 8
    %400 = vset.pattern.permute.xlu0 %v399
    %401 = vperm.xlu0 %400, %v390
    %v402 = vpop.permute.xlu0 %401
    %v403 = vperm.slane %v90, 0
    %v404 = vlaneseq
    %v405 = vshrl.u32 %v404, 7
    %407 = vset.pattern.permute.xlu0 %v405
    %408 = vperm.xlu0 %407, %v403
    %v409 = vpop.permute.xlu0 %408
    %v410 = vlaneseq
    %v411 = vshrl.u32 %v410, 7
    %v412 = vadd.s32 %v411, 8
    %413 = vset.pattern.permute.xlu0 %v412
    %414 = vperm.xlu0 %413, %v403
    %v415 = vpop.permute.xlu0 %414
    %v416 = vperm.slane %v90, 1
    %v417 = vlaneseq
    %v418 = vshrl.u32 %v417, 7
    %420 = vset.pattern.permute.xlu0 %v418
    %421 = vperm.xlu0 %420, %v416
    %v422 = vpop.permute.xlu0 %421
    %v423 = vlaneseq
    %v424 = vshrl.u32 %v423, 7
    %v425 = vadd.s32 %v424, 8
    %426 = vset.pattern.permute.xlu0 %v425
    %427 = vperm.xlu0 %426, %v416
    %v428 = vpop.permute.xlu0 %427
    %v429 = vperm.slane %v90, 2
    %v430 = vlaneseq
    %v431 = vshrl.u32 %v430, 7
    %433 = vset.pattern.permute.xlu0 %v431
    %434 = vperm.xlu0 %433, %v429
    %v435 = vpop.permute.xlu0 %434
    %v436 = vlaneseq
    %v437 = vshrl.u32 %v436, 7
    %v438 = vadd.s32 %v437, 8
    %439 = vset.pattern.permute.xlu0 %v438
    %440 = vperm.xlu0 %439, %v429
    %v441 = vpop.permute.xlu0 %440
    %v442 = vperm.slane %v90, 3
    %v443 = vlaneseq
    %v444 = vshrl.u32 %v443, 7
    %446 = vset.pattern.permute.xlu0 %v444
    %447 = vperm.xlu0 %446, %v442
    %v448 = vpop.permute.xlu0 %447
    %v449 = vlaneseq
    %v450 = vshrl.u32 %v449, 7
    %v451 = vadd.s32 %v450, 8
    %452 = vset.pattern.permute.xlu0 %v451
    %453 = vperm.xlu0 %452, %v442
    %v454 = vpop.permute.xlu0 %453
    %v455 = vperm.slane %v90, 4
    %v456 = vlaneseq
    %v457 = vshrl.u32 %v456, 7
    %459 = vset.pattern.permute.xlu0 %v457
    %460 = vperm.xlu0 %459, %v455
    %v461 = vpop.permute.xlu0 %460
    %v462 = vlaneseq
    %v463 = vshrl.u32 %v462, 7
    %v464 = vadd.s32 %v463, 8
    %465 = vset.pattern.permute.xlu0 %v464
    %466 = vperm.xlu0 %465, %v455
    %v467 = vpop.permute.xlu0 %466
    %v468 = vperm.slane %v90, 5
    %v469 = vlaneseq
    %v470 = vshrl.u32 %v469, 7
    %472 = vset.pattern.permute.xlu0 %v470
    %473 = vperm.xlu0 %472, %v468
    %v474 = vpop.permute.xlu0 %473
    %v475 = vlaneseq
    %v476 = vshrl.u32 %v475, 7
    %v477 = vadd.s32 %v476, 8
    %478 = vset.pattern.permute.xlu0 %v477
    %479 = vperm.xlu0 %478, %v468
    %v480 = vpop.permute.xlu0 %479
    %v481 = vperm.slane %v90, 6
    %v482 = vlaneseq
    %v483 = vshrl.u32 %v482, 7
    %485 = vset.pattern.permute.xlu0 %v483
    %486 = vperm.xlu0 %485, %v481
    %v487 = vpop.permute.xlu0 %486
    %v488 = vlaneseq
    %v489 = vshrl.u32 %v488, 7
    %v490 = vadd.s32 %v489, 8
    %491 = vset.pattern.permute.xlu0 %v490
    %492 = vperm.xlu0 %491, %v481
    %v493 = vpop.permute.xlu0 %492
    %v494 = vperm.slane %v90, 7
    %v495 = vlaneseq
    %v496 = vshrl.u32 %v495, 7
    %498 = vset.pattern.permute.xlu0 %v496
    %499 = vperm.xlu0 %498, %v494
    %v500 = vpop.permute.xlu0 %499
    %v501 = vlaneseq
    %v502 = vshrl.u32 %v501, 7
    %v503 = vadd.s32 %v502, 8
    %504 = vset.pattern.permute.xlu0 %v503
    %505 = vperm.xlu0 %504, %v494
    %v506 = vpop.permute.xlu0 %505
    %v507 = vld [vmem:[#allocation5] sm:$0xff]
    %v508 = vld [vmem:[#allocation5 + $0x8] sm:$0xff]
    %v509 = vld [vmem:[#allocation5 + $0x10] sm:$0xff]
    %v510 = vld [vmem:[#allocation5 + $0x18] sm:$0xff]
    %v511 = vperm.slane %v507, 0
    %v512 = vlaneseq
    %v513 = vshrl.u32 %v512, 7
    %515 = vset.pattern.permute.xlu0 %v513
    %516 = vperm.xlu0 %515, %v511
    %v517 = vpop.permute.xlu0 %516
    %v518 = vlaneseq
    %v519 = vshrl.u32 %v518, 7
    %v520 = vadd.s32 %v519, 8
    %521 = vset.pattern.permute.xlu0 %v520
    %522 = vperm.xlu0 %521, %v511
    %v523 = vpop.permute.xlu0 %522
    %v524 = vperm.slane %v507, 1
    %v525 = vlaneseq
    %v526 = vshrl.u32 %v525, 7
    %528 = vset.pattern.permute.xlu0 %v526
    %529 = vperm.xlu0 %528, %v524
    %v530 = vpop.permute.xlu0 %529
    %v531 = vlaneseq
    %v532 = vshrl.u32 %v531, 7
    %v533 = vadd.s32 %v532, 8
    %534 = vset.pattern.permute.xlu0 %v533
    %535 = vperm.xlu0 %534, %v524
    %v536 = vpop.permute.xlu0 %535
    %v537 = vperm.slane %v507, 2
    %v538 = vlaneseq
    %v539 = vshrl.u32 %v538, 7
    %541 = vset.pattern.permute.xlu0 %v539
    %542 = vperm.xlu0 %541, %v537
    %v543 = vpop.permute.xlu0 %542
    %v544 = vlaneseq
    %v545 = vshrl.u32 %v544, 7
    %v546 = vadd.s32 %v545, 8
    %547 = vset.pattern.permute.xlu0 %v546
    %548 = vperm.xlu0 %547, %v537
    %v549 = vpop.permute.xlu0 %548
    %v550 = vperm.slane %v507, 3
    %v551 = vlaneseq
    %v552 = vshrl.u32 %v551, 7
    %554 = vset.pattern.permute.xlu0 %v552
    %555 = vperm.xlu0 %554, %v550
    %v556 = vpop.permute.xlu0 %555
    %v557 = vlaneseq
    %v558 = vshrl.u32 %v557, 7
    %v559 = vadd.s32 %v558, 8
    %560 = vset.pattern.permute.xlu0 %v559
    %561 = vperm.xlu0 %560, %v550
    %v562 = vpop.permute.xlu0 %561
    %v563 = vperm.slane %v507, 4
    %v564 = vlaneseq
    %v565 = vshrl.u32 %v564, 7
    %567 = vset.pattern.permute.xlu0 %v565
    %568 = vperm.xlu0 %567, %v563
    %v569 = vpop.permute.xlu0 %568
    %v570 = vlaneseq
    %v571 = vshrl.u32 %v570, 7
    %v572 = vadd.s32 %v571, 8
    %573 = vset.pattern.permute.xlu0 %v572
    %574 = vperm.xlu0 %573, %v563
    %v575 = vpop.permute.xlu0 %574
    %v576 = vperm.slane %v507, 5
    %v577 = vlaneseq
    %v578 = vshrl.u32 %v577, 7
    %580 = vset.pattern.permute.xlu0 %v578
    %581 = vperm.xlu0 %580, %v576
    %v582 = vpop.permute.xlu0 %581
    %v583 = vlaneseq
    %v584 = vshrl.u32 %v583, 7
    %v585 = vadd.s32 %v584, 8
    %586 = vset.pattern.permute.xlu0 %v585
    %587 = vperm.xlu0 %586, %v576
    %v588 = vpop.permute.xlu0 %587
    %v589 = vperm.slane %v507, 6
    %v590 = vlaneseq
    %v591 = vshrl.u32 %v590, 7
    %593 = vset.pattern.permute.xlu0 %v591
    %594 = vperm.xlu0 %593, %v589
    %v595 = vpop.permute.xlu0 %594
    %v596 = vlaneseq
    %v597 = vshrl.u32 %v596, 7
    %v598 = vadd.s32 %v597, 8
    %599 = vset.pattern.permute.xlu0 %v598
    %600 = vperm.xlu0 %599, %v589
    %v601 = vpop.permute.xlu0 %600
    %v602 = vperm.slane %v507, 7
    %v603 = vlaneseq
    %v604 = vshrl.u32 %v603, 7
    %606 = vset.pattern.permute.xlu0 %v604
    %607 = vperm.xlu0 %606, %v602
    %v608 = vpop.permute.xlu0 %607
    %v609 = vlaneseq
    %v610 = vshrl.u32 %v609, 7
    %v611 = vadd.s32 %v610, 8
    %612 = vset.pattern.permute.xlu0 %v611
    %613 = vperm.xlu0 %612, %v602
    %v614 = vpop.permute.xlu0 %613
    %v615 = vperm.slane %v508, 0
    %v616 = vlaneseq
    %v617 = vshrl.u32 %v616, 7
    %619 = vset.pattern.permute.xlu0 %v617
    %620 = vperm.xlu0 %619, %v615
    %v621 = vpop.permute.xlu0 %620
    %v622 = vlaneseq
    %v623 = vshrl.u32 %v622, 7
    %v624 = vadd.s32 %v623, 8
    %625 = vset.pattern.permute.xlu0 %v624
    %626 = vperm.xlu0 %625, %v615
    %v627 = vpop.permute.xlu0 %626
    %v628 = vperm.slane %v508, 1
    %v629 = vlaneseq
    %v630 = vshrl.u32 %v629, 7
    %632 = vset.pattern.permute.xlu0 %v630
    %633 = vperm.xlu0 %632, %v628
    %v634 = vpop.permute.xlu0 %633
    %v635 = vlaneseq
    %v636 = vshrl.u32 %v635, 7
    %v637 = vadd.s32 %v636, 8
    %638 = vset.pattern.permute.xlu0 %v637
    %639 = vperm.xlu0 %638, %v628
    %v640 = vpop.permute.xlu0 %639
    %v641 = vperm.slane %v508, 2
    %v642 = vlaneseq
    %v643 = vshrl.u32 %v642, 7
    %645 = vset.pattern.permute.xlu0 %v643
    %646 = vperm.xlu0 %645, %v641
    %v647 = vpop.permute.xlu0 %646
    %v648 = vlaneseq
    %v649 = vshrl.u32 %v648, 7
    %v650 = vadd.s32 %v649, 8
    %651 = vset.pattern.permute.xlu0 %v650
    %652 = vperm.xlu0 %651, %v641
    %v653 = vpop.permute.xlu0 %652
    %v654 = vperm.slane %v508, 3
    %v655 = vlaneseq
    %v656 = vshrl.u32 %v655, 7
    %658 = vset.pattern.permute.xlu0 %v656
    %659 = vperm.xlu0 %658, %v654
    %v660 = vpop.permute.xlu0 %659
    %v661 = vlaneseq
    %v662 = vshrl.u32 %v661, 7
    %v663 = vadd.s32 %v662, 8
    %664 = vset.pattern.permute.xlu0 %v663
    %665 = vperm.xlu0 %664, %v654
    %v666 = vpop.permute.xlu0 %665
    %v667 = vperm.slane %v508, 4
    %v668 = vlaneseq
    %v669 = vshrl.u32 %v668, 7
    %671 = vset.pattern.permute.xlu0 %v669
    %672 = vperm.xlu0 %671, %v667
    %v673 = vpop.permute.xlu0 %672
    %v674 = vlaneseq
    %v675 = vshrl.u32 %v674, 7
    %v676 = vadd.s32 %v675, 8
    %677 = vset.pattern.permute.xlu0 %v676
    %678 = vperm.xlu0 %677, %v667
    %v679 = vpop.permute.xlu0 %678
    %v680 = vperm.slane %v508, 5
    %v681 = vlaneseq
    %v682 = vshrl.u32 %v681, 7
    %684 = vset.pattern.permute.xlu0 %v682
    %685 = vperm.xlu0 %684, %v680
    %v686 = vpop.permute.xlu0 %685
    %v687 = vlaneseq
    %v688 = vshrl.u32 %v687, 7
    %v689 = vadd.s32 %v688, 8
    %690 = vset.pattern.permute.xlu0 %v689
    %691 = vperm.xlu0 %690, %v680
    %v692 = vpop.permute.xlu0 %691
    %v693 = vperm.slane %v508, 6
    %v694 = vlaneseq
    %v695 = vshrl.u32 %v694, 7
    %697 = vset.pattern.permute.xlu0 %v695
    %698 = vperm.xlu0 %697, %v693
    %v699 = vpop.permute.xlu0 %698
    %v700 = vlaneseq
    %v701 = vshrl.u32 %v700, 7
    %v702 = vadd.s32 %v701, 8
    %703 = vset.pattern.permute.xlu0 %v702
    %704 = vperm.xlu0 %703, %v693
    %v705 = vpop.permute.xlu0 %704
    %v706 = vperm.slane %v508, 7
    %v707 = vlaneseq
    %v708 = vshrl.u32 %v707, 7
    %710 = vset.pattern.permute.xlu0 %v708
    %711 = vperm.xlu0 %710, %v706
    %v712 = vpop.permute.xlu0 %711
    %v713 = vlaneseq
    %v714 = vshrl.u32 %v713, 7
    %v715 = vadd.s32 %v714, 8
    %716 = vset.pattern.permute.xlu0 %v715
    %717 = vperm.xlu0 %716, %v706
    %v718 = vpop.permute.xlu0 %717
    %v719 = vperm.slane %v509, 0
    %v720 = vlaneseq
    %v721 = vshrl.u32 %v720, 7
    %723 = vset.pattern.permute.xlu0 %v721
    %724 = vperm.xlu0 %723, %v719
    %v725 = vpop.permute.xlu0 %724
    %v726 = vlaneseq
    %v727 = vshrl.u32 %v726, 7
    %v728 = vadd.s32 %v727, 8
    %729 = vset.pattern.permute.xlu0 %v728
    %730 = vperm.xlu0 %729, %v719
    %v731 = vpop.permute.xlu0 %730
    %v732 = vperm.slane %v509, 1
    %v733 = vlaneseq
    %v734 = vshrl.u32 %v733, 7
    %736 = vset.pattern.permute.xlu0 %v734
    %737 = vperm.xlu0 %736, %v732
    %v738 = vpop.permute.xlu0 %737
    %v739 = vlaneseq
    %v740 = vshrl.u32 %v739, 7
    %v741 = vadd.s32 %v740, 8
    %742 = vset.pattern.permute.xlu0 %v741
    %743 = vperm.xlu0 %742, %v732
    %v744 = vpop.permute.xlu0 %743
    %v745 = vperm.slane %v509, 2
    %v746 = vlaneseq
    %v747 = vshrl.u32 %v746, 7
    %749 = vset.pattern.permute.xlu0 %v747
    %750 = vperm.xlu0 %749, %v745
    %v751 = vpop.permute.xlu0 %750
    %v752 = vlaneseq
    %v753 = vshrl.u32 %v752, 7
    %v754 = vadd.s32 %v753, 8
    %755 = vset.pattern.permute.xlu0 %v754
    %756 = vperm.xlu0 %755, %v745
    %v757 = vpop.permute.xlu0 %756
    %v758 = vperm.slane %v509, 3
    %v759 = vlaneseq
    %v760 = vshrl.u32 %v759, 7
    %762 = vset.pattern.permute.xlu0 %v760
    %763 = vperm.xlu0 %762, %v758
    %v764 = vpop.permute.xlu0 %763
    %v765 = vlaneseq
    %v766 = vshrl.u32 %v765, 7
    %v767 = vadd.s32 %v766, 8
    %768 = vset.pattern.permute.xlu0 %v767
    %769 = vperm.xlu0 %768, %v758
    %v770 = vpop.permute.xlu0 %769
    %v771 = vperm.slane %v509, 4
    %v772 = vlaneseq
    %v773 = vshrl.u32 %v772, 7
    %775 = vset.pattern.permute.xlu0 %v773
    %776 = vperm.xlu0 %775, %v771
    %v777 = vpop.permute.xlu0 %776
    %v778 = vlaneseq
    %v779 = vshrl.u32 %v778, 7
    %v780 = vadd.s32 %v779, 8
    %781 = vset.pattern.permute.xlu0 %v780
    %782 = vperm.xlu0 %781, %v771
    %v783 = vpop.permute.xlu0 %782
    %v784 = vperm.slane %v509, 5
    %v785 = vlaneseq
    %v786 = vshrl.u32 %v785, 7
    %788 = vset.pattern.permute.xlu0 %v786
    %789 = vperm.xlu0 %788, %v784
    %v790 = vpop.permute.xlu0 %789
    %v791 = vlaneseq
    %v792 = vshrl.u32 %v791, 7
    %v793 = vadd.s32 %v792, 8
    %794 = vset.pattern.permute.xlu0 %v793
    %795 = vperm.xlu0 %794, %v784
    %v796 = vpop.permute.xlu0 %795
    %v797 = vperm.slane %v509, 6
    %v798 = vlaneseq
    %v799 = vshrl.u32 %v798, 7
    %801 = vset.pattern.permute.xlu0 %v799
    %802 = vperm.xlu0 %801, %v797
    %v803 = vpop.permute.xlu0 %802
    %v804 = vlaneseq
    %v805 = vshrl.u32 %v804, 7
    %v806 = vadd.s32 %v805, 8
    %807 = vset.pattern.permute.xlu0 %v806
    %808 = vperm.xlu0 %807, %v797
    %v809 = vpop.permute.xlu0 %808
    %v810 = vperm.slane %v509, 7
    %v811 = vlaneseq
    %v812 = vshrl.u32 %v811, 7
    %814 = vset.pattern.permute.xlu0 %v812
    %815 = vperm.xlu0 %814, %v810
    %v816 = vpop.permute.xlu0 %815
    %v817 = vlaneseq
    %v818 = vshrl.u32 %v817, 7
    %v819 = vadd.s32 %v818, 8
    %820 = vset.pattern.permute.xlu0 %v819
    %821 = vperm.xlu0 %820, %v810
    %v822 = vpop.permute.xlu0 %821
    %v823 = vperm.slane %v510, 0
    %v824 = vlaneseq
    %v825 = vshrl.u32 %v824, 7
    %827 = vset.pattern.permute.xlu0 %v825
    %828 = vperm.xlu0 %827, %v823
    %v829 = vpop.permute.xlu0 %828
    %v830 = vlaneseq
    %v831 = vshrl.u32 %v830, 7
    %v832 = vadd.s32 %v831, 8
    %833 = vset.pattern.permute.xlu0 %v832
    %834 = vperm.xlu0 %833, %v823
    %v835 = vpop.permute.xlu0 %834
    %v836 = vperm.slane %v510, 1
    %v837 = vlaneseq
    %v838 = vshrl.u32 %v837, 7
    %840 = vset.pattern.permute.xlu0 %v838
    %841 = vperm.xlu0 %840, %v836
    %v842 = vpop.permute.xlu0 %841
    %v843 = vlaneseq
    %v844 = vshrl.u32 %v843, 7
    %v845 = vadd.s32 %v844, 8
    %846 = vset.pattern.permute.xlu0 %v845
    %847 = vperm.xlu0 %846, %v836
    %v848 = vpop.permute.xlu0 %847
    %v849 = vperm.slane %v510, 2
    %v850 = vlaneseq
    %v851 = vshrl.u32 %v850, 7
    %853 = vset.pattern.permute.xlu0 %v851
    %854 = vperm.xlu0 %853, %v849
    %v855 = vpop.permute.xlu0 %854
    %v856 = vlaneseq
    %v857 = vshrl.u32 %v856, 7
    %v858 = vadd.s32 %v857, 8
    %859 = vset.pattern.permute.xlu0 %v858
    %860 = vperm.xlu0 %859, %v849
    %v861 = vpop.permute.xlu0 %860
    %v862 = vperm.slane %v510, 3
    %v863 = vlaneseq
    %v864 = vshrl.u32 %v863, 7
    %866 = vset.pattern.permute.xlu0 %v864
    %867 = vperm.xlu0 %866, %v862
    %v868 = vpop.permute.xlu0 %867
    %v869 = vlaneseq
    %v870 = vshrl.u32 %v869, 7
    %v871 = vadd.s32 %v870, 8
    %872 = vset.pattern.permute.xlu0 %v871
    %873 = vperm.xlu0 %872, %v862
    %v874 = vpop.permute.xlu0 %873
    %v875 = vperm.slane %v510, 4
    %v876 = vlaneseq
    %v877 = vshrl.u32 %v876, 7
    %879 = vset.pattern.permute.xlu0 %v877
    %880 = vperm.xlu0 %879, %v875
    %v881 = vpop.permute.xlu0 %880
    %v882 = vlaneseq
    %v883 = vshrl.u32 %v882, 7
    %v884 = vadd.s32 %v883, 8
    %885 = vset.pattern.permute.xlu0 %v884
    %886 = vperm.xlu0 %885, %v875
    %v887 = vpop.permute.xlu0 %886
    %v888 = vperm.slane %v510, 5
    %v889 = vlaneseq
    %v890 = vshrl.u32 %v889, 7
    %892 = vset.pattern.permute.xlu0 %v890
    %893 = vperm.xlu0 %892, %v888
    %v894 = vpop.permute.xlu0 %893
    %v895 = vlaneseq
    %v896 = vshrl.u32 %v895, 7
    %v897 = vadd.s32 %v896, 8
    %898 = vset.pattern.permute.xlu0 %v897
    %899 = vperm.xlu0 %898, %v888
    %v900 = vpop.permute.xlu0 %899
    %v901 = vperm.slane %v510, 6
    %v902 = vlaneseq
    %v903 = vshrl.u32 %v902, 7
    %905 = vset.pattern.permute.xlu0 %v903
    %906 = vperm.xlu0 %905, %v901
    %v907 = vpop.permute.xlu0 %906
    %v908 = vlaneseq
    %v909 = vshrl.u32 %v908, 7
    %v910 = vadd.s32 %v909, 8
    %911 = vset.pattern.permute.xlu0 %v910
    %912 = vperm.xlu0 %911, %v901
    %v913 = vpop.permute.xlu0 %912
    %v914 = vperm.slane %v510, 7
    %v915 = vlaneseq
    %v916 = vshrl.u32 %v915, 7
    %918 = vset.pattern.permute.xlu0 %v916
    %919 = vperm.xlu0 %918, %v914
    %v920 = vpop.permute.xlu0 %919
    %v921 = vlaneseq
    %v922 = vshrl.u32 %v921, 7
    %v923 = vadd.s32 %v922, 8
    %924 = vset.pattern.permute.xlu0 %v923
    %925 = vperm.xlu0 %924, %v914
    %v926 = vpop.permute.xlu0 %925
    %v927 = vlaneseq
    %v928 = vand.u32 %v927, 127
    %vm929 = vcmp.eq.s32.totalorder %v517, %v928
    %vm930 = vcmp.eq.s32.totalorder %v523, %v928
    %vm931 = vcmp.eq.s32.totalorder %v530, %v928
    %vm932 = vcmp.eq.s32.totalorder %v536, %v928
    %vm933 = vcmp.eq.s32.totalorder %v543, %v928
    %vm934 = vcmp.eq.s32.totalorder %v549, %v928
    %vm935 = vcmp.eq.s32.totalorder %v556, %v928
    %vm936 = vcmp.eq.s32.totalorder %v562, %v928
    %vm937 = vcmp.eq.s32.totalorder %v569, %v928
    %vm938 = vcmp.eq.s32.totalorder %v575, %v928
    %vm939 = vcmp.eq.s32.totalorder %v582, %v928
    %vm940 = vcmp.eq.s32.totalorder %v588, %v928
    %vm941 = vcmp.eq.s32.totalorder %v595, %v928
    %vm942 = vcmp.eq.s32.totalorder %v601, %v928
    %vm943 = vcmp.eq.s32.totalorder %v608, %v928
    %vm944 = vcmp.eq.s32.totalorder %v614, %v928
    %vm945 = vcmp.eq.s32.totalorder %v621, %v928
    %vm946 = vcmp.eq.s32.totalorder %v627, %v928
    %vm947 = vcmp.eq.s32.totalorder %v634, %v928
    %vm948 = vcmp.eq.s32.totalorder %v640, %v928
    %vm949 = vcmp.eq.s32.totalorder %v647, %v928
    %vm950 = vcmp.eq.s32.totalorder %v653, %v928
    %vm951 = vcmp.eq.s32.totalorder %v660, %v928
    %vm952 = vcmp.eq.s32.totalorder %v666, %v928
    %vm953 = vcmp.eq.s32.totalorder %v673, %v928
    %vm954 = vcmp.eq.s32.totalorder %v679, %v928
    %vm955 = vcmp.eq.s32.totalorder %v686, %v928
    %vm956 = vcmp.eq.s32.totalorder %v692, %v928
    %vm957 = vcmp.eq.s32.totalorder %v699, %v928
    %vm958 = vcmp.eq.s32.totalorder %v705, %v928
    %vm959 = vcmp.eq.s32.totalorder %v712, %v928
    %vm960 = vcmp.eq.s32.totalorder %v718, %v928
    %vm961 = vcmp.eq.s32.totalorder %v725, %v928
    %vm962 = vcmp.eq.s32.totalorder %v731, %v928
    %vm963 = vcmp.eq.s32.totalorder %v738, %v928
    %vm964 = vcmp.eq.s32.totalorder %v744, %v928
    %vm965 = vcmp.eq.s32.totalorder %v751, %v928
    %vm966 = vcmp.eq.s32.totalorder %v757, %v928
    %vm967 = vcmp.eq.s32.totalorder %v764, %v928
    %vm968 = vcmp.eq.s32.totalorder %v770, %v928
    %vm969 = vcmp.eq.s32.totalorder %v777, %v928
    %vm970 = vcmp.eq.s32.totalorder %v783, %v928
    %vm971 = vcmp.eq.s32.totalorder %v790, %v928
    %vm972 = vcmp.eq.s32.totalorder %v796, %v928
    %vm973 = vcmp.eq.s32.totalorder %v803, %v928
    %vm974 = vcmp.eq.s32.totalorder %v809, %v928
    %vm975 = vcmp.eq.s32.totalorder %v816, %v928
    %vm976 = vcmp.eq.s32.totalorder %v822, %v928
    %vm977 = vcmp.eq.s32.totalorder %v829, %v928
    %vm978 = vcmp.eq.s32.totalorder %v835, %v928
    %vm979 = vcmp.eq.s32.totalorder %v842, %v928
    %vm980 = vcmp.eq.s32.totalorder %v848, %v928
    %vm981 = vcmp.eq.s32.totalorder %v855, %v928
    %vm982 = vcmp.eq.s32.totalorder %v861, %v928
    %vm983 = vcmp.eq.s32.totalorder %v868, %v928
    %vm984 = vcmp.eq.s32.totalorder %v874, %v928
    %vm985 = vcmp.eq.s32.totalorder %v881, %v928
    %vm986 = vcmp.eq.s32.totalorder %v887, %v928
    %vm987 = vcmp.eq.s32.totalorder %v894, %v928
    %vm988 = vcmp.eq.s32.totalorder %v900, %v928
    %vm989 = vcmp.eq.s32.totalorder %v907, %v928
    %vm990 = vcmp.eq.s32.totalorder %v913, %v928
    %vm991 = vcmp.eq.s32.totalorder %v920, %v928
    %vm992 = vcmp.eq.s32.totalorder %v926, %v928
    %v993 = vsel %vm929, 1, 0
    %v994 = vsel %vm930, 1, 0
    %v995 = vsel %vm931, 1, 0
    %v996 = vsel %vm932, 1, 0
    %v997 = vsel %vm933, 1, 0
    %v998 = vsel %vm934, 1, 0
    %v999 = vsel %vm935, 1, 0
    %v1000 = vsel %vm936, 1, 0
    %v1001 = vsel %vm937, 1, 0
    %v1002 = vsel %vm938, 1, 0
    %v1003 = vsel %vm939, 1, 0
    %v1004 = vsel %vm940, 1, 0
    %v1005 = vsel %vm941, 1, 0
    %v1006 = vsel %vm942, 1, 0
    %v1007 = vsel %vm943, 1, 0
    %v1008 = vsel %vm944, 1, 0
    %v1009 = vsel %vm945, 1, 0
    %v1010 = vsel %vm946, 1, 0
    %v1011 = vsel %vm947, 1, 0
    %v1012 = vsel %vm948, 1, 0
    %v1013 = vsel %vm949, 1, 0
    %v1014 = vsel %vm950, 1, 0
    %v1015 = vsel %vm951, 1, 0
    %v1016 = vsel %vm952, 1, 0
    %v1017 = vsel %vm953, 1, 0
    %v1018 = vsel %vm954, 1, 0
    %v1019 = vsel %vm955, 1, 0
    %v1020 = vsel %vm956, 1, 0
    %v1021 = vsel %vm957, 1, 0
    %v1022 = vsel %vm958, 1, 0
    %v1023 = vsel %vm959, 1, 0
    %v1024 = vsel %vm960, 1, 0
    %v1025 = vsel %vm961, 1, 0
    %v1026 = vsel %vm962, 1, 0
    %v1027 = vsel %vm963, 1, 0
    %v1028 = vsel %vm964, 1, 0
    %v1029 = vsel %vm965, 1, 0
    %v1030 = vsel %vm966, 1, 0
    %v1031 = vsel %vm967, 1, 0
    %v1032 = vsel %vm968, 1, 0
    %v1033 = vsel %vm969, 1, 0
    %v1034 = vsel %vm970, 1, 0
    %v1035 = vsel %vm971, 1, 0
    %v1036 = vsel %vm972, 1, 0
    %v1037 = vsel %vm973, 1, 0
    %v1038 = vsel %vm974, 1, 0
    %v1039 = vsel %vm975, 1, 0
    %v1040 = vsel %vm976, 1, 0
    %v1041 = vsel %vm977, 1, 0
    %v1042 = vsel %vm978, 1, 0
    %v1043 = vsel %vm979, 1, 0
    %v1044 = vsel %vm980, 1, 0
    %v1045 = vsel %vm981, 1, 0
    %v1046 = vsel %vm982, 1, 0
    %v1047 = vsel %vm983, 1, 0
    %v1048 = vsel %vm984, 1, 0
    %v1049 = vsel %vm985, 1, 0
    %v1050 = vsel %vm986, 1, 0
    %v1051 = vsel %vm987, 1, 0
    %v1052 = vsel %vm988, 1, 0
    %v1053 = vsel %vm989, 1, 0
    %v1054 = vsel %vm990, 1, 0
    %v1055 = vsel %vm991, 1, 0
    %v1056 = vsel %vm992, 1, 0
    %v1057 = vcvt.s32.f32 %v993
    %v1058 = vcvt.s32.f32 %v994
    %v1059 = vcvt.s32.f32 %v995
    %v1060 = vcvt.s32.f32 %v996
    %v1061 = vcvt.s32.f32 %v997
    %v1062 = vcvt.s32.f32 %v998
    %v1063 = vcvt.s32.f32 %v999
    %v1064 = vcvt.s32.f32 %v1000
    %v1065 = vcvt.s32.f32 %v1001
    %v1066 = vcvt.s32.f32 %v1002
    %v1067 = vcvt.s32.f32 %v1003
    %v1068 = vcvt.s32.f32 %v1004
    %v1069 = vcvt.s32.f32 %v1005
    %v1070 = vcvt.s32.f32 %v1006
    %v1071 = vcvt.s32.f32 %v1007
    %v1072 = vcvt.s32.f32 %v1008
    %v1073 = vcvt.s32.f32 %v1009
    %v1074 = vcvt.s32.f32 %v1010
    %v1075 = vcvt.s32.f32 %v1011
    %v1076 = vcvt.s32.f32 %v1012
    %v1077 = vcvt.s32.f32 %v1013
    %v1078 = vcvt.s32.f32 %v1014
    %v1079 = vcvt.s32.f32 %v1015
    %v1080 = vcvt.s32.f32 %v1016
    %v1081 = vcvt.s32.f32 %v1017
    %v1082 = vcvt.s32.f32 %v1018
    %v1083 = vcvt.s32.f32 %v1019
    %v1084 = vcvt.s32.f32 %v1020
    %v1085 = vcvt.s32.f32 %v1021
    %v1086 = vcvt.s32.f32 %v1022
    %v1087 = vcvt.s32.f32 %v1023
    %v1088 = vcvt.s32.f32 %v1024
    %v1089 = vcvt.s32.f32 %v1025
    %v1090 = vcvt.s32.f32 %v1026
    %v1091 = vcvt.s32.f32 %v1027
    %v1092 = vcvt.s32.f32 %v1028
    %v1093 = vcvt.s32.f32 %v1029
    %v1094 = vcvt.s32.f32 %v1030
    %v1095 = vcvt.s32.f32 %v1031
    %v1096 = vcvt.s32.f32 %v1032
    %v1097 = vcvt.s32.f32 %v1033
    %v1098 = vcvt.s32.f32 %v1034
    %v1099 = vcvt.s32.f32 %v1035
    %v1100 = vcvt.s32.f32 %v1036
    %v1101 = vcvt.s32.f32 %v1037
    %v1102 = vcvt.s32.f32 %v1038
    %v1103 = vcvt.s32.f32 %v1039
    %v1104 = vcvt.s32.f32 %v1040
    %v1105 = vcvt.s32.f32 %v1041
    %v1106 = vcvt.s32.f32 %v1042
    %v1107 = vcvt.s32.f32 %v1043
    %v1108 = vcvt.s32.f32 %v1044
    %v1109 = vcvt.s32.f32 %v1045
    %v1110 = vcvt.s32.f32 %v1046
    %v1111 = vcvt.s32.f32 %v1047
    %v1112 = vcvt.s32.f32 %v1048
    %v1113 = vcvt.s32.f32 %v1049
    %v1114 = vcvt.s32.f32 %v1050
    %v1115 = vcvt.s32.f32 %v1051
    %v1116 = vcvt.s32.f32 %v1052
    %v1117 = vcvt.s32.f32 %v1053
    %v1118 = vcvt.s32.f32 %v1054
    %v1119 = vcvt.s32.f32 %v1055
    %v1120 = vcvt.s32.f32 %v1056
    %v1121 = vld [vmem:[%s4] sm:$0x1f]
    %vm1122 = vcmask 39936
    %v1124 = vsel %vm1122, %v1057, 0
    %v1127 = vsel %vm1122, %v1058, 0
    %v1130 = vsel %vm1122, %v1059, 0
    %v1133 = vsel %vm1122, %v1060, 0
    %v1136 = vsel %vm1122, %v1061, 0
    %v1139 = vsel %vm1122, %v1062, 0
    %v1142 = vsel %vm1122, %v1063, 0
    %v1145 = vsel %vm1122, %v1064, 0
    %v1148 = vsel %vm1122, %v1065, 0
    %v1151 = vsel %vm1122, %v1066, 0
    %v1154 = vsel %vm1122, %v1067, 0
    %v1157 = vsel %vm1122, %v1068, 0
    %v1160 = vsel %vm1122, %v1069, 0
    %v1163 = vsel %vm1122, %v1070, 0
    %v1166 = vsel %vm1122, %v1071, 0
    %v1169 = vsel %vm1122, %v1072, 0
    %v1172 = vsel %vm1122, %v1073, 0
    %v1175 = vsel %vm1122, %v1074, 0
    %v1178 = vsel %vm1122, %v1075, 0
    %v1181 = vsel %vm1122, %v1076, 0
    %v1184 = vsel %vm1122, %v1077, 0
    %v1187 = vsel %vm1122, %v1078, 0
    %v1190 = vsel %vm1122, %v1079, 0
    %v1193 = vsel %vm1122, %v1080, 0
    %v1196 = vsel %vm1122, %v1081, 0
    %v1199 = vsel %vm1122, %v1082, 0
    %v1202 = vsel %vm1122, %v1083, 0
    %v1205 = vsel %vm1122, %v1084, 0
    %v1208 = vsel %vm1122, %v1085, 0
    %v1211 = vsel %vm1122, %v1086, 0
    %v1214 = vsel %vm1122, %v1087, 0
    %v1217 = vsel %vm1122, %v1088, 0
    %v1220 = vsel %vm1122, %v1089, 0
    %v1223 = vsel %vm1122, %v1090, 0
    %v1226 = vsel %vm1122, %v1091, 0
    %v1229 = vsel %vm1122, %v1092, 0
    %v1232 = vsel %vm1122, %v1093, 0
    %v1235 = vsel %vm1122, %v1094, 0
    %v1238 = vsel %vm1122, %v1095, 0
    %v1241 = vsel %vm1122, %v1096, 0
    %v1244 = vsel %vm1122, %v1097, 0
    %v1247 = vsel %vm1122, %v1098, 0
    %v1250 = vsel %vm1122, %v1099, 0
    %v1253 = vsel %vm1122, %v1100, 0
    %v1256 = vsel %vm1122, %v1101, 0
    %v1259 = vsel %vm1122, %v1102, 0
    %v1262 = vsel %vm1122, %v1103, 0
    %v1265 = vsel %vm1122, %v1104, 0
    %v1268 = vsel %vm1122, %v1105, 0
    %v1271 = vsel %vm1122, %v1106, 0
    %v1274 = vsel %vm1122, %v1107, 0
    %v1277 = vsel %vm1122, %v1108, 0
    %v1280 = vsel %vm1122, %v1109, 0
    %v1283 = vsel %vm1122, %v1110, 0
    %v1286 = vsel %vm1122, %v1111, 0
    %v1289 = vsel %vm1122, %v1112, 0
    %v1292 = vsel %vm1122, %v1113, 0
    %v1295 = vsel %vm1122, %v1114, 0
    %v1298 = vsel %vm1122, %v1115, 0
    %v1301 = vsel %vm1122, %v1116, 0
    %v1304 = vsel %vm1122, %v1117, 0
    %v1307 = vsel %vm1122, %v1118, 0
    %v1310 = vsel %vm1122, %v1119, 0
    %v1313 = vsel %vm1122, %v1120, 0
    %vm1315 = vcmask 1044480
    %v1317 = vsel %vm1315, %v1121, 0
    %1319 = vmatpush.msra.mxu0 0.0
    %1320 = vmatpush.msra.mxu0 0.0
    %1321 = vmatpush.msra.mxu0 0.0
    %1322 = vmatpush.msra.mxu0 0.0
    %1323 = vmatpush.msra.mxu0 0.0
    %1324 = vmatpush.msra.mxu0 0.0
    %1325 = vmatpush.msra.mxu0 0.0
    %1326 = vmatpush.msra.mxu0 0.0
    %1327 = vmatpush.msra.mxu0 0.0
    %1328 = vmatpush.msra.mxu0 0.0
    %1329 = vmatpush.msra.mxu0 0.0
    %1330 = vmatpush.msra.mxu0 0.0
    %1331 = vmatpush.msra.mxu0 0.0
    %1332 = vmatpush.msra.mxu0 0.0
    %1333 = vmatpush.msra.mxu0 0.0
    %1334 = vmatpush.msra.mxu0 %v1317
    %1335 = vmatmul.f32.gmra.mxu0 %v1124
    %v1336 = vpop.f32.mrf.mxu0
    %v1337 = vadd.f32 0.0, %v1336
    %1338 = vmatmul.f32.gmra.mxu0 %v1127
    %v1339 = vpop.f32.mrf.mxu0
    %v1340 = vadd.f32 0.0, %v1339
    %1341 = vmatmul.f32.gmra.mxu0 %v1130
    %v1342 = vpop.f32.mrf.mxu0
    %v1343 = vadd.f32 0.0, %v1342
    %1344 = vmatmul.f32.gmra.mxu0 %v1133
    %v1345 = vpop.f32.mrf.mxu0
    %v1346 = vadd.f32 0.0, %v1345
    %1347 = vmatmul.f32.gmra.mxu0 %v1136
    %v1348 = vpop.f32.mrf.mxu0
    %v1349 = vadd.f32 0.0, %v1348
    %1350 = vmatmul.f32.gmra.mxu0 %v1139
    %v1351 = vpop.f32.mrf.mxu0
    %v1352 = vadd.f32 0.0, %v1351
    %1353 = vmatmul.f32.gmra.mxu0 %v1142
    %v1354 = vpop.f32.mrf.mxu0
    %v1355 = vadd.f32 0.0, %v1354
    %1356 = vmatmul.f32.gmra.mxu0 %v1145
    %v1357 = vpop.f32.mrf.mxu0
    %v1358 = vadd.f32 0.0, %v1357
    %1359 = vmatmul.f32.gmra.mxu0 %v1148
    %v1360 = vpop.f32.mrf.mxu0
    %v1361 = vadd.f32 0.0, %v1360
    %1362 = vmatmul.f32.gmra.mxu0 %v1151
    %v1363 = vpop.f32.mrf.mxu0
    %v1364 = vadd.f32 0.0, %v1363
    %1365 = vmatmul.f32.gmra.mxu0 %v1154
    %v1366 = vpop.f32.mrf.mxu0
    %v1367 = vadd.f32 0.0, %v1366
    %1368 = vmatmul.f32.gmra.mxu0 %v1157
    %v1369 = vpop.f32.mrf.mxu0
    %v1370 = vadd.f32 0.0, %v1369
    %1371 = vmatmul.f32.gmra.mxu0 %v1160
    %v1372 = vpop.f32.mrf.mxu0
    %v1373 = vadd.f32 0.0, %v1372
    %1374 = vmatmul.f32.gmra.mxu0 %v1163
    %v1375 = vpop.f32.mrf.mxu0
    %v1376 = vadd.f32 0.0, %v1375
    %1377 = vmatmul.f32.gmra.mxu0 %v1166
    %v1378 = vpop.f32.mrf.mxu0
    %v1379 = vadd.f32 0.0, %v1378
    %1380 = vmatmul.f32.gmra.mxu0 %v1169
    %v1381 = vpop.f32.mrf.mxu0
    %v1382 = vadd.f32 0.0, %v1381
    %1383 = vmatmul.f32.gmra.mxu0 %v1172
    %v1384 = vpop.f32.mrf.mxu0
    %v1385 = vadd.f32 0.0, %v1384
    %1386 = vmatmul.f32.gmra.mxu0 %v1175
    %v1387 = vpop.f32.mrf.mxu0
    %v1388 = vadd.f32 0.0, %v1387
    %1389 = vmatmul.f32.gmra.mxu0 %v1178
    %v1390 = vpop.f32.mrf.mxu0
    %v1391 = vadd.f32 0.0, %v1390
    %1392 = vmatmul.f32.gmra.mxu0 %v1181
    %v1393 = vpop.f32.mrf.mxu0
    %v1394 = vadd.f32 0.0, %v1393
    %1395 = vmatmul.f32.gmra.mxu0 %v1184
    %v1396 = vpop.f32.mrf.mxu0
    %v1397 = vadd.f32 0.0, %v1396
    %1398 = vmatmul.f32.gmra.mxu0 %v1187
    %v1399 = vpop.f32.mrf.mxu0
    %v1400 = vadd.f32 0.0, %v1399
    %1401 = vmatmul.f32.gmra.mxu0 %v1190
    %v1402 = vpop.f32.mrf.mxu0
    %v1403 = vadd.f32 0.0, %v1402
    %1404 = vmatmul.f32.gmra.mxu0 %v1193
    %v1405 = vpop.f32.mrf.mxu0
    %v1406 = vadd.f32 0.0, %v1405
    %1407 = vmatmul.f32.gmra.mxu0 %v1196
    %v1408 = vpop.f32.mrf.mxu0
    %v1409 = vadd.f32 0.0, %v1408
    %1410 = vmatmul.f32.gmra.mxu0 %v1199
    %v1411 = vpop.f32.mrf.mxu0
    %v1412 = vadd.f32 0.0, %v1411
    %1413 = vmatmul.f32.gmra.mxu0 %v1202
    %v1414 = vpop.f32.mrf.mxu0
    %v1415 = vadd.f32 0.0, %v1414
    %1416 = vmatmul.f32.gmra.mxu0 %v1205
    %v1417 = vpop.f32.mrf.mxu0
    %v1418 = vadd.f32 0.0, %v1417
    %1419 = vmatmul.f32.gmra.mxu0 %v1208
    %v1420 = vpop.f32.mrf.mxu0
    %v1421 = vadd.f32 0.0, %v1420
    %1422 = vmatmul.f32.gmra.mxu0 %v1211
    %v1423 = vpop.f32.mrf.mxu0
    %v1424 = vadd.f32 0.0, %v1423
    %1425 = vmatmul.f32.gmra.mxu0 %v1214
    %v1426 = vpop.f32.mrf.mxu0
    %v1427 = vadd.f32 0.0, %v1426
    %1428 = vmatmul.f32.gmra.mxu0 %v1217
    %v1429 = vpop.f32.mrf.mxu0
    %v1430 = vadd.f32 0.0, %v1429
    %1431 = vmatmul.f32.gmra.mxu0 %v1220
    %v1432 = vpop.f32.mrf.mxu0
    %v1433 = vadd.f32 0.0, %v1432
    %1434 = vmatmul.f32.gmra.mxu0 %v1223
    %v1435 = vpop.f32.mrf.mxu0
    %v1436 = vadd.f32 0.0, %v1435
    %1437 = vmatmul.f32.gmra.mxu0 %v1226
    %v1438 = vpop.f32.mrf.mxu0
    %v1439 = vadd.f32 0.0, %v1438
    %1440 = vmatmul.f32.gmra.mxu0 %v1229
    %v1441 = vpop.f32.mrf.mxu0
    %v1442 = vadd.f32 0.0, %v1441
    %1443 = vmatmul.f32.gmra.mxu0 %v1232
    %v1444 = vpop.f32.mrf.mxu0
    %v1445 = vadd.f32 0.0, %v1444
    %1446 = vmatmul.f32.gmra.mxu0 %v1235
    %v1447 = vpop.f32.mrf.mxu0
    %v1448 = vadd.f32 0.0, %v1447
    %1449 = vmatmul.f32.gmra.mxu0 %v1238
    %v1450 = vpop.f32.mrf.mxu0
    %v1451 = vadd.f32 0.0, %v1450
    %1452 = vmatmul.f32.gmra.mxu0 %v1241
    %v1453 = vpop.f32.mrf.mxu0
    %v1454 = vadd.f32 0.0, %v1453
    %1455 = vmatmul.f32.gmra.mxu0 %v1244
    %v1456 = vpop.f32.mrf.mxu0
    %v1457 = vadd.f32 0.0, %v1456
    %1458 = vmatmul.f32.gmra.mxu0 %v1247
    %v1459 = vpop.f32.mrf.mxu0
    %v1460 = vadd.f32 0.0, %v1459
    %1461 = vmatmul.f32.gmra.mxu0 %v1250
    %v1462 = vpop.f32.mrf.mxu0
    %v1463 = vadd.f32 0.0, %v1462
    %1464 = vmatmul.f32.gmra.mxu0 %v1253
    %v1465 = vpop.f32.mrf.mxu0
    %v1466 = vadd.f32 0.0, %v1465
    %1467 = vmatmul.f32.gmra.mxu0 %v1256
    %v1468 = vpop.f32.mrf.mxu0
    %v1469 = vadd.f32 0.0, %v1468
    %1470 = vmatmul.f32.gmra.mxu0 %v1259
    %v1471 = vpop.f32.mrf.mxu0
    %v1472 = vadd.f32 0.0, %v1471
    %1473 = vmatmul.f32.gmra.mxu0 %v1262
    %v1474 = vpop.f32.mrf.mxu0
    %v1475 = vadd.f32 0.0, %v1474
    %1476 = vmatmul.f32.gmra.mxu0 %v1265
    %v1477 = vpop.f32.mrf.mxu0
    %v1478 = vadd.f32 0.0, %v1477
    %1479 = vmatmul.f32.gmra.mxu0 %v1268
    %v1480 = vpop.f32.mrf.mxu0
    %v1481 = vadd.f32 0.0, %v1480
    %1482 = vmatmul.f32.gmra.mxu0 %v1271
    %v1483 = vpop.f32.mrf.mxu0
    %v1484 = vadd.f32 0.0, %v1483
    %1485 = vmatmul.f32.gmra.mxu0 %v1274
    %v1486 = vpop.f32.mrf.mxu0
    %v1487 = vadd.f32 0.0, %v1486
    %1488 = vmatmul.f32.gmra.mxu0 %v1277
    %v1489 = vpop.f32.mrf.mxu0
    %v1490 = vadd.f32 0.0, %v1489
    %1491 = vmatmul.f32.gmra.mxu0 %v1280
    %v1492 = vpop.f32.mrf.mxu0
    %v1493 = vadd.f32 0.0, %v1492
    %1494 = vmatmul.f32.gmra.mxu0 %v1283
    %v1495 = vpop.f32.mrf.mxu0
    %v1496 = vadd.f32 0.0, %v1495
    %1497 = vmatmul.f32.gmra.mxu0 %v1286
    %v1498 = vpop.f32.mrf.mxu0
    %v1499 = vadd.f32 0.0, %v1498
    %1500 = vmatmul.f32.gmra.mxu0 %v1289
    %v1501 = vpop.f32.mrf.mxu0
    %v1502 = vadd.f32 0.0, %v1501
    %1503 = vmatmul.f32.gmra.mxu0 %v1292
    %v1504 = vpop.f32.mrf.mxu0
    %v1505 = vadd.f32 0.0, %v1504
    %1506 = vmatmul.f32.gmra.mxu0 %v1295
    %v1507 = vpop.f32.mrf.mxu0
    %v1508 = vadd.f32 0.0, %v1507
    %1509 = vmatmul.f32.gmra.mxu0 %v1298
    %v1510 = vpop.f32.mrf.mxu0
    %v1511 = vadd.f32 0.0, %v1510
    %1512 = vmatmul.f32.gmra.mxu0 %v1301
    %v1513 = vpop.f32.mrf.mxu0
    %v1514 = vadd.f32 0.0, %v1513
    %1515 = vmatmul.f32.gmra.mxu0 %v1304
    %v1516 = vpop.f32.mrf.mxu0
    %v1517 = vadd.f32 0.0, %v1516
    %1518 = vmatmul.f32.gmra.mxu0 %v1307
    %v1519 = vpop.f32.mrf.mxu0
    %v1520 = vadd.f32 0.0, %v1519
    %1521 = vmatmul.f32.gmra.mxu0 %v1310
    %v1522 = vpop.f32.mrf.mxu0
    %v1523 = vadd.f32 0.0, %v1522
    %1524 = vmatmul.f32.gmra.mxu0 %v1313
    %v1525 = vpop.f32.mrf.mxu0
    %v1526 = vadd.f32 0.0, %v1525
    %1527 = vdwg.mxu0
    %v1528 = vmul.f32 %v1337, %v97
    %v1529 = vmul.f32 %v1340, %v103
    %v1530 = vmul.f32 %v1343, %v110
    %v1531 = vmul.f32 %v1346, %v116
    %v1532 = vmul.f32 %v1349, %v123
    %v1533 = vmul.f32 %v1352, %v129
    %v1534 = vmul.f32 %v1355, %v136
    %v1535 = vmul.f32 %v1358, %v142
    %v1536 = vmul.f32 %v1361, %v149
    %v1537 = vmul.f32 %v1364, %v155
    %v1538 = vmul.f32 %v1367, %v162
    %v1539 = vmul.f32 %v1370, %v168
    %v1540 = vmul.f32 %v1373, %v175
    %v1541 = vmul.f32 %v1376, %v181
    %v1542 = vmul.f32 %v1379, %v188
    %v1543 = vmul.f32 %v1382, %v194
    %v1544 = vmul.f32 %v1385, %v201
    %v1545 = vmul.f32 %v1388, %v207
    %v1546 = vmul.f32 %v1391, %v214
    %v1547 = vmul.f32 %v1394, %v220
    %v1548 = vmul.f32 %v1397, %v227
    %v1549 = vmul.f32 %v1400, %v233
    %v1550 = vmul.f32 %v1403, %v240
    %v1551 = vmul.f32 %v1406, %v246
    %v1552 = vmul.f32 %v1409, %v253
    %v1553 = vmul.f32 %v1412, %v259
    %v1554 = vmul.f32 %v1415, %v266
    %v1555 = vmul.f32 %v1418, %v272
    %v1556 = vmul.f32 %v1421, %v279
    %v1557 = vmul.f32 %v1424, %v285
    %v1558 = vmul.f32 %v1427, %v292
    %v1559 = vmul.f32 %v1430, %v298
    %v1560 = vmul.f32 %v1433, %v305
    %v1561 = vmul.f32 %v1436, %v311
    %v1562 = vmul.f32 %v1439, %v318
    %v1563 = vmul.f32 %v1442, %v324
    %v1564 = vmul.f32 %v1445, %v331
    %v1565 = vmul.f32 %v1448, %v337
    %v1566 = vmul.f32 %v1451, %v344
    %v1567 = vmul.f32 %v1454, %v350
    %v1568 = vmul.f32 %v1457, %v357
    %v1569 = vmul.f32 %v1460, %v363
    %v1570 = vmul.f32 %v1463, %v370
    %v1571 = vmul.f32 %v1466, %v376
    %v1572 = vmul.f32 %v1469, %v383
    %v1573 = vmul.f32 %v1472, %v389
    %v1574 = vmul.f32 %v1475, %v396
    %v1575 = vmul.f32 %v1478, %v402
    %v1576 = vmul.f32 %v1481, %v409
    %v1577 = vmul.f32 %v1484, %v415
    %v1578 = vmul.f32 %v1487, %v422
    %v1579 = vmul.f32 %v1490, %v428
    %v1580 = vmul.f32 %v1493, %v435
    %v1581 = vmul.f32 %v1496, %v441
    %v1582 = vmul.f32 %v1499, %v448
    %v1583 = vmul.f32 %v1502, %v454
    %v1584 = vmul.f32 %v1505, %v461
    %v1585 = vmul.f32 %v1508, %v467
    %v1586 = vmul.f32 %v1511, %v474
    %v1587 = vmul.f32 %v1514, %v480
    %v1588 = vmul.f32 %v1517, %v487
    %v1589 = vmul.f32 %v1520, %v493
    %v1590 = vmul.f32 %v1523, %v500
    %v1591 = vmul.f32 %v1526, %v506
    %vm1592 = vcmask 261120
    %1593 = vst.msk [vmem:[#allocation2] sm:$0xff] %vm1592, %v1528
    %1594 = vst.msk [vmem:[#allocation2 + $0x8] sm:$0xff] %vm1592, %v1529
    %1595 = vst.msk [vmem:[#allocation2 + $0x10] sm:$0xff] %vm1592, %v1530
    %1596 = vst.msk [vmem:[#allocation2 + $0x18] sm:$0xff] %vm1592, %v1531
    %1597 = vst.msk [vmem:[#allocation2 + $0x20] sm:$0xff] %vm1592, %v1532
    %1598 = vst.msk [vmem:[#allocation2 + $0x28] sm:$0xff] %vm1592, %v1533
    %1599 = vst.msk [vmem:[#allocation2 + $0x30] sm:$0xff] %vm1592, %v1534
    %1600 = vst.msk [vmem:[#allocation2 + $0x38] sm:$0xff] %vm1592, %v1535
    %1601 = vst.msk [vmem:[#allocation2 + $0x40] sm:$0xff] %vm1592, %v1536
    %1602 = vst.msk [vmem:[#allocation2 + $0x48] sm:$0xff] %vm1592, %v1537
    %1603 = vst.msk [vmem:[#allocation2 + $0x50] sm:$0xff] %vm1592, %v1538
    %1604 = vst.msk [vmem:[#allocation2 + $0x58] sm:$0xff] %vm1592, %v1539
    %1605 = vst.msk [vmem:[#allocation2 + $0x60] sm:$0xff] %vm1592, %v1540
    %1606 = vst.msk [vmem:[#allocation2 + $0x68] sm:$0xff] %vm1592, %v1541
    %1607 = vst.msk [vmem:[#allocation2 + $0x70] sm:$0xff] %vm1592, %v1542
    %1608 = vst.msk [vmem:[#allocation2 + $0x78] sm:$0xff] %vm1592, %v1543
    %1609 = vst.msk [vmem:[#allocation2 + $0x80] sm:$0xff] %vm1592, %v1544
    %1610 = vst.msk [vmem:[#allocation2 + $0x88] sm:$0xff] %vm1592, %v1545
    %1611 = vst.msk [vmem:[#allocation2 + $0x90] sm:$0xff] %vm1592, %v1546
    %1612 = vst.msk [vmem:[#allocation2 + $0x98] sm:$0xff] %vm1592, %v1547
    %1613 = vst.msk [vmem:[#allocation2 + $0xa0] sm:$0xff] %vm1592, %v1548
    %1614 = vst.msk [vmem:[#allocation2 + $0xa8] sm:$0xff] %vm1592, %v1549
    %1615 = vst.msk [vmem:[#allocation2 + $0xb0] sm:$0xff] %vm1592, %v1550
    %1616 = vst.msk [vmem:[#allocation2 + $0xb8] sm:$0xff] %vm1592, %v1551
    %1617 = vst.msk [vmem:[#allocation2 + $0xc0] sm:$0xff] %vm1592, %v1552
    %1618 = vst.msk [vmem:[#allocation2 + $0xc8] sm:$0xff] %vm1592, %v1553
    %1619 = vst.msk [vmem:[#allocation2 + $0xd0] sm:$0xff] %vm1592, %v1554
    %1620 = vst.msk [vmem:[#allocation2 + $0xd8] sm:$0xff] %vm1592, %v1555
    %1621 = vst.msk [vmem:[#allocation2 + $0xe0] sm:$0xff] %vm1592, %v1556
    %1622 = vst.msk [vmem:[#allocation2 + $0xe8] sm:$0xff] %vm1592, %v1557
    %1623 = vst.msk [vmem:[#allocation2 + $0xf0] sm:$0xff] %vm1592, %v1558
    %1624 = vst.msk [vmem:[#allocation2 + $0xf8] sm:$0xff] %vm1592, %v1559
    %1625 = vst.msk [vmem:[#allocation2 + $0x100] sm:$0xff] %vm1592, %v1560
    %1626 = vst.msk [vmem:[#allocation2 + $0x108] sm:$0xff] %vm1592, %v1561
    %1627 = vst.msk [vmem:[#allocation2 + $0x110] sm:$0xff] %vm1592, %v1562
    %1628 = vst.msk [vmem:[#allocation2 + $0x118] sm:$0xff] %vm1592, %v1563
    %1629 = vst.msk [vmem:[#allocation2 + $0x120] sm:$0xff] %vm1592, %v1564
    %1630 = vst.msk [vmem:[#allocation2 + $0x128] sm:$0xff] %vm1592, %v1565
    %1631 = vst.msk [vmem:[#allocation2 + $0x130] sm:$0xff] %vm1592, %v1566
    %1632 = vst.msk [vmem:[#allocation2 + $0x138] sm:$0xff] %vm1592, %v1567
    %1633 = vst.msk [vmem:[#allocation2 + $0x140] sm:$0xff] %vm1592, %v1568
    %1634 = vst.msk [vmem:[#allocation2 + $0x148] sm:$0xff] %vm1592, %v1569
    %1635 = vst.msk [vmem:[#allocation2 + $0x150] sm:$0xff] %vm1592, %v1570
    %1636 = vst.msk [vmem:[#allocation2 + $0x158] sm:$0xff] %vm1592, %v1571
    %1637 = vst.msk [vmem:[#allocation2 + $0x160] sm:$0xff] %vm1592, %v1572
    %1638 = vst.msk [vmem:[#allocation2 + $0x168] sm:$0xff] %vm1592, %v1573
    %1639 = vst.msk [vmem:[#allocation2 + $0x170] sm:$0xff] %vm1592, %v1574
    %1640 = vst.msk [vmem:[#allocation2 + $0x178] sm:$0xff] %vm1592, %v1575
    %1641 = vst.msk [vmem:[#allocation2 + $0x180] sm:$0xff] %vm1592, %v1576
    %1642 = vst.msk [vmem:[#allocation2 + $0x188] sm:$0xff] %vm1592, %v1577
    %1643 = vst.msk [vmem:[#allocation2 + $0x190] sm:$0xff] %vm1592, %v1578
    %1644 = vst.msk [vmem:[#allocation2 + $0x198] sm:$0xff] %vm1592, %v1579
    %1645 = vst.msk [vmem:[#allocation2 + $0x1a0] sm:$0xff] %vm1592, %v1580
    %1646 = vst.msk [vmem:[#allocation2 + $0x1a8] sm:$0xff] %vm1592, %v1581
    %1647 = vst.msk [vmem:[#allocation2 + $0x1b0] sm:$0xff] %vm1592, %v1582
    %1648 = vst.msk [vmem:[#allocation2 + $0x1b8] sm:$0xff] %vm1592, %v1583
    %1649 = vst.msk [vmem:[#allocation2 + $0x1c0] sm:$0xff] %vm1592, %v1584
    %1650 = vst.msk [vmem:[#allocation2 + $0x1c8] sm:$0xff] %vm1592, %v1585
    %1651 = vst.msk [vmem:[#allocation2 + $0x1d0] sm:$0xff] %vm1592, %v1586
    %1652 = vst.msk [vmem:[#allocation2 + $0x1d8] sm:$0xff] %vm1592, %v1587
    %1653 = vst.msk [vmem:[#allocation2 + $0x1e0] sm:$0xff] %vm1592, %v1588
    %1654 = vst.msk [vmem:[#allocation2 + $0x1e8] sm:$0xff] %vm1592, %v1589
    %1655 = vst.msk [vmem:[#allocation2 + $0x1f0] sm:$0xff] %vm1592, %v1590
    %1656 = vst.msk [vmem:[#allocation2 + $0x1f8] sm:$0xff] %vm1592, %v1591
    %1721 = vrot.lane.b32.xlu0 %v1528, 96
    %v1722 = vpop.permute.xlu0 %1721
    %1723 = vrot.lane.b32.xlu0 %v1529, 96
    %v1724 = vpop.permute.xlu0 %1723
    %1725 = vrot.lane.b32.xlu0 %v1530, 96
    %v1726 = vpop.permute.xlu0 %1725
    %1727 = vrot.lane.b32.xlu0 %v1531, 96
    %v1728 = vpop.permute.xlu0 %1727
    %1729 = vrot.lane.b32.xlu0 %v1532, 96
    %v1730 = vpop.permute.xlu0 %1729
    %1731 = vrot.lane.b32.xlu0 %v1533, 96
    %v1732 = vpop.permute.xlu0 %1731
    %1733 = vrot.lane.b32.xlu0 %v1534, 96
    %v1734 = vpop.permute.xlu0 %1733
    %1735 = vrot.lane.b32.xlu0 %v1535, 96
    %v1736 = vpop.permute.xlu0 %1735
    %1737 = vrot.lane.b32.xlu0 %v1536, 96
    %v1738 = vpop.permute.xlu0 %1737
    %1739 = vrot.lane.b32.xlu0 %v1537, 96
    %v1740 = vpop.permute.xlu0 %1739
    %1741 = vrot.lane.b32.xlu0 %v1538, 96
    %v1742 = vpop.permute.xlu0 %1741
    %1743 = vrot.lane.b32.xlu0 %v1539, 96
    %v1744 = vpop.permute.xlu0 %1743
    %1745 = vrot.lane.b32.xlu0 %v1540, 96
    %v1746 = vpop.permute.xlu0 %1745
    %1747 = vrot.lane.b32.xlu0 %v1541, 96
    %v1748 = vpop.permute.xlu0 %1747
    %1749 = vrot.lane.b32.xlu0 %v1542, 96
    %v1750 = vpop.permute.xlu0 %1749
    %1751 = vrot.lane.b32.xlu0 %v1543, 96
    %v1752 = vpop.permute.xlu0 %1751
    %1753 = vrot.lane.b32.xlu0 %v1544, 96
    %v1754 = vpop.permute.xlu0 %1753
    %1755 = vrot.lane.b32.xlu0 %v1545, 96
    %v1756 = vpop.permute.xlu0 %1755
    %1757 = vrot.lane.b32.xlu0 %v1546, 96
    %v1758 = vpop.permute.xlu0 %1757
    %1759 = vrot.lane.b32.xlu0 %v1547, 96
    %v1760 = vpop.permute.xlu0 %1759
    %1761 = vrot.lane.b32.xlu0 %v1548, 96
    %v1762 = vpop.permute.xlu0 %1761
    %1763 = vrot.lane.b32.xlu0 %v1549, 96
    %v1764 = vpop.permute.xlu0 %1763
    %1765 = vrot.lane.b32.xlu0 %v1550, 96
    %v1766 = vpop.permute.xlu0 %1765
    %1767 = vrot.lane.b32.xlu0 %v1551, 96
    %v1768 = vpop.permute.xlu0 %1767
    %1769 = vrot.lane.b32.xlu0 %v1552, 96
    %v1770 = vpop.permute.xlu0 %1769
    %1771 = vrot.lane.b32.xlu0 %v1553, 96
    %v1772 = vpop.permute.xlu0 %1771
    %1773 = vrot.lane.b32.xlu0 %v1554, 96
    %v1774 = vpop.permute.xlu0 %1773
    %1775 = vrot.lane.b32.xlu0 %v1555, 96
    %v1776 = vpop.permute.xlu0 %1775
    %1777 = vrot.lane.b32.xlu0 %v1556, 96
    %v1778 = vpop.permute.xlu0 %1777
    %1779 = vrot.lane.b32.xlu0 %v1557, 96
    %v1780 = vpop.permute.xlu0 %1779
    %1781 = vrot.lane.b32.xlu0 %v1558, 96
    %v1782 = vpop.permute.xlu0 %1781
    %1783 = vrot.lane.b32.xlu0 %v1559, 96
    %v1784 = vpop.permute.xlu0 %1783
    %1785 = vrot.lane.b32.xlu0 %v1560, 96
    %v1786 = vpop.permute.xlu0 %1785
    %1787 = vrot.lane.b32.xlu0 %v1561, 96
    %v1788 = vpop.permute.xlu0 %1787
    %1789 = vrot.lane.b32.xlu0 %v1562, 96
    %v1790 = vpop.permute.xlu0 %1789
    %1791 = vrot.lane.b32.xlu0 %v1563, 96
    %v1792 = vpop.permute.xlu0 %1791
    %1793 = vrot.lane.b32.xlu0 %v1564, 96
    %v1794 = vpop.permute.xlu0 %1793
    %1795 = vrot.lane.b32.xlu0 %v1565, 96
    %v1796 = vpop.permute.xlu0 %1795
    %1797 = vrot.lane.b32.xlu0 %v1566, 96
    %v1798 = vpop.permute.xlu0 %1797
    %1799 = vrot.lane.b32.xlu0 %v1567, 96
    %v1800 = vpop.permute.xlu0 %1799
    %1801 = vrot.lane.b32.xlu0 %v1568, 96
    %v1802 = vpop.permute.xlu0 %1801
    %1803 = vrot.lane.b32.xlu0 %v1569, 96
    %v1804 = vpop.permute.xlu0 %1803
    %1805 = vrot.lane.b32.xlu0 %v1570, 96
    %v1806 = vpop.permute.xlu0 %1805
    %1807 = vrot.lane.b32.xlu0 %v1571, 96
    %v1808 = vpop.permute.xlu0 %1807
    %1809 = vrot.lane.b32.xlu0 %v1572, 96
    %v1810 = vpop.permute.xlu0 %1809
    %1811 = vrot.lane.b32.xlu0 %v1573, 96
    %v1812 = vpop.permute.xlu0 %1811
    %1813 = vrot.lane.b32.xlu0 %v1574, 96
    %v1814 = vpop.permute.xlu0 %1813
    %1815 = vrot.lane.b32.xlu0 %v1575, 96
    %v1816 = vpop.permute.xlu0 %1815
    %1817 = vrot.lane.b32.xlu0 %v1576, 96
    %v1818 = vpop.permute.xlu0 %1817
    %1819 = vrot.lane.b32.xlu0 %v1577, 96
    %v1820 = vpop.permute.xlu0 %1819
    %1821 = vrot.lane.b32.xlu0 %v1578, 96
    %v1822 = vpop.permute.xlu0 %1821
    %1823 = vrot.lane.b32.xlu0 %v1579, 96
    %v1824 = vpop.permute.xlu0 %1823
    %1825 = vrot.lane.b32.xlu0 %v1580, 96
    %v1826 = vpop.permute.xlu0 %1825
    %1827 = vrot.lane.b32.xlu0 %v1581, 96
    %v1828 = vpop.permute.xlu0 %1827
    %1829 = vrot.lane.b32.xlu0 %v1582, 96
    %v1830 = vpop.permute.xlu0 %1829
    %1831 = vrot.lane.b32.xlu0 %v1583, 96
    %v1832 = vpop.permute.xlu0 %1831
    %1833 = vrot.lane.b32.xlu0 %v1584, 96
    %v1834 = vpop.permute.xlu0 %1833
    %1835 = vrot.lane.b32.xlu0 %v1585, 96
    %v1836 = vpop.permute.xlu0 %1835
    %1837 = vrot.lane.b32.xlu0 %v1586, 96
    %v1838 = vpop.permute.xlu0 %1837
    %1839 = vrot.lane.b32.xlu0 %v1587, 96
    %v1840 = vpop.permute.xlu0 %1839
    %1841 = vrot.lane.b32.xlu0 %v1588, 96
    %v1842 = vpop.permute.xlu0 %1841
    %1843 = vrot.lane.b32.xlu0 %v1589, 96
    %v1844 = vpop.permute.xlu0 %1843
    %1845 = vrot.lane.b32.xlu0 %v1590, 96
    %v1846 = vpop.permute.xlu0 %1845
    %1847 = vrot.lane.b32.xlu0 %v1591, 96
    %v1848 = vpop.permute.xlu0 %1847
    %1913 = vst.msk [vmem:[#allocation3] sm:$0xff] %vm1592, %v1722
    %1914 = vst.msk [vmem:[#allocation3 + $0x8] sm:$0xff] %vm1592, %v1724
    %1915 = vst.msk [vmem:[#allocation3 + $0x10] sm:$0xff] %vm1592, %v1726
    %1916 = vst.msk [vmem:[#allocation3 + $0x18] sm:$0xff] %vm1592, %v1728
    %1917 = vst.msk [vmem:[#allocation3 + $0x20] sm:$0xff] %vm1592, %v1730
    %1918 = vst.msk [vmem:[#allocation3 + $0x28] sm:$0xff] %vm1592, %v1732
    %1919 = vst.msk [vmem:[#allocation3 + $0x30] sm:$0xff] %vm1592, %v1734
    %1920 = vst.msk [vmem:[#allocation3 + $0x38] sm:$0xff] %vm1592, %v1736
    %1921 = vst.msk [vmem:[#allocation3 + $0x40] sm:$0xff] %vm1592, %v1738
    %1922 = vst.msk [vmem:[#allocation3 + $0x48] sm:$0xff] %vm1592, %v1740
    %1923 = vst.msk [vmem:[#allocation3 + $0x50] sm:$0xff] %vm1592, %v1742
    %1924 = vst.msk [vmem:[#allocation3 + $0x58] sm:$0xff] %vm1592, %v1744
    %1925 = vst.msk [vmem:[#allocation3 + $0x60] sm:$0xff] %vm1592, %v1746
    %1926 = vst.msk [vmem:[#allocation3 + $0x68] sm:$0xff] %vm1592, %v1748
    %1927 = vst.msk [vmem:[#allocation3 + $0x70] sm:$0xff] %vm1592, %v1750
    %1928 = vst.msk [vmem:[#allocation3 + $0x78] sm:$0xff] %vm1592, %v1752
    %1929 = vst.msk [vmem:[#allocation3 + $0x80] sm:$0xff] %vm1592, %v1754
    %1930 = vst.msk [vmem:[#allocation3 + $0x88] sm:$0xff] %vm1592, %v1756
    %1931 = vst.msk [vmem:[#allocation3 + $0x90] sm:$0xff] %vm1592, %v1758
    %1932 = vst.msk [vmem:[#allocation3 + $0x98] sm:$0xff] %vm1592, %v1760
    %1933 = vst.msk [vmem:[#allocation3 + $0xa0] sm:$0xff] %vm1592, %v1762
    %1934 = vst.msk [vmem:[#allocation3 + $0xa8] sm:$0xff] %vm1592, %v1764
    %1935 = vst.msk [vmem:[#allocation3 + $0xb0] sm:$0xff] %vm1592, %v1766
    %1936 = vst.msk [vmem:[#allocation3 + $0xb8] sm:$0xff] %vm1592, %v1768
    %1937 = vst.msk [vmem:[#allocation3 + $0xc0] sm:$0xff] %vm1592, %v1770
    %1938 = vst.msk [vmem:[#allocation3 + $0xc8] sm:$0xff] %vm1592, %v1772
    %1939 = vst.msk [vmem:[#allocation3 + $0xd0] sm:$0xff] %vm1592, %v1774
    %1940 = vst.msk [vmem:[#allocation3 + $0xd8] sm:$0xff] %vm1592, %v1776
    %1941 = vst.msk [vmem:[#allocation3 + $0xe0] sm:$0xff] %vm1592, %v1778
    %1942 = vst.msk [vmem:[#allocation3 + $0xe8] sm:$0xff] %vm1592, %v1780
    %1943 = vst.msk [vmem:[#allocation3 + $0xf0] sm:$0xff] %vm1592, %v1782
    %1944 = vst.msk [vmem:[#allocation3 + $0xf8] sm:$0xff] %vm1592, %v1784
    %1945 = vst.msk [vmem:[#allocation3 + $0x100] sm:$0xff] %vm1592, %v1786
    %1946 = vst.msk [vmem:[#allocation3 + $0x108] sm:$0xff] %vm1592, %v1788
    %1947 = vst.msk [vmem:[#allocation3 + $0x110] sm:$0xff] %vm1592, %v1790
    %1948 = vst.msk [vmem:[#allocation3 + $0x118] sm:$0xff] %vm1592, %v1792
    %1949 = vst.msk [vmem:[#allocation3 + $0x120] sm:$0xff] %vm1592, %v1794
    %1950 = vst.msk [vmem:[#allocation3 + $0x128] sm:$0xff] %vm1592, %v1796
    %1951 = vst.msk [vmem:[#allocation3 + $0x130] sm:$0xff] %vm1592, %v1798
    %1952 = vst.msk [vmem:[#allocation3 + $0x138] sm:$0xff] %vm1592, %v1800
    %1953 = vst.msk [vmem:[#allocation3 + $0x140] sm:$0xff] %vm1592, %v1802
    %1954 = vst.msk [vmem:[#allocation3 + $0x148] sm:$0xff] %vm1592, %v1804
    %1955 = vst.msk [vmem:[#allocation3 + $0x150] sm:$0xff] %vm1592, %v1806
    %1956 = vst.msk [vmem:[#allocation3 + $0x158] sm:$0xff] %vm1592, %v1808
    %1957 = vst.msk [vmem:[#allocation3 + $0x160] sm:$0xff] %vm1592, %v1810
    %1958 = vst.msk [vmem:[#allocation3 + $0x168] sm:$0xff] %vm1592, %v1812
    %1959 = vst.msk [vmem:[#allocation3 + $0x170] sm:$0xff] %vm1592, %v1814
    %1960 = vst.msk [vmem:[#allocation3 + $0x178] sm:$0xff] %vm1592, %v1816
    %1961 = vst.msk [vmem:[#allocation3 + $0x180] sm:$0xff] %vm1592, %v1818
    %1962 = vst.msk [vmem:[#allocation3 + $0x188] sm:$0xff] %vm1592, %v1820
    %1963 = vst.msk [vmem:[#allocation3 + $0x190] sm:$0xff] %vm1592, %v1822
    %1964 = vst.msk [vmem:[#allocation3 + $0x198] sm:$0xff] %vm1592, %v1824
    %1965 = vst.msk [vmem:[#allocation3 + $0x1a0] sm:$0xff] %vm1592, %v1826
    %1966 = vst.msk [vmem:[#allocation3 + $0x1a8] sm:$0xff] %vm1592, %v1828
    %1967 = vst.msk [vmem:[#allocation3 + $0x1b0] sm:$0xff] %vm1592, %v1830
    %1968 = vst.msk [vmem:[#allocation3 + $0x1b8] sm:$0xff] %vm1592, %v1832
    %1969 = vst.msk [vmem:[#allocation3 + $0x1c0] sm:$0xff] %vm1592, %v1834
    %1970 = vst.msk [vmem:[#allocation3 + $0x1c8] sm:$0xff] %vm1592, %v1836
    %1971 = vst.msk [vmem:[#allocation3 + $0x1d0] sm:$0xff] %vm1592, %v1838
    %1972 = vst.msk [vmem:[#allocation3 + $0x1d8] sm:$0xff] %vm1592, %v1840
    %1973 = vst.msk [vmem:[#allocation3 + $0x1e0] sm:$0xff] %vm1592, %v1842
    %1974 = vst.msk [vmem:[#allocation3 + $0x1e8] sm:$0xff] %vm1592, %v1844
    %1975 = vst.msk [vmem:[#allocation3 + $0x1f0] sm:$0xff] %vm1592, %v1846
    %1976 = vst.msk [vmem:[#allocation3 + $0x1f8] sm:$0xff] %vm1592, %v1848
    %1977 = vrot.lane.b32.xlu0 %v1528, 64
    %v1978 = vpop.permute.xlu0 %1977
    %1979 = vrot.lane.b32.xlu0 %v1529, 64
    %v1980 = vpop.permute.xlu0 %1979
    %1981 = vrot.lane.b32.xlu0 %v1530, 64
    %v1982 = vpop.permute.xlu0 %1981
    %1983 = vrot.lane.b32.xlu0 %v1531, 64
    %v1984 = vpop.permute.xlu0 %1983
    %1985 = vrot.lane.b32.xlu0 %v1532, 64
    %v1986 = vpop.permute.xlu0 %1985
    %1987 = vrot.lane.b32.xlu0 %v1533, 64
    %v1988 = vpop.permute.xlu0 %1987
    %1989 = vrot.lane.b32.xlu0 %v1534, 64
    %v1990 = vpop.permute.xlu0 %1989
    %1991 = vrot.lane.b32.xlu0 %v1535, 64
    %v1992 = vpop.permute.xlu0 %1991
    %1993 = vrot.lane.b32.xlu0 %v1536, 64
    %v1994 = vpop.permute.xlu0 %1993
    %1995 = vrot.lane.b32.xlu0 %v1537, 64
    %v1996 = vpop.permute.xlu0 %1995
    %1997 = vrot.lane.b32.xlu0 %v1538, 64
    %v1998 = vpop.permute.xlu0 %1997
    %1999 = vrot.lane.b32.xlu0 %v1539, 64
    %v2000 = vpop.permute.xlu0 %1999
    %2001 = vrot.lane.b32.xlu0 %v1540, 64
    %v2002 = vpop.permute.xlu0 %2001
    %2003 = vrot.lane.b32.xlu0 %v1541, 64
    %v2004 = vpop.permute.xlu0 %2003
    %2005 = vrot.lane.b32.xlu0 %v1542, 64
    %v2006 = vpop.permute.xlu0 %2005
    %2007 = vrot.lane.b32.xlu0 %v1543, 64
    %v2008 = vpop.permute.xlu0 %2007
    %2009 = vrot.lane.b32.xlu0 %v1544, 64
    %v2010 = vpop.permute.xlu0 %2009
    %2011 = vrot.lane.b32.xlu0 %v1545, 64
    %v2012 = vpop.permute.xlu0 %2011
    %2013 = vrot.lane.b32.xlu0 %v1546, 64
    %v2014 = vpop.permute.xlu0 %2013
    %2015 = vrot.lane.b32.xlu0 %v1547, 64
    %v2016 = vpop.permute.xlu0 %2015
    %2017 = vrot.lane.b32.xlu0 %v1548, 64
    %v2018 = vpop.permute.xlu0 %2017
    %2019 = vrot.lane.b32.xlu0 %v1549, 64
    %v2020 = vpop.permute.xlu0 %2019
    %2021 = vrot.lane.b32.xlu0 %v1550, 64
    %v2022 = vpop.permute.xlu0 %2021
    %2023 = vrot.lane.b32.xlu0 %v1551, 64
    %v2024 = vpop.permute.xlu0 %2023
    %2025 = vrot.lane.b32.xlu0 %v1552, 64
    %v2026 = vpop.permute.xlu0 %2025
    %2027 = vrot.lane.b32.xlu0 %v1553, 64
    %v2028 = vpop.permute.xlu0 %2027
    %2029 = vrot.lane.b32.xlu0 %v1554, 64
    %v2030 = vpop.permute.xlu0 %2029
    %2031 = vrot.lane.b32.xlu0 %v1555, 64
    %v2032 = vpop.permute.xlu0 %2031
    %2033 = vrot.lane.b32.xlu0 %v1556, 64
    %v2034 = vpop.permute.xlu0 %2033
    %2035 = vrot.lane.b32.xlu0 %v1557, 64
    %v2036 = vpop.permute.xlu0 %2035
    %2037 = vrot.lane.b32.xlu0 %v1558, 64
    %v2038 = vpop.permute.xlu0 %2037
    %2039 = vrot.lane.b32.xlu0 %v1559, 64
    %v2040 = vpop.permute.xlu0 %2039
    %2041 = vrot.lane.b32.xlu0 %v1560, 64
    %v2042 = vpop.permute.xlu0 %2041
    %2043 = vrot.lane.b32.xlu0 %v1561, 64
    %v2044 = vpop.permute.xlu0 %2043
    %2045 = vrot.lane.b32.xlu0 %v1562, 64
    %v2046 = vpop.permute.xlu0 %2045
    %2047 = vrot.lane.b32.xlu0 %v1563, 64
    %v2048 = vpop.permute.xlu0 %2047
    %2049 = vrot.lane.b32.xlu0 %v1564, 64
    %v2050 = vpop.permute.xlu0 %2049
    %2051 = vrot.lane.b32.xlu0 %v1565, 64
    %v2052 = vpop.permute.xlu0 %2051
    %2053 = vrot.lane.b32.xlu0 %v1566, 64
    %v2054 = vpop.permute.xlu0 %2053
    %2055 = vrot.lane.b32.xlu0 %v1567, 64
    %v2056 = vpop.permute.xlu0 %2055
    %2057 = vrot.lane.b32.xlu0 %v1568, 64
    %v2058 = vpop.permute.xlu0 %2057
    %2059 = vrot.lane.b32.xlu0 %v1569, 64
    %v2060 = vpop.permute.xlu0 %2059
    %2061 = vrot.lane.b32.xlu0 %v1570, 64
    %v2062 = vpop.permute.xlu0 %2061
    %2063 = vrot.lane.b32.xlu0 %v1571, 64
    %v2064 = vpop.permute.xlu0 %2063
    %2065 = vrot.lane.b32.xlu0 %v1572, 64
    %v2066 = vpop.permute.xlu0 %2065
    %2067 = vrot.lane.b32.xlu0 %v1573, 64
    %v2068 = vpop.permute.xlu0 %2067
    %2069 = vrot.lane.b32.xlu0 %v1574, 64
    %v2070 = vpop.permute.xlu0 %2069
    %2071 = vrot.lane.b32.xlu0 %v1575, 64
    %v2072 = vpop.permute.xlu0 %2071
    %2073 = vrot.lane.b32.xlu0 %v1576, 64
    %v2074 = vpop.permute.xlu0 %2073
    %2075 = vrot.lane.b32.xlu0 %v1577, 64
    %v2076 = vpop.permute.xlu0 %2075
    %2077 = vrot.lane.b32.xlu0 %v1578, 64
    %v2078 = vpop.permute.xlu0 %2077
    %2079 = vrot.lane.b32.xlu0 %v1579, 64
    %v2080 = vpop.permute.xlu0 %2079
    %2081 = vrot.lane.b32.xlu0 %v1580, 64
    %v2082 = vpop.permute.xlu0 %2081
    %2083 = vrot.lane.b32.xlu0 %v1581, 64
    %v2084 = vpop.permute.xlu0 %2083
    %2085 = vrot.lane.b32.xlu0 %v1582, 64
    %v2086 = vpop.permute.xlu0 %2085
    %2087 = vrot.lane.b32.xlu0 %v1583, 64
    %v2088 = vpop.permute.xlu0 %2087
    %2089 = vrot.lane.b32.xlu0 %v1584, 64
    %v2090 = vpop.permute.xlu0 %2089
    %2091 = vrot.lane.b32.xlu0 %v1585, 64
    %v2092 = vpop.permute.xlu0 %2091
    %2093 = vrot.lane.b32.xlu0 %v1586, 64
    %v2094 = vpop.permute.xlu0 %2093
    %2095 = vrot.lane.b32.xlu0 %v1587, 64
    %v2096 = vpop.permute.xlu0 %2095
    %2097 = vrot.lane.b32.xlu0 %v1588, 64
    %v2098 = vpop.permute.xlu0 %2097
    %2099 = vrot.lane.b32.xlu0 %v1589, 64
    %v2100 = vpop.permute.xlu0 %2099
    %2101 = vrot.lane.b32.xlu0 %v1590, 64
    %v2102 = vpop.permute.xlu0 %2101
    %2103 = vrot.lane.b32.xlu0 %v1591, 64
    %v2104 = vpop.permute.xlu0 %2103
    %2169 = vst.msk [vmem:[#allocation4] sm:$0xff] %vm1592, %v1978
    %2170 = vst.msk [vmem:[#allocation4 + $0x8] sm:$0xff] %vm1592, %v1980
    %2171 = vst.msk [vmem:[#allocation4 + $0x10] sm:$0xff] %vm1592, %v1982
    %2172 = vst.msk [vmem:[#allocation4 + $0x18] sm:$0xff] %vm1592, %v1984
    %2173 = vst.msk [vmem:[#allocation4 + $0x20] sm:$0xff] %vm1592, %v1986
    %2174 = vst.msk [vmem:[#allocation4 + $0x28] sm:$0xff] %vm1592, %v1988
    %2175 = vst.msk [vmem:[#allocation4 + $0x30] sm:$0xff] %vm1592, %v1990
    %2176 = vst.msk [vmem:[#allocation4 + $0x38] sm:$0xff] %vm1592, %v1992
    %2177 = vst.msk [vmem:[#allocation4 + $0x40] sm:$0xff] %vm1592, %v1994
    %2178 = vst.msk [vmem:[#allocation4 + $0x48] sm:$0xff] %vm1592, %v1996
    %2179 = vst.msk [vmem:[#allocation4 + $0x50] sm:$0xff] %vm1592, %v1998
    %2180 = vst.msk [vmem:[#allocation4 + $0x58] sm:$0xff] %vm1592, %v2000
    %2181 = vst.msk [vmem:[#allocation4 + $0x60] sm:$0xff] %vm1592, %v2002
    %2182 = vst.msk [vmem:[#allocation4 + $0x68] sm:$0xff] %vm1592, %v2004
    %2183 = vst.msk [vmem:[#allocation4 + $0x70] sm:$0xff] %vm1592, %v2006
    %2184 = vst.msk [vmem:[#allocation4 + $0x78] sm:$0xff] %vm1592, %v2008
    %2185 = vst.msk [vmem:[#allocation4 + $0x80] sm:$0xff] %vm1592, %v2010
    %2186 = vst.msk [vmem:[#allocation4 + $0x88] sm:$0xff] %vm1592, %v2012
    %2187 = vst.msk [vmem:[#allocation4 + $0x90] sm:$0xff] %vm1592, %v2014
    %2188 = vst.msk [vmem:[#allocation4 + $0x98] sm:$0xff] %vm1592, %v2016
    %2189 = vst.msk [vmem:[#allocation4 + $0xa0] sm:$0xff] %vm1592, %v2018
    %2190 = vst.msk [vmem:[#allocation4 + $0xa8] sm:$0xff] %vm1592, %v2020
    %2191 = vst.msk [vmem:[#allocation4 + $0xb0] sm:$0xff] %vm1592, %v2022
    %2192 = vst.msk [vmem:[#allocation4 + $0xb8] sm:$0xff] %vm1592, %v2024
    %2193 = vst.msk [vmem:[#allocation4 + $0xc0] sm:$0xff] %vm1592, %v2026
    %2194 = vst.msk [vmem:[#allocation4 + $0xc8] sm:$0xff] %vm1592, %v2028
    %2195 = vst.msk [vmem:[#allocation4 + $0xd0] sm:$0xff] %vm1592, %v2030
    %2196 = vst.msk [vmem:[#allocation4 + $0xd8] sm:$0xff] %vm1592, %v2032
    %2197 = vst.msk [vmem:[#allocation4 + $0xe0] sm:$0xff] %vm1592, %v2034
    %2198 = vst.msk [vmem:[#allocation4 + $0xe8] sm:$0xff] %vm1592, %v2036
    %2199 = vst.msk [vmem:[#allocation4 + $0xf0] sm:$0xff] %vm1592, %v2038
    %2200 = vst.msk [vmem:[#allocation4 + $0xf8] sm:$0xff] %vm1592, %v2040
    %2201 = vst.msk [vmem:[#allocation4 + $0x100] sm:$0xff] %vm1592, %v2042
    %2202 = vst.msk [vmem:[#allocation4 + $0x108] sm:$0xff] %vm1592, %v2044
    %2203 = vst.msk [vmem:[#allocation4 + $0x110] sm:$0xff] %vm1592, %v2046
    %2204 = vst.msk [vmem:[#allocation4 + $0x118] sm:$0xff] %vm1592, %v2048
    %2205 = vst.msk [vmem:[#allocation4 + $0x120] sm:$0xff] %vm1592, %v2050
    %2206 = vst.msk [vmem:[#allocation4 + $0x128] sm:$0xff] %vm1592, %v2052
    %2207 = vst.msk [vmem:[#allocation4 + $0x130] sm:$0xff] %vm1592, %v2054
    %2208 = vst.msk [vmem:[#allocation4 + $0x138] sm:$0xff] %vm1592, %v2056
    %2209 = vst.msk [vmem:[#allocation4 + $0x140] sm:$0xff] %vm1592, %v2058
    %2210 = vst.msk [vmem:[#allocation4 + $0x148] sm:$0xff] %vm1592, %v2060
    %2211 = vst.msk [vmem:[#allocation4 + $0x150] sm:$0xff] %vm1592, %v2062
    %2212 = vst.msk [vmem:[#allocation4 + $0x158] sm:$0xff] %vm1592, %v2064
    %2213 = vst.msk [vmem:[#allocation4 + $0x160] sm:$0xff] %vm1592, %v2066
    %2214 = vst.msk [vmem:[#allocation4 + $0x168] sm:$0xff] %vm1592, %v2068
    %2215 = vst.msk [vmem:[#allocation4 + $0x170] sm:$0xff] %vm1592, %v2070
    %2216 = vst.msk [vmem:[#allocation4 + $0x178] sm:$0xff] %vm1592, %v2072
    %2217 = vst.msk [vmem:[#allocation4 + $0x180] sm:$0xff] %vm1592, %v2074
    %2218 = vst.msk [vmem:[#allocation4 + $0x188] sm:$0xff] %vm1592, %v2076
    %2219 = vst.msk [vmem:[#allocation4 + $0x190] sm:$0xff] %vm1592, %v2078
    %2220 = vst.msk [vmem:[#allocation4 + $0x198] sm:$0xff] %vm1592, %v2080
    %2221 = vst.msk [vmem:[#allocation4 + $0x1a0] sm:$0xff] %vm1592, %v2082
    %2222 = vst.msk [vmem:[#allocation4 + $0x1a8] sm:$0xff] %vm1592, %v2084
    %2223 = vst.msk [vmem:[#allocation4 + $0x1b0] sm:$0xff] %vm1592, %v2086
    %2224 = vst.msk [vmem:[#allocation4 + $0x1b8] sm:$0xff] %vm1592, %v2088
    %2225 = vst.msk [vmem:[#allocation4 + $0x1c0] sm:$0xff] %vm1592, %v2090
    %2226 = vst.msk [vmem:[#allocation4 + $0x1c8] sm:$0xff] %vm1592, %v2092
    %2227 = vst.msk [vmem:[#allocation4 + $0x1d0] sm:$0xff] %vm1592, %v2094
    %2228 = vst.msk [vmem:[#allocation4 + $0x1d8] sm:$0xff] %vm1592, %v2096
    %2229 = vst.msk [vmem:[#allocation4 + $0x1e0] sm:$0xff] %vm1592, %v2098
    %2230 = vst.msk [vmem:[#allocation4 + $0x1e8] sm:$0xff] %vm1592, %v2100
    %2231 = vst.msk [vmem:[#allocation4 + $0x1f0] sm:$0xff] %vm1592, %v2102
    %2232 = vst.msk [vmem:[#allocation4 + $0x1f8] sm:$0xff] %vm1592, %v2104
    %v2233 = vld [vmem:[#allocation9] sm:$0xff]
    %v2234 = vld [vmem:[#allocation9 + $0x8] sm:$0xff]
    %v2235 = vld [vmem:[#allocation9 + $0x10] sm:$0xff]
    %v2236 = vld [vmem:[#allocation9 + $0x18] sm:$0xff]
    %vm2237 = vcmp.gt.f32.partialorder %v97, 0.0
    %vm2238 = vcmp.gt.f32.partialorder %v103, 0.0
    %vm2239 = vcmp.gt.f32.partialorder %v110, 0.0
    %vm2240 = vcmp.gt.f32.partialorder %v116, 0.0
    %vm2241 = vcmp.gt.f32.partialorder %v123, 0.0
    %vm2242 = vcmp.gt.f32.partialorder %v129, 0.0
    %vm2243 = vcmp.gt.f32.partialorder %v136, 0.0
    %vm2244 = vcmp.gt.f32.partialorder %v142, 0.0
    %vm2245 = vcmp.gt.f32.partialorder %v149, 0.0
    %vm2246 = vcmp.gt.f32.partialorder %v155, 0.0
    %vm2247 = vcmp.gt.f32.partialorder %v162, 0.0
    %vm2248 = vcmp.gt.f32.partialorder %v168, 0.0
    %vm2249 = vcmp.gt.f32.partialorder %v175, 0.0
    %vm2250 = vcmp.gt.f32.partialorder %v181, 0.0
    %vm2251 = vcmp.gt.f32.partialorder %v188, 0.0
    %vm2252 = vcmp.gt.f32.partialorder %v194, 0.0
    %vm2253 = vcmp.gt.f32.partialorder %v201, 0.0
    %vm2254 = vcmp.gt.f32.partialorder %v207, 0.0
    %vm2255 = vcmp.gt.f32.partialorder %v214, 0.0
    %vm2256 = vcmp.gt.f32.partialorder %v220, 0.0
    %vm2257 = vcmp.gt.f32.partialorder %v227, 0.0
    %vm2258 = vcmp.gt.f32.partialorder %v233, 0.0
    %vm2259 = vcmp.gt.f32.partialorder %v240, 0.0
    %vm2260 = vcmp.gt.f32.partialorder %v246, 0.0
    %vm2261 = vcmp.gt.f32.partialorder %v253, 0.0
    %vm2262 = vcmp.gt.f32.partialorder %v259, 0.0
    %vm2263 = vcmp.gt.f32.partialorder %v266, 0.0
    %vm2264 = vcmp.gt.f32.partialorder %v272, 0.0
    %vm2265 = vcmp.gt.f32.partialorder %v279, 0.0
    %vm2266 = vcmp.gt.f32.partialorder %v285, 0.0
    %vm2267 = vcmp.gt.f32.partialorder %v292, 0.0
    %vm2268 = vcmp.gt.f32.partialorder %v298, 0.0
    %vm2269 = vcmp.gt.f32.partialorder %v305, 0.0
    %vm2270 = vcmp.gt.f32.partialorder %v311, 0.0
    %vm2271 = vcmp.gt.f32.partialorder %v318, 0.0
    %vm2272 = vcmp.gt.f32.partialorder %v324, 0.0
    %vm2273 = vcmp.gt.f32.partialorder %v331, 0.0
    %vm2274 = vcmp.gt.f32.partialorder %v337, 0.0
    %vm2275 = vcmp.gt.f32.partialorder %v344, 0.0
    %vm2276 = vcmp.gt.f32.partialorder %v350, 0.0
    %vm2277 = vcmp.gt.f32.partialorder %v357, 0.0
    %vm2278 = vcmp.gt.f32.partialorder %v363, 0.0
    %vm2279 = vcmp.gt.f32.partialorder %v370, 0.0
    %vm2280 = vcmp.gt.f32.partialorder %v376, 0.0
    %vm2281 = vcmp.gt.f32.partialorder %v383, 0.0
    %vm2282 = vcmp.gt.f32.partialorder %v389, 0.0
    %vm2283 = vcmp.gt.f32.partialorder %v396, 0.0
    %vm2284 = vcmp.gt.f32.partialorder %v402, 0.0
    %vm2285 = vcmp.gt.f32.partialorder %v409, 0.0
    %vm2286 = vcmp.gt.f32.partialorder %v415, 0.0
    %vm2287 = vcmp.gt.f32.partialorder %v422, 0.0
    %vm2288 = vcmp.gt.f32.partialorder %v428, 0.0
    %vm2289 = vcmp.gt.f32.partialorder %v435, 0.0
    %vm2290 = vcmp.gt.f32.partialorder %v441, 0.0
    %vm2291 = vcmp.gt.f32.partialorder %v448, 0.0
    %vm2292 = vcmp.gt.f32.partialorder %v454, 0.0
    %vm2293 = vcmp.gt.f32.partialorder %v461, 0.0
    %vm2294 = vcmp.gt.f32.partialorder %v467, 0.0
    %vm2295 = vcmp.gt.f32.partialorder %v474, 0.0
    %vm2296 = vcmp.gt.f32.partialorder %v480, 0.0
    %vm2297 = vcmp.gt.f32.partialorder %v487, 0.0
    %vm2298 = vcmp.gt.f32.partialorder %v493, 0.0
    %vm2299 = vcmp.gt.f32.partialorder %v500, 0.0
    %vm2300 = vcmp.gt.f32.partialorder %v506, 0.0
    %v2301 = vsel %vm2237, 0.0, -1e+09
    %v2302 = vsel %vm2238, 0.0, -1e+09
    %v2303 = vsel %vm2239, 0.0, -1e+09
    %v2304 = vsel %vm2240, 0.0, -1e+09
    %v2305 = vsel %vm2241, 0.0, -1e+09
    %v2306 = vsel %vm2242, 0.0, -1e+09
    %v2307 = vsel %vm2243, 0.0, -1e+09
    %v2308 = vsel %vm2244, 0.0, -1e+09
    %v2309 = vsel %vm2245, 0.0, -1e+09
    %v2310 = vsel %vm2246, 0.0, -1e+09
    %v2311 = vsel %vm2247, 0.0, -1e+09
    %v2312 = vsel %vm2248, 0.0, -1e+09
    %v2313 = vsel %vm2249, 0.0, -1e+09
    %v2314 = vsel %vm2250, 0.0, -1e+09
    %v2315 = vsel %vm2251, 0.0, -1e+09
    %v2316 = vsel %vm2252, 0.0, -1e+09
    %v2317 = vsel %vm2253, 0.0, -1e+09
    %v2318 = vsel %vm2254, 0.0, -1e+09
    %v2319 = vsel %vm2255, 0.0, -1e+09
    %v2320 = vsel %vm2256, 0.0, -1e+09
    %v2321 = vsel %vm2257, 0.0, -1e+09
    %v2322 = vsel %vm2258, 0.0, -1e+09
    %v2323 = vsel %vm2259, 0.0, -1e+09
    %v2324 = vsel %vm2260, 0.0, -1e+09
    %v2325 = vsel %vm2261, 0.0, -1e+09
    %v2326 = vsel %vm2262, 0.0, -1e+09
    %v2327 = vsel %vm2263, 0.0, -1e+09
    %v2328 = vsel %vm2264, 0.0, -1e+09
    %v2329 = vsel %vm2265, 0.0, -1e+09
    %v2330 = vsel %vm2266, 0.0, -1e+09
    %v2331 = vsel %vm2267, 0.0, -1e+09
    %v2332 = vsel %vm2268, 0.0, -1e+09
    %v2333 = vsel %vm2269, 0.0, -1e+09
    %v2334 = vsel %vm2270, 0.0, -1e+09
    %v2335 = vsel %vm2271, 0.0, -1e+09
    %v2336 = vsel %vm2272, 0.0, -1e+09
    %v2337 = vsel %vm2273, 0.0, -1e+09
    %v2338 = vsel %vm2274, 0.0, -1e+09
    %v2339 = vsel %vm2275, 0.0, -1e+09
    %v2340 = vsel %vm2276, 0.0, -1e+09
    %v2341 = vsel %vm2277, 0.0, -1e+09
    %v2342 = vsel %vm2278, 0.0, -1e+09
    %v2343 = vsel %vm2279, 0.0, -1e+09
    %v2344 = vsel %vm2280, 0.0, -1e+09
    %v2345 = vsel %vm2281, 0.0, -1e+09
    %v2346 = vsel %vm2282, 0.0, -1e+09
    %v2347 = vsel %vm2283, 0.0, -1e+09
    %v2348 = vsel %vm2284, 0.0, -1e+09
    %v2349 = vsel %vm2285, 0.0, -1e+09
    %v2350 = vsel %vm2286, 0.0, -1e+09
    %v2351 = vsel %vm2287, 0.0, -1e+09
    %v2352 = vsel %vm2288, 0.0, -1e+09
    %v2353 = vsel %vm2289, 0.0, -1e+09
    %v2354 = vsel %vm2290, 0.0, -1e+09
    %v2355 = vsel %vm2291, 0.0, -1e+09
    %v2356 = vsel %vm2292, 0.0, -1e+09
    %v2357 = vsel %vm2293, 0.0, -1e+09
    %v2358 = vsel %vm2294, 0.0, -1e+09
    %v2359 = vsel %vm2295, 0.0, -1e+09
    %v2360 = vsel %vm2296, 0.0, -1e+09
    %v2361 = vsel %vm2297, 0.0, -1e+09
    %v2362 = vsel %vm2298, 0.0, -1e+09
    %v2363 = vsel %vm2299, 0.0, -1e+09
    %v2364 = vsel %vm2300, 0.0, -1e+09
    %2366 = vset.pattern.permute.xlu0 0
    %2367 = vperm.xlu0 %2366, %v83
    %v2368 = vpop.permute.xlu0 %2367
    %2371 = vset.pattern.permute.xlu0 0
    %2372 = vperm.xlu0 %2371, %v84
    %v2373 = vpop.permute.xlu0 %2372
    %2376 = vset.pattern.permute.xlu0 0
    %2377 = vperm.xlu0 %2376, %v85
    %v2378 = vpop.permute.xlu0 %2377
    %2381 = vset.pattern.permute.xlu0 0
    %2382 = vperm.xlu0 %2381, %v86
    %v2383 = vpop.permute.xlu0 %2382
    %v2385 = vld [vmem:[#allocation7] sm:$0xff]
    %v2386 = vld [vmem:[#allocation7 + $0x8] sm:$0xff]
    %v2387 = vld [vmem:[#allocation7 + $0x10] sm:$0xff]
    %v2388 = vld [vmem:[#allocation7 + $0x18] sm:$0xff]
    %v2389 = vld [vmem:[%s6] sm:$0x7]
    %v2390 = vperm.slane %v2389, 0
    %v2391 = vperm.slane %v2389, 1
    %v2392 = vperm.slane %v2389, 2
    %v2394 = vsel %vm1592, %v79, 0
    %v2397 = vsel %vm1592, %v80, 0
    %v2400 = vsel %vm1592, %v81, 0
    %v2403 = vsel %vm1592, %v82, 0
    %2405 = vmatpush.msra.mxu0 0.0
    %2406 = vmatpush.msra.mxu0 0.0
    %2407 = vmatpush.msra.mxu0 0.0
    %2408 = vmatpush.msra.mxu0 0.0
    %2409 = vmatpush.msra.mxu0 0.0
    %2410 = vmatpush.msra.mxu0 0.0
    %2411 = vmatpush.msra.mxu0 0.0
    %2412 = vmatpush.msra.mxu0 0.0
    %2413 = vmatpush.msra.mxu0 0.0
    %2414 = vmatpush.msra.mxu0 0.0
    %2415 = vmatpush.msra.mxu0 0.0
    %2416 = vmatpush.msra.mxu0 0.0
    %2417 = vmatpush.msra.mxu0 %v2388
    %2418 = vmatpush.msra.mxu0 %v2387
    %2419 = vmatpush.msra.mxu0 %v2386
    %2420 = vmatpush.msra.mxu0 %v2385
    %2421 = vmatmul.f32.gmra.mxu0 %v2394
    %v2422 = vpop.f32.mrf.mxu0
    %v2423 = vadd.f32 0.0, %v2422
    %2424 = vmatmul.f32.gmra.mxu0 %v2397
    %v2425 = vpop.f32.mrf.mxu0
    %v2426 = vadd.f32 0.0, %v2425
    %2427 = vmatmul.f32.gmra.mxu0 %v2400
    %v2428 = vpop.f32.mrf.mxu0
    %v2429 = vadd.f32 0.0, %v2428
    %2430 = vmatmul.f32.gmra.mxu0 %v2403
    %v2431 = vpop.f32.mrf.mxu0
    %v2432 = vadd.f32 0.0, %v2431
    %2433 = vdwg.mxu0
    %v2434 = vld [vmem:[#allocation3] sm:$0xff]
    %v2435 = vld [vmem:[#allocation3 + $0x8] sm:$0xff]
    %v2436 = vld [vmem:[#allocation3 + $0x10] sm:$0xff]
    %v2437 = vld [vmem:[#allocation3 + $0x18] sm:$0xff]
    %v2438 = vld [vmem:[#allocation3 + $0x20] sm:$0xff]
    %v2439 = vld [vmem:[#allocation3 + $0x28] sm:$0xff]
    %v2440 = vld [vmem:[#allocation3 + $0x30] sm:$0xff]
    %v2441 = vld [vmem:[#allocation3 + $0x38] sm:$0xff]
    %v2442 = vld [vmem:[#allocation3 + $0x40] sm:$0xff]
    %v2443 = vld [vmem:[#allocation3 + $0x48] sm:$0xff]
    %v2444 = vld [vmem:[#allocation3 + $0x50] sm:$0xff]
    %v2445 = vld [vmem:[#allocation3 + $0x58] sm:$0xff]
    %v2446 = vld [vmem:[#allocation3 + $0x60] sm:$0xff]
    %v2447 = vld [vmem:[#allocation3 + $0x68] sm:$0xff]
    %v2448 = vld [vmem:[#allocation3 + $0x70] sm:$0xff]
    %v2449 = vld [vmem:[#allocation3 + $0x78] sm:$0xff]
    %v2450 = vld [vmem:[#allocation3 + $0x80] sm:$0xff]
    %v2451 = vld [vmem:[#allocation3 + $0x88] sm:$0xff]
    %v2452 = vld [vmem:[#allocation3 + $0x90] sm:$0xff]
    %v2453 = vld [vmem:[#allocation3 + $0x98] sm:$0xff]
    %v2454 = vld [vmem:[#allocation3 + $0xa0] sm:$0xff]
    %v2455 = vld [vmem:[#allocation3 + $0xa8] sm:$0xff]
    %v2456 = vld [vmem:[#allocation3 + $0xb0] sm:$0xff]
    %v2457 = vld [vmem:[#allocation3 + $0xb8] sm:$0xff]
    %v2458 = vld [vmem:[#allocation3 + $0xc0] sm:$0xff]
    %v2459 = vld [vmem:[#allocation3 + $0xc8] sm:$0xff]
    %v2460 = vld [vmem:[#allocation3 + $0xd0] sm:$0xff]
    %v2461 = vld [vmem:[#allocation3 + $0xd8] sm:$0xff]
    %v2462 = vld [vmem:[#allocation3 + $0xe0] sm:$0xff]
    %v2463 = vld [vmem:[#allocation3 + $0xe8] sm:$0xff]
    %v2464 = vld [vmem:[#allocation3 + $0xf0] sm:$0xff]
    %v2465 = vld [vmem:[#allocation3 + $0xf8] sm:$0xff]
    %v2466 = vld [vmem:[#allocation3 + $0x100] sm:$0xff]
    %v2467 = vld [vmem:[#allocation3 + $0x108] sm:$0xff]
    %v2468 = vld [vmem:[#allocation3 + $0x110] sm:$0xff]
    %v2469 = vld [vmem:[#allocation3 + $0x118] sm:$0xff]
    %v2470 = vld [vmem:[#allocation3 + $0x120] sm:$0xff]
    %v2471 = vld [vmem:[#allocation3 + $0x128] sm:$0xff]
    %v2472 = vld [vmem:[#allocation3 + $0x130] sm:$0xff]
    %v2473 = vld [vmem:[#allocation3 + $0x138] sm:$0xff]
    %v2474 = vld [vmem:[#allocation3 + $0x140] sm:$0xff]
    %v2475 = vld [vmem:[#allocation3 + $0x148] sm:$0xff]
    %v2476 = vld [vmem:[#allocation3 + $0x150] sm:$0xff]
    %v2477 = vld [vmem:[#allocation3 + $0x158] sm:$0xff]
    %v2478 = vld [vmem:[#allocation3 + $0x160] sm:$0xff]
    %v2479 = vld [vmem:[#allocation3 + $0x168] sm:$0xff]
    %v2480 = vld [vmem:[#allocation3 + $0x170] sm:$0xff]
    %v2481 = vld [vmem:[#allocation3 + $0x178] sm:$0xff]
    %v2482 = vld [vmem:[#allocation3 + $0x180] sm:$0xff]
    %v2483 = vld [vmem:[#allocation3 + $0x188] sm:$0xff]
    %v2484 = vld [vmem:[#allocation3 + $0x190] sm:$0xff]
    %v2485 = vld [vmem:[#allocation3 + $0x198] sm:$0xff]
    %v2486 = vld [vmem:[#allocation3 + $0x1a0] sm:$0xff]
    %v2487 = vld [vmem:[#allocation3 + $0x1a8] sm:$0xff]
    %v2488 = vld [vmem:[#allocation3 + $0x1b0] sm:$0xff]
    %v2489 = vld [vmem:[#allocation3 + $0x1b8] sm:$0xff]
    %v2490 = vld [vmem:[#allocation3 + $0x1c0] sm:$0xff]
    %v2491 = vld [vmem:[#allocation3 + $0x1c8] sm:$0xff]
    %v2492 = vld [vmem:[#allocation3 + $0x1d0] sm:$0xff]
    %v2493 = vld [vmem:[#allocation3 + $0x1d8] sm:$0xff]
    %v2494 = vld [vmem:[#allocation3 + $0x1e0] sm:$0xff]
    %v2495 = vld [vmem:[#allocation3 + $0x1e8] sm:$0xff]
    %v2496 = vld [vmem:[#allocation3 + $0x1f0] sm:$0xff]
    %v2497 = vld [vmem:[#allocation3 + $0x1f8] sm:$0xff]
    %2562 = vrot.lane.b32.xlu0 %v2434, 32
    %v2563 = vpop.permute.xlu0 %2562
    %2564 = vrot.lane.b32.xlu0 %v2435, 32
    %v2565 = vpop.permute.xlu0 %2564
    %2566 = vrot.lane.b32.xlu0 %v2436, 32
    %v2567 = vpop.permute.xlu0 %2566
    %2568 = vrot.lane.b32.xlu0 %v2437, 32
    %v2569 = vpop.permute.xlu0 %2568
    %2570 = vrot.lane.b32.xlu0 %v2438, 32
    %v2571 = vpop.permute.xlu0 %2570
    %2572 = vrot.lane.b32.xlu0 %v2439, 32
    %v2573 = vpop.permute.xlu0 %2572
    %2574 = vrot.lane.b32.xlu0 %v2440, 32
    %v2575 = vpop.permute.xlu0 %2574
    %2576 = vrot.lane.b32.xlu0 %v2441, 32
    %v2577 = vpop.permute.xlu0 %2576
    %2578 = vrot.lane.b32.xlu0 %v2442, 32
    %v2579 = vpop.permute.xlu0 %2578
    %2580 = vrot.lane.b32.xlu0 %v2443, 32
    %v2581 = vpop.permute.xlu0 %2580
    %2582 = vrot.lane.b32.xlu0 %v2444, 32
    %v2583 = vpop.permute.xlu0 %2582
    %2584 = vrot.lane.b32.xlu0 %v2445, 32
    %v2585 = vpop.permute.xlu0 %2584
    %2586 = vrot.lane.b32.xlu0 %v2446, 32
    %v2587 = vpop.permute.xlu0 %2586
    %2588 = vrot.lane.b32.xlu0 %v2447, 32
    %v2589 = vpop.permute.xlu0 %2588
    %2590 = vrot.lane.b32.xlu0 %v2448, 32
    %v2591 = vpop.permute.xlu0 %2590
    %2592 = vrot.lane.b32.xlu0 %v2449, 32
    %v2593 = vpop.permute.xlu0 %2592
    %2594 = vrot.lane.b32.xlu0 %v2450, 32
    %v2595 = vpop.permute.xlu0 %2594
    %2596 = vrot.lane.b32.xlu0 %v2451, 32
    %v2597 = vpop.permute.xlu0 %2596
    %2598 = vrot.lane.b32.xlu0 %v2452, 32
    %v2599 = vpop.permute.xlu0 %2598
    %2600 = vrot.lane.b32.xlu0 %v2453, 32
    %v2601 = vpop.permute.xlu0 %2600
    %2602 = vrot.lane.b32.xlu0 %v2454, 32
    %v2603 = vpop.permute.xlu0 %2602
    %2604 = vrot.lane.b32.xlu0 %v2455, 32
    %v2605 = vpop.permute.xlu0 %2604
    %2606 = vrot.lane.b32.xlu0 %v2456, 32
    %v2607 = vpop.permute.xlu0 %2606
    %2608 = vrot.lane.b32.xlu0 %v2457, 32
    %v2609 = vpop.permute.xlu0 %2608
    %2610 = vrot.lane.b32.xlu0 %v2458, 32
    %v2611 = vpop.permute.xlu0 %2610
    %2612 = vrot.lane.b32.xlu0 %v2459, 32
    %v2613 = vpop.permute.xlu0 %2612
    %2614 = vrot.lane.b32.xlu0 %v2460, 32
    %v2615 = vpop.permute.xlu0 %2614
    %2616 = vrot.lane.b32.xlu0 %v2461, 32
    %v2617 = vpop.permute.xlu0 %2616
    %2618 = vrot.lane.b32.xlu0 %v2462, 32
    %v2619 = vpop.permute.xlu0 %2618
    %2620 = vrot.lane.b32.xlu0 %v2463, 32
    %v2621 = vpop.permute.xlu0 %2620
    %2622 = vrot.lane.b32.xlu0 %v2464, 32
    %v2623 = vpop.permute.xlu0 %2622
    %2624 = vrot.lane.b32.xlu0 %v2465, 32
    %v2625 = vpop.permute.xlu0 %2624
    %2626 = vrot.lane.b32.xlu0 %v2466, 32
    %v2627 = vpop.permute.xlu0 %2626
    %2628 = vrot.lane.b32.xlu0 %v2467, 32
    %v2629 = vpop.permute.xlu0 %2628
    %2630 = vrot.lane.b32.xlu0 %v2468, 32
    %v2631 = vpop.permute.xlu0 %2630
    %2632 = vrot.lane.b32.xlu0 %v2469, 32
    %v2633 = vpop.permute.xlu0 %2632
    %2634 = vrot.lane.b32.xlu0 %v2470, 32
    %v2635 = vpop.permute.xlu0 %2634
    %2636 = vrot.lane.b32.xlu0 %v2471, 32
    %v2637 = vpop.permute.xlu0 %2636
    %2638 = vrot.lane.b32.xlu0 %v2472, 32
    %v2639 = vpop.permute.xlu0 %2638
    %2640 = vrot.lane.b32.xlu0 %v2473, 32
    %v2641 = vpop.permute.xlu0 %2640
    %2642 = vrot.lane.b32.xlu0 %v2474, 32
    %v2643 = vpop.permute.xlu0 %2642
    %2644 = vrot.lane.b32.xlu0 %v2475, 32
    %v2645 = vpop.permute.xlu0 %2644
    %2646 = vrot.lane.b32.xlu0 %v2476, 32
    %v2647 = vpop.permute.xlu0 %2646
    %2648 = vrot.lane.b32.xlu0 %v2477, 32
    %v2649 = vpop.permute.xlu0 %2648
    %2650 = vrot.lane.b32.xlu0 %v2478, 32
    %v2651 = vpop.permute.xlu0 %2650
    %2652 = vrot.lane.b32.xlu0 %v2479, 32
    %v2653 = vpop.permute.xlu0 %2652
    %2654 = vrot.lane.b32.xlu0 %v2480, 32
    %v2655 = vpop.permute.xlu0 %2654
    %2656 = vrot.lane.b32.xlu0 %v2481, 32
    %v2657 = vpop.permute.xlu0 %2656
    %2658 = vrot.lane.b32.xlu0 %v2482, 32
    %v2659 = vpop.permute.xlu0 %2658
    %2660 = vrot.lane.b32.xlu0 %v2483, 32
    %v2661 = vpop.permute.xlu0 %2660
    %2662 = vrot.lane.b32.xlu0 %v2484, 32
    %v2663 = vpop.permute.xlu0 %2662
    %2664 = vrot.lane.b32.xlu0 %v2485, 32
    %v2665 = vpop.permute.xlu0 %2664
    %2666 = vrot.lane.b32.xlu0 %v2486, 32
    %v2667 = vpop.permute.xlu0 %2666
    %2668 = vrot.lane.b32.xlu0 %v2487, 32
    %v2669 = vpop.permute.xlu0 %2668
    %2670 = vrot.lane.b32.xlu0 %v2488, 32
    %v2671 = vpop.permute.xlu0 %2670
    %2672 = vrot.lane.b32.xlu0 %v2489, 32
    %v2673 = vpop.permute.xlu0 %2672
    %2674 = vrot.lane.b32.xlu0 %v2490, 32
    %v2675 = vpop.permute.xlu0 %2674
    %2676 = vrot.lane.b32.xlu0 %v2491, 32
    %v2677 = vpop.permute.xlu0 %2676
    %2678 = vrot.lane.b32.xlu0 %v2492, 32
    %v2679 = vpop.permute.xlu0 %2678
    %2680 = vrot.lane.b32.xlu0 %v2493, 32
    %v2681 = vpop.permute.xlu0 %2680
    %2682 = vrot.lane.b32.xlu0 %v2494, 32
    %v2683 = vpop.permute.xlu0 %2682
    %2684 = vrot.lane.b32.xlu0 %v2495, 32
    %v2685 = vpop.permute.xlu0 %2684
    %2686 = vrot.lane.b32.xlu0 %v2496, 32
    %v2687 = vpop.permute.xlu0 %2686
    %2688 = vrot.lane.b32.xlu0 %v2497, 32
    %v2689 = vpop.permute.xlu0 %2688
    %v2754 = vmul.f32 %v2423, %v2563
    %v2755 = vmul.f32 %v2426, %v2565
    %v2756 = vmul.f32 %v2423, %v2567
    %v2757 = vmul.f32 %v2426, %v2569
    %v2758 = vmul.f32 %v2423, %v2571
    %v2759 = vmul.f32 %v2426, %v2573
    %v2760 = vmul.f32 %v2423, %v2575
    %v2761 = vmul.f32 %v2426, %v2577
    %v2762 = vmul.f32 %v2423, %v2579
    %v2763 = vmul.f32 %v2426, %v2581
    %v2764 = vmul.f32 %v2423, %v2583
    %v2765 = vmul.f32 %v2426, %v2585
    %v2766 = vmul.f32 %v2423, %v2587
    %v2767 = vmul.f32 %v2426, %v2589
    %v2768 = vmul.f32 %v2423, %v2591
    %v2769 = vmul.f32 %v2426, %v2593
    %v2770 = vmul.f32 %v2423, %v2595
    %v2771 = vmul.f32 %v2426, %v2597
    %v2772 = vmul.f32 %v2423, %v2599
    %v2773 = vmul.f32 %v2426, %v2601
    %v2774 = vmul.f32 %v2423, %v2603
    %v2775 = vmul.f32 %v2426, %v2605
    %v2776 = vmul.f32 %v2423, %v2607
    %v2777 = vmul.f32 %v2426, %v2609
    %v2778 = vmul.f32 %v2423, %v2611
    %v2779 = vmul.f32 %v2426, %v2613
    %v2780 = vmul.f32 %v2423, %v2615
    %v2781 = vmul.f32 %v2426, %v2617
    %v2782 = vmul.f32 %v2423, %v2619
    %v2783 = vmul.f32 %v2426, %v2621
    %v2784 = vmul.f32 %v2423, %v2623
    %v2785 = vmul.f32 %v2426, %v2625
    %v2786 = vmul.f32 %v2429, %v2627
    %v2787 = vmul.f32 %v2432, %v2629
    %v2788 = vmul.f32 %v2429, %v2631
    %v2789 = vmul.f32 %v2432, %v2633
    %v2790 = vmul.f32 %v2429, %v2635
    %v2791 = vmul.f32 %v2432, %v2637
    %v2792 = vmul.f32 %v2429, %v2639
    %v2793 = vmul.f32 %v2432, %v2641
    %v2794 = vmul.f32 %v2429, %v2643
    %v2795 = vmul.f32 %v2432, %v2645
    %v2796 = vmul.f32 %v2429, %v2647
    %v2797 = vmul.f32 %v2432, %v2649
    %v2798 = vmul.f32 %v2429, %v2651
    %v2799 = vmul.f32 %v2432, %v2653
    %v2800 = vmul.f32 %v2429, %v2655
    %v2801 = vmul.f32 %v2432, %v2657
    %v2802 = vmul.f32 %v2429, %v2659
    %v2803 = vmul.f32 %v2432, %v2661
    %v2804 = vmul.f32 %v2429, %v2663
    %v2805 = vmul.f32 %v2432, %v2665
    %v2806 = vmul.f32 %v2429, %v2667
    %v2807 = vmul.f32 %v2432, %v2669
    %v2808 = vmul.f32 %v2429, %v2671
    %v2809 = vmul.f32 %v2432, %v2673
    %v2810 = vmul.f32 %v2429, %v2675
    %v2811 = vmul.f32 %v2432, %v2677
    %v2812 = vmul.f32 %v2429, %v2679
    %v2813 = vmul.f32 %v2432, %v2681
    %v2814 = vmul.f32 %v2429, %v2683
    %v2815 = vmul.f32 %v2432, %v2685
    %v2816 = vmul.f32 %v2429, %v2687
    %v2817 = vmul.f32 %v2432, %v2689
    %v2818 = vld [vmem:[#allocation2] sm:$0xff]
    %v2819 = vld [vmem:[#allocation2 + $0x8] sm:$0xff]
    %v2820 = vld [vmem:[#allocation2 + $0x10] sm:$0xff]
    %v2821 = vld [vmem:[#allocation2 + $0x18] sm:$0xff]
    %v2822 = vld [vmem:[#allocation2 + $0x20] sm:$0xff]
    %v2823 = vld [vmem:[#allocation2 + $0x28] sm:$0xff]
    %v2824 = vld [vmem:[#allocation2 + $0x30] sm:$0xff]
    %v2825 = vld [vmem:[#allocation2 + $0x38] sm:$0xff]
    %v2826 = vld [vmem:[#allocation2 + $0x40] sm:$0xff]
    %v2827 = vld [vmem:[#allocation2 + $0x48] sm:$0xff]
    %v2828 = vld [vmem:[#allocation2 + $0x50] sm:$0xff]
    %v2829 = vld [vmem:[#allocation2 + $0x58] sm:$0xff]
    %v2830 = vld [vmem:[#allocation2 + $0x60] sm:$0xff]
    %v2831 = vld [vmem:[#allocation2 + $0x68] sm:$0xff]
    %v2832 = vld [vmem:[#allocation2 + $0x70] sm:$0xff]
    %v2833 = vld [vmem:[#allocation2 + $0x78] sm:$0xff]
    %v2834 = vld [vmem:[#allocation2 + $0x80] sm:$0xff]
    %v2835 = vld [vmem:[#allocation2 + $0x88] sm:$0xff]
    %v2836 = vld [vmem:[#allocation2 + $0x90] sm:$0xff]
    %v2837 = vld [vmem:[#allocation2 + $0x98] sm:$0xff]
    %v2838 = vld [vmem:[#allocation2 + $0xa0] sm:$0xff]
    %v2839 = vld [vmem:[#allocation2 + $0xa8] sm:$0xff]
    %v2840 = vld [vmem:[#allocation2 + $0xb0] sm:$0xff]
    %v2841 = vld [vmem:[#allocation2 + $0xb8] sm:$0xff]
    %v2842 = vld [vmem:[#allocation2 + $0xc0] sm:$0xff]
    %v2843 = vld [vmem:[#allocation2 + $0xc8] sm:$0xff]
    %v2844 = vld [vmem:[#allocation2 + $0xd0] sm:$0xff]
    %v2845 = vld [vmem:[#allocation2 + $0xd8] sm:$0xff]
    %v2846 = vld [vmem:[#allocation2 + $0xe0] sm:$0xff]
    %v2847 = vld [vmem:[#allocation2 + $0xe8] sm:$0xff]
    %v2848 = vld [vmem:[#allocation2 + $0xf0] sm:$0xff]
    %v2849 = vld [vmem:[#allocation2 + $0xf8] sm:$0xff]
    %v2850 = vld [vmem:[#allocation2 + $0x100] sm:$0xff]
    %v2851 = vld [vmem:[#allocation2 + $0x108] sm:$0xff]
    %v2852 = vld [vmem:[#allocation2 + $0x110] sm:$0xff]
    %v2853 = vld [vmem:[#allocation2 + $0x118] sm:$0xff]
    %v2854 = vld [vmem:[#allocation2 + $0x120] sm:$0xff]
    %v2855 = vld [vmem:[#allocation2 + $0x128] sm:$0xff]
    %v2856 = vld [vmem:[#allocation2 + $0x130] sm:$0xff]
    %v2857 = vld [vmem:[#allocation2 + $0x138] sm:$0xff]
    %v2858 = vld [vmem:[#allocation2 + $0x140] sm:$0xff]
    %v2859 = vld [vmem:[#allocation2 + $0x148] sm:$0xff]
    %v2860 = vld [vmem:[#allocation2 + $0x150] sm:$0xff]
    %v2861 = vld [vmem:[#allocation2 + $0x158] sm:$0xff]
    %v2862 = vld [vmem:[#allocation2 + $0x160] sm:$0xff]
    %v2863 = vld [vmem:[#allocation2 + $0x168] sm:$0xff]
    %v2864 = vld [vmem:[#allocation2 + $0x170] sm:$0xff]
    %v2865 = vld [vmem:[#allocation2 + $0x178] sm:$0xff]
    %v2866 = vld [vmem:[#allocation2 + $0x180] sm:$0xff]
    %v2867 = vld [vmem:[#allocation2 + $0x188] sm:$0xff]
    %v2868 = vld [vmem:[#allocation2 + $0x190] sm:$0xff]
    %v2869 = vld [vmem:[#allocation2 + $0x198] sm:$0xff]
    %v2870 = vld [vmem:[#allocation2 + $0x1a0] sm:$0xff]
    %v2871 = vld [vmem:[#allocation2 + $0x1a8] sm:$0xff]
    %v2872 = vld [vmem:[#allocation2 + $0x1b0] sm:$0xff]
    %v2873 = vld [vmem:[#allocation2 + $0x1b8] sm:$0xff]
    %v2874 = vld [vmem:[#allocation2 + $0x1c0] sm:$0xff]
    %v2875 = vld [vmem:[#allocation2 + $0x1c8] sm:$0xff]
    %v2876 = vld [vmem:[#allocation2 + $0x1d0] sm:$0xff]
    %v2877 = vld [vmem:[#allocation2 + $0x1d8] sm:$0xff]
    %v2878 = vld [vmem:[#allocation2 + $0x1e0] sm:$0xff]
    %v2879 = vld [vmem:[#allocation2 + $0x1e8] sm:$0xff]
    %v2880 = vld [vmem:[#allocation2 + $0x1f0] sm:$0xff]
    %v2881 = vld [vmem:[#allocation2 + $0x1f8] sm:$0xff]
    %2946 = vrot.lane.b32.xlu0 %v2818, 32
    %v2947 = vpop.permute.xlu0 %2946
    %2948 = vrot.lane.b32.xlu0 %v2819, 32
    %v2949 = vpop.permute.xlu0 %2948
    %2950 = vrot.lane.b32.xlu0 %v2820, 32
    %v2951 = vpop.permute.xlu0 %2950
    %2952 = vrot.lane.b32.xlu0 %v2821, 32
    %v2953 = vpop.permute.xlu0 %2952
    %2954 = vrot.lane.b32.xlu0 %v2822, 32
    %v2955 = vpop.permute.xlu0 %2954
    %2956 = vrot.lane.b32.xlu0 %v2823, 32
    %v2957 = vpop.permute.xlu0 %2956
    %2958 = vrot.lane.b32.xlu0 %v2824, 32
    %v2959 = vpop.permute.xlu0 %2958
    %2960 = vrot.lane.b32.xlu0 %v2825, 32
    %v2961 = vpop.permute.xlu0 %2960
    %2962 = vrot.lane.b32.xlu0 %v2826, 32
    %v2963 = vpop.permute.xlu0 %2962
    %2964 = vrot.lane.b32.xlu0 %v2827, 32
    %v2965 = vpop.permute.xlu0 %2964
    %2966 = vrot.lane.b32.xlu0 %v2828, 32
    %v2967 = vpop.permute.xlu0 %2966
    %2968 = vrot.lane.b32.xlu0 %v2829, 32
    %v2969 = vpop.permute.xlu0 %2968
    %2970 = vrot.lane.b32.xlu0 %v2830, 32
    %v2971 = vpop.permute.xlu0 %2970
    %2972 = vrot.lane.b32.xlu0 %v2831, 32
    %v2973 = vpop.permute.xlu0 %2972
    %2974 = vrot.lane.b32.xlu0 %v2832, 32
    %v2975 = vpop.permute.xlu0 %2974
    %2976 = vrot.lane.b32.xlu0 %v2833, 32
    %v2977 = vpop.permute.xlu0 %2976
    %2978 = vrot.lane.b32.xlu0 %v2834, 32
    %v2979 = vpop.permute.xlu0 %2978
    %2980 = vrot.lane.b32.xlu0 %v2835, 32
    %v2981 = vpop.permute.xlu0 %2980
    %2982 = vrot.lane.b32.xlu0 %v2836, 32
    %v2983 = vpop.permute.xlu0 %2982
    %2984 = vrot.lane.b32.xlu0 %v2837, 32
    %v2985 = vpop.permute.xlu0 %2984
    %2986 = vrot.lane.b32.xlu0 %v2838, 32
    %v2987 = vpop.permute.xlu0 %2986
    %2988 = vrot.lane.b32.xlu0 %v2839, 32
    %v2989 = vpop.permute.xlu0 %2988
    %2990 = vrot.lane.b32.xlu0 %v2840, 32
    %v2991 = vpop.permute.xlu0 %2990
    %2992 = vrot.lane.b32.xlu0 %v2841, 32
    %v2993 = vpop.permute.xlu0 %2992
    %2994 = vrot.lane.b32.xlu0 %v2842, 32
    %v2995 = vpop.permute.xlu0 %2994
    %2996 = vrot.lane.b32.xlu0 %v2843, 32
    %v2997 = vpop.permute.xlu0 %2996
    %2998 = vrot.lane.b32.xlu0 %v2844, 32
    %v2999 = vpop.permute.xlu0 %2998
    %3000 = vrot.lane.b32.xlu0 %v2845, 32
    %v3001 = vpop.permute.xlu0 %3000
    %3002 = vrot.lane.b32.xlu0 %v2846, 32
    %v3003 = vpop.permute.xlu0 %3002
    %3004 = vrot.lane.b32.xlu0 %v2847, 32
    %v3005 = vpop.permute.xlu0 %3004
    %3006 = vrot.lane.b32.xlu0 %v2848, 32
    %v3007 = vpop.permute.xlu0 %3006
    %3008 = vrot.lane.b32.xlu0 %v2849, 32
    %v3009 = vpop.permute.xlu0 %3008
    %3010 = vrot.lane.b32.xlu0 %v2850, 32
    %v3011 = vpop.permute.xlu0 %3010
    %3012 = vrot.lane.b32.xlu0 %v2851, 32
    %v3013 = vpop.permute.xlu0 %3012
    %3014 = vrot.lane.b32.xlu0 %v2852, 32
    %v3015 = vpop.permute.xlu0 %3014
    %3016 = vrot.lane.b32.xlu0 %v2853, 32
    %v3017 = vpop.permute.xlu0 %3016
    %3018 = vrot.lane.b32.xlu0 %v2854, 32
    %v3019 = vpop.permute.xlu0 %3018
    %3020 = vrot.lane.b32.xlu0 %v2855, 32
    %v3021 = vpop.permute.xlu0 %3020
    %3022 = vrot.lane.b32.xlu0 %v2856, 32
    %v3023 = vpop.permute.xlu0 %3022
    %3024 = vrot.lane.b32.xlu0 %v2857, 32
    %v3025 = vpop.permute.xlu0 %3024
    %3026 = vrot.lane.b32.xlu0 %v2858, 32
    %v3027 = vpop.permute.xlu0 %3026
    %3028 = vrot.lane.b32.xlu0 %v2859, 32
    %v3029 = vpop.permute.xlu0 %3028
    %3030 = vrot.lane.b32.xlu0 %v2860, 32
    %v3031 = vpop.permute.xlu0 %3030
    %3032 = vrot.lane.b32.xlu0 %v2861, 32
    %v3033 = vpop.permute.xlu0 %3032
    %3034 = vrot.lane.b32.xlu0 %v2862, 32
    %v3035 = vpop.permute.xlu0 %3034
    %3036 = vrot.lane.b32.xlu0 %v2863, 32
    %v3037 = vpop.permute.xlu0 %3036
    %3038 = vrot.lane.b32.xlu0 %v2864, 32
    %v3039 = vpop.permute.xlu0 %3038
    %3040 = vrot.lane.b32.xlu0 %v2865, 32
    %v3041 = vpop.permute.xlu0 %3040
    %3042 = vrot.lane.b32.xlu0 %v2866, 32
    %v3043 = vpop.permute.xlu0 %3042
    %3044 = vrot.lane.b32.xlu0 %v2867, 32
    %v3045 = vpop.permute.xlu0 %3044
    %3046 = vrot.lane.b32.xlu0 %v2868, 32
    %v3047 = vpop.permute.xlu0 %3046
    %3048 = vrot.lane.b32.xlu0 %v2869, 32
    %v3049 = vpop.permute.xlu0 %3048
    %3050 = vrot.lane.b32.xlu0 %v2870, 32
    %v3051 = vpop.permute.xlu0 %3050
    %3052 = vrot.lane.b32.xlu0 %v2871, 32
    %v3053 = vpop.permute.xlu0 %3052
    %3054 = vrot.lane.b32.xlu0 %v2872, 32
    %v3055 = vpop.permute.xlu0 %3054
    %3056 = vrot.lane.b32.xlu0 %v2873, 32
    %v3057 = vpop.permute.xlu0 %3056
    %3058 = vrot.lane.b32.xlu0 %v2874, 32
    %v3059 = vpop.permute.xlu0 %3058
    %3060 = vrot.lane.b32.xlu0 %v2875, 32
    %v3061 = vpop.permute.xlu0 %3060
    %3062 = vrot.lane.b32.xlu0 %v2876, 32
    %v3063 = vpop.permute.xlu0 %3062
    %3064 = vrot.lane.b32.xlu0 %v2877, 32
    %v3065 = vpop.permute.xlu0 %3064
    %3066 = vrot.lane.b32.xlu0 %v2878, 32
    %v3067 = vpop.permute.xlu0 %3066
    %3068 = vrot.lane.b32.xlu0 %v2879, 32
    %v3069 = vpop.permute.xlu0 %3068
    %3070 = vrot.lane.b32.xlu0 %v2880, 32
    %v3071 = vpop.permute.xlu0 %3070
    %3072 = vrot.lane.b32.xlu0 %v2881, 32
    %v3073 = vpop.permute.xlu0 %3072
    %v3138 = vadd.f32 %v2754, %v2947
    %v3139 = vadd.f32 %v2755, %v2949
    %v3140 = vadd.f32 %v2756, %v2951
    %v3141 = vadd.f32 %v2757, %v2953
    %v3142 = vadd.f32 %v2758, %v2955
    %v3143 = vadd.f32 %v2759, %v2957
    %v3144 = vadd.f32 %v2760, %v2959
    %v3145 = vadd.f32 %v2761, %v2961
    %v3146 = vadd.f32 %v2762, %v2963
    %v3147 = vadd.f32 %v2763, %v2965
    %v3148 = vadd.f32 %v2764, %v2967
    %v3149 = vadd.f32 %v2765, %v2969
    %v3150 = vadd.f32 %v2766, %v2971
    %v3151 = vadd.f32 %v2767, %v2973
    %v3152 = vadd.f32 %v2768, %v2975
    %v3153 = vadd.f32 %v2769, %v2977
    %v3154 = vadd.f32 %v2770, %v2979
    %v3155 = vadd.f32 %v2771, %v2981
    %v3156 = vadd.f32 %v2772, %v2983
    %v3157 = vadd.f32 %v2773, %v2985
    %v3158 = vadd.f32 %v2774, %v2987
    %v3159 = vadd.f32 %v2775, %v2989
    %v3160 = vadd.f32 %v2776, %v2991
    %v3161 = vadd.f32 %v2777, %v2993
    %v3162 = vadd.f32 %v2778, %v2995
    %v3163 = vadd.f32 %v2779, %v2997
    %v3164 = vadd.f32 %v2780, %v2999
    %v3165 = vadd.f32 %v2781, %v3001
    %v3166 = vadd.f32 %v2782, %v3003
    %v3167 = vadd.f32 %v2783, %v3005
    %v3168 = vadd.f32 %v2784, %v3007
    %v3169 = vadd.f32 %v2785, %v3009
    %v3170 = vadd.f32 %v2786, %v3011
    %v3171 = vadd.f32 %v2787, %v3013
    %v3172 = vadd.f32 %v2788, %v3015
    %v3173 = vadd.f32 %v2789, %v3017
    %v3174 = vadd.f32 %v2790, %v3019
    %v3175 = vadd.f32 %v2791, %v3021
    %v3176 = vadd.f32 %v2792, %v3023
    %v3177 = vadd.f32 %v2793, %v3025
    %v3178 = vadd.f32 %v2794, %v3027
    %v3179 = vadd.f32 %v2795, %v3029
    %v3180 = vadd.f32 %v2796, %v3031
    %v3181 = vadd.f32 %v2797, %v3033
    %v3182 = vadd.f32 %v2798, %v3035
    %v3183 = vadd.f32 %v2799, %v3037
    %v3184 = vadd.f32 %v2800, %v3039
    %v3185 = vadd.f32 %v2801, %v3041
    %v3186 = vadd.f32 %v2802, %v3043
    %v3187 = vadd.f32 %v2803, %v3045
    %v3188 = vadd.f32 %v2804, %v3047
    %v3189 = vadd.f32 %v2805, %v3049
    %v3190 = vadd.f32 %v2806, %v3051
    %v3191 = vadd.f32 %v2807, %v3053
    %v3192 = vadd.f32 %v2808, %v3055
    %v3193 = vadd.f32 %v2809, %v3057
    %v3194 = vadd.f32 %v2810, %v3059
    %v3195 = vadd.f32 %v2811, %v3061
    %v3196 = vadd.f32 %v2812, %v3063
    %v3197 = vadd.f32 %v2813, %v3065
    %v3198 = vadd.f32 %v2814, %v3067
    %v3199 = vadd.f32 %v2815, %v3069
    %v3200 = vadd.f32 %v2816, %v3071
    %v3201 = vadd.f32 %v2817, %v3073
    %v3206 = vrot.slane %v2423, 1
    %v3207 = vrot.slane %v2423, 2
    %v3208 = vrot.slane %v2423, 3
    %v3209 = vrot.slane %v2423, 4
    %v3210 = vrot.slane %v2423, 5
    %v3211 = vrot.slane %v2423, 6
    %v3212 = vrot.slane %v2423, 7
    %v3213 = vrot.slane %v2426, 1
    %v3214 = vrot.slane %v2426, 2
    %v3215 = vrot.slane %v2426, 3
    %v3216 = vrot.slane %v2426, 4
    %v3217 = vrot.slane %v2426, 5
    %v3218 = vrot.slane %v2426, 6
    %v3219 = vrot.slane %v2426, 7
    %v3220 = vrot.slane %v2429, 1
    %v3221 = vrot.slane %v2429, 2
    %v3222 = vrot.slane %v2429, 3
    %v3223 = vrot.slane %v2429, 4
    %v3224 = vrot.slane %v2429, 5
    %v3225 = vrot.slane %v2429, 6
    %v3226 = vrot.slane %v2429, 7
    %v3227 = vrot.slane %v2432, 1
    %v3228 = vrot.slane %v2432, 2
    %v3229 = vrot.slane %v2432, 3
    %v3230 = vrot.slane %v2432, 4
    %v3231 = vrot.slane %v2432, 5
    %v3232 = vrot.slane %v2432, 6
    %v3233 = vrot.slane %v2432, 7
    %v3234 = vperm.slane %v2423, 0
    %v3235 = vperm.slane %v3206, 0
    %v3236 = vperm.slane %v3207, 0
    %v3237 = vperm.slane %v3208, 0
    %v3238 = vperm.slane %v3209, 0
    %v3239 = vperm.slane %v3210, 0
    %v3240 = vperm.slane %v3211, 0
    %v3241 = vperm.slane %v3212, 0
    %v3242 = vperm.slane %v2426, 0
    %v3243 = vperm.slane %v3213, 0
    %v3244 = vperm.slane %v3214, 0
    %v3245 = vperm.slane %v3215, 0
    %v3246 = vperm.slane %v3216, 0
    %v3247 = vperm.slane %v3217, 0
    %v3248 = vperm.slane %v3218, 0
    %v3249 = vperm.slane %v3219, 0
    %v3250 = vperm.slane %v2429, 0
    %v3251 = vperm.slane %v3220, 0
    %v3252 = vperm.slane %v3221, 0
    %v3253 = vperm.slane %v3222, 0
    %v3254 = vperm.slane %v3223, 0
    %v3255 = vperm.slane %v3224, 0
    %v3256 = vperm.slane %v3225, 0
    %v3257 = vperm.slane %v3226, 0
    %v3258 = vperm.slane %v2432, 0
    %v3259 = vperm.slane %v3227, 0
    %v3260 = vperm.slane %v3228, 0
    %v3261 = vperm.slane %v3229, 0
    %v3262 = vperm.slane %v3230, 0
    %v3263 = vperm.slane %v3231, 0
    %v3264 = vperm.slane %v3232, 0
    %v3265 = vperm.slane %v3233, 0
    %3362 = vrot.lane.b32.xlu0 %v3138, 96
    %v3363 = vpop.permute.xlu0 %3362
    %3364 = vrot.lane.b32.xlu0 %v3139, 96
    %v3365 = vpop.permute.xlu0 %3364
    %3366 = vrot.lane.b32.xlu0 %v3140, 96
    %v3367 = vpop.permute.xlu0 %3366
    %3368 = vrot.lane.b32.xlu0 %v3141, 96
    %v3369 = vpop.permute.xlu0 %3368
    %3370 = vrot.lane.b32.xlu0 %v3142, 96
    %v3371 = vpop.permute.xlu0 %3370
    %3372 = vrot.lane.b32.xlu0 %v3143, 96
    %v3373 = vpop.permute.xlu0 %3372
    %3374 = vrot.lane.b32.xlu0 %v3144, 96
    %v3375 = vpop.permute.xlu0 %3374
    %3376 = vrot.lane.b32.xlu0 %v3145, 96
    %v3377 = vpop.permute.xlu0 %3376
    %3378 = vrot.lane.b32.xlu0 %v3146, 96
    %v3379 = vpop.permute.xlu0 %3378
    %3380 = vrot.lane.b32.xlu0 %v3147, 96
    %v3381 = vpop.permute.xlu0 %3380
    %3382 = vrot.lane.b32.xlu0 %v3148, 96
    %v3383 = vpop.permute.xlu0 %3382
    %3384 = vrot.lane.b32.xlu0 %v3149, 96
    %v3385 = vpop.permute.xlu0 %3384
    %3386 = vrot.lane.b32.xlu0 %v3150, 96
    %v3387 = vpop.permute.xlu0 %3386
    %3388 = vrot.lane.b32.xlu0 %v3151, 96
    %v3389 = vpop.permute.xlu0 %3388
    %3390 = vrot.lane.b32.xlu0 %v3152, 96
    %v3391 = vpop.permute.xlu0 %3390
    %3392 = vrot.lane.b32.xlu0 %v3153, 96
    %v3393 = vpop.permute.xlu0 %3392
    %3394 = vrot.lane.b32.xlu0 %v3154, 96
    %v3395 = vpop.permute.xlu0 %3394
    %3396 = vrot.lane.b32.xlu0 %v3155, 96
    %v3397 = vpop.permute.xlu0 %3396
    %3398 = vrot.lane.b32.xlu0 %v3156, 96
    %v3399 = vpop.permute.xlu0 %3398
    %3400 = vrot.lane.b32.xlu0 %v3157, 96
    %v3401 = vpop.permute.xlu0 %3400
    %3402 = vrot.lane.b32.xlu0 %v3158, 96
    %v3403 = vpop.permute.xlu0 %3402
    %3404 = vrot.lane.b32.xlu0 %v3159, 96
    %v3405 = vpop.permute.xlu0 %3404
    %3406 = vrot.lane.b32.xlu0 %v3160, 96
    %v3407 = vpop.permute.xlu0 %3406
    %3408 = vrot.lane.b32.xlu0 %v3161, 96
    %v3409 = vpop.permute.xlu0 %3408
    %3410 = vrot.lane.b32.xlu0 %v3162, 96
    %v3411 = vpop.permute.xlu0 %3410
    %3412 = vrot.lane.b32.xlu0 %v3163, 96
    %v3413 = vpop.permute.xlu0 %3412
    %3414 = vrot.lane.b32.xlu0 %v3164, 96
    %v3415 = vpop.permute.xlu0 %3414
    %3416 = vrot.lane.b32.xlu0 %v3165, 96
    %v3417 = vpop.permute.xlu0 %3416
    %3418 = vrot.lane.b32.xlu0 %v3166, 96
    %v3419 = vpop.permute.xlu0 %3418
    %3420 = vrot.lane.b32.xlu0 %v3167, 96
    %v3421 = vpop.permute.xlu0 %3420
    %3422 = vrot.lane.b32.xlu0 %v3168, 96
    %v3423 = vpop.permute.xlu0 %3422
    %3424 = vrot.lane.b32.xlu0 %v3169, 96
    %v3425 = vpop.permute.xlu0 %3424
    %3426 = vrot.lane.b32.xlu0 %v3170, 96
    %v3427 = vpop.permute.xlu0 %3426
    %3428 = vrot.lane.b32.xlu0 %v3171, 96
    %v3429 = vpop.permute.xlu0 %3428
    %3430 = vrot.lane.b32.xlu0 %v3172, 96
    %v3431 = vpop.permute.xlu0 %3430
    %3432 = vrot.lane.b32.xlu0 %v3173, 96
    %v3433 = vpop.permute.xlu0 %3432
    %3434 = vrot.lane.b32.xlu0 %v3174, 96
    %v3435 = vpop.permute.xlu0 %3434
    %3436 = vrot.lane.b32.xlu0 %v3175, 96
    %v3437 = vpop.permute.xlu0 %3436
    %3438 = vrot.lane.b32.xlu0 %v3176, 96
    %v3439 = vpop.permute.xlu0 %3438
    %3440 = vrot.lane.b32.xlu0 %v3177, 96
    %v3441 = vpop.permute.xlu0 %3440
    %3442 = vrot.lane.b32.xlu0 %v3178, 96
    %v3443 = vpop.permute.xlu0 %3442
    %3444 = vrot.lane.b32.xlu0 %v3179, 96
    %v3445 = vpop.permute.xlu0 %3444
    %3446 = vrot.lane.b32.xlu0 %v3180, 96
    %v3447 = vpop.permute.xlu0 %3446
    %3448 = vrot.lane.b32.xlu0 %v3181, 96
    %v3449 = vpop.permute.xlu0 %3448
    %3450 = vrot.lane.b32.xlu0 %v3182, 96
    %v3451 = vpop.permute.xlu0 %3450
    %3452 = vrot.lane.b32.xlu0 %v3183, 96
    %v3453 = vpop.permute.xlu0 %3452
    %3454 = vrot.lane.b32.xlu0 %v3184, 96
    %v3455 = vpop.permute.xlu0 %3454
    %3456 = vrot.lane.b32.xlu0 %v3185, 96
    %v3457 = vpop.permute.xlu0 %3456
    %3458 = vrot.lane.b32.xlu0 %v3186, 96
    %v3459 = vpop.permute.xlu0 %3458
    %3460 = vrot.lane.b32.xlu0 %v3187, 96
    %v3461 = vpop.permute.xlu0 %3460
    %3462 = vrot.lane.b32.xlu0 %v3188, 96
    %v3463 = vpop.permute.xlu0 %3462
    %3464 = vrot.lane.b32.xlu0 %v3189, 96
    %v3465 = vpop.permute.xlu0 %3464
    %3466 = vrot.lane.b32.xlu0 %v3190, 96
    %v3467 = vpop.permute.xlu0 %3466
    %3468 = vrot.lane.b32.xlu0 %v3191, 96
    %v3469 = vpop.permute.xlu0 %3468
    %3470 = vrot.lane.b32.xlu0 %v3192, 96
    %v3471 = vpop.permute.xlu0 %3470
    %3472 = vrot.lane.b32.xlu0 %v3193, 96
    %v3473 = vpop.permute.xlu0 %3472
    %3474 = vrot.lane.b32.xlu0 %v3194, 96
    %v3475 = vpop.permute.xlu0 %3474
    %3476 = vrot.lane.b32.xlu0 %v3195, 96
    %v3477 = vpop.permute.xlu0 %3476
    %3478 = vrot.lane.b32.xlu0 %v3196, 96
    %v3479 = vpop.permute.xlu0 %3478
    %3480 = vrot.lane.b32.xlu0 %v3197, 96
    %v3481 = vpop.permute.xlu0 %3480
    %3482 = vrot.lane.b32.xlu0 %v3198, 96
    %v3483 = vpop.permute.xlu0 %3482
    %3484 = vrot.lane.b32.xlu0 %v3199, 96
    %v3485 = vpop.permute.xlu0 %3484
    %3486 = vrot.lane.b32.xlu0 %v3200, 96
    %v3487 = vpop.permute.xlu0 %3486
    %3488 = vrot.lane.b32.xlu0 %v3201, 96
    %v3489 = vpop.permute.xlu0 %3488
    %v3554 = vmul.f32 %v3234, %v3363
    %v3555 = vmul.f32 %v3234, %v3365
    %v3556 = vmul.f32 %v3235, %v3367
    %v3557 = vmul.f32 %v3235, %v3369
    %v3558 = vmul.f32 %v3236, %v3371
    %v3559 = vmul.f32 %v3236, %v3373
    %v3560 = vmul.f32 %v3237, %v3375
    %v3561 = vmul.f32 %v3237, %v3377
    %v3562 = vmul.f32 %v3238, %v3379
    %v3563 = vmul.f32 %v3238, %v3381
    %v3564 = vmul.f32 %v3239, %v3383
    %v3565 = vmul.f32 %v3239, %v3385
    %v3566 = vmul.f32 %v3240, %v3387
    %v3567 = vmul.f32 %v3240, %v3389
    %v3568 = vmul.f32 %v3241, %v3391
    %v3569 = vmul.f32 %v3241, %v3393
    %v3570 = vmul.f32 %v3242, %v3395
    %v3571 = vmul.f32 %v3242, %v3397
    %v3572 = vmul.f32 %v3243, %v3399
    %v3573 = vmul.f32 %v3243, %v3401
    %v3574 = vmul.f32 %v3244, %v3403
    %v3575 = vmul.f32 %v3244, %v3405
    %v3576 = vmul.f32 %v3245, %v3407
    %v3577 = vmul.f32 %v3245, %v3409
    %v3578 = vmul.f32 %v3246, %v3411
    %v3579 = vmul.f32 %v3246, %v3413
    %v3580 = vmul.f32 %v3247, %v3415
    %v3581 = vmul.f32 %v3247, %v3417
    %v3582 = vmul.f32 %v3248, %v3419
    %v3583 = vmul.f32 %v3248, %v3421
    %v3584 = vmul.f32 %v3249, %v3423
    %v3585 = vmul.f32 %v3249, %v3425
    %v3586 = vmul.f32 %v3250, %v3427
    %v3587 = vmul.f32 %v3250, %v3429
    %v3588 = vmul.f32 %v3251, %v3431
    %v3589 = vmul.f32 %v3251, %v3433
    %v3590 = vmul.f32 %v3252, %v3435
    %v3591 = vmul.f32 %v3252, %v3437
    %v3592 = vmul.f32 %v3253, %v3439
    %v3593 = vmul.f32 %v3253, %v3441
    %v3594 = vmul.f32 %v3254, %v3443
    %v3595 = vmul.f32 %v3254, %v3445
    %v3596 = vmul.f32 %v3255, %v3447
    %v3597 = vmul.f32 %v3255, %v3449
    %v3598 = vmul.f32 %v3256, %v3451
    %v3599 = vmul.f32 %v3256, %v3453
    %v3600 = vmul.f32 %v3257, %v3455
    %v3601 = vmul.f32 %v3257, %v3457
    %v3602 = vmul.f32 %v3258, %v3459
    %v3603 = vmul.f32 %v3258, %v3461
    %v3604 = vmul.f32 %v3259, %v3463
    %v3605 = vmul.f32 %v3259, %v3465
    %v3606 = vmul.f32 %v3260, %v3467
    %v3607 = vmul.f32 %v3260, %v3469
    %v3608 = vmul.f32 %v3261, %v3471
    %v3609 = vmul.f32 %v3261, %v3473
    %v3610 = vmul.f32 %v3262, %v3475
    %v3611 = vmul.f32 %v3262, %v3477
    %v3612 = vmul.f32 %v3263, %v3479
    %v3613 = vmul.f32 %v3263, %v3481
    %v3614 = vmul.f32 %v3264, %v3483
    %v3615 = vmul.f32 %v3264, %v3485
    %v3616 = vmul.f32 %v3265, %v3487
    %v3617 = vmul.f32 %v3265, %v3489
    %v3619 = vsel %vm1592, %v3554, 0
    %v3622 = vsel %vm1592, %v3555, 0
    %v3625 = vsel %vm1592, %v3556, 0
    %v3628 = vsel %vm1592, %v3557, 0
    %v3631 = vsel %vm1592, %v3558, 0
    %v3634 = vsel %vm1592, %v3559, 0
    %v3637 = vsel %vm1592, %v3560, 0
    %v3640 = vsel %vm1592, %v3561, 0
    %v3643 = vsel %vm1592, %v3562, 0
    %v3646 = vsel %vm1592, %v3563, 0
    %v3649 = vsel %vm1592, %v3564, 0
    %v3652 = vsel %vm1592, %v3565, 0
    %v3655 = vsel %vm1592, %v3566, 0
    %v3658 = vsel %vm1592, %v3567, 0
    %v3661 = vsel %vm1592, %v3568, 0
    %v3664 = vsel %vm1592, %v3569, 0
    %v3667 = vsel %vm1592, %v3570, 0
    %v3670 = vsel %vm1592, %v3571, 0
    %v3673 = vsel %vm1592, %v3572, 0
    %v3676 = vsel %vm1592, %v3573, 0
    %v3679 = vsel %vm1592, %v3574, 0
    %v3682 = vsel %vm1592, %v3575, 0
    %v3685 = vsel %vm1592, %v3576, 0
    %v3688 = vsel %vm1592, %v3577, 0
    %v3691 = vsel %vm1592, %v3578, 0
    %v3694 = vsel %vm1592, %v3579, 0
    %v3697 = vsel %vm1592, %v3580, 0
    %v3700 = vsel %vm1592, %v3581, 0
    %v3703 = vsel %vm1592, %v3582, 0
    %v3706 = vsel %vm1592, %v3583, 0
    %v3709 = vsel %vm1592, %v3584, 0
    %v3712 = vsel %vm1592, %v3585, 0
    %v3715 = vsel %vm1592, %v3586, 0
    %v3718 = vsel %vm1592, %v3587, 0
    %v3721 = vsel %vm1592, %v3588, 0
    %v3724 = vsel %vm1592, %v3589, 0
    %v3727 = vsel %vm1592, %v3590, 0
    %v3730 = vsel %vm1592, %v3591, 0
    %v3733 = vsel %vm1592, %v3592, 0
    %v3736 = vsel %vm1592, %v3593, 0
    %v3739 = vsel %vm1592, %v3594, 0
    %v3742 = vsel %vm1592, %v3595, 0
    %v3745 = vsel %vm1592, %v3596, 0
    %v3748 = vsel %vm1592, %v3597, 0
    %v3751 = vsel %vm1592, %v3598, 0
    %v3754 = vsel %vm1592, %v3599, 0
    %v3757 = vsel %vm1592, %v3600, 0
    %v3760 = vsel %vm1592, %v3601, 0
    %v3763 = vsel %vm1592, %v3602, 0
    %v3766 = vsel %vm1592, %v3603, 0
    %v3769 = vsel %vm1592, %v3604, 0
    %v3772 = vsel %vm1592, %v3605, 0
    %v3775 = vsel %vm1592, %v3606, 0
    %v3778 = vsel %vm1592, %v3607, 0
    %v3781 = vsel %vm1592, %v3608, 0
    %v3784 = vsel %vm1592, %v3609, 0
    %v3787 = vsel %vm1592, %v3610, 0
    %v3790 = vsel %vm1592, %v3611, 0
    %v3793 = vsel %vm1592, %v3612, 0
    %v3796 = vsel %vm1592, %v3613, 0
    %v3799 = vsel %vm1592, %v3614, 0
    %v3802 = vsel %vm1592, %v3615, 0
    %v3805 = vsel %vm1592, %v3616, 0
    %v3808 = vsel %vm1592, %v3617, 0
    %3810 = vmatpush.msra.mxu0 0.0
    %3811 = vmatpush.msra.mxu0 0.0
    %3812 = vmatpush.msra.mxu0 0.0
    %3813 = vmatpush.msra.mxu0 0.0
    %3814 = vmatpush.msra.mxu0 0.0
    %3815 = vmatpush.msra.mxu0 0.0
    %3816 = vmatpush.msra.mxu0 0.0
    %3817 = vmatpush.msra.mxu0 0.0
    %3818 = vmatpush.msra.mxu0 0.0
    %3819 = vmatpush.msra.mxu0 0.0
    %3820 = vmatpush.msra.mxu0 0.0
    %3821 = vmatpush.msra.mxu0 0.0
    %3822 = vmatpush.msra.mxu0 %v2236
    %3823 = vmatpush.msra.mxu0 %v2235
    %3824 = vmatpush.msra.mxu0 %v2234
    %3825 = vmatpush.msra.mxu0 %v2233
    %3826 = vmatmul.f32.gmra.mxu0 %v3619
    %v3827 = vpop.f32.mrf.mxu0
    %v3828 = vadd.f32 0.0, %v3827
    %3829 = vmatmul.f32.gmra.mxu0 %v3622
    %v3830 = vpop.f32.mrf.mxu0
    %v3831 = vadd.f32 0.0, %v3830
    %3832 = vmatmul.f32.gmra.mxu0 %v3625
    %v3833 = vpop.f32.mrf.mxu0
    %v3834 = vadd.f32 0.0, %v3833
    %3835 = vmatmul.f32.gmra.mxu0 %v3628
    %v3836 = vpop.f32.mrf.mxu0
    %v3837 = vadd.f32 0.0, %v3836
    %3838 = vmatmul.f32.gmra.mxu0 %v3631
    %v3839 = vpop.f32.mrf.mxu0
    %v3840 = vadd.f32 0.0, %v3839
    %3841 = vmatmul.f32.gmra.mxu0 %v3634
    %v3842 = vpop.f32.mrf.mxu0
    %v3843 = vadd.f32 0.0, %v3842
    %3844 = vmatmul.f32.gmra.mxu0 %v3637
    %v3845 = vpop.f32.mrf.mxu0
    %v3846 = vadd.f32 0.0, %v3845
    %3847 = vmatmul.f32.gmra.mxu0 %v3640
    %v3848 = vpop.f32.mrf.mxu0
    %v3849 = vadd.f32 0.0, %v3848
    %3850 = vmatmul.f32.gmra.mxu0 %v3643
    %v3851 = vpop.f32.mrf.mxu0
    %v3852 = vadd.f32 0.0, %v3851
    %3853 = vmatmul.f32.gmra.mxu0 %v3646
    %v3854 = vpop.f32.mrf.mxu0
    %v3855 = vadd.f32 0.0, %v3854
    %3856 = vmatmul.f32.gmra.mxu0 %v3649
    %v3857 = vpop.f32.mrf.mxu0
    %v3858 = vadd.f32 0.0, %v3857
    %3859 = vmatmul.f32.gmra.mxu0 %v3652
    %v3860 = vpop.f32.mrf.mxu0
    %v3861 = vadd.f32 0.0, %v3860
    %3862 = vmatmul.f32.gmra.mxu0 %v3655
    %v3863 = vpop.f32.mrf.mxu0
    %v3864 = vadd.f32 0.0, %v3863
    %3865 = vmatmul.f32.gmra.mxu0 %v3658
    %v3866 = vpop.f32.mrf.mxu0
    %v3867 = vadd.f32 0.0, %v3866
    %3868 = vmatmul.f32.gmra.mxu0 %v3661
    %v3869 = vpop.f32.mrf.mxu0
    %v3870 = vadd.f32 0.0, %v3869
    %3871 = vmatmul.f32.gmra.mxu0 %v3664
    %v3872 = vpop.f32.mrf.mxu0
    %v3873 = vadd.f32 0.0, %v3872
    %3874 = vmatmul.f32.gmra.mxu0 %v3667
    %v3875 = vpop.f32.mrf.mxu0
    %v3876 = vadd.f32 0.0, %v3875
    %3877 = vmatmul.f32.gmra.mxu0 %v3670
    %v3878 = vpop.f32.mrf.mxu0
    %v3879 = vadd.f32 0.0, %v3878
    %3880 = vmatmul.f32.gmra.mxu0 %v3673
    %v3881 = vpop.f32.mrf.mxu0
    %v3882 = vadd.f32 0.0, %v3881
    %3883 = vmatmul.f32.gmra.mxu0 %v3676
    %v3884 = vpop.f32.mrf.mxu0
    %v3885 = vadd.f32 0.0, %v3884
    %3886 = vmatmul.f32.gmra.mxu0 %v3679
    %v3887 = vpop.f32.mrf.mxu0
    %v3888 = vadd.f32 0.0, %v3887
    %3889 = vmatmul.f32.gmra.mxu0 %v3682
    %v3890 = vpop.f32.mrf.mxu0
    %v3891 = vadd.f32 0.0, %v3890
    %3892 = vmatmul.f32.gmra.mxu0 %v3685
    %v3893 = vpop.f32.mrf.mxu0
    %v3894 = vadd.f32 0.0, %v3893
    %3895 = vmatmul.f32.gmra.mxu0 %v3688
    %v3896 = vpop.f32.mrf.mxu0
    %v3897 = vadd.f32 0.0, %v3896
    %3898 = vmatmul.f32.gmra.mxu0 %v3691
    %v3899 = vpop.f32.mrf.mxu0
    %v3900 = vadd.f32 0.0, %v3899
    %3901 = vmatmul.f32.gmra.mxu0 %v3694
    %v3902 = vpop.f32.mrf.mxu0
    %v3903 = vadd.f32 0.0, %v3902
    %3904 = vmatmul.f32.gmra.mxu0 %v3697
    %v3905 = vpop.f32.mrf.mxu0
    %v3906 = vadd.f32 0.0, %v3905
    %3907 = vmatmul.f32.gmra.mxu0 %v3700
    %v3908 = vpop.f32.mrf.mxu0
    %v3909 = vadd.f32 0.0, %v3908
    %3910 = vmatmul.f32.gmra.mxu0 %v3703
    %v3911 = vpop.f32.mrf.mxu0
    %v3912 = vadd.f32 0.0, %v3911
    %3913 = vmatmul.f32.gmra.mxu0 %v3706
    %v3914 = vpop.f32.mrf.mxu0
    %v3915 = vadd.f32 0.0, %v3914
    %3916 = vmatmul.f32.gmra.mxu0 %v3709
    %v3917 = vpop.f32.mrf.mxu0
    %v3918 = vadd.f32 0.0, %v3917
    %3919 = vmatmul.f32.gmra.mxu0 %v3712
    %v3920 = vpop.f32.mrf.mxu0
    %v3921 = vadd.f32 0.0, %v3920
    %3922 = vmatmul.f32.gmra.mxu0 %v3715
    %v3923 = vpop.f32.mrf.mxu0
    %v3924 = vadd.f32 0.0, %v3923
    %3925 = vmatmul.f32.gmra.mxu0 %v3718
    %v3926 = vpop.f32.mrf.mxu0
    %v3927 = vadd.f32 0.0, %v3926
    %3928 = vmatmul.f32.gmra.mxu0 %v3721
    %v3929 = vpop.f32.mrf.mxu0
    %v3930 = vadd.f32 0.0, %v3929
    %3931 = vmatmul.f32.gmra.mxu0 %v3724
    %v3932 = vpop.f32.mrf.mxu0
    %v3933 = vadd.f32 0.0, %v3932
    %3934 = vmatmul.f32.gmra.mxu0 %v3727
    %v3935 = vpop.f32.mrf.mxu0
    %v3936 = vadd.f32 0.0, %v3935
    %3937 = vmatmul.f32.gmra.mxu0 %v3730
    %v3938 = vpop.f32.mrf.mxu0
    %v3939 = vadd.f32 0.0, %v3938
    %3940 = vmatmul.f32.gmra.mxu0 %v3733
    %v3941 = vpop.f32.mrf.mxu0
    %v3942 = vadd.f32 0.0, %v3941
    %3943 = vmatmul.f32.gmra.mxu0 %v3736
    %v3944 = vpop.f32.mrf.mxu0
    %v3945 = vadd.f32 0.0, %v3944
    %3946 = vmatmul.f32.gmra.mxu0 %v3739
    %v3947 = vpop.f32.mrf.mxu0
    %v3948 = vadd.f32 0.0, %v3947
    %3949 = vmatmul.f32.gmra.mxu0 %v3742
    %v3950 = vpop.f32.mrf.mxu0
    %v3951 = vadd.f32 0.0, %v3950
    %3952 = vmatmul.f32.gmra.mxu0 %v3745
    %v3953 = vpop.f32.mrf.mxu0
    %v3954 = vadd.f32 0.0, %v3953
    %3955 = vmatmul.f32.gmra.mxu0 %v3748
    %v3956 = vpop.f32.mrf.mxu0
    %v3957 = vadd.f32 0.0, %v3956
    %3958 = vmatmul.f32.gmra.mxu0 %v3751
    %v3959 = vpop.f32.mrf.mxu0
    %v3960 = vadd.f32 0.0, %v3959
    %3961 = vmatmul.f32.gmra.mxu0 %v3754
    %v3962 = vpop.f32.mrf.mxu0
    %v3963 = vadd.f32 0.0, %v3962
    %3964 = vmatmul.f32.gmra.mxu0 %v3757
    %v3965 = vpop.f32.mrf.mxu0
    %v3966 = vadd.f32 0.0, %v3965
    %3967 = vmatmul.f32.gmra.mxu0 %v3760
    %v3968 = vpop.f32.mrf.mxu0
    %v3969 = vadd.f32 0.0, %v3968
    %3970 = vmatmul.f32.gmra.mxu0 %v3763
    %v3971 = vpop.f32.mrf.mxu0
    %v3972 = vadd.f32 0.0, %v3971
    %3973 = vmatmul.f32.gmra.mxu0 %v3766
    %v3974 = vpop.f32.mrf.mxu0
    %v3975 = vadd.f32 0.0, %v3974
    %3976 = vmatmul.f32.gmra.mxu0 %v3769
    %v3977 = vpop.f32.mrf.mxu0
    %v3978 = vadd.f32 0.0, %v3977
    %3979 = vmatmul.f32.gmra.mxu0 %v3772
    %v3980 = vpop.f32.mrf.mxu0
    %v3981 = vadd.f32 0.0, %v3980
    %3982 = vmatmul.f32.gmra.mxu0 %v3775
    %v3983 = vpop.f32.mrf.mxu0
    %v3984 = vadd.f32 0.0, %v3983
    %3985 = vmatmul.f32.gmra.mxu0 %v3778
    %v3986 = vpop.f32.mrf.mxu0
    %v3987 = vadd.f32 0.0, %v3986
    %3988 = vmatmul.f32.gmra.mxu0 %v3781
    %v3989 = vpop.f32.mrf.mxu0
    %v3990 = vadd.f32 0.0, %v3989
    %3991 = vmatmul.f32.gmra.mxu0 %v3784
    %v3992 = vpop.f32.mrf.mxu0
    %v3993 = vadd.f32 0.0, %v3992
    %3994 = vmatmul.f32.gmra.mxu0 %v3787
    %v3995 = vpop.f32.mrf.mxu0
    %v3996 = vadd.f32 0.0, %v3995
    %3997 = vmatmul.f32.gmra.mxu0 %v3790
    %v3998 = vpop.f32.mrf.mxu0
    %v3999 = vadd.f32 0.0, %v3998
    %4000 = vmatmul.f32.gmra.mxu0 %v3793
    %v4001 = vpop.f32.mrf.mxu0
    %v4002 = vadd.f32 0.0, %v4001
    %4003 = vmatmul.f32.gmra.mxu0 %v3796
    %v4004 = vpop.f32.mrf.mxu0
    %v4005 = vadd.f32 0.0, %v4004
    %4006 = vmatmul.f32.gmra.mxu0 %v3799
    %v4007 = vpop.f32.mrf.mxu0
    %v4008 = vadd.f32 0.0, %v4007
    %4009 = vmatmul.f32.gmra.mxu0 %v3802
    %v4010 = vpop.f32.mrf.mxu0
    %v4011 = vadd.f32 0.0, %v4010
    %4012 = vmatmul.f32.gmra.mxu0 %v3805
    %v4013 = vpop.f32.mrf.mxu0
    %v4014 = vadd.f32 0.0, %v4013
    %4015 = vmatmul.f32.gmra.mxu0 %v3808
    %v4016 = vpop.f32.mrf.mxu0
    %v4017 = vadd.f32 0.0, %v4016
    %4018 = vdwg.mxu0
    %v4019 = vadd.f32 %v3828, %v2301
    %v4020 = vadd.f32 %v3831, %v2302
    %v4021 = vadd.f32 %v3834, %v2303
    %v4022 = vadd.f32 %v3837, %v2304
    %v4023 = vadd.f32 %v3840, %v2305
    %v4024 = vadd.f32 %v3843, %v2306
    %v4025 = vadd.f32 %v3846, %v2307
    %v4026 = vadd.f32 %v3849, %v2308
    %v4027 = vadd.f32 %v3852, %v2309
    %v4028 = vadd.f32 %v3855, %v2310
    %v4029 = vadd.f32 %v3858, %v2311
    %v4030 = vadd.f32 %v3861, %v2312
    %v4031 = vadd.f32 %v3864, %v2313
    %v4032 = vadd.f32 %v3867, %v2314
    %v4033 = vadd.f32 %v3870, %v2315
    %v4034 = vadd.f32 %v3873, %v2316
    %v4035 = vadd.f32 %v3876, %v2317
    %v4036 = vadd.f32 %v3879, %v2318
    %v4037 = vadd.f32 %v3882, %v2319
    %v4038 = vadd.f32 %v3885, %v2320
    %v4039 = vadd.f32 %v3888, %v2321
    %v4040 = vadd.f32 %v3891, %v2322
    %v4041 = vadd.f32 %v3894, %v2323
    %v4042 = vadd.f32 %v3897, %v2324
    %v4043 = vadd.f32 %v3900, %v2325
    %v4044 = vadd.f32 %v3903, %v2326
    %v4045 = vadd.f32 %v3906, %v2327
    %v4046 = vadd.f32 %v3909, %v2328
    %v4047 = vadd.f32 %v3912, %v2329
    %v4048 = vadd.f32 %v3915, %v2330
    %v4049 = vadd.f32 %v3918, %v2331
    %v4050 = vadd.f32 %v3921, %v2332
    %v4051 = vadd.f32 %v3924, %v2333
    %v4052 = vadd.f32 %v3927, %v2334
    %v4053 = vadd.f32 %v3930, %v2335
    %v4054 = vadd.f32 %v3933, %v2336
    %v4055 = vadd.f32 %v3936, %v2337
    %v4056 = vadd.f32 %v3939, %v2338
    %v4057 = vadd.f32 %v3942, %v2339
    %v4058 = vadd.f32 %v3945, %v2340
    %v4059 = vadd.f32 %v3948, %v2341
    %v4060 = vadd.f32 %v3951, %v2342
    %v4061 = vadd.f32 %v3954, %v2343
    %v4062 = vadd.f32 %v3957, %v2344
    %v4063 = vadd.f32 %v3960, %v2345
    %v4064 = vadd.f32 %v3963, %v2346
    %v4065 = vadd.f32 %v3966, %v2347
    %v4066 = vadd.f32 %v3969, %v2348
    %v4067 = vadd.f32 %v3972, %v2349
    %v4068 = vadd.f32 %v3975, %v2350
    %v4069 = vadd.f32 %v3978, %v2351
    %v4070 = vadd.f32 %v3981, %v2352
    %v4071 = vadd.f32 %v3984, %v2353
    %v4072 = vadd.f32 %v3987, %v2354
    %v4073 = vadd.f32 %v3990, %v2355
    %v4074 = vadd.f32 %v3993, %v2356
    %v4075 = vadd.f32 %v3996, %v2357
    %v4076 = vadd.f32 %v3999, %v2358
    %v4077 = vadd.f32 %v4002, %v2359
    %v4078 = vadd.f32 %v4005, %v2360
    %v4079 = vadd.f32 %v4008, %v2361
    %v4080 = vadd.f32 %v4011, %v2362
    %v4081 = vadd.f32 %v4014, %v2363
    %v4082 = vadd.f32 %v4017, %v2364
    %v4083 = vsel %vm1592, %v4019, -inf
    %v4084 = vsel %vm1592, %v4020, -inf
    %v4085 = vmax.f32 %v4083, %v4084
    %v4086 = vrot.slane %v4085, 4
    %v4087 = vmax.f32 %v4085, %v4086
    %v4088 = vrot.slane %v4087, 2
    %v4089 = vmax.f32 %v4087, %v4088
    %v4090 = vrot.slane %v4089, 1
    %v4091 = vmax.f32 %v4089, %v4090
    %v4092 = vsel %vm1592, %v4021, -inf
    %v4093 = vsel %vm1592, %v4022, -inf
    %v4094 = vmax.f32 %v4092, %v4093
    %v4095 = vrot.slane %v4094, 4
    %v4096 = vmax.f32 %v4094, %v4095
    %v4097 = vrot.slane %v4096, 2
    %v4098 = vmax.f32 %v4096, %v4097
    %v4099 = vrot.slane %v4098, 1
    %v4100 = vmax.f32 %v4098, %v4099
    %v4101 = vsel %vm1592, %v4023, -inf
    %v4102 = vsel %vm1592, %v4024, -inf
    %v4103 = vmax.f32 %v4101, %v4102
    %v4104 = vrot.slane %v4103, 4
    %v4105 = vmax.f32 %v4103, %v4104
    %v4106 = vrot.slane %v4105, 2
    %v4107 = vmax.f32 %v4105, %v4106
    %v4108 = vrot.slane %v4107, 1
    %v4109 = vmax.f32 %v4107, %v4108
    %v4110 = vsel %vm1592, %v4025, -inf
    %v4111 = vsel %vm1592, %v4026, -inf
    %v4112 = vmax.f32 %v4110, %v4111
    %v4113 = vrot.slane %v4112, 4
    %v4114 = vmax.f32 %v4112, %v4113
    %v4115 = vrot.slane %v4114, 2
    %v4116 = vmax.f32 %v4114, %v4115
    %v4117 = vrot.slane %v4116, 1
    %v4118 = vmax.f32 %v4116, %v4117
    %v4119 = vsel %vm1592, %v4027, -inf
    %v4120 = vsel %vm1592, %v4028, -inf
    %v4121 = vmax.f32 %v4119, %v4120
    %v4122 = vrot.slane %v4121, 4
    %v4123 = vmax.f32 %v4121, %v4122
    %v4124 = vrot.slane %v4123, 2
    %v4125 = vmax.f32 %v4123, %v4124
    %v4126 = vrot.slane %v4125, 1
    %v4127 = vmax.f32 %v4125, %v4126
    %v4128 = vsel %vm1592, %v4029, -inf
    %v4129 = vsel %vm1592, %v4030, -inf
    %v4130 = vmax.f32 %v4128, %v4129
    %v4131 = vrot.slane %v4130, 4
    %v4132 = vmax.f32 %v4130, %v4131
    %v4133 = vrot.slane %v4132, 2
    %v4134 = vmax.f32 %v4132, %v4133
    %v4135 = vrot.slane %v4134, 1
    %v4136 = vmax.f32 %v4134, %v4135
    %v4137 = vsel %vm1592, %v4031, -inf
    %v4138 = vsel %vm1592, %v4032, -inf
    %v4139 = vmax.f32 %v4137, %v4138
    %v4140 = vrot.slane %v4139, 4
    %v4141 = vmax.f32 %v4139, %v4140
    %v4142 = vrot.slane %v4141, 2
    %v4143 = vmax.f32 %v4141, %v4142
    %v4144 = vrot.slane %v4143, 1
    %v4145 = vmax.f32 %v4143, %v4144
    %v4146 = vsel %vm1592, %v4033, -inf
    %v4147 = vsel %vm1592, %v4034, -inf
    %v4148 = vmax.f32 %v4146, %v4147
    %v4149 = vrot.slane %v4148, 4
    %v4150 = vmax.f32 %v4148, %v4149
    %v4151 = vrot.slane %v4150, 2
    %v4152 = vmax.f32 %v4150, %v4151
    %v4153 = vrot.slane %v4152, 1
    %v4154 = vmax.f32 %v4152, %v4153
    %v4155 = vsel %vm1592, %v4035, -inf
    %v4156 = vsel %vm1592, %v4036, -inf
    %v4157 = vmax.f32 %v4155, %v4156
    %v4158 = vrot.slane %v4157, 4
    %v4159 = vmax.f32 %v4157, %v4158
    %v4160 = vrot.slane %v4159, 2
    %v4161 = vmax.f32 %v4159, %v4160
    %v4162 = vrot.slane %v4161, 1
    %v4163 = vmax.f32 %v4161, %v4162
    %v4164 = vsel %vm1592, %v4037, -inf
    %v4165 = vsel %vm1592, %v4038, -inf
    %v4166 = vmax.f32 %v4164, %v4165
    %v4167 = vrot.slane %v4166, 4
    %v4168 = vmax.f32 %v4166, %v4167
    %v4169 = vrot.slane %v4168, 2
    %v4170 = vmax.f32 %v4168, %v4169
    %v4171 = vrot.slane %v4170, 1
    %v4172 = vmax.f32 %v4170, %v4171
    %v4173 = vsel %vm1592, %v4039, -inf
    %v4174 = vsel %vm1592, %v4040, -inf
    %v4175 = vmax.f32 %v4173, %v4174
    %v4176 = vrot.slane %v4175, 4
    %v4177 = vmax.f32 %v4175, %v4176
    %v4178 = vrot.slane %v4177, 2
    %v4179 = vmax.f32 %v4177, %v4178
    %v4180 = vrot.slane %v4179, 1
    %v4181 = vmax.f32 %v4179, %v4180
    %v4182 = vsel %vm1592, %v4041, -inf
    %v4183 = vsel %vm1592, %v4042, -inf
    %v4184 = vmax.f32 %v4182, %v4183
    %v4185 = vrot.slane %v4184, 4
    %v4186 = vmax.f32 %v4184, %v4185
    %v4187 = vrot.slane %v4186, 2
    %v4188 = vmax.f32 %v4186, %v4187
    %v4189 = vrot.slane %v4188, 1
    %v4190 = vmax.f32 %v4188, %v4189
    %v4191 = vsel %vm1592, %v4043, -inf
    %v4192 = vsel %vm1592, %v4044, -inf
    %v4193 = vmax.f32 %v4191, %v4192
    %v4194 = vrot.slane %v4193, 4
    %v4195 = vmax.f32 %v4193, %v4194
    %v4196 = vrot.slane %v4195, 2
    %v4197 = vmax.f32 %v4195, %v4196
    %v4198 = vrot.slane %v4197, 1
    %v4199 = vmax.f32 %v4197, %v4198
    %v4200 = vsel %vm1592, %v4045, -inf
    %v4201 = vsel %vm1592, %v4046, -inf
    %v4202 = vmax.f32 %v4200, %v4201
    %v4203 = vrot.slane %v4202, 4
    %v4204 = vmax.f32 %v4202, %v4203
    %v4205 = vrot.slane %v4204, 2
    %v4206 = vmax.f32 %v4204, %v4205
    %v4207 = vrot.slane %v4206, 1
    %v4208 = vmax.f32 %v4206, %v4207
    %v4209 = vsel %vm1592, %v4047, -inf
    %v4210 = vsel %vm1592, %v4048, -inf
    %v4211 = vmax.f32 %v4209, %v4210
    %v4212 = vrot.slane %v4211, 4
    %v4213 = vmax.f32 %v4211, %v4212
    %v4214 = vrot.slane %v4213, 2
    %v4215 = vmax.f32 %v4213, %v4214
    %v4216 = vrot.slane %v4215, 1
    %v4217 = vmax.f32 %v4215, %v4216
    %v4218 = vsel %vm1592, %v4049, -inf
    %v4219 = vsel %vm1592, %v4050, -inf
    %v4220 = vmax.f32 %v4218, %v4219
    %v4221 = vrot.slane %v4220, 4
    %v4222 = vmax.f32 %v4220, %v4221
    %v4223 = vrot.slane %v4222, 2
    %v4224 = vmax.f32 %v4222, %v4223
    %v4225 = vrot.slane %v4224, 1
    %v4226 = vmax.f32 %v4224, %v4225
    %v4227 = vsel %vm1592, %v4051, -inf
    %v4228 = vsel %vm1592, %v4052, -inf
    %v4229 = vmax.f32 %v4227, %v4228
    %v4230 = vrot.slane %v4229, 4
    %v4231 = vmax.f32 %v4229, %v4230
    %v4232 = vrot.slane %v4231, 2
    %v4233 = vmax.f32 %v4231, %v4232
    %v4234 = vrot.slane %v4233, 1
    %v4235 = vmax.f32 %v4233, %v4234
    %v4236 = vsel %vm1592, %v4053, -inf
    %v4237 = vsel %vm1592, %v4054, -inf
    %v4238 = vmax.f32 %v4236, %v4237
    %v4239 = vrot.slane %v4238, 4
    %v4240 = vmax.f32 %v4238, %v4239
    %v4241 = vrot.slane %v4240, 2
    %v4242 = vmax.f32 %v4240, %v4241
    %v4243 = vrot.slane %v4242, 1
    %v4244 = vmax.f32 %v4242, %v4243
    %v4245 = vsel %vm1592, %v4055, -inf
    %v4246 = vsel %vm1592, %v4056, -inf
    %v4247 = vmax.f32 %v4245, %v4246
    %v4248 = vrot.slane %v4247, 4
    %v4249 = vmax.f32 %v4247, %v4248
    %v4250 = vrot.slane %v4249, 2
    %v4251 = vmax.f32 %v4249, %v4250
    %v4252 = vrot.slane %v4251, 1
    %v4253 = vmax.f32 %v4251, %v4252
    %v4254 = vsel %vm1592, %v4057, -inf
    %v4255 = vsel %vm1592, %v4058, -inf
    %v4256 = vmax.f32 %v4254, %v4255
    %v4257 = vrot.slane %v4256, 4
    %v4258 = vmax.f32 %v4256, %v4257
    %v4259 = vrot.slane %v4258, 2
    %v4260 = vmax.f32 %v4258, %v4259
    %v4261 = vrot.slane %v4260, 1
    %v4262 = vmax.f32 %v4260, %v4261
    %v4263 = vsel %vm1592, %v4059, -inf
    %v4264 = vsel %vm1592, %v4060, -inf
    %v4265 = vmax.f32 %v4263, %v4264
    %v4266 = vrot.slane %v4265, 4
    %v4267 = vmax.f32 %v4265, %v4266
    %v4268 = vrot.slane %v4267, 2
    %v4269 = vmax.f32 %v4267, %v4268
    %v4270 = vrot.slane %v4269, 1
    %v4271 = vmax.f32 %v4269, %v4270
    %v4272 = vsel %vm1592, %v4061, -inf
    %v4273 = vsel %vm1592, %v4062, -inf
    %v4274 = vmax.f32 %v4272, %v4273
    %v4275 = vrot.slane %v4274, 4
    %v4276 = vmax.f32 %v4274, %v4275
    %v4277 = vrot.slane %v4276, 2
    %v4278 = vmax.f32 %v4276, %v4277
    %v4279 = vrot.slane %v4278, 1
    %v4280 = vmax.f32 %v4278, %v4279
    %v4281 = vsel %vm1592, %v4063, -inf
    %v4282 = vsel %vm1592, %v4064, -inf
    %v4283 = vmax.f32 %v4281, %v4282
    %v4284 = vrot.slane %v4283, 4
    %v4285 = vmax.f32 %v4283, %v4284
    %v4286 = vrot.slane %v4285, 2
    %v4287 = vmax.f32 %v4285, %v4286
    %v4288 = vrot.slane %v4287, 1
    %v4289 = vmax.f32 %v4287, %v4288
    %v4290 = vsel %vm1592, %v4065, -inf
    %v4291 = vsel %vm1592, %v4066, -inf
    %v4292 = vmax.f32 %v4290, %v4291
    %v4293 = vrot.slane %v4292, 4
    %v4294 = vmax.f32 %v4292, %v4293
    %v4295 = vrot.slane %v4294, 2
    %v4296 = vmax.f32 %v4294, %v4295
    %v4297 = vrot.slane %v4296, 1
    %v4298 = vmax.f32 %v4296, %v4297
    %v4299 = vsel %vm1592, %v4067, -inf
    %v4300 = vsel %vm1592, %v4068, -inf
    %v4301 = vmax.f32 %v4299, %v4300
    %v4302 = vrot.slane %v4301, 4
    %v4303 = vmax.f32 %v4301, %v4302
    %v4304 = vrot.slane %v4303, 2
    %v4305 = vmax.f32 %v4303, %v4304
    %v4306 = vrot.slane %v4305, 1
    %v4307 = vmax.f32 %v4305, %v4306
    %v4308 = vsel %vm1592, %v4069, -inf
    %v4309 = vsel %vm1592, %v4070, -inf
    %v4310 = vmax.f32 %v4308, %v4309
    %v4311 = vrot.slane %v4310, 4
    %v4312 = vmax.f32 %v4310, %v4311
    %v4313 = vrot.slane %v4312, 2
    %v4314 = vmax.f32 %v4312, %v4313
    %v4315 = vrot.slane %v4314, 1
    %v4316 = vmax.f32 %v4314, %v4315
    %v4317 = vsel %vm1592, %v4071, -inf
    %v4318 = vsel %vm1592, %v4072, -inf
    %v4319 = vmax.f32 %v4317, %v4318
    %v4320 = vrot.slane %v4319, 4
    %v4321 = vmax.f32 %v4319, %v4320
    %v4322 = vrot.slane %v4321, 2
    %v4323 = vmax.f32 %v4321, %v4322
    %v4324 = vrot.slane %v4323, 1
    %v4325 = vmax.f32 %v4323, %v4324
    %v4326 = vsel %vm1592, %v4073, -inf
    %v4327 = vsel %vm1592, %v4074, -inf
    %v4328 = vmax.f32 %v4326, %v4327
    %v4329 = vrot.slane %v4328, 4
    %v4330 = vmax.f32 %v4328, %v4329
    %v4331 = vrot.slane %v4330, 2
    %v4332 = vmax.f32 %v4330, %v4331
    %v4333 = vrot.slane %v4332, 1
    %v4334 = vmax.f32 %v4332, %v4333
    %v4335 = vsel %vm1592, %v4075, -inf
    %v4336 = vsel %vm1592, %v4076, -inf
    %v4337 = vmax.f32 %v4335, %v4336
    %v4338 = vrot.slane %v4337, 4
    %v4339 = vmax.f32 %v4337, %v4338
    %v4340 = vrot.slane %v4339, 2
    %v4341 = vmax.f32 %v4339, %v4340
    %v4342 = vrot.slane %v4341, 1
    %v4343 = vmax.f32 %v4341, %v4342
    %v4344 = vsel %vm1592, %v4077, -inf
    %v4345 = vsel %vm1592, %v4078, -inf
    %v4346 = vmax.f32 %v4344, %v4345
    %v4347 = vrot.slane %v4346, 4
    %v4348 = vmax.f32 %v4346, %v4347
    %v4349 = vrot.slane %v4348, 2
    %v4350 = vmax.f32 %v4348, %v4349
    %v4351 = vrot.slane %v4350, 1
    %v4352 = vmax.f32 %v4350, %v4351
    %v4353 = vsel %vm1592, %v4079, -inf
    %v4354 = vsel %vm1592, %v4080, -inf
    %v4355 = vmax.f32 %v4353, %v4354
    %v4356 = vrot.slane %v4355, 4
    %v4357 = vmax.f32 %v4355, %v4356
    %v4358 = vrot.slane %v4357, 2
    %v4359 = vmax.f32 %v4357, %v4358
    %v4360 = vrot.slane %v4359, 1
    %v4361 = vmax.f32 %v4359, %v4360
    %v4362 = vsel %vm1592, %v4081, -inf
    %v4363 = vsel %vm1592, %v4082, -inf
    %v4364 = vmax.f32 %v4362, %v4363
    %v4365 = vrot.slane %v4364, 4
    %v4366 = vmax.f32 %v4364, %v4365
    %v4367 = vrot.slane %v4366, 2
    %v4368 = vmax.f32 %v4366, %v4367
    %v4369 = vrot.slane %v4368, 1
    %v4370 = vmax.f32 %v4368, %v4369
    %v4371 = vsub.f32 %v4019, %v4091
    %v4372 = vsub.f32 %v4020, %v4091
    %v4373 = vsub.f32 %v4021, %v4100
    %v4374 = vsub.f32 %v4022, %v4100
    %v4375 = vsub.f32 %v4023, %v4109
    %v4376 = vsub.f32 %v4024, %v4109
    %v4377 = vsub.f32 %v4025, %v4118
    %v4378 = vsub.f32 %v4026, %v4118
    %v4379 = vsub.f32 %v4027, %v4127
    %v4380 = vsub.f32 %v4028, %v4127
    %v4381 = vsub.f32 %v4029, %v4136
    %v4382 = vsub.f32 %v4030, %v4136
    %v4383 = vsub.f32 %v4031, %v4145
    %v4384 = vsub.f32 %v4032, %v4145
    %v4385 = vsub.f32 %v4033, %v4154
    %v4386 = vsub.f32 %v4034, %v4154
    %v4387 = vsub.f32 %v4035, %v4163
    %v4388 = vsub.f32 %v4036, %v4163
    %v4389 = vsub.f32 %v4037, %v4172
    %v4390 = vsub.f32 %v4038, %v4172
    %v4391 = vsub.f32 %v4039, %v4181
    %v4392 = vsub.f32 %v4040, %v4181
    %v4393 = vsub.f32 %v4041, %v4190
    %v4394 = vsub.f32 %v4042, %v4190
    %v4395 = vsub.f32 %v4043, %v4199
    %v4396 = vsub.f32 %v4044, %v4199
    %v4397 = vsub.f32 %v4045, %v4208
    %v4398 = vsub.f32 %v4046, %v4208
    %v4399 = vsub.f32 %v4047, %v4217
    %v4400 = vsub.f32 %v4048, %v4217
    %v4401 = vsub.f32 %v4049, %v4226
    %v4402 = vsub.f32 %v4050, %v4226
    %v4403 = vsub.f32 %v4051, %v4235
    %v4404 = vsub.f32 %v4052, %v4235
    %v4405 = vsub.f32 %v4053, %v4244
    %v4406 = vsub.f32 %v4054, %v4244
    %v4407 = vsub.f32 %v4055, %v4253
    %v4408 = vsub.f32 %v4056, %v4253
    %v4409 = vsub.f32 %v4057, %v4262
    %v4410 = vsub.f32 %v4058, %v4262
    %v4411 = vsub.f32 %v4059, %v4271
    %v4412 = vsub.f32 %v4060, %v4271
    %v4413 = vsub.f32 %v4061, %v4280
    %v4414 = vsub.f32 %v4062, %v4280
    %v4415 = vsub.f32 %v4063, %v4289
    %v4416 = vsub.f32 %v4064, %v4289
    %v4417 = vsub.f32 %v4065, %v4298
    %v4418 = vsub.f32 %v4066, %v4298
    %v4419 = vsub.f32 %v4067, %v4307
    %v4420 = vsub.f32 %v4068, %v4307
    %v4421 = vsub.f32 %v4069, %v4316
    %v4422 = vsub.f32 %v4070, %v4316
    %v4423 = vsub.f32 %v4071, %v4325
    %v4424 = vsub.f32 %v4072, %v4325
    %v4425 = vsub.f32 %v4073, %v4334
    %v4426 = vsub.f32 %v4074, %v4334
    %v4427 = vsub.f32 %v4075, %v4343
    %v4428 = vsub.f32 %v4076, %v4343
    %v4429 = vsub.f32 %v4077, %v4352
    %v4430 = vsub.f32 %v4078, %v4352
    %v4431 = vsub.f32 %v4079, %v4361
    %v4432 = vsub.f32 %v4080, %v4361
    %v4433 = vsub.f32 %v4081, %v4370
    %v4434 = vsub.f32 %v4082, %v4370
    %v4435 = vmul.f32 %v4371, 1.442695
    %v4436 = vpow.pop %v4435
    %v4437 = vmul.f32 %v4372, 1.442695
    %v4438 = vpow.pop %v4437
    %v4439 = vmul.f32 %v4373, 1.442695
    %v4440 = vpow.pop %v4439
    %v4441 = vmul.f32 %v4374, 1.442695
    %v4442 = vpow.pop %v4441
    %v4443 = vmul.f32 %v4375, 1.442695
    %v4444 = vpow.pop %v4443
    %v4445 = vmul.f32 %v4376, 1.442695
    %v4446 = vpow.pop %v4445
    %v4447 = vmul.f32 %v4377, 1.442695
    %v4448 = vpow.pop %v4447
    %v4449 = vmul.f32 %v4378, 1.442695
    %v4450 = vpow.pop %v4449
    %v4451 = vmul.f32 %v4379, 1.442695
    %v4452 = vpow.pop %v4451
    %v4453 = vmul.f32 %v4380, 1.442695
    %v4454 = vpow.pop %v4453
    %v4455 = vmul.f32 %v4381, 1.442695
    %v4456 = vpow.pop %v4455
    %v4457 = vmul.f32 %v4382, 1.442695
    %v4458 = vpow.pop %v4457
    %v4459 = vmul.f32 %v4383, 1.442695
    %v4460 = vpow.pop %v4459
    %v4461 = vmul.f32 %v4384, 1.442695
    %v4462 = vpow.pop %v4461
    %v4463 = vmul.f32 %v4385, 1.442695
    %v4464 = vpow.pop %v4463
    %v4465 = vmul.f32 %v4386, 1.442695
    %v4466 = vpow.pop %v4465
    %v4467 = vmul.f32 %v4387, 1.442695
    %v4468 = vpow.pop %v4467
    %v4469 = vmul.f32 %v4388, 1.442695
    %v4470 = vpow.pop %v4469
    %v4471 = vmul.f32 %v4389, 1.442695
    %v4472 = vpow.pop %v4471
    %v4473 = vmul.f32 %v4390, 1.442695
    %v4474 = vpow.pop %v4473
    %v4475 = vmul.f32 %v4391, 1.442695
    %v4476 = vpow.pop %v4475
    %v4477 = vmul.f32 %v4392, 1.442695
    %v4478 = vpow.pop %v4477
    %v4479 = vmul.f32 %v4393, 1.442695
    %v4480 = vpow.pop %v4479
    %v4481 = vmul.f32 %v4394, 1.442695
    %v4482 = vpow.pop %v4481
    %v4483 = vmul.f32 %v4395, 1.442695
    %v4484 = vpow.pop %v4483
    %v4485 = vmul.f32 %v4396, 1.442695
    %v4486 = vpow.pop %v4485
    %v4487 = vmul.f32 %v4397, 1.442695
    %v4488 = vpow.pop %v4487
    %v4489 = vmul.f32 %v4398, 1.442695
    %v4490 = vpow.pop %v4489
    %v4491 = vmul.f32 %v4399, 1.442695
    %v4492 = vpow.pop %v4491
    %v4493 = vmul.f32 %v4400, 1.442695
    %v4494 = vpow.pop %v4493
    %v4495 = vmul.f32 %v4401, 1.442695
    %v4496 = vpow.pop %v4495
    %v4497 = vmul.f32 %v4402, 1.442695
    %v4498 = vpow.pop %v4497
    %v4499 = vmul.f32 %v4403, 1.442695
    %v4500 = vpow.pop %v4499
    %v4501 = vmul.f32 %v4404, 1.442695
    %v4502 = vpow.pop %v4501
    %v4503 = vmul.f32 %v4405, 1.442695
    %v4504 = vpow.pop %v4503
    %v4505 = vmul.f32 %v4406, 1.442695
    %v4506 = vpow.pop %v4505
    %v4507 = vmul.f32 %v4407, 1.442695
    %v4508 = vpow.pop %v4507
    %v4509 = vmul.f32 %v4408, 1.442695
    %v4510 = vpow.pop %v4509
    %v4511 = vmul.f32 %v4409, 1.442695
    %v4512 = vpow.pop %v4511
    %v4513 = vmul.f32 %v4410, 1.442695
    %v4514 = vpow.pop %v4513
    %v4515 = vmul.f32 %v4411, 1.442695
    %v4516 = vpow.pop %v4515
    %v4517 = vmul.f32 %v4412, 1.442695
    %v4518 = vpow.pop %v4517
    %v4519 = vmul.f32 %v4413, 1.442695
    %v4520 = vpow.pop %v4519
    %v4521 = vmul.f32 %v4414, 1.442695
    %v4522 = vpow.pop %v4521
    %v4523 = vmul.f32 %v4415, 1.442695
    %v4524 = vpow.pop %v4523
    %v4525 = vmul.f32 %v4416, 1.442695
    %v4526 = vpow.pop %v4525
    %v4527 = vmul.f32 %v4417, 1.442695
    %v4528 = vpow.pop %v4527
    %v4529 = vmul.f32 %v4418, 1.442695
    %v4530 = vpow.pop %v4529
    %v4531 = vmul.f32 %v4419, 1.442695
    %v4532 = vpow.pop %v4531
    %v4533 = vmul.f32 %v4420, 1.442695
    %v4534 = vpow.pop %v4533
    %v4535 = vmul.f32 %v4421, 1.442695
    %v4536 = vpow.pop %v4535
    %v4537 = vmul.f32 %v4422, 1.442695
    %v4538 = vpow.pop %v4537
    %v4539 = vmul.f32 %v4423, 1.442695
    %v4540 = vpow.pop %v4539
    %v4541 = vmul.f32 %v4424, 1.442695
    %v4542 = vpow.pop %v4541
    %v4543 = vmul.f32 %v4425, 1.442695
    %v4544 = vpow.pop %v4543
    %v4545 = vmul.f32 %v4426, 1.442695
    %v4546 = vpow.pop %v4545
    %v4547 = vmul.f32 %v4427, 1.442695
    %v4548 = vpow.pop %v4547
    %v4549 = vmul.f32 %v4428, 1.442695
    %v4550 = vpow.pop %v4549
    %v4551 = vmul.f32 %v4429, 1.442695
    %v4552 = vpow.pop %v4551
    %v4553 = vmul.f32 %v4430, 1.442695
    %v4554 = vpow.pop %v4553
    %v4555 = vmul.f32 %v4431, 1.442695
    %v4556 = vpow.pop %v4555
    %v4557 = vmul.f32 %v4432, 1.442695
    %v4558 = vpow.pop %v4557
    %v4559 = vmul.f32 %v4433, 1.442695
    %v4560 = vpow.pop %v4559
    %v4561 = vmul.f32 %v4434, 1.442695
    %v4562 = vpow.pop %v4561
    %v4563 = vsel %vm1592, %v4436, 0.0
    %v4564 = vsel %vm1592, %v4438, 0.0
    %v4565 = vadd.f32 %v4563, %v4564
    %v4566 = vrot.slane %v4565, 4
    %v4567 = vadd.f32 %v4565, %v4566
    %v4568 = vrot.slane %v4567, 2
    %v4569 = vadd.f32 %v4567, %v4568
    %v4570 = vrot.slane %v4569, 1
    %v4571 = vadd.f32 %v4569, %v4570
    %v4572 = vsel %vm1592, %v4440, 0.0
    %v4573 = vsel %vm1592, %v4442, 0.0
    %v4574 = vadd.f32 %v4572, %v4573
    %v4575 = vrot.slane %v4574, 4
    %v4576 = vadd.f32 %v4574, %v4575
    %v4577 = vrot.slane %v4576, 2
    %v4578 = vadd.f32 %v4576, %v4577
    %v4579 = vrot.slane %v4578, 1
    %v4580 = vadd.f32 %v4578, %v4579
    %v4581 = vsel %vm1592, %v4444, 0.0
    %v4582 = vsel %vm1592, %v4446, 0.0
    %v4583 = vadd.f32 %v4581, %v4582
    %v4584 = vrot.slane %v4583, 4
    %v4585 = vadd.f32 %v4583, %v4584
    %v4586 = vrot.slane %v4585, 2
    %v4587 = vadd.f32 %v4585, %v4586
    %v4588 = vrot.slane %v4587, 1
    %v4589 = vadd.f32 %v4587, %v4588
    %v4590 = vsel %vm1592, %v4448, 0.0
    %v4591 = vsel %vm1592, %v4450, 0.0
    %v4592 = vadd.f32 %v4590, %v4591
    %v4593 = vrot.slane %v4592, 4
    %v4594 = vadd.f32 %v4592, %v4593
    %v4595 = vrot.slane %v4594, 2
    %v4596 = vadd.f32 %v4594, %v4595
    %v4597 = vrot.slane %v4596, 1
    %v4598 = vadd.f32 %v4596, %v4597
    %v4599 = vsel %vm1592, %v4452, 0.0
    %v4600 = vsel %vm1592, %v4454, 0.0
    %v4601 = vadd.f32 %v4599, %v4600
    %v4602 = vrot.slane %v4601, 4
    %v4603 = vadd.f32 %v4601, %v4602
    %v4604 = vrot.slane %v4603, 2
    %v4605 = vadd.f32 %v4603, %v4604
    %v4606 = vrot.slane %v4605, 1
    %v4607 = vadd.f32 %v4605, %v4606
    %v4608 = vsel %vm1592, %v4456, 0.0
    %v4609 = vsel %vm1592, %v4458, 0.0
    %v4610 = vadd.f32 %v4608, %v4609
    %v4611 = vrot.slane %v4610, 4
    %v4612 = vadd.f32 %v4610, %v4611
    %v4613 = vrot.slane %v4612, 2
    %v4614 = vadd.f32 %v4612, %v4613
    %v4615 = vrot.slane %v4614, 1
    %v4616 = vadd.f32 %v4614, %v4615
    %v4617 = vsel %vm1592, %v4460, 0.0
    %v4618 = vsel %vm1592, %v4462, 0.0
    %v4619 = vadd.f32 %v4617, %v4618
    %v4620 = vrot.slane %v4619, 4
    %v4621 = vadd.f32 %v4619, %v4620
    %v4622 = vrot.slane %v4621, 2
    %v4623 = vadd.f32 %v4621, %v4622
    %v4624 = vrot.slane %v4623, 1
    %v4625 = vadd.f32 %v4623, %v4624
    %v4626 = vsel %vm1592, %v4464, 0.0
    %v4627 = vsel %vm1592, %v4466, 0.0
    %v4628 = vadd.f32 %v4626, %v4627
    %v4629 = vrot.slane %v4628, 4
    %v4630 = vadd.f32 %v4628, %v4629
    %v4631 = vrot.slane %v4630, 2
    %v4632 = vadd.f32 %v4630, %v4631
    %v4633 = vrot.slane %v4632, 1
    %v4634 = vadd.f32 %v4632, %v4633
    %v4635 = vsel %vm1592, %v4468, 0.0
    %v4636 = vsel %vm1592, %v4470, 0.0
    %v4637 = vadd.f32 %v4635, %v4636
    %v4638 = vrot.slane %v4637, 4
    %v4639 = vadd.f32 %v4637, %v4638
    %v4640 = vrot.slane %v4639, 2
    %v4641 = vadd.f32 %v4639, %v4640
    %v4642 = vrot.slane %v4641, 1
    %v4643 = vadd.f32 %v4641, %v4642
    %v4644 = vsel %vm1592, %v4472, 0.0
    %v4645 = vsel %vm1592, %v4474, 0.0
    %v4646 = vadd.f32 %v4644, %v4645
    %v4647 = vrot.slane %v4646, 4
    %v4648 = vadd.f32 %v4646, %v4647
    %v4649 = vrot.slane %v4648, 2
    %v4650 = vadd.f32 %v4648, %v4649
    %v4651 = vrot.slane %v4650, 1
    %v4652 = vadd.f32 %v4650, %v4651
    %v4653 = vsel %vm1592, %v4476, 0.0
    %v4654 = vsel %vm1592, %v4478, 0.0
    %v4655 = vadd.f32 %v4653, %v4654
    %v4656 = vrot.slane %v4655, 4
    %v4657 = vadd.f32 %v4655, %v4656
    %v4658 = vrot.slane %v4657, 2
    %v4659 = vadd.f32 %v4657, %v4658
    %v4660 = vrot.slane %v4659, 1
    %v4661 = vadd.f32 %v4659, %v4660
    %v4662 = vsel %vm1592, %v4480, 0.0
    %v4663 = vsel %vm1592, %v4482, 0.0
    %v4664 = vadd.f32 %v4662, %v4663
    %v4665 = vrot.slane %v4664, 4
    %v4666 = vadd.f32 %v4664, %v4665
    %v4667 = vrot.slane %v4666, 2
    %v4668 = vadd.f32 %v4666, %v4667
    %v4669 = vrot.slane %v4668, 1
    %v4670 = vadd.f32 %v4668, %v4669
    %v4671 = vsel %vm1592, %v4484, 0.0
    %v4672 = vsel %vm1592, %v4486, 0.0
    %v4673 = vadd.f32 %v4671, %v4672
    %v4674 = vrot.slane %v4673, 4
    %v4675 = vadd.f32 %v4673, %v4674
    %v4676 = vrot.slane %v4675, 2
    %v4677 = vadd.f32 %v4675, %v4676
    %v4678 = vrot.slane %v4677, 1
    %v4679 = vadd.f32 %v4677, %v4678
    %v4680 = vsel %vm1592, %v4488, 0.0
    %v4681 = vsel %vm1592, %v4490, 0.0
    %v4682 = vadd.f32 %v4680, %v4681
    %v4683 = vrot.slane %v4682, 4
    %v4684 = vadd.f32 %v4682, %v4683
    %v4685 = vrot.slane %v4684, 2
    %v4686 = vadd.f32 %v4684, %v4685
    %v4687 = vrot.slane %v4686, 1
    %v4688 = vadd.f32 %v4686, %v4687
    %v4689 = vsel %vm1592, %v4492, 0.0
    %v4690 = vsel %vm1592, %v4494, 0.0
    %v4691 = vadd.f32 %v4689, %v4690
    %v4692 = vrot.slane %v4691, 4
    %v4693 = vadd.f32 %v4691, %v4692
    %v4694 = vrot.slane %v4693, 2
    %v4695 = vadd.f32 %v4693, %v4694
    %v4696 = vrot.slane %v4695, 1
    %v4697 = vadd.f32 %v4695, %v4696
    %v4698 = vsel %vm1592, %v4496, 0.0
    %v4699 = vsel %vm1592, %v4498, 0.0
    %v4700 = vadd.f32 %v4698, %v4699
    %v4701 = vrot.slane %v4700, 4
    %v4702 = vadd.f32 %v4700, %v4701
    %v4703 = vrot.slane %v4702, 2
    %v4704 = vadd.f32 %v4702, %v4703
    %v4705 = vrot.slane %v4704, 1
    %v4706 = vadd.f32 %v4704, %v4705
    %v4707 = vsel %vm1592, %v4500, 0.0
    %v4708 = vsel %vm1592, %v4502, 0.0
    %v4709 = vadd.f32 %v4707, %v4708
    %v4710 = vrot.slane %v4709, 4
    %v4711 = vadd.f32 %v4709, %v4710
    %v4712 = vrot.slane %v4711, 2
    %v4713 = vadd.f32 %v4711, %v4712
    %v4714 = vrot.slane %v4713, 1
    %v4715 = vadd.f32 %v4713, %v4714
    %v4716 = vsel %vm1592, %v4504, 0.0
    %v4717 = vsel %vm1592, %v4506, 0.0
    %v4718 = vadd.f32 %v4716, %v4717
    %v4719 = vrot.slane %v4718, 4
    %v4720 = vadd.f32 %v4718, %v4719
    %v4721 = vrot.slane %v4720, 2
    %v4722 = vadd.f32 %v4720, %v4721
    %v4723 = vrot.slane %v4722, 1
    %v4724 = vadd.f32 %v4722, %v4723
    %v4725 = vsel %vm1592, %v4508, 0.0
    %v4726 = vsel %vm1592, %v4510, 0.0
    %v4727 = vadd.f32 %v4725, %v4726
    %v4728 = vrot.slane %v4727, 4
    %v4729 = vadd.f32 %v4727, %v4728
    %v4730 = vrot.slane %v4729, 2
    %v4731 = vadd.f32 %v4729, %v4730
    %v4732 = vrot.slane %v4731, 1
    %v4733 = vadd.f32 %v4731, %v4732
    %v4734 = vsel %vm1592, %v4512, 0.0
    %v4735 = vsel %vm1592, %v4514, 0.0
    %v4736 = vadd.f32 %v4734, %v4735
    %v4737 = vrot.slane %v4736, 4
    %v4738 = vadd.f32 %v4736, %v4737
    %v4739 = vrot.slane %v4738, 2
    %v4740 = vadd.f32 %v4738, %v4739
    %v4741 = vrot.slane %v4740, 1
    %v4742 = vadd.f32 %v4740, %v4741
    %v4743 = vsel %vm1592, %v4516, 0.0
    %v4744 = vsel %vm1592, %v4518, 0.0
    %v4745 = vadd.f32 %v4743, %v4744
    %v4746 = vrot.slane %v4745, 4
    %v4747 = vadd.f32 %v4745, %v4746
    %v4748 = vrot.slane %v4747, 2
    %v4749 = vadd.f32 %v4747, %v4748
    %v4750 = vrot.slane %v4749, 1
    %v4751 = vadd.f32 %v4749, %v4750
    %v4752 = vsel %vm1592, %v4520, 0.0
    %v4753 = vsel %vm1592, %v4522, 0.0
    %v4754 = vadd.f32 %v4752, %v4753
    %v4755 = vrot.slane %v4754, 4
    %v4756 = vadd.f32 %v4754, %v4755
    %v4757 = vrot.slane %v4756, 2
    %v4758 = vadd.f32 %v4756, %v4757
    %v4759 = vrot.slane %v4758, 1
    %v4760 = vadd.f32 %v4758, %v4759
    %v4761 = vsel %vm1592, %v4524, 0.0
    %v4762 = vsel %vm1592, %v4526, 0.0
    %v4763 = vadd.f32 %v4761, %v4762
    %v4764 = vrot.slane %v4763, 4
    %v4765 = vadd.f32 %v4763, %v4764
    %v4766 = vrot.slane %v4765, 2
    %v4767 = vadd.f32 %v4765, %v4766
    %v4768 = vrot.slane %v4767, 1
    %v4769 = vadd.f32 %v4767, %v4768
    %v4770 = vsel %vm1592, %v4528, 0.0
    %v4771 = vsel %vm1592, %v4530, 0.0
    %v4772 = vadd.f32 %v4770, %v4771
    %v4773 = vrot.slane %v4772, 4
    %v4774 = vadd.f32 %v4772, %v4773
    %v4775 = vrot.slane %v4774, 2
    %v4776 = vadd.f32 %v4774, %v4775
    %v4777 = vrot.slane %v4776, 1
    %v4778 = vadd.f32 %v4776, %v4777
    %v4779 = vsel %vm1592, %v4532, 0.0
    %v4780 = vsel %vm1592, %v4534, 0.0
    %v4781 = vadd.f32 %v4779, %v4780
    %v4782 = vrot.slane %v4781, 4
    %v4783 = vadd.f32 %v4781, %v4782
    %v4784 = vrot.slane %v4783, 2
    %v4785 = vadd.f32 %v4783, %v4784
    %v4786 = vrot.slane %v4785, 1
    %v4787 = vadd.f32 %v4785, %v4786
    %v4788 = vsel %vm1592, %v4536, 0.0
    %v4789 = vsel %vm1592, %v4538, 0.0
    %v4790 = vadd.f32 %v4788, %v4789
    %v4791 = vrot.slane %v4790, 4
    %v4792 = vadd.f32 %v4790, %v4791
    %v4793 = vrot.slane %v4792, 2
    %v4794 = vadd.f32 %v4792, %v4793
    %v4795 = vrot.slane %v4794, 1
    %v4796 = vadd.f32 %v4794, %v4795
    %v4797 = vsel %vm1592, %v4540, 0.0
    %v4798 = vsel %vm1592, %v4542, 0.0
    %v4799 = vadd.f32 %v4797, %v4798
    %v4800 = vrot.slane %v4799, 4
    %v4801 = vadd.f32 %v4799, %v4800
    %v4802 = vrot.slane %v4801, 2
    %v4803 = vadd.f32 %v4801, %v4802
    %v4804 = vrot.slane %v4803, 1
    %v4805 = vadd.f32 %v4803, %v4804
    %v4806 = vsel %vm1592, %v4544, 0.0
    %v4807 = vsel %vm1592, %v4546, 0.0
    %v4808 = vadd.f32 %v4806, %v4807
    %v4809 = vrot.slane %v4808, 4
    %v4810 = vadd.f32 %v4808, %v4809
    %v4811 = vrot.slane %v4810, 2
    %v4812 = vadd.f32 %v4810, %v4811
    %v4813 = vrot.slane %v4812, 1
    %v4814 = vadd.f32 %v4812, %v4813
    %v4815 = vsel %vm1592, %v4548, 0.0
    %v4816 = vsel %vm1592, %v4550, 0.0
    %v4817 = vadd.f32 %v4815, %v4816
    %v4818 = vrot.slane %v4817, 4
    %v4819 = vadd.f32 %v4817, %v4818
    %v4820 = vrot.slane %v4819, 2
    %v4821 = vadd.f32 %v4819, %v4820
    %v4822 = vrot.slane %v4821, 1
    %v4823 = vadd.f32 %v4821, %v4822
    %v4824 = vsel %vm1592, %v4552, 0.0
    %v4825 = vsel %vm1592, %v4554, 0.0
    %v4826 = vadd.f32 %v4824, %v4825
    %v4827 = vrot.slane %v4826, 4
    %v4828 = vadd.f32 %v4826, %v4827
    %v4829 = vrot.slane %v4828, 2
    %v4830 = vadd.f32 %v4828, %v4829
    %v4831 = vrot.slane %v4830, 1
    %v4832 = vadd.f32 %v4830, %v4831
    %v4833 = vsel %vm1592, %v4556, 0.0
    %v4834 = vsel %vm1592, %v4558, 0.0
    %v4835 = vadd.f32 %v4833, %v4834
    %v4836 = vrot.slane %v4835, 4
    %v4837 = vadd.f32 %v4835, %v4836
    %v4838 = vrot.slane %v4837, 2
    %v4839 = vadd.f32 %v4837, %v4838
    %v4840 = vrot.slane %v4839, 1
    %v4841 = vadd.f32 %v4839, %v4840
    %v4842 = vsel %vm1592, %v4560, 0.0
    %v4843 = vsel %vm1592, %v4562, 0.0
    %v4844 = vadd.f32 %v4842, %v4843
    %v4845 = vrot.slane %v4844, 4
    %v4846 = vadd.f32 %v4844, %v4845
    %v4847 = vrot.slane %v4846, 2
    %v4848 = vadd.f32 %v4846, %v4847
    %v4849 = vrot.slane %v4848, 1
    %v4850 = vadd.f32 %v4848, %v4849
    %v4851 = vrcp.pop %v4571
    %v4852 = vrcp.pop %v4580
    %v4853 = vrcp.pop %v4589
    %v4854 = vrcp.pop %v4598
    %v4855 = vrcp.pop %v4607
    %v4856 = vrcp.pop %v4616
    %v4857 = vrcp.pop %v4625
    %v4858 = vrcp.pop %v4634
    %v4859 = vrcp.pop %v4643
    %v4860 = vrcp.pop %v4652
    %v4861 = vrcp.pop %v4661
    %v4862 = vrcp.pop %v4670
    %v4863 = vrcp.pop %v4679
    %v4864 = vrcp.pop %v4688
    %v4865 = vrcp.pop %v4697
    %v4866 = vrcp.pop %v4706
    %v4867 = vrcp.pop %v4715
    %v4868 = vrcp.pop %v4724
    %v4869 = vrcp.pop %v4733
    %v4870 = vrcp.pop %v4742
    %v4871 = vrcp.pop %v4751
    %v4872 = vrcp.pop %v4760
    %v4873 = vrcp.pop %v4769
    %v4874 = vrcp.pop %v4778
    %v4875 = vrcp.pop %v4787
    %v4876 = vrcp.pop %v4796
    %v4877 = vrcp.pop %v4805
    %v4878 = vrcp.pop %v4814
    %v4879 = vrcp.pop %v4823
    %v4880 = vrcp.pop %v4832
    %v4881 = vrcp.pop %v4841
    %v4882 = vrcp.pop %v4850
    %v4883 = vmul.f32 %v4436, %v4851
    %v4884 = vmul.f32 %v4438, %v4851
    %v4885 = vmul.f32 %v4440, %v4852
    %v4886 = vmul.f32 %v4442, %v4852
    %v4887 = vmul.f32 %v4444, %v4853
    %v4888 = vmul.f32 %v4446, %v4853
    %v4889 = vmul.f32 %v4448, %v4854
    %v4890 = vmul.f32 %v4450, %v4854
    %v4891 = vmul.f32 %v4452, %v4855
    %v4892 = vmul.f32 %v4454, %v4855
    %v4893 = vmul.f32 %v4456, %v4856
    %v4894 = vmul.f32 %v4458, %v4856
    %v4895 = vmul.f32 %v4460, %v4857
    %v4896 = vmul.f32 %v4462, %v4857
    %v4897 = vmul.f32 %v4464, %v4858
    %v4898 = vmul.f32 %v4466, %v4858
    %v4899 = vmul.f32 %v4468, %v4859
    %v4900 = vmul.f32 %v4470, %v4859
    %v4901 = vmul.f32 %v4472, %v4860
    %v4902 = vmul.f32 %v4474, %v4860
    %v4903 = vmul.f32 %v4476, %v4861
    %v4904 = vmul.f32 %v4478, %v4861
    %v4905 = vmul.f32 %v4480, %v4862
    %v4906 = vmul.f32 %v4482, %v4862
    %v4907 = vmul.f32 %v4484, %v4863
    %v4908 = vmul.f32 %v4486, %v4863
    %v4909 = vmul.f32 %v4488, %v4864
    %v4910 = vmul.f32 %v4490, %v4864
    %v4911 = vmul.f32 %v4492, %v4865
    %v4912 = vmul.f32 %v4494, %v4865
    %v4913 = vmul.f32 %v4496, %v4866
    %v4914 = vmul.f32 %v4498, %v4866
    %v4915 = vmul.f32 %v4500, %v4867
    %v4916 = vmul.f32 %v4502, %v4867
    %v4917 = vmul.f32 %v4504, %v4868
    %v4918 = vmul.f32 %v4506, %v4868
    %v4919 = vmul.f32 %v4508, %v4869
    %v4920 = vmul.f32 %v4510, %v4869
    %v4921 = vmul.f32 %v4512, %v4870
    %v4922 = vmul.f32 %v4514, %v4870
    %v4923 = vmul.f32 %v4516, %v4871
    %v4924 = vmul.f32 %v4518, %v4871
    %v4925 = vmul.f32 %v4520, %v4872
    %v4926 = vmul.f32 %v4522, %v4872
    %v4927 = vmul.f32 %v4524, %v4873
    %v4928 = vmul.f32 %v4526, %v4873
    %v4929 = vmul.f32 %v4528, %v4874
    %v4930 = vmul.f32 %v4530, %v4874
    %v4931 = vmul.f32 %v4532, %v4875
    %v4932 = vmul.f32 %v4534, %v4875
    %v4933 = vmul.f32 %v4536, %v4876
    %v4934 = vmul.f32 %v4538, %v4876
    %v4935 = vmul.f32 %v4540, %v4877
    %v4936 = vmul.f32 %v4542, %v4877
    %v4937 = vmul.f32 %v4544, %v4878
    %v4938 = vmul.f32 %v4546, %v4878
    %v4939 = vmul.f32 %v4548, %v4879
    %v4940 = vmul.f32 %v4550, %v4879
    %v4941 = vmul.f32 %v4552, %v4880
    %v4942 = vmul.f32 %v4554, %v4880
    %v4943 = vmul.f32 %v4556, %v4881
    %v4944 = vmul.f32 %v4558, %v4881
    %v4945 = vmul.f32 %v4560, %v4882
    %v4946 = vmul.f32 %v4562, %v4882
    %v4947 = vld [vmem:[#allocation4] sm:$0xff]
    %v4948 = vld [vmem:[#allocation4 + $0x8] sm:$0xff]
    %v4949 = vld [vmem:[#allocation4 + $0x10] sm:$0xff]
    %v4950 = vld [vmem:[#allocation4 + $0x18] sm:$0xff]
    %v4951 = vld [vmem:[#allocation4 + $0x20] sm:$0xff]
    %v4952 = vld [vmem:[#allocation4 + $0x28] sm:$0xff]
    %v4953 = vld [vmem:[#allocation4 + $0x30] sm:$0xff]
    %v4954 = vld [vmem:[#allocation4 + $0x38] sm:$0xff]
    %v4955 = vld [vmem:[#allocation4 + $0x40] sm:$0xff]
    %v4956 = vld [vmem:[#allocation4 + $0x48] sm:$0xff]
    %v4957 = vld [vmem:[#allocation4 + $0x50] sm:$0xff]
    %v4958 = vld [vmem:[#allocation4 + $0x58] sm:$0xff]
    %v4959 = vld [vmem:[#allocation4 + $0x60] sm:$0xff]
    %v4960 = vld [vmem:[#allocation4 + $0x68] sm:$0xff]
    %v4961 = vld [vmem:[#allocation4 + $0x70] sm:$0xff]
    %v4962 = vld [vmem:[#allocation4 + $0x78] sm:$0xff]
    %v4963 = vld [vmem:[#allocation4 + $0x80] sm:$0xff]
    %v4964 = vld [vmem:[#allocation4 + $0x88] sm:$0xff]
    %v4965 = vld [vmem:[#allocation4 + $0x90] sm:$0xff]
    %v4966 = vld [vmem:[#allocation4 + $0x98] sm:$0xff]
    %v4967 = vld [vmem:[#allocation4 + $0xa0] sm:$0xff]
    %v4968 = vld [vmem:[#allocation4 + $0xa8] sm:$0xff]
    %v4969 = vld [vmem:[#allocation4 + $0xb0] sm:$0xff]
    %v4970 = vld [vmem:[#allocation4 + $0xb8] sm:$0xff]
    %v4971 = vld [vmem:[#allocation4 + $0xc0] sm:$0xff]
    %v4972 = vld [vmem:[#allocation4 + $0xc8] sm:$0xff]
    %v4973 = vld [vmem:[#allocation4 + $0xd0] sm:$0xff]
    %v4974 = vld [vmem:[#allocation4 + $0xd8] sm:$0xff]
    %v4975 = vld [vmem:[#allocation4 + $0xe0] sm:$0xff]
    %v4976 = vld [vmem:[#allocation4 + $0xe8] sm:$0xff]
    %v4977 = vld [vmem:[#allocation4 + $0xf0] sm:$0xff]
    %v4978 = vld [vmem:[#allocation4 + $0xf8] sm:$0xff]
    %v4979 = vld [vmem:[#allocation4 + $0x100] sm:$0xff]
    %v4980 = vld [vmem:[#allocation4 + $0x108] sm:$0xff]
    %v4981 = vld [vmem:[#allocation4 + $0x110] sm:$0xff]
    %v4982 = vld [vmem:[#allocation4 + $0x118] sm:$0xff]
    %v4983 = vld [vmem:[#allocation4 + $0x120] sm:$0xff]
    %v4984 = vld [vmem:[#allocation4 + $0x128] sm:$0xff]
    %v4985 = vld [vmem:[#allocation4 + $0x130] sm:$0xff]
    %v4986 = vld [vmem:[#allocation4 + $0x138] sm:$0xff]
    %v4987 = vld [vmem:[#allocation4 + $0x140] sm:$0xff]
    %v4988 = vld [vmem:[#allocation4 + $0x148] sm:$0xff]
    %v4989 = vld [vmem:[#allocation4 + $0x150] sm:$0xff]
    %v4990 = vld [vmem:[#allocation4 + $0x158] sm:$0xff]
    %v4991 = vld [vmem:[#allocation4 + $0x160] sm:$0xff]
    %v4992 = vld [vmem:[#allocation4 + $0x168] sm:$0xff]
    %v4993 = vld [vmem:[#allocation4 + $0x170] sm:$0xff]
    %v4994 = vld [vmem:[#allocation4 + $0x178] sm:$0xff]
    %v4995 = vld [vmem:[#allocation4 + $0x180] sm:$0xff]
    %v4996 = vld [vmem:[#allocation4 + $0x188] sm:$0xff]
    %v4997 = vld [vmem:[#allocation4 + $0x190] sm:$0xff]
    %v4998 = vld [vmem:[#allocation4 + $0x198] sm:$0xff]
    %v4999 = vld [vmem:[#allocation4 + $0x1a0] sm:$0xff]
    %v5000 = vld [vmem:[#allocation4 + $0x1a8] sm:$0xff]
    %v5001 = vld [vmem:[#allocation4 + $0x1b0] sm:$0xff]
    %v5002 = vld [vmem:[#allocation4 + $0x1b8] sm:$0xff]
    %v5003 = vld [vmem:[#allocation4 + $0x1c0] sm:$0xff]
    %v5004 = vld [vmem:[#allocation4 + $0x1c8] sm:$0xff]
    %v5005 = vld [vmem:[#allocation4 + $0x1d0] sm:$0xff]
    %v5006 = vld [vmem:[#allocation4 + $0x1d8] sm:$0xff]
    %v5007 = vld [vmem:[#allocation4 + $0x1e0] sm:$0xff]
    %v5008 = vld [vmem:[#allocation4 + $0x1e8] sm:$0xff]
    %v5009 = vld [vmem:[#allocation4 + $0x1f0] sm:$0xff]
    %v5010 = vld [vmem:[#allocation4 + $0x1f8] sm:$0xff]
    %5075 = vrot.lane.b32.xlu0 %v4947, 64
    %v5076 = vpop.permute.xlu0 %5075
    %5077 = vrot.lane.b32.xlu0 %v4948, 64
    %v5078 = vpop.permute.xlu0 %5077
    %5079 = vrot.lane.b32.xlu0 %v4949, 64
    %v5080 = vpop.permute.xlu0 %5079
    %5081 = vrot.lane.b32.xlu0 %v4950, 64
    %v5082 = vpop.permute.xlu0 %5081
    %5083 = vrot.lane.b32.xlu0 %v4951, 64
    %v5084 = vpop.permute.xlu0 %5083
    %5085 = vrot.lane.b32.xlu0 %v4952, 64
    %v5086 = vpop.permute.xlu0 %5085
    %5087 = vrot.lane.b32.xlu0 %v4953, 64
    %v5088 = vpop.permute.xlu0 %5087
    %5089 = vrot.lane.b32.xlu0 %v4954, 64
    %v5090 = vpop.permute.xlu0 %5089
    %5091 = vrot.lane.b32.xlu0 %v4955, 64
    %v5092 = vpop.permute.xlu0 %5091
    %5093 = vrot.lane.b32.xlu0 %v4956, 64
    %v5094 = vpop.permute.xlu0 %5093
    %5095 = vrot.lane.b32.xlu0 %v4957, 64
    %v5096 = vpop.permute.xlu0 %5095
    %5097 = vrot.lane.b32.xlu0 %v4958, 64
    %v5098 = vpop.permute.xlu0 %5097
    %5099 = vrot.lane.b32.xlu0 %v4959, 64
    %v5100 = vpop.permute.xlu0 %5099
    %5101 = vrot.lane.b32.xlu0 %v4960, 64
    %v5102 = vpop.permute.xlu0 %5101
    %5103 = vrot.lane.b32.xlu0 %v4961, 64
    %v5104 = vpop.permute.xlu0 %5103
    %5105 = vrot.lane.b32.xlu0 %v4962, 64
    %v5106 = vpop.permute.xlu0 %5105
    %5107 = vrot.lane.b32.xlu0 %v4963, 64
    %v5108 = vpop.permute.xlu0 %5107
    %5109 = vrot.lane.b32.xlu0 %v4964, 64
    %v5110 = vpop.permute.xlu0 %5109
    %5111 = vrot.lane.b32.xlu0 %v4965, 64
    %v5112 = vpop.permute.xlu0 %5111
    %5113 = vrot.lane.b32.xlu0 %v4966, 64
    %v5114 = vpop.permute.xlu0 %5113
    %5115 = vrot.lane.b32.xlu0 %v4967, 64
    %v5116 = vpop.permute.xlu0 %5115
    %5117 = vrot.lane.b32.xlu0 %v4968, 64
    %v5118 = vpop.permute.xlu0 %5117
    %5119 = vrot.lane.b32.xlu0 %v4969, 64
    %v5120 = vpop.permute.xlu0 %5119
    %5121 = vrot.lane.b32.xlu0 %v4970, 64
    %v5122 = vpop.permute.xlu0 %5121
    %5123 = vrot.lane.b32.xlu0 %v4971, 64
    %v5124 = vpop.permute.xlu0 %5123
    %5125 = vrot.lane.b32.xlu0 %v4972, 64
    %v5126 = vpop.permute.xlu0 %5125
    %5127 = vrot.lane.b32.xlu0 %v4973, 64
    %v5128 = vpop.permute.xlu0 %5127
    %5129 = vrot.lane.b32.xlu0 %v4974, 64
    %v5130 = vpop.permute.xlu0 %5129
    %5131 = vrot.lane.b32.xlu0 %v4975, 64
    %v5132 = vpop.permute.xlu0 %5131
    %5133 = vrot.lane.b32.xlu0 %v4976, 64
    %v5134 = vpop.permute.xlu0 %5133
    %5135 = vrot.lane.b32.xlu0 %v4977, 64
    %v5136 = vpop.permute.xlu0 %5135
    %5137 = vrot.lane.b32.xlu0 %v4978, 64
    %v5138 = vpop.permute.xlu0 %5137
    %5139 = vrot.lane.b32.xlu0 %v4979, 64
    %v5140 = vpop.permute.xlu0 %5139
    %5141 = vrot.lane.b32.xlu0 %v4980, 64
    %v5142 = vpop.permute.xlu0 %5141
    %5143 = vrot.lane.b32.xlu0 %v4981, 64
    %v5144 = vpop.permute.xlu0 %5143
    %5145 = vrot.lane.b32.xlu0 %v4982, 64
    %v5146 = vpop.permute.xlu0 %5145
    %5147 = vrot.lane.b32.xlu0 %v4983, 64
    %v5148 = vpop.permute.xlu0 %5147
    %5149 = vrot.lane.b32.xlu0 %v4984, 64
    %v5150 = vpop.permute.xlu0 %5149
    %5151 = vrot.lane.b32.xlu0 %v4985, 64
    %v5152 = vpop.permute.xlu0 %5151
    %5153 = vrot.lane.b32.xlu0 %v4986, 64
    %v5154 = vpop.permute.xlu0 %5153
    %5155 = vrot.lane.b32.xlu0 %v4987, 64
    %v5156 = vpop.permute.xlu0 %5155
    %5157 = vrot.lane.b32.xlu0 %v4988, 64
    %v5158 = vpop.permute.xlu0 %5157
    %5159 = vrot.lane.b32.xlu0 %v4989, 64
    %v5160 = vpop.permute.xlu0 %5159
    %5161 = vrot.lane.b32.xlu0 %v4990, 64
    %v5162 = vpop.permute.xlu0 %5161
    %5163 = vrot.lane.b32.xlu0 %v4991, 64
    %v5164 = vpop.permute.xlu0 %5163
    %5165 = vrot.lane.b32.xlu0 %v4992, 64
    %v5166 = vpop.permute.xlu0 %5165
    %5167 = vrot.lane.b32.xlu0 %v4993, 64
    %v5168 = vpop.permute.xlu0 %5167
    %5169 = vrot.lane.b32.xlu0 %v4994, 64
    %v5170 = vpop.permute.xlu0 %5169
    %5171 = vrot.lane.b32.xlu0 %v4995, 64
    %v5172 = vpop.permute.xlu0 %5171
    %5173 = vrot.lane.b32.xlu0 %v4996, 64
    %v5174 = vpop.permute.xlu0 %5173
    %5175 = vrot.lane.b32.xlu0 %v4997, 64
    %v5176 = vpop.permute.xlu0 %5175
    %5177 = vrot.lane.b32.xlu0 %v4998, 64
    %v5178 = vpop.permute.xlu0 %5177
    %5179 = vrot.lane.b32.xlu0 %v4999, 64
    %v5180 = vpop.permute.xlu0 %5179
    %5181 = vrot.lane.b32.xlu0 %v5000, 64
    %v5182 = vpop.permute.xlu0 %5181
    %5183 = vrot.lane.b32.xlu0 %v5001, 64
    %v5184 = vpop.permute.xlu0 %5183
    %5185 = vrot.lane.b32.xlu0 %v5002, 64
    %v5186 = vpop.permute.xlu0 %5185
    %5187 = vrot.lane.b32.xlu0 %v5003, 64
    %v5188 = vpop.permute.xlu0 %5187
    %5189 = vrot.lane.b32.xlu0 %v5004, 64
    %v5190 = vpop.permute.xlu0 %5189
    %5191 = vrot.lane.b32.xlu0 %v5005, 64
    %v5192 = vpop.permute.xlu0 %5191
    %5193 = vrot.lane.b32.xlu0 %v5006, 64
    %v5194 = vpop.permute.xlu0 %5193
    %5195 = vrot.lane.b32.xlu0 %v5007, 64
    %v5196 = vpop.permute.xlu0 %5195
    %5197 = vrot.lane.b32.xlu0 %v5008, 64
    %v5198 = vpop.permute.xlu0 %5197
    %5199 = vrot.lane.b32.xlu0 %v5009, 64
    %v5200 = vpop.permute.xlu0 %5199
    %5201 = vrot.lane.b32.xlu0 %v5010, 64
    %v5202 = vpop.permute.xlu0 %5201
    %v5267 = vadd.f32 %v2423, %v5076
    %v5268 = vadd.f32 %v2426, %v5078
    %v5269 = vadd.f32 %v2423, %v5080
    %v5270 = vadd.f32 %v2426, %v5082
    %v5271 = vadd.f32 %v2423, %v5084
    %v5272 = vadd.f32 %v2426, %v5086
    %v5273 = vadd.f32 %v2423, %v5088
    %v5274 = vadd.f32 %v2426, %v5090
    %v5275 = vadd.f32 %v2423, %v5092
    %v5276 = vadd.f32 %v2426, %v5094
    %v5277 = vadd.f32 %v2423, %v5096
    %v5278 = vadd.f32 %v2426, %v5098
    %v5279 = vadd.f32 %v2423, %v5100
    %v5280 = vadd.f32 %v2426, %v5102
    %v5281 = vadd.f32 %v2423, %v5104
    %v5282 = vadd.f32 %v2426, %v5106
    %v5283 = vadd.f32 %v2423, %v5108
    %v5284 = vadd.f32 %v2426, %v5110
    %v5285 = vadd.f32 %v2423, %v5112
    %v5286 = vadd.f32 %v2426, %v5114
    %v5287 = vadd.f32 %v2423, %v5116
    %v5288 = vadd.f32 %v2426, %v5118
    %v5289 = vadd.f32 %v2423, %v5120
    %v5290 = vadd.f32 %v2426, %v5122
    %v5291 = vadd.f32 %v2423, %v5124
    %v5292 = vadd.f32 %v2426, %v5126
    %v5293 = vadd.f32 %v2423, %v5128
    %v5294 = vadd.f32 %v2426, %v5130
    %v5295 = vadd.f32 %v2423, %v5132
    %v5296 = vadd.f32 %v2426, %v5134
    %v5297 = vadd.f32 %v2423, %v5136
    %v5298 = vadd.f32 %v2426, %v5138
    %v5299 = vadd.f32 %v2429, %v5140
    %v5300 = vadd.f32 %v2432, %v5142
    %v5301 = vadd.f32 %v2429, %v5144
    %v5302 = vadd.f32 %v2432, %v5146
    %v5303 = vadd.f32 %v2429, %v5148
    %v5304 = vadd.f32 %v2432, %v5150
    %v5305 = vadd.f32 %v2429, %v5152
    %v5306 = vadd.f32 %v2432, %v5154
    %v5307 = vadd.f32 %v2429, %v5156
    %v5308 = vadd.f32 %v2432, %v5158
    %v5309 = vadd.f32 %v2429, %v5160
    %v5310 = vadd.f32 %v2432, %v5162
    %v5311 = vadd.f32 %v2429, %v5164
    %v5312 = vadd.f32 %v2432, %v5166
    %v5313 = vadd.f32 %v2429, %v5168
    %v5314 = vadd.f32 %v2432, %v5170
    %v5315 = vadd.f32 %v2429, %v5172
    %v5316 = vadd.f32 %v2432, %v5174
    %v5317 = vadd.f32 %v2429, %v5176
    %v5318 = vadd.f32 %v2432, %v5178
    %v5319 = vadd.f32 %v2429, %v5180
    %v5320 = vadd.f32 %v2432, %v5182
    %v5321 = vadd.f32 %v2429, %v5184
    %v5322 = vadd.f32 %v2432, %v5186
    %v5323 = vadd.f32 %v2429, %v5188
    %v5324 = vadd.f32 %v2432, %v5190
    %v5325 = vadd.f32 %v2429, %v5192
    %v5326 = vadd.f32 %v2432, %v5194
    %v5327 = vadd.f32 %v2429, %v5196
    %v5328 = vadd.f32 %v2432, %v5198
    %v5329 = vadd.f32 %v2429, %v5200
    %v5330 = vadd.f32 %v2432, %v5202
    %5395 = vrot.lane.b32.xlu0 %v5267, 64
    %v5396 = vpop.permute.xlu0 %5395
    %5397 = vrot.lane.b32.xlu0 %v5268, 64
    %v5398 = vpop.permute.xlu0 %5397
    %5399 = vrot.lane.b32.xlu0 %v5269, 64
    %v5400 = vpop.permute.xlu0 %5399
    %5401 = vrot.lane.b32.xlu0 %v5270, 64
    %v5402 = vpop.permute.xlu0 %5401
    %5403 = vrot.lane.b32.xlu0 %v5271, 64
    %v5404 = vpop.permute.xlu0 %5403
    %5405 = vrot.lane.b32.xlu0 %v5272, 64
    %v5406 = vpop.permute.xlu0 %5405
    %5407 = vrot.lane.b32.xlu0 %v5273, 64
    %v5408 = vpop.permute.xlu0 %5407
    %5409 = vrot.lane.b32.xlu0 %v5274, 64
    %v5410 = vpop.permute.xlu0 %5409
    %5411 = vrot.lane.b32.xlu0 %v5275, 64
    %v5412 = vpop.permute.xlu0 %5411
    %5413 = vrot.lane.b32.xlu0 %v5276, 64
    %v5414 = vpop.permute.xlu0 %5413
    %5415 = vrot.lane.b32.xlu0 %v5277, 64
    %v5416 = vpop.permute.xlu0 %5415
    %5417 = vrot.lane.b32.xlu0 %v5278, 64
    %v5418 = vpop.permute.xlu0 %5417
    %5419 = vrot.lane.b32.xlu0 %v5279, 64
    %v5420 = vpop.permute.xlu0 %5419
    %5421 = vrot.lane.b32.xlu0 %v5280, 64
    %v5422 = vpop.permute.xlu0 %5421
    %5423 = vrot.lane.b32.xlu0 %v5281, 64
    %v5424 = vpop.permute.xlu0 %5423
    %5425 = vrot.lane.b32.xlu0 %v5282, 64
    %v5426 = vpop.permute.xlu0 %5425
    %5427 = vrot.lane.b32.xlu0 %v5283, 64
    %v5428 = vpop.permute.xlu0 %5427
    %5429 = vrot.lane.b32.xlu0 %v5284, 64
    %v5430 = vpop.permute.xlu0 %5429
    %5431 = vrot.lane.b32.xlu0 %v5285, 64
    %v5432 = vpop.permute.xlu0 %5431
    %5433 = vrot.lane.b32.xlu0 %v5286, 64
    %v5434 = vpop.permute.xlu0 %5433
    %5435 = vrot.lane.b32.xlu0 %v5287, 64
    %v5436 = vpop.permute.xlu0 %5435
    %5437 = vrot.lane.b32.xlu0 %v5288, 64
    %v5438 = vpop.permute.xlu0 %5437
    %5439 = vrot.lane.b32.xlu0 %v5289, 64
    %v5440 = vpop.permute.xlu0 %5439
    %5441 = vrot.lane.b32.xlu0 %v5290, 64
    %v5442 = vpop.permute.xlu0 %5441
    %5443 = vrot.lane.b32.xlu0 %v5291, 64
    %v5444 = vpop.permute.xlu0 %5443
    %5445 = vrot.lane.b32.xlu0 %v5292, 64
    %v5446 = vpop.permute.xlu0 %5445
    %5447 = vrot.lane.b32.xlu0 %v5293, 64
    %v5448 = vpop.permute.xlu0 %5447
    %5449 = vrot.lane.b32.xlu0 %v5294, 64
    %v5450 = vpop.permute.xlu0 %5449
    %5451 = vrot.lane.b32.xlu0 %v5295, 64
    %v5452 = vpop.permute.xlu0 %5451
    %5453 = vrot.lane.b32.xlu0 %v5296, 64
    %v5454 = vpop.permute.xlu0 %5453
    %5455 = vrot.lane.b32.xlu0 %v5297, 64
    %v5456 = vpop.permute.xlu0 %5455
    %5457 = vrot.lane.b32.xlu0 %v5298, 64
    %v5458 = vpop.permute.xlu0 %5457
    %5459 = vrot.lane.b32.xlu0 %v5299, 64
    %v5460 = vpop.permute.xlu0 %5459
    %5461 = vrot.lane.b32.xlu0 %v5300, 64
    %v5462 = vpop.permute.xlu0 %5461
    %5463 = vrot.lane.b32.xlu0 %v5301, 64
    %v5464 = vpop.permute.xlu0 %5463
    %5465 = vrot.lane.b32.xlu0 %v5302, 64
    %v5466 = vpop.permute.xlu0 %5465
    %5467 = vrot.lane.b32.xlu0 %v5303, 64
    %v5468 = vpop.permute.xlu0 %5467
    %5469 = vrot.lane.b32.xlu0 %v5304, 64
    %v5470 = vpop.permute.xlu0 %5469
    %5471 = vrot.lane.b32.xlu0 %v5305, 64
    %v5472 = vpop.permute.xlu0 %5471
    %5473 = vrot.lane.b32.xlu0 %v5306, 64
    %v5474 = vpop.permute.xlu0 %5473
    %5475 = vrot.lane.b32.xlu0 %v5307, 64
    %v5476 = vpop.permute.xlu0 %5475
    %5477 = vrot.lane.b32.xlu0 %v5308, 64
    %v5478 = vpop.permute.xlu0 %5477
    %5479 = vrot.lane.b32.xlu0 %v5309, 64
    %v5480 = vpop.permute.xlu0 %5479
    %5481 = vrot.lane.b32.xlu0 %v5310, 64
    %v5482 = vpop.permute.xlu0 %5481
    %5483 = vrot.lane.b32.xlu0 %v5311, 64
    %v5484 = vpop.permute.xlu0 %5483
    %5485 = vrot.lane.b32.xlu0 %v5312, 64
    %v5486 = vpop.permute.xlu0 %5485
    %5487 = vrot.lane.b32.xlu0 %v5313, 64
    %v5488 = vpop.permute.xlu0 %5487
    %5489 = vrot.lane.b32.xlu0 %v5314, 64
    %v5490 = vpop.permute.xlu0 %5489
    %5491 = vrot.lane.b32.xlu0 %v5315, 64
    %v5492 = vpop.permute.xlu0 %5491
    %5493 = vrot.lane.b32.xlu0 %v5316, 64
    %v5494 = vpop.permute.xlu0 %5493
    %5495 = vrot.lane.b32.xlu0 %v5317, 64
    %v5496 = vpop.permute.xlu0 %5495
    %5497 = vrot.lane.b32.xlu0 %v5318, 64
    %v5498 = vpop.permute.xlu0 %5497
    %5499 = vrot.lane.b32.xlu0 %v5319, 64
    %v5500 = vpop.permute.xlu0 %5499
    %5501 = vrot.lane.b32.xlu0 %v5320, 64
    %v5502 = vpop.permute.xlu0 %5501
    %5503 = vrot.lane.b32.xlu0 %v5321, 64
    %v5504 = vpop.permute.xlu0 %5503
    %5505 = vrot.lane.b32.xlu0 %v5322, 64
    %v5506 = vpop.permute.xlu0 %5505
    %5507 = vrot.lane.b32.xlu0 %v5323, 64
    %v5508 = vpop.permute.xlu0 %5507
    %5509 = vrot.lane.b32.xlu0 %v5324, 64
    %v5510 = vpop.permute.xlu0 %5509
    %5511 = vrot.lane.b32.xlu0 %v5325, 64
    %v5512 = vpop.permute.xlu0 %5511
    %5513 = vrot.lane.b32.xlu0 %v5326, 64
    %v5514 = vpop.permute.xlu0 %5513
    %5515 = vrot.lane.b32.xlu0 %v5327, 64
    %v5516 = vpop.permute.xlu0 %5515
    %5517 = vrot.lane.b32.xlu0 %v5328, 64
    %v5518 = vpop.permute.xlu0 %5517
    %5519 = vrot.lane.b32.xlu0 %v5329, 64
    %v5520 = vpop.permute.xlu0 %5519
    %5521 = vrot.lane.b32.xlu0 %v5330, 64
    %v5522 = vpop.permute.xlu0 %5521
    %v5587 = vmul.f32 %v4883, %v5396
    %v5588 = vmul.f32 %v4884, %v5398
    %v5589 = vmul.f32 %v4885, %v5400
    %v5590 = vmul.f32 %v4886, %v5402
    %v5591 = vmul.f32 %v4887, %v5404
    %v5592 = vmul.f32 %v4888, %v5406
    %v5593 = vmul.f32 %v4889, %v5408
    %v5594 = vmul.f32 %v4890, %v5410
    %v5595 = vmul.f32 %v4891, %v5412
    %v5596 = vmul.f32 %v4892, %v5414
    %v5597 = vmul.f32 %v4893, %v5416
    %v5598 = vmul.f32 %v4894, %v5418
    %v5599 = vmul.f32 %v4895, %v5420
    %v5600 = vmul.f32 %v4896, %v5422
    %v5601 = vmul.f32 %v4897, %v5424
    %v5602 = vmul.f32 %v4898, %v5426
    %v5603 = vmul.f32 %v4899, %v5428
    %v5604 = vmul.f32 %v4900, %v5430
    %v5605 = vmul.f32 %v4901, %v5432
    %v5606 = vmul.f32 %v4902, %v5434
    %v5607 = vmul.f32 %v4903, %v5436
    %v5608 = vmul.f32 %v4904, %v5438
    %v5609 = vmul.f32 %v4905, %v5440
    %v5610 = vmul.f32 %v4906, %v5442
    %v5611 = vmul.f32 %v4907, %v5444
    %v5612 = vmul.f32 %v4908, %v5446
    %v5613 = vmul.f32 %v4909, %v5448
    %v5614 = vmul.f32 %v4910, %v5450
    %v5615 = vmul.f32 %v4911, %v5452
    %v5616 = vmul.f32 %v4912, %v5454
    %v5617 = vmul.f32 %v4913, %v5456
    %v5618 = vmul.f32 %v4914, %v5458
    %v5619 = vmul.f32 %v4915, %v5460
    %v5620 = vmul.f32 %v4916, %v5462
    %v5621 = vmul.f32 %v4917, %v5464
    %v5622 = vmul.f32 %v4918, %v5466
    %v5623 = vmul.f32 %v4919, %v5468
    %v5624 = vmul.f32 %v4920, %v5470
    %v5625 = vmul.f32 %v4921, %v5472
    %v5626 = vmul.f32 %v4922, %v5474
    %v5627 = vmul.f32 %v4923, %v5476
    %v5628 = vmul.f32 %v4924, %v5478
    %v5629 = vmul.f32 %v4925, %v5480
    %v5630 = vmul.f32 %v4926, %v5482
    %v5631 = vmul.f32 %v4927, %v5484
    %v5632 = vmul.f32 %v4928, %v5486
    %v5633 = vmul.f32 %v4929, %v5488
    %v5634 = vmul.f32 %v4930, %v5490
    %v5635 = vmul.f32 %v4931, %v5492
    %v5636 = vmul.f32 %v4932, %v5494
    %v5637 = vmul.f32 %v4933, %v5496
    %v5638 = vmul.f32 %v4934, %v5498
    %v5639 = vmul.f32 %v4935, %v5500
    %v5640 = vmul.f32 %v4936, %v5502
    %v5641 = vmul.f32 %v4937, %v5504
    %v5642 = vmul.f32 %v4938, %v5506
    %v5643 = vmul.f32 %v4939, %v5508
    %v5644 = vmul.f32 %v4940, %v5510
    %v5645 = vmul.f32 %v4941, %v5512
    %v5646 = vmul.f32 %v4942, %v5514
    %v5647 = vmul.f32 %v4943, %v5516
    %v5648 = vmul.f32 %v4944, %v5518
    %v5649 = vmul.f32 %v4945, %v5520
    %v5650 = vmul.f32 %v4946, %v5522
    %v5651 = vsel %vm1592, %v5587, 0.0
    %v5652 = vsel %vm1592, %v5588, 0.0
    %v5653 = vadd.f32 %v5651, %v5652
    %v5654 = vrot.slane %v5653, 4
    %v5655 = vadd.f32 %v5653, %v5654
    %v5656 = vrot.slane %v5655, 2
    %v5657 = vadd.f32 %v5655, %v5656
    %v5658 = vrot.slane %v5657, 1
    %v5659 = vadd.f32 %v5657, %v5658
    %v5660 = vsel %vm1592, %v5589, 0.0
    %v5661 = vsel %vm1592, %v5590, 0.0
    %v5662 = vadd.f32 %v5660, %v5661
    %v5663 = vrot.slane %v5662, 4
    %v5664 = vadd.f32 %v5662, %v5663
    %v5665 = vrot.slane %v5664, 2
    %v5666 = vadd.f32 %v5664, %v5665
    %v5667 = vrot.slane %v5666, 1
    %v5668 = vadd.f32 %v5666, %v5667
    %v5669 = vsel %vm1592, %v5591, 0.0
    %v5670 = vsel %vm1592, %v5592, 0.0
    %v5671 = vadd.f32 %v5669, %v5670
    %v5672 = vrot.slane %v5671, 4
    %v5673 = vadd.f32 %v5671, %v5672
    %v5674 = vrot.slane %v5673, 2
    %v5675 = vadd.f32 %v5673, %v5674
    %v5676 = vrot.slane %v5675, 1
    %v5677 = vadd.f32 %v5675, %v5676
    %v5678 = vsel %vm1592, %v5593, 0.0
    %v5679 = vsel %vm1592, %v5594, 0.0
    %v5680 = vadd.f32 %v5678, %v5679
    %v5681 = vrot.slane %v5680, 4
    %v5682 = vadd.f32 %v5680, %v5681
    %v5683 = vrot.slane %v5682, 2
    %v5684 = vadd.f32 %v5682, %v5683
    %v5685 = vrot.slane %v5684, 1
    %v5686 = vadd.f32 %v5684, %v5685
    %v5687 = vsel %vm1592, %v5595, 0.0
    %v5688 = vsel %vm1592, %v5596, 0.0
    %v5689 = vadd.f32 %v5687, %v5688
    %v5690 = vrot.slane %v5689, 4
    %v5691 = vadd.f32 %v5689, %v5690
    %v5692 = vrot.slane %v5691, 2
    %v5693 = vadd.f32 %v5691, %v5692
    %v5694 = vrot.slane %v5693, 1
    %v5695 = vadd.f32 %v5693, %v5694
    %v5696 = vsel %vm1592, %v5597, 0.0
    %v5697 = vsel %vm1592, %v5598, 0.0
    %v5698 = vadd.f32 %v5696, %v5697
    %v5699 = vrot.slane %v5698, 4
    %v5700 = vadd.f32 %v5698, %v5699
    %v5701 = vrot.slane %v5700, 2
    %v5702 = vadd.f32 %v5700, %v5701
    %v5703 = vrot.slane %v5702, 1
    %v5704 = vadd.f32 %v5702, %v5703
    %v5705 = vsel %vm1592, %v5599, 0.0
    %v5706 = vsel %vm1592, %v5600, 0.0
    %v5707 = vadd.f32 %v5705, %v5706
    %v5708 = vrot.slane %v5707, 4
    %v5709 = vadd.f32 %v5707, %v5708
    %v5710 = vrot.slane %v5709, 2
    %v5711 = vadd.f32 %v5709, %v5710
    %v5712 = vrot.slane %v5711, 1
    %v5713 = vadd.f32 %v5711, %v5712
    %v5714 = vsel %vm1592, %v5601, 0.0
    %v5715 = vsel %vm1592, %v5602, 0.0
    %v5716 = vadd.f32 %v5714, %v5715
    %v5717 = vrot.slane %v5716, 4
    %v5718 = vadd.f32 %v5716, %v5717
    %v5719 = vrot.slane %v5718, 2
    %v5720 = vadd.f32 %v5718, %v5719
    %v5721 = vrot.slane %v5720, 1
    %v5722 = vadd.f32 %v5720, %v5721
    %v5723 = vsel %vm1592, %v5603, 0.0
    %v5724 = vsel %vm1592, %v5604, 0.0
    %v5725 = vadd.f32 %v5723, %v5724
    %v5726 = vrot.slane %v5725, 4
    %v5727 = vadd.f32 %v5725, %v5726
    %v5728 = vrot.slane %v5727, 2
    %v5729 = vadd.f32 %v5727, %v5728
    %v5730 = vrot.slane %v5729, 1
    %v5731 = vadd.f32 %v5729, %v5730
    %v5732 = vsel %vm1592, %v5605, 0.0
    %v5733 = vsel %vm1592, %v5606, 0.0
    %v5734 = vadd.f32 %v5732, %v5733
    %v5735 = vrot.slane %v5734, 4
    %v5736 = vadd.f32 %v5734, %v5735
    %v5737 = vrot.slane %v5736, 2
    %v5738 = vadd.f32 %v5736, %v5737
    %v5739 = vrot.slane %v5738, 1
    %v5740 = vadd.f32 %v5738, %v5739
    %v5741 = vsel %vm1592, %v5607, 0.0
    %v5742 = vsel %vm1592, %v5608, 0.0
    %v5743 = vadd.f32 %v5741, %v5742
    %v5744 = vrot.slane %v5743, 4
    %v5745 = vadd.f32 %v5743, %v5744
    %v5746 = vrot.slane %v5745, 2
    %v5747 = vadd.f32 %v5745, %v5746
    %v5748 = vrot.slane %v5747, 1
    %v5749 = vadd.f32 %v5747, %v5748
    %v5750 = vsel %vm1592, %v5609, 0.0
    %v5751 = vsel %vm1592, %v5610, 0.0
    %v5752 = vadd.f32 %v5750, %v5751
    %v5753 = vrot.slane %v5752, 4
    %v5754 = vadd.f32 %v5752, %v5753
    %v5755 = vrot.slane %v5754, 2
    %v5756 = vadd.f32 %v5754, %v5755
    %v5757 = vrot.slane %v5756, 1
    %v5758 = vadd.f32 %v5756, %v5757
    %v5759 = vsel %vm1592, %v5611, 0.0
    %v5760 = vsel %vm1592, %v5612, 0.0
    %v5761 = vadd.f32 %v5759, %v5760
    %v5762 = vrot.slane %v5761, 4
    %v5763 = vadd.f32 %v5761, %v5762
    %v5764 = vrot.slane %v5763, 2
    %v5765 = vadd.f32 %v5763, %v5764
    %v5766 = vrot.slane %v5765, 1
    %v5767 = vadd.f32 %v5765, %v5766
    %v5768 = vsel %vm1592, %v5613, 0.0
    %v5769 = vsel %vm1592, %v5614, 0.0
    %v5770 = vadd.f32 %v5768, %v5769
    %v5771 = vrot.slane %v5770, 4
    %v5772 = vadd.f32 %v5770, %v5771
    %v5773 = vrot.slane %v5772, 2
    %v5774 = vadd.f32 %v5772, %v5773
    %v5775 = vrot.slane %v5774, 1
    %v5776 = vadd.f32 %v5774, %v5775
    %v5777 = vsel %vm1592, %v5615, 0.0
    %v5778 = vsel %vm1592, %v5616, 0.0
    %v5779 = vadd.f32 %v5777, %v5778
    %v5780 = vrot.slane %v5779, 4
    %v5781 = vadd.f32 %v5779, %v5780
    %v5782 = vrot.slane %v5781, 2
    %v5783 = vadd.f32 %v5781, %v5782
    %v5784 = vrot.slane %v5783, 1
    %v5785 = vadd.f32 %v5783, %v5784
    %v5786 = vsel %vm1592, %v5617, 0.0
    %v5787 = vsel %vm1592, %v5618, 0.0
    %v5788 = vadd.f32 %v5786, %v5787
    %v5789 = vrot.slane %v5788, 4
    %v5790 = vadd.f32 %v5788, %v5789
    %v5791 = vrot.slane %v5790, 2
    %v5792 = vadd.f32 %v5790, %v5791
    %v5793 = vrot.slane %v5792, 1
    %v5794 = vadd.f32 %v5792, %v5793
    %v5795 = vsel %vm1592, %v5619, 0.0
    %v5796 = vsel %vm1592, %v5620, 0.0
    %v5797 = vadd.f32 %v5795, %v5796
    %v5798 = vrot.slane %v5797, 4
    %v5799 = vadd.f32 %v5797, %v5798
    %v5800 = vrot.slane %v5799, 2
    %v5801 = vadd.f32 %v5799, %v5800
    %v5802 = vrot.slane %v5801, 1
    %v5803 = vadd.f32 %v5801, %v5802
    %v5804 = vsel %vm1592, %v5621, 0.0
    %v5805 = vsel %vm1592, %v5622, 0.0
    %v5806 = vadd.f32 %v5804, %v5805
    %v5807 = vrot.slane %v5806, 4
    %v5808 = vadd.f32 %v5806, %v5807
    %v5809 = vrot.slane %v5808, 2
    %v5810 = vadd.f32 %v5808, %v5809
    %v5811 = vrot.slane %v5810, 1
    %v5812 = vadd.f32 %v5810, %v5811
    %v5813 = vsel %vm1592, %v5623, 0.0
    %v5814 = vsel %vm1592, %v5624, 0.0
    %v5815 = vadd.f32 %v5813, %v5814
    %v5816 = vrot.slane %v5815, 4
    %v5817 = vadd.f32 %v5815, %v5816
    %v5818 = vrot.slane %v5817, 2
    %v5819 = vadd.f32 %v5817, %v5818
    %v5820 = vrot.slane %v5819, 1
    %v5821 = vadd.f32 %v5819, %v5820
    %v5822 = vsel %vm1592, %v5625, 0.0
    %v5823 = vsel %vm1592, %v5626, 0.0
    %v5824 = vadd.f32 %v5822, %v5823
    %v5825 = vrot.slane %v5824, 4
    %v5826 = vadd.f32 %v5824, %v5825
    %v5827 = vrot.slane %v5826, 2
    %v5828 = vadd.f32 %v5826, %v5827
    %v5829 = vrot.slane %v5828, 1
    %v5830 = vadd.f32 %v5828, %v5829
    %v5831 = vsel %vm1592, %v5627, 0.0
    %v5832 = vsel %vm1592, %v5628, 0.0
    %v5833 = vadd.f32 %v5831, %v5832
    %v5834 = vrot.slane %v5833, 4
    %v5835 = vadd.f32 %v5833, %v5834
    %v5836 = vrot.slane %v5835, 2
    %v5837 = vadd.f32 %v5835, %v5836
    %v5838 = vrot.slane %v5837, 1
    %v5839 = vadd.f32 %v5837, %v5838
    %v5840 = vsel %vm1592, %v5629, 0.0
    %v5841 = vsel %vm1592, %v5630, 0.0
    %v5842 = vadd.f32 %v5840, %v5841
    %v5843 = vrot.slane %v5842, 4
    %v5844 = vadd.f32 %v5842, %v5843
    %v5845 = vrot.slane %v5844, 2
    %v5846 = vadd.f32 %v5844, %v5845
    %v5847 = vrot.slane %v5846, 1
    %v5848 = vadd.f32 %v5846, %v5847
    %v5849 = vsel %vm1592, %v5631, 0.0
    %v5850 = vsel %vm1592, %v5632, 0.0
    %v5851 = vadd.f32 %v5849, %v5850
    %v5852 = vrot.slane %v5851, 4
    %v5853 = vadd.f32 %v5851, %v5852
    %v5854 = vrot.slane %v5853, 2
    %v5855 = vadd.f32 %v5853, %v5854
    %v5856 = vrot.slane %v5855, 1
    %v5857 = vadd.f32 %v5855, %v5856
    %v5858 = vsel %vm1592, %v5633, 0.0
    %v5859 = vsel %vm1592, %v5634, 0.0
    %v5860 = vadd.f32 %v5858, %v5859
    %v5861 = vrot.slane %v5860, 4
    %v5862 = vadd.f32 %v5860, %v5861
    %v5863 = vrot.slane %v5862, 2
    %v5864 = vadd.f32 %v5862, %v5863
    %v5865 = vrot.slane %v5864, 1
    %v5866 = vadd.f32 %v5864, %v5865
    %v5867 = vsel %vm1592, %v5635, 0.0
    %v5868 = vsel %vm1592, %v5636, 0.0
    %v5869 = vadd.f32 %v5867, %v5868
    %v5870 = vrot.slane %v5869, 4
    %v5871 = vadd.f32 %v5869, %v5870
    %v5872 = vrot.slane %v5871, 2
    %v5873 = vadd.f32 %v5871, %v5872
    %v5874 = vrot.slane %v5873, 1
    %v5875 = vadd.f32 %v5873, %v5874
    %v5876 = vsel %vm1592, %v5637, 0.0
    %v5877 = vsel %vm1592, %v5638, 0.0
    %v5878 = vadd.f32 %v5876, %v5877
    %v5879 = vrot.slane %v5878, 4
    %v5880 = vadd.f32 %v5878, %v5879
    %v5881 = vrot.slane %v5880, 2
    %v5882 = vadd.f32 %v5880, %v5881
    %v5883 = vrot.slane %v5882, 1
    %v5884 = vadd.f32 %v5882, %v5883
    %v5885 = vsel %vm1592, %v5639, 0.0
    %v5886 = vsel %vm1592, %v5640, 0.0
    %v5887 = vadd.f32 %v5885, %v5886
    %v5888 = vrot.slane %v5887, 4
    %v5889 = vadd.f32 %v5887, %v5888
    %v5890 = vrot.slane %v5889, 2
    %v5891 = vadd.f32 %v5889, %v5890
    %v5892 = vrot.slane %v5891, 1
    %v5893 = vadd.f32 %v5891, %v5892
    %v5894 = vsel %vm1592, %v5641, 0.0
    %v5895 = vsel %vm1592, %v5642, 0.0
    %v5896 = vadd.f32 %v5894, %v5895
    %v5897 = vrot.slane %v5896, 4
    %v5898 = vadd.f32 %v5896, %v5897
    %v5899 = vrot.slane %v5898, 2
    %v5900 = vadd.f32 %v5898, %v5899
    %v5901 = vrot.slane %v5900, 1
    %v5902 = vadd.f32 %v5900, %v5901
    %v5903 = vsel %vm1592, %v5643, 0.0
    %v5904 = vsel %vm1592, %v5644, 0.0
    %v5905 = vadd.f32 %v5903, %v5904
    %v5906 = vrot.slane %v5905, 4
    %v5907 = vadd.f32 %v5905, %v5906
    %v5908 = vrot.slane %v5907, 2
    %v5909 = vadd.f32 %v5907, %v5908
    %v5910 = vrot.slane %v5909, 1
    %v5911 = vadd.f32 %v5909, %v5910
    %v5912 = vsel %vm1592, %v5645, 0.0
    %v5913 = vsel %vm1592, %v5646, 0.0
    %v5914 = vadd.f32 %v5912, %v5913
    %v5915 = vrot.slane %v5914, 4
    %v5916 = vadd.f32 %v5914, %v5915
    %v5917 = vrot.slane %v5916, 2
    %v5918 = vadd.f32 %v5916, %v5917
    %v5919 = vrot.slane %v5918, 1
    %v5920 = vadd.f32 %v5918, %v5919
    %v5921 = vsel %vm1592, %v5647, 0.0
    %v5922 = vsel %vm1592, %v5648, 0.0
    %v5923 = vadd.f32 %v5921, %v5922
    %v5924 = vrot.slane %v5923, 4
    %v5925 = vadd.f32 %v5923, %v5924
    %v5926 = vrot.slane %v5925, 2
    %v5927 = vadd.f32 %v5925, %v5926
    %v5928 = vrot.slane %v5927, 1
    %v5929 = vadd.f32 %v5927, %v5928
    %v5930 = vsel %vm1592, %v5649, 0.0
    %v5931 = vsel %vm1592, %v5650, 0.0
    %v5932 = vadd.f32 %v5930, %v5931
    %v5933 = vrot.slane %v5932, 4
    %v5934 = vadd.f32 %v5932, %v5933
    %v5935 = vrot.slane %v5934, 2
    %v5936 = vadd.f32 %v5934, %v5935
    %v5937 = vrot.slane %v5936, 1
    %v5938 = vadd.f32 %v5936, %v5937
    %vm5971 = vcmask 1041409
    %v5972 = vsel %vm5971, %v5668, %v5659
    %vm5973 = vcmask 1042434
    %v5974 = vsel %vm5973, %v5677, %v5972
    %vm5975 = vcmask 1043459
    %v5976 = vsel %vm5975, %v5686, %v5974
    %vm5977 = vcmask 1044484
    %v5978 = vsel %vm5977, %v5695, %v5976
    %vm5979 = vcmask 1045509
    %v5980 = vsel %vm5979, %v5704, %v5978
    %vm5981 = vcmask 1046534
    %v5982 = vsel %vm5981, %v5713, %v5980
    %vm5983 = vcmask 1047559
    %v5984 = vsel %vm5983, %v5722, %v5982
    %v5985 = vsel %vm5971, %v5740, %v5731
    %v5986 = vsel %vm5973, %v5749, %v5985
    %v5987 = vsel %vm5975, %v5758, %v5986
    %v5988 = vsel %vm5977, %v5767, %v5987
    %v5989 = vsel %vm5979, %v5776, %v5988
    %v5990 = vsel %vm5981, %v5785, %v5989
    %v5991 = vsel %vm5983, %v5794, %v5990
    %v5992 = vsel %vm5971, %v5812, %v5803
    %v5993 = vsel %vm5973, %v5821, %v5992
    %v5994 = vsel %vm5975, %v5830, %v5993
    %v5995 = vsel %vm5977, %v5839, %v5994
    %v5996 = vsel %vm5979, %v5848, %v5995
    %v5997 = vsel %vm5981, %v5857, %v5996
    %v5998 = vsel %vm5983, %v5866, %v5997
    %v5999 = vsel %vm5971, %v5884, %v5875
    %v6000 = vsel %vm5973, %v5893, %v5999
    %v6001 = vsel %vm5975, %v5902, %v6000
    %v6002 = vsel %vm5977, %v5911, %v6001
    %v6003 = vsel %vm5979, %v5920, %v6002
    %v6004 = vsel %vm5981, %v5929, %v6003
    %v6005 = vsel %vm5983, %v5938, %v6004
    %6010 = vrot.lane.b32.xlu0 %v2385, 32
    %v6011 = vpop.permute.xlu0 %6010
    %6012 = vrot.lane.b32.xlu0 %v2386, 32
    %v6013 = vpop.permute.xlu0 %6012
    %6014 = vrot.lane.b32.xlu0 %v2387, 32
    %v6015 = vpop.permute.xlu0 %6014
    %6016 = vrot.lane.b32.xlu0 %v2388, 32
    %v6017 = vpop.permute.xlu0 %6016
    %v6022 = vsel %vm1592, %v5984, 0
    %v6024 = vsel %vm1592, %v5991, 0
    %v6026 = vsel %vm1592, %v5998, 0
    %v6028 = vsel %vm1592, %v6005, 0
    %6030 = vmatpush.msra.mxu0 0.0
    %6031 = vmatpush.msra.mxu0 0.0
    %6032 = vmatpush.msra.mxu0 0.0
    %6033 = vmatpush.msra.mxu0 0.0
    %6034 = vmatpush.msra.mxu0 0.0
    %6035 = vmatpush.msra.mxu0 0.0
    %6036 = vmatpush.msra.mxu0 0.0
    %6037 = vmatpush.msra.mxu0 0.0
    %6038 = vmatpush.msra.mxu0 0.0
    %6039 = vmatpush.msra.mxu0 0.0
    %6040 = vmatpush.msra.mxu0 0.0
    %6041 = vmatpush.msra.mxu0 0.0
    %6042 = vmatpush.msra.mxu0 %v6017
    %6043 = vmatpush.msra.mxu0 %v6015
    %6044 = vmatpush.msra.mxu0 %v6013
    %6045 = vmatpush.msra.mxu0 %v6011
    %6046 = vmatmul.f32.gmra.mxu0 %v6022
    %v6047 = vpop.f32.mrf.mxu0
    %v6048 = vadd.f32 %v2390, %v6047
    %6049 = vmatmul.f32.gmra.mxu0 %v6024
    %v6050 = vpop.f32.mrf.mxu0
    %v6051 = vadd.f32 %v2390, %v6050
    %6052 = vmatmul.f32.gmra.mxu0 %v6026
    %v6053 = vpop.f32.mrf.mxu0
    %v6054 = vadd.f32 %v2390, %v6053
    %6055 = vmatmul.f32.gmra.mxu0 %v6028
    %v6056 = vpop.f32.mrf.mxu0
    %v6057 = vadd.f32 %v2390, %v6056
    %6058 = vdwg.mxu0
    %v6059 = vadd.f32 %v79, %v6048
    %v6060 = vadd.f32 %v80, %v6051
    %v6061 = vadd.f32 %v81, %v6054
    %v6062 = vadd.f32 %v82, %v6057
    %v6063 = vsel %vm1592, %v6059, 0.0
    %6064 = vadd.xlane.f32.xlu0 %v6063
    %v6065 = vpop.xlane.xlu0 %6064
    %v6066 = vsel %vm1592, %v6060, 0.0
    %6067 = vadd.xlane.f32.xlu0 %v6066
    %v6068 = vpop.xlane.xlu0 %6067
    %v6069 = vsel %vm1592, %v6061, 0.0
    %6070 = vadd.xlane.f32.xlu0 %v6069
    %v6071 = vpop.xlane.xlu0 %6070
    %v6072 = vsel %vm1592, %v6062, 0.0
    %6073 = vadd.xlane.f32.xlu0 %v6072
    %v6074 = vpop.xlane.xlu0 %6073
    %v6075 = vrcp.pop 32.0
    %v6076 = vmul.f32 32.0, %v6075
    %v6077 = vsub.f32 1.0, %v6076
    %v6078 = vmul.f32 %v6075, %v6077
    %v6079 = vadd.f32 %v6075, %v6078
    %vm6080 = vweird.f32 %v6075
    %v6081 = vsel %vm6080, %v6075, %v6079
    %v6082 = vmul.f32 %v6065, %v6081
    %v6083 = vmul.f32 %v6068, %v6081
    %v6084 = vmul.f32 %v6071, %v6081
    %v6085 = vmul.f32 %v6074, %v6081
    %v6086 = vsub.f32 %v6059, %v6082
    %v6087 = vsub.f32 %v6060, %v6083
    %v6088 = vsub.f32 %v6061, %v6084
    %v6089 = vsub.f32 %v6062, %v6085
    %v6090 = vmul.f32 %v6086, %v6086
    %v6091 = vmul.f32 %v6087, %v6087
    %v6092 = vmul.f32 %v6088, %v6088
    %v6093 = vmul.f32 %v6089, %v6089
    %v6094 = vsel %vm1592, %v6090, 0.0
    %6095 = vadd.xlane.f32.xlu0 %v6094
    %v6096 = vpop.xlane.xlu0 %6095
    %v6097 = vsel %vm1592, %v6091, 0.0
    %6098 = vadd.xlane.f32.xlu0 %v6097
    %v6099 = vpop.xlane.xlu0 %6098
    %v6100 = vsel %vm1592, %v6092, 0.0
    %6101 = vadd.xlane.f32.xlu0 %v6100
    %v6102 = vpop.xlane.xlu0 %6101
    %v6103 = vsel %vm1592, %v6093, 0.0
    %6104 = vadd.xlane.f32.xlu0 %v6103
    %v6105 = vpop.xlane.xlu0 %6104
    %v6106 = vmul.f32 %v6096, %v6081
    %v6107 = vmul.f32 %v6099, %v6081
    %v6108 = vmul.f32 %v6102, %v6081
    %v6109 = vmul.f32 %v6105, %v6081
    %v6110 = vadd.f32 %v6106, 1e-05
    %v6111 = vadd.f32 %v6107, 1e-05
    %v6112 = vadd.f32 %v6108, 1e-05
    %v6113 = vadd.f32 %v6109, 1e-05
    %v6114 = vrsqrt.pop %v6110
    %v6115 = vmul.f32 %v6114, %v6110
    %v6116 = vmul.f32 %v6115, %v6114
    %v6117 = vmul.f32 0.5, %v6116
    %v6118 = vsub.f32 1.5, %v6117
    %v6119 = vmul.f32 %v6114, %v6118
    %vm6120 = vweird.f32 %v6110
    %vm6121 = vweird.f32 %v6114
    %vm6122 = vmor %vm6120, %vm6121
    %v6123 = vsel %vm6122, %v6114, %v6119
    %v6124 = vrsqrt.pop %v6111
    %v6125 = vmul.f32 %v6124, %v6111
    %v6126 = vmul.f32 %v6125, %v6124
    %v6127 = vmul.f32 0.5, %v6126
    %v6128 = vsub.f32 1.5, %v6127
    %v6129 = vmul.f32 %v6124, %v6128
    %vm6130 = vweird.f32 %v6111
    %vm6131 = vweird.f32 %v6124
    %vm6132 = vmor %vm6130, %vm6131
    %v6133 = vsel %vm6132, %v6124, %v6129
    %v6134 = vrsqrt.pop %v6112
    %v6135 = vmul.f32 %v6134, %v6112
    %v6136 = vmul.f32 %v6135, %v6134
    %v6137 = vmul.f32 0.5, %v6136
    %v6138 = vsub.f32 1.5, %v6137
    %v6139 = vmul.f32 %v6134, %v6138
    %vm6140 = vweird.f32 %v6112
    %vm6141 = vweird.f32 %v6134
    %vm6142 = vmor %vm6140, %vm6141
    %v6143 = vsel %vm6142, %v6134, %v6139
    %v6144 = vrsqrt.pop %v6113
    %v6145 = vmul.f32 %v6144, %v6113
    %v6146 = vmul.f32 %v6145, %v6144
    %v6147 = vmul.f32 0.5, %v6146
    %v6148 = vsub.f32 1.5, %v6147
    %v6149 = vmul.f32 %v6144, %v6148
    %vm6150 = vweird.f32 %v6113
    %vm6151 = vweird.f32 %v6144
    %vm6152 = vmor %vm6150, %vm6151
    %v6153 = vsel %vm6152, %v6144, %v6149
    %v6154 = vmul.f32 %v6086, %v6123
    %v6155 = vmul.f32 %v6087, %v6133
    %v6156 = vmul.f32 %v6088, %v6143
    %v6157 = vmul.f32 %v6089, %v6153
    %v6158 = vmul.f32 %v6154, %v2391
    %v6159 = vmul.f32 %v6155, %v2391
    %v6160 = vmul.f32 %v6156, %v2391
    %v6161 = vmul.f32 %v6157, %v2391
    %v6162 = vadd.f32 %v6158, %v2392
    %v6163 = vadd.f32 %v6159, %v2392
    %v6164 = vadd.f32 %v6160, %v2392
    %v6165 = vadd.f32 %v6161, %v2392
    %v6166 = vmul.f32 %v6162, %v2368
    %v6167 = vmul.f32 %v6163, %v2373
    %v6168 = vmul.f32 %v6164, %v2378
    %v6169 = vmul.f32 %v6165, %v2383
    %v6171 = vsel %vm1592, %v6166, 0
    %v6174 = vsel %vm1592, %v6167, 0
    %v6177 = vsel %vm1592, %v6168, 0
    %v6180 = vsel %vm1592, %v6169, 0
    %6182 = vmatpush.msra.mxu0 0.0
    %6183 = vmatpush.msra.mxu0 0.0
    %6184 = vmatpush.msra.mxu0 0.0
    %6185 = vmatpush.msra.mxu0 0.0
    %6186 = vmatpush.msra.mxu0 0.0
    %6187 = vmatpush.msra.mxu0 0.0
    %6188 = vmatpush.msra.mxu0 0.0
    %6189 = vmatpush.msra.mxu0 0.0
    %6190 = vmatpush.msra.mxu0 0.0
    %6191 = vmatpush.msra.mxu0 0.0
    %6192 = vmatpush.msra.mxu0 0.0
    %6193 = vmatpush.msra.mxu0 0.0
    %6194 = vmatpush.msra.mxu0 %v2388
    %6195 = vmatpush.msra.mxu0 %v2387
    %6196 = vmatpush.msra.mxu0 %v2386
    %6197 = vmatpush.msra.mxu0 %v2385
    %6198 = vmatmul.f32.gmra.mxu0 %v6171
    %v6199 = vpop.f32.mrf.mxu0
    %v6200 = vadd.f32 0.0, %v6199
    %6201 = vmatmul.f32.gmra.mxu0 %v6174
    %v6202 = vpop.f32.mrf.mxu0
    %v6203 = vadd.f32 0.0, %v6202
    %6204 = vmatmul.f32.gmra.mxu0 %v6177
    %v6205 = vpop.f32.mrf.mxu0
    %v6206 = vadd.f32 0.0, %v6205
    %6207 = vmatmul.f32.gmra.mxu0 %v6180
    %v6208 = vpop.f32.mrf.mxu0
    %v6209 = vadd.f32 0.0, %v6208
    %6210 = vdwg.mxu0
    %v6211 = vmul.f32 %v6200, %v2563
    %v6212 = vmul.f32 %v6203, %v2565
    %v6213 = vmul.f32 %v6200, %v2567
    %v6214 = vmul.f32 %v6203, %v2569
    %v6215 = vmul.f32 %v6200, %v2571
    %v6216 = vmul.f32 %v6203, %v2573
    %v6217 = vmul.f32 %v6200, %v2575
    %v6218 = vmul.f32 %v6203, %v2577
    %v6219 = vmul.f32 %v6200, %v2579
    %v6220 = vmul.f32 %v6203, %v2581
    %v6221 = vmul.f32 %v6200, %v2583
    %v6222 = vmul.f32 %v6203, %v2585
    %v6223 = vmul.f32 %v6200, %v2587
    %v6224 = vmul.f32 %v6203, %v2589
    %v6225 = vmul.f32 %v6200, %v2591
    %v6226 = vmul.f32 %v6203, %v2593
    %v6227 = vmul.f32 %v6200, %v2595
    %v6228 = vmul.f32 %v6203, %v2597
    %v6229 = vmul.f32 %v6200, %v2599
    %v6230 = vmul.f32 %v6203, %v2601
    %v6231 = vmul.f32 %v6200, %v2603
    %v6232 = vmul.f32 %v6203, %v2605
    %v6233 = vmul.f32 %v6200, %v2607
    %v6234 = vmul.f32 %v6203, %v2609
    %v6235 = vmul.f32 %v6200, %v2611
    %v6236 = vmul.f32 %v6203, %v2613
    %v6237 = vmul.f32 %v6200, %v2615
    %v6238 = vmul.f32 %v6203, %v2617
    %v6239 = vmul.f32 %v6200, %v2619
    %v6240 = vmul.f32 %v6203, %v2621
    %v6241 = vmul.f32 %v6200, %v2623
    %v6242 = vmul.f32 %v6203, %v2625
    %v6243 = vmul.f32 %v6206, %v2627
    %v6244 = vmul.f32 %v6209, %v2629
    %v6245 = vmul.f32 %v6206, %v2631
    %v6246 = vmul.f32 %v6209, %v2633
    %v6247 = vmul.f32 %v6206, %v2635
    %v6248 = vmul.f32 %v6209, %v2637
    %v6249 = vmul.f32 %v6206, %v2639
    %v6250 = vmul.f32 %v6209, %v2641
    %v6251 = vmul.f32 %v6206, %v2643
    %v6252 = vmul.f32 %v6209, %v2645
    %v6253 = vmul.f32 %v6206, %v2647
    %v6254 = vmul.f32 %v6209, %v2649
    %v6255 = vmul.f32 %v6206, %v2651
    %v6256 = vmul.f32 %v6209, %v2653
    %v6257 = vmul.f32 %v6206, %v2655
    %v6258 = vmul.f32 %v6209, %v2657
    %v6259 = vmul.f32 %v6206, %v2659
    %v6260 = vmul.f32 %v6209, %v2661
    %v6261 = vmul.f32 %v6206, %v2663
    %v6262 = vmul.f32 %v6209, %v2665
    %v6263 = vmul.f32 %v6206, %v2667
    %v6264 = vmul.f32 %v6209, %v2669
    %v6265 = vmul.f32 %v6206, %v2671
    %v6266 = vmul.f32 %v6209, %v2673
    %v6267 = vmul.f32 %v6206, %v2675
    %v6268 = vmul.f32 %v6209, %v2677
    %v6269 = vmul.f32 %v6206, %v2679
    %v6270 = vmul.f32 %v6209, %v2681
    %v6271 = vmul.f32 %v6206, %v2683
    %v6272 = vmul.f32 %v6209, %v2685
    %v6273 = vmul.f32 %v6206, %v2687
    %v6274 = vmul.f32 %v6209, %v2689
    %v6275 = vadd.f32 %v6211, %v2947
    %v6276 = vadd.f32 %v6212, %v2949
    %v6277 = vadd.f32 %v6213, %v2951
    %v6278 = vadd.f32 %v6214, %v2953
    %v6279 = vadd.f32 %v6215, %v2955
    %v6280 = vadd.f32 %v6216, %v2957
    %v6281 = vadd.f32 %v6217, %v2959
    %v6282 = vadd.f32 %v6218, %v2961
    %v6283 = vadd.f32 %v6219, %v2963
    %v6284 = vadd.f32 %v6220, %v2965
    %v6285 = vadd.f32 %v6221, %v2967
    %v6286 = vadd.f32 %v6222, %v2969
    %v6287 = vadd.f32 %v6223, %v2971
    %v6288 = vadd.f32 %v6224, %v2973
    %v6289 = vadd.f32 %v6225, %v2975
    %v6290 = vadd.f32 %v6226, %v2977
    %v6291 = vadd.f32 %v6227, %v2979
    %v6292 = vadd.f32 %v6228, %v2981
    %v6293 = vadd.f32 %v6229, %v2983
    %v6294 = vadd.f32 %v6230, %v2985
    %v6295 = vadd.f32 %v6231, %v2987
    %v6296 = vadd.f32 %v6232, %v2989
    %v6297 = vadd.f32 %v6233, %v2991
    %v6298 = vadd.f32 %v6234, %v2993
    %v6299 = vadd.f32 %v6235, %v2995
    %v6300 = vadd.f32 %v6236, %v2997
    %v6301 = vadd.f32 %v6237, %v2999
    %v6302 = vadd.f32 %v6238, %v3001
    %v6303 = vadd.f32 %v6239, %v3003
    %v6304 = vadd.f32 %v6240, %v3005
    %v6305 = vadd.f32 %v6241, %v3007
    %v6306 = vadd.f32 %v6242, %v3009
    %v6307 = vadd.f32 %v6243, %v3011
    %v6308 = vadd.f32 %v6244, %v3013
    %v6309 = vadd.f32 %v6245, %v3015
    %v6310 = vadd.f32 %v6246, %v3017
    %v6311 = vadd.f32 %v6247, %v3019
    %v6312 = vadd.f32 %v6248, %v3021
    %v6313 = vadd.f32 %v6249, %v3023
    %v6314 = vadd.f32 %v6250, %v3025
    %v6315 = vadd.f32 %v6251, %v3027
    %v6316 = vadd.f32 %v6252, %v3029
    %v6317 = vadd.f32 %v6253, %v3031
    %v6318 = vadd.f32 %v6254, %v3033
    %v6319 = vadd.f32 %v6255, %v3035
    %v6320 = vadd.f32 %v6256, %v3037
    %v6321 = vadd.f32 %v6257, %v3039
    %v6322 = vadd.f32 %v6258, %v3041
    %v6323 = vadd.f32 %v6259, %v3043
    %v6324 = vadd.f32 %v6260, %v3045
    %v6325 = vadd.f32 %v6261, %v3047
    %v6326 = vadd.f32 %v6262, %v3049
    %v6327 = vadd.f32 %v6263, %v3051
    %v6328 = vadd.f32 %v6264, %v3053
    %v6329 = vadd.f32 %v6265, %v3055
    %v6330 = vadd.f32 %v6266, %v3057
    %v6331 = vadd.f32 %v6267, %v3059
    %v6332 = vadd.f32 %v6268, %v3061
    %v6333 = vadd.f32 %v6269, %v3063
    %v6334 = vadd.f32 %v6270, %v3065
    %v6335 = vadd.f32 %v6271, %v3067
    %v6336 = vadd.f32 %v6272, %v3069
    %v6337 = vadd.f32 %v6273, %v3071
    %v6338 = vadd.f32 %v6274, %v3073
    %v6343 = vrot.slane %v6200, 1
    %v6344 = vrot.slane %v6200, 2
    %v6345 = vrot.slane %v6200, 3
    %v6346 = vrot.slane %v6200, 4
    %v6347 = vrot.slane %v6200, 5
    %v6348 = vrot.slane %v6200, 6
    %v6349 = vrot.slane %v6200, 7
    %v6350 = vrot.slane %v6203, 1
    %v6351 = vrot.slane %v6203, 2
    %v6352 = vrot.slane %v6203, 3
    %v6353 = vrot.slane %v6203, 4
    %v6354 = vrot.slane %v6203, 5
    %v6355 = vrot.slane %v6203, 6
    %v6356 = vrot.slane %v6203, 7
    %v6357 = vrot.slane %v6206, 1
    %v6358 = vrot.slane %v6206, 2
    %v6359 = vrot.slane %v6206, 3
    %v6360 = vrot.slane %v6206, 4
    %v6361 = vrot.slane %v6206, 5
    %v6362 = vrot.slane %v6206, 6
    %v6363 = vrot.slane %v6206, 7
    %v6364 = vrot.slane %v6209, 1
    %v6365 = vrot.slane %v6209, 2
    %v6366 = vrot.slane %v6209, 3
    %v6367 = vrot.slane %v6209, 4
    %v6368 = vrot.slane %v6209, 5
    %v6369 = vrot.slane %v6209, 6
    %v6370 = vrot.slane %v6209, 7
    %v6371 = vperm.slane %v6200, 0
    %v6372 = vperm.slane %v6343, 0
    %v6373 = vperm.slane %v6344, 0
    %v6374 = vperm.slane %v6345, 0
    %v6375 = vperm.slane %v6346, 0
    %v6376 = vperm.slane %v6347, 0
    %v6377 = vperm.slane %v6348, 0
    %v6378 = vperm.slane %v6349, 0
    %v6379 = vperm.slane %v6203, 0
    %v6380 = vperm.slane %v6350, 0
    %v6381 = vperm.slane %v6351, 0
    %v6382 = vperm.slane %v6352, 0
    %v6383 = vperm.slane %v6353, 0
    %v6384 = vperm.slane %v6354, 0
    %v6385 = vperm.slane %v6355, 0
    %v6386 = vperm.slane %v6356, 0
    %v6387 = vperm.slane %v6206, 0
    %v6388 = vperm.slane %v6357, 0
    %v6389 = vperm.slane %v6358, 0
    %v6390 = vperm.slane %v6359, 0
    %v6391 = vperm.slane %v6360, 0
    %v6392 = vperm.slane %v6361, 0
    %v6393 = vperm.slane %v6362, 0
    %v6394 = vperm.slane %v6363, 0
    %v6395 = vperm.slane %v6209, 0
    %v6396 = vperm.slane %v6364, 0
    %v6397 = vperm.slane %v6365, 0
    %v6398 = vperm.slane %v6366, 0
    %v6399 = vperm.slane %v6367, 0
    %v6400 = vperm.slane %v6368, 0
    %v6401 = vperm.slane %v6369, 0
    %v6402 = vperm.slane %v6370, 0
    %6499 = vrot.lane.b32.xlu0 %v6275, 96
    %v6500 = vpop.permute.xlu0 %6499
    %6501 = vrot.lane.b32.xlu0 %v6276, 96
    %v6502 = vpop.permute.xlu0 %6501
    %6503 = vrot.lane.b32.xlu0 %v6277, 96
    %v6504 = vpop.permute.xlu0 %6503
    %6505 = vrot.lane.b32.xlu0 %v6278, 96
    %v6506 = vpop.permute.xlu0 %6505
    %6507 = vrot.lane.b32.xlu0 %v6279, 96
    %v6508 = vpop.permute.xlu0 %6507
    %6509 = vrot.lane.b32.xlu0 %v6280, 96
    %v6510 = vpop.permute.xlu0 %6509
    %6511 = vrot.lane.b32.xlu0 %v6281, 96
    %v6512 = vpop.permute.xlu0 %6511
    %6513 = vrot.lane.b32.xlu0 %v6282, 96
    %v6514 = vpop.permute.xlu0 %6513
    %6515 = vrot.lane.b32.xlu0 %v6283, 96
    %v6516 = vpop.permute.xlu0 %6515
    %6517 = vrot.lane.b32.xlu0 %v6284, 96
    %v6518 = vpop.permute.xlu0 %6517
    %6519 = vrot.lane.b32.xlu0 %v6285, 96
    %v6520 = vpop.permute.xlu0 %6519
    %6521 = vrot.lane.b32.xlu0 %v6286, 96
    %v6522 = vpop.permute.xlu0 %6521
    %6523 = vrot.lane.b32.xlu0 %v6287, 96
    %v6524 = vpop.permute.xlu0 %6523
    %6525 = vrot.lane.b32.xlu0 %v6288, 96
    %v6526 = vpop.permute.xlu0 %6525
    %6527 = vrot.lane.b32.xlu0 %v6289, 96
    %v6528 = vpop.permute.xlu0 %6527
    %6529 = vrot.lane.b32.xlu0 %v6290, 96
    %v6530 = vpop.permute.xlu0 %6529
    %6531 = vrot.lane.b32.xlu0 %v6291, 96
    %v6532 = vpop.permute.xlu0 %6531
    %6533 = vrot.lane.b32.xlu0 %v6292, 96
    %v6534 = vpop.permute.xlu0 %6533
    %6535 = vrot.lane.b32.xlu0 %v6293, 96
    %v6536 = vpop.permute.xlu0 %6535
    %6537 = vrot.lane.b32.xlu0 %v6294, 96
    %v6538 = vpop.permute.xlu0 %6537
    %6539 = vrot.lane.b32.xlu0 %v6295, 96
    %v6540 = vpop.permute.xlu0 %6539
    %6541 = vrot.lane.b32.xlu0 %v6296, 96
    %v6542 = vpop.permute.xlu0 %6541
    %6543 = vrot.lane.b32.xlu0 %v6297, 96
    %v6544 = vpop.permute.xlu0 %6543
    %6545 = vrot.lane.b32.xlu0 %v6298, 96
    %v6546 = vpop.permute.xlu0 %6545
    %6547 = vrot.lane.b32.xlu0 %v6299, 96
    %v6548 = vpop.permute.xlu0 %6547
    %6549 = vrot.lane.b32.xlu0 %v6300, 96
    %v6550 = vpop.permute.xlu0 %6549
    %6551 = vrot.lane.b32.xlu0 %v6301, 96
    %v6552 = vpop.permute.xlu0 %6551
    %6553 = vrot.lane.b32.xlu0 %v6302, 96
    %v6554 = vpop.permute.xlu0 %6553
    %6555 = vrot.lane.b32.xlu0 %v6303, 96
    %v6556 = vpop.permute.xlu0 %6555
    %6557 = vrot.lane.b32.xlu0 %v6304, 96
    %v6558 = vpop.permute.xlu0 %6557
    %6559 = vrot.lane.b32.xlu0 %v6305, 96
    %v6560 = vpop.permute.xlu0 %6559
    %6561 = vrot.lane.b32.xlu0 %v6306, 96
    %v6562 = vpop.permute.xlu0 %6561
    %6563 = vrot.lane.b32.xlu0 %v6307, 96
    %v6564 = vpop.permute.xlu0 %6563
    %6565 = vrot.lane.b32.xlu0 %v6308, 96
    %v6566 = vpop.permute.xlu0 %6565
    %6567 = vrot.lane.b32.xlu0 %v6309, 96
    %v6568 = vpop.permute.xlu0 %6567
    %6569 = vrot.lane.b32.xlu0 %v6310, 96
    %v6570 = vpop.permute.xlu0 %6569
    %6571 = vrot.lane.b32.xlu0 %v6311, 96
    %v6572 = vpop.permute.xlu0 %6571
    %6573 = vrot.lane.b32.xlu0 %v6312, 96
    %v6574 = vpop.permute.xlu0 %6573
    %6575 = vrot.lane.b32.xlu0 %v6313, 96
    %v6576 = vpop.permute.xlu0 %6575
    %6577 = vrot.lane.b32.xlu0 %v6314, 96
    %v6578 = vpop.permute.xlu0 %6577
    %6579 = vrot.lane.b32.xlu0 %v6315, 96
    %v6580 = vpop.permute.xlu0 %6579
    %6581 = vrot.lane.b32.xlu0 %v6316, 96
    %v6582 = vpop.permute.xlu0 %6581
    %6583 = vrot.lane.b32.xlu0 %v6317, 96
    %v6584 = vpop.permute.xlu0 %6583
    %6585 = vrot.lane.b32.xlu0 %v6318, 96
    %v6586 = vpop.permute.xlu0 %6585
    %6587 = vrot.lane.b32.xlu0 %v6319, 96
    %v6588 = vpop.permute.xlu0 %6587
    %6589 = vrot.lane.b32.xlu0 %v6320, 96
    %v6590 = vpop.permute.xlu0 %6589
    %6591 = vrot.lane.b32.xlu0 %v6321, 96
    %v6592 = vpop.permute.xlu0 %6591
    %6593 = vrot.lane.b32.xlu0 %v6322, 96
    %v6594 = vpop.permute.xlu0 %6593
    %6595 = vrot.lane.b32.xlu0 %v6323, 96
    %v6596 = vpop.permute.xlu0 %6595
    %6597 = vrot.lane.b32.xlu0 %v6324, 96
    %v6598 = vpop.permute.xlu0 %6597
    %6599 = vrot.lane.b32.xlu0 %v6325, 96
    %v6600 = vpop.permute.xlu0 %6599
    %6601 = vrot.lane.b32.xlu0 %v6326, 96
    %v6602 = vpop.permute.xlu0 %6601
    %6603 = vrot.lane.b32.xlu0 %v6327, 96
    %v6604 = vpop.permute.xlu0 %6603
    %6605 = vrot.lane.b32.xlu0 %v6328, 96
    %v6606 = vpop.permute.xlu0 %6605
    %6607 = vrot.lane.b32.xlu0 %v6329, 96
    %v6608 = vpop.permute.xlu0 %6607
    %6609 = vrot.lane.b32.xlu0 %v6330, 96
    %v6610 = vpop.permute.xlu0 %6609
    %6611 = vrot.lane.b32.xlu0 %v6331, 96
    %v6612 = vpop.permute.xlu0 %6611
    %6613 = vrot.lane.b32.xlu0 %v6332, 96
    %v6614 = vpop.permute.xlu0 %6613
    %6615 = vrot.lane.b32.xlu0 %v6333, 96
    %v6616 = vpop.permute.xlu0 %6615
    %6617 = vrot.lane.b32.xlu0 %v6334, 96
    %v6618 = vpop.permute.xlu0 %6617
    %6619 = vrot.lane.b32.xlu0 %v6335, 96
    %v6620 = vpop.permute.xlu0 %6619
    %6621 = vrot.lane.b32.xlu0 %v6336, 96
    %v6622 = vpop.permute.xlu0 %6621
    %6623 = vrot.lane.b32.xlu0 %v6337, 96
    %v6624 = vpop.permute.xlu0 %6623
    %6625 = vrot.lane.b32.xlu0 %v6338, 96
    %v6626 = vpop.permute.xlu0 %6625
    %v6691 = vmul.f32 %v6371, %v6500
    %v6692 = vmul.f32 %v6371, %v6502
    %v6693 = vmul.f32 %v6372, %v6504
    %v6694 = vmul.f32 %v6372, %v6506
    %v6695 = vmul.f32 %v6373, %v6508
    %v6696 = vmul.f32 %v6373, %v6510
    %v6697 = vmul.f32 %v6374, %v6512
    %v6698 = vmul.f32 %v6374, %v6514
    %v6699 = vmul.f32 %v6375, %v6516
    %v6700 = vmul.f32 %v6375, %v6518
    %v6701 = vmul.f32 %v6376, %v6520
    %v6702 = vmul.f32 %v6376, %v6522
    %v6703 = vmul.f32 %v6377, %v6524
    %v6704 = vmul.f32 %v6377, %v6526
    %v6705 = vmul.f32 %v6378, %v6528
    %v6706 = vmul.f32 %v6378, %v6530
    %v6707 = vmul.f32 %v6379, %v6532
    %v6708 = vmul.f32 %v6379, %v6534
    %v6709 = vmul.f32 %v6380, %v6536
    %v6710 = vmul.f32 %v6380, %v6538
    %v6711 = vmul.f32 %v6381, %v6540
    %v6712 = vmul.f32 %v6381, %v6542
    %v6713 = vmul.f32 %v6382, %v6544
    %v6714 = vmul.f32 %v6382, %v6546
    %v6715 = vmul.f32 %v6383, %v6548
    %v6716 = vmul.f32 %v6383, %v6550
    %v6717 = vmul.f32 %v6384, %v6552
    %v6718 = vmul.f32 %v6384, %v6554
    %v6719 = vmul.f32 %v6385, %v6556
    %v6720 = vmul.f32 %v6385, %v6558
    %v6721 = vmul.f32 %v6386, %v6560
    %v6722 = vmul.f32 %v6386, %v6562
    %v6723 = vmul.f32 %v6387, %v6564
    %v6724 = vmul.f32 %v6387, %v6566
    %v6725 = vmul.f32 %v6388, %v6568
    %v6726 = vmul.f32 %v6388, %v6570
    %v6727 = vmul.f32 %v6389, %v6572
    %v6728 = vmul.f32 %v6389, %v6574
    %v6729 = vmul.f32 %v6390, %v6576
    %v6730 = vmul.f32 %v6390, %v6578
    %v6731 = vmul.f32 %v6391, %v6580
    %v6732 = vmul.f32 %v6391, %v6582
    %v6733 = vmul.f32 %v6392, %v6584
    %v6734 = vmul.f32 %v6392, %v6586
    %v6735 = vmul.f32 %v6393, %v6588
    %v6736 = vmul.f32 %v6393, %v6590
    %v6737 = vmul.f32 %v6394, %v6592
    %v6738 = vmul.f32 %v6394, %v6594
    %v6739 = vmul.f32 %v6395, %v6596
    %v6740 = vmul.f32 %v6395, %v6598
    %v6741 = vmul.f32 %v6396, %v6600
    %v6742 = vmul.f32 %v6396, %v6602
    %v6743 = vmul.f32 %v6397, %v6604
    %v6744 = vmul.f32 %v6397, %v6606
    %v6745 = vmul.f32 %v6398, %v6608
    %v6746 = vmul.f32 %v6398, %v6610
    %v6747 = vmul.f32 %v6399, %v6612
    %v6748 = vmul.f32 %v6399, %v6614
    %v6749 = vmul.f32 %v6400, %v6616
    %v6750 = vmul.f32 %v6400, %v6618
    %v6751 = vmul.f32 %v6401, %v6620
    %v6752 = vmul.f32 %v6401, %v6622
    %v6753 = vmul.f32 %v6402, %v6624
    %v6754 = vmul.f32 %v6402, %v6626
    %v6756 = vsel %vm1592, %v6691, 0
    %v6759 = vsel %vm1592, %v6692, 0
    %v6762 = vsel %vm1592, %v6693, 0
    %v6765 = vsel %vm1592, %v6694, 0
    %v6768 = vsel %vm1592, %v6695, 0
    %v6771 = vsel %vm1592, %v6696, 0
    %v6774 = vsel %vm1592, %v6697, 0
    %v6777 = vsel %vm1592, %v6698, 0
    %v6780 = vsel %vm1592, %v6699, 0
    %v6783 = vsel %vm1592, %v6700, 0
    %v6786 = vsel %vm1592, %v6701, 0
    %v6789 = vsel %vm1592, %v6702, 0
    %v6792 = vsel %vm1592, %v6703, 0
    %v6795 = vsel %vm1592, %v6704, 0
    %v6798 = vsel %vm1592, %v6705, 0
    %v6801 = vsel %vm1592, %v6706, 0
    %v6804 = vsel %vm1592, %v6707, 0
    %v6807 = vsel %vm1592, %v6708, 0
    %v6810 = vsel %vm1592, %v6709, 0
    %v6813 = vsel %vm1592, %v6710, 0
    %v6816 = vsel %vm1592, %v6711, 0
    %v6819 = vsel %vm1592, %v6712, 0
    %v6822 = vsel %vm1592, %v6713, 0
    %v6825 = vsel %vm1592, %v6714, 0
    %v6828 = vsel %vm1592, %v6715, 0
    %v6831 = vsel %vm1592, %v6716, 0
    %v6834 = vsel %vm1592, %v6717, 0
    %v6837 = vsel %vm1592, %v6718, 0
    %v6840 = vsel %vm1592, %v6719, 0
    %v6843 = vsel %vm1592, %v6720, 0
    %v6846 = vsel %vm1592, %v6721, 0
    %v6849 = vsel %vm1592, %v6722, 0
    %v6852 = vsel %vm1592, %v6723, 0
    %v6855 = vsel %vm1592, %v6724, 0
    %v6858 = vsel %vm1592, %v6725, 0
    %v6861 = vsel %vm1592, %v6726, 0
    %v6864 = vsel %vm1592, %v6727, 0
    %v6867 = vsel %vm1592, %v6728, 0
    %v6870 = vsel %vm1592, %v6729, 0
    %v6873 = vsel %vm1592, %v6730, 0
    %v6876 = vsel %vm1592, %v6731, 0
    %v6879 = vsel %vm1592, %v6732, 0
    %v6882 = vsel %vm1592, %v6733, 0
    %v6885 = vsel %vm1592, %v6734, 0
    %v6888 = vsel %vm1592, %v6735, 0
    %v6891 = vsel %vm1592, %v6736, 0
    %v6894 = vsel %vm1592, %v6737, 0
    %v6897 = vsel %vm1592, %v6738, 0
    %v6900 = vsel %vm1592, %v6739, 0
    %v6903 = vsel %vm1592, %v6740, 0
    %v6906 = vsel %vm1592, %v6741, 0
    %v6909 = vsel %vm1592, %v6742, 0
    %v6912 = vsel %vm1592, %v6743, 0
    %v6915 = vsel %vm1592, %v6744, 0
    %v6918 = vsel %vm1592, %v6745, 0
    %v6921 = vsel %vm1592, %v6746, 0
    %v6924 = vsel %vm1592, %v6747, 0
    %v6927 = vsel %vm1592, %v6748, 0
    %v6930 = vsel %vm1592, %v6749, 0
    %v6933 = vsel %vm1592, %v6750, 0
    %v6936 = vsel %vm1592, %v6751, 0
    %v6939 = vsel %vm1592, %v6752, 0
    %v6942 = vsel %vm1592, %v6753, 0
    %v6945 = vsel %vm1592, %v6754, 0
    %6947 = vmatpush.msra.mxu0 0.0
    %6948 = vmatpush.msra.mxu0 0.0
    %6949 = vmatpush.msra.mxu0 0.0
    %6950 = vmatpush.msra.mxu0 0.0
    %6951 = vmatpush.msra.mxu0 0.0
    %6952 = vmatpush.msra.mxu0 0.0
    %6953 = vmatpush.msra.mxu0 0.0
    %6954 = vmatpush.msra.mxu0 0.0
    %6955 = vmatpush.msra.mxu0 0.0
    %6956 = vmatpush.msra.mxu0 0.0
    %6957 = vmatpush.msra.mxu0 0.0
    %6958 = vmatpush.msra.mxu0 0.0
    %6959 = vmatpush.msra.mxu0 %v2236
    %6960 = vmatpush.msra.mxu0 %v2235
    %6961 = vmatpush.msra.mxu0 %v2234
    %6962 = vmatpush.msra.mxu0 %v2233
    %6963 = vmatmul.f32.gmra.mxu0 %v6756
    %v6964 = vpop.f32.mrf.mxu0
    %v6965 = vadd.f32 0.0, %v6964
    %6966 = vmatmul.f32.gmra.mxu0 %v6759
    %v6967 = vpop.f32.mrf.mxu0
    %v6968 = vadd.f32 0.0, %v6967
    %6969 = vmatmul.f32.gmra.mxu0 %v6762
    %v6970 = vpop.f32.mrf.mxu0
    %v6971 = vadd.f32 0.0, %v6970
    %6972 = vmatmul.f32.gmra.mxu0 %v6765
    %v6973 = vpop.f32.mrf.mxu0
    %v6974 = vadd.f32 0.0, %v6973
    %6975 = vmatmul.f32.gmra.mxu0 %v6768
    %v6976 = vpop.f32.mrf.mxu0
    %v6977 = vadd.f32 0.0, %v6976
    %6978 = vmatmul.f32.gmra.mxu0 %v6771
    %v6979 = vpop.f32.mrf.mxu0
    %v6980 = vadd.f32 0.0, %v6979
    %6981 = vmatmul.f32.gmra.mxu0 %v6774
    %v6982 = vpop.f32.mrf.mxu0
    %v6983 = vadd.f32 0.0, %v6982
    %6984 = vmatmul.f32.gmra.mxu0 %v6777
    %v6985 = vpop.f32.mrf.mxu0
    %v6986 = vadd.f32 0.0, %v6985
    %6987 = vmatmul.f32.gmra.mxu0 %v6780
    %v6988 = vpop.f32.mrf.mxu0
    %v6989 = vadd.f32 0.0, %v6988
    %6990 = vmatmul.f32.gmra.mxu0 %v6783
    %v6991 = vpop.f32.mrf.mxu0
    %v6992 = vadd.f32 0.0, %v6991
    %6993 = vmatmul.f32.gmra.mxu0 %v6786
    %v6994 = vpop.f32.mrf.mxu0
    %v6995 = vadd.f32 0.0, %v6994
    %6996 = vmatmul.f32.gmra.mxu0 %v6789
    %v6997 = vpop.f32.mrf.mxu0
    %v6998 = vadd.f32 0.0, %v6997
    %6999 = vmatmul.f32.gmra.mxu0 %v6792
    %v7000 = vpop.f32.mrf.mxu0
    %v7001 = vadd.f32 0.0, %v7000
    %7002 = vmatmul.f32.gmra.mxu0 %v6795
    %v7003 = vpop.f32.mrf.mxu0
    %v7004 = vadd.f32 0.0, %v7003
    %7005 = vmatmul.f32.gmra.mxu0 %v6798
    %v7006 = vpop.f32.mrf.mxu0
    %v7007 = vadd.f32 0.0, %v7006
    %7008 = vmatmul.f32.gmra.mxu0 %v6801
    %v7009 = vpop.f32.mrf.mxu0
    %v7010 = vadd.f32 0.0, %v7009
    %7011 = vmatmul.f32.gmra.mxu0 %v6804
    %v7012 = vpop.f32.mrf.mxu0
    %v7013 = vadd.f32 0.0, %v7012
    %7014 = vmatmul.f32.gmra.mxu0 %v6807
    %v7015 = vpop.f32.mrf.mxu0
    %v7016 = vadd.f32 0.0, %v7015
    %7017 = vmatmul.f32.gmra.mxu0 %v6810
    %v7018 = vpop.f32.mrf.mxu0
    %v7019 = vadd.f32 0.0, %v7018
    %7020 = vmatmul.f32.gmra.mxu0 %v6813
    %v7021 = vpop.f32.mrf.mxu0
    %v7022 = vadd.f32 0.0, %v7021
    %7023 = vmatmul.f32.gmra.mxu0 %v6816
    %v7024 = vpop.f32.mrf.mxu0
    %v7025 = vadd.f32 0.0, %v7024
    %7026 = vmatmul.f32.gmra.mxu0 %v6819
    %v7027 = vpop.f32.mrf.mxu0
    %v7028 = vadd.f32 0.0, %v7027
    %7029 = vmatmul.f32.gmra.mxu0 %v6822
    %v7030 = vpop.f32.mrf.mxu0
    %v7031 = vadd.f32 0.0, %v7030
    %7032 = vmatmul.f32.gmra.mxu0 %v6825
    %v7033 = vpop.f32.mrf.mxu0
    %v7034 = vadd.f32 0.0, %v7033
    %7035 = vmatmul.f32.gmra.mxu0 %v6828
    %v7036 = vpop.f32.mrf.mxu0
    %v7037 = vadd.f32 0.0, %v7036
    %7038 = vmatmul.f32.gmra.mxu0 %v6831
    %v7039 = vpop.f32.mrf.mxu0
    %v7040 = vadd.f32 0.0, %v7039
    %7041 = vmatmul.f32.gmra.mxu0 %v6834
    %v7042 = vpop.f32.mrf.mxu0
    %v7043 = vadd.f32 0.0, %v7042
    %7044 = vmatmul.f32.gmra.mxu0 %v6837
    %v7045 = vpop.f32.mrf.mxu0
    %v7046 = vadd.f32 0.0, %v7045
    %7047 = vmatmul.f32.gmra.mxu0 %v6840
    %v7048 = vpop.f32.mrf.mxu0
    %v7049 = vadd.f32 0.0, %v7048
    %7050 = vmatmul.f32.gmra.mxu0 %v6843
    %v7051 = vpop.f32.mrf.mxu0
    %v7052 = vadd.f32 0.0, %v7051
    %7053 = vmatmul.f32.gmra.mxu0 %v6846
    %v7054 = vpop.f32.mrf.mxu0
    %v7055 = vadd.f32 0.0, %v7054
    %7056 = vmatmul.f32.gmra.mxu0 %v6849
    %v7057 = vpop.f32.mrf.mxu0
    %v7058 = vadd.f32 0.0, %v7057
    %7059 = vmatmul.f32.gmra.mxu0 %v6852
    %v7060 = vpop.f32.mrf.mxu0
    %v7061 = vadd.f32 0.0, %v7060
    %7062 = vmatmul.f32.gmra.mxu0 %v6855
    %v7063 = vpop.f32.mrf.mxu0
    %v7064 = vadd.f32 0.0, %v7063
    %7065 = vmatmul.f32.gmra.mxu0 %v6858
    %v7066 = vpop.f32.mrf.mxu0
    %v7067 = vadd.f32 0.0, %v7066
    %7068 = vmatmul.f32.gmra.mxu0 %v6861
    %v7069 = vpop.f32.mrf.mxu0
    %v7070 = vadd.f32 0.0, %v7069
    %7071 = vmatmul.f32.gmra.mxu0 %v6864
    %v7072 = vpop.f32.mrf.mxu0
    %v7073 = vadd.f32 0.0, %v7072
    %7074 = vmatmul.f32.gmra.mxu0 %v6867
    %v7075 = vpop.f32.mrf.mxu0
    %v7076 = vadd.f32 0.0, %v7075
    %7077 = vmatmul.f32.gmra.mxu0 %v6870
    %v7078 = vpop.f32.mrf.mxu0
    %v7079 = vadd.f32 0.0, %v7078
    %7080 = vmatmul.f32.gmra.mxu0 %v6873
    %v7081 = vpop.f32.mrf.mxu0
    %v7082 = vadd.f32 0.0, %v7081
    %7083 = vmatmul.f32.gmra.mxu0 %v6876
    %v7084 = vpop.f32.mrf.mxu0
    %v7085 = vadd.f32 0.0, %v7084
    %7086 = vmatmul.f32.gmra.mxu0 %v6879
    %v7087 = vpop.f32.mrf.mxu0
    %v7088 = vadd.f32 0.0, %v7087
    %7089 = vmatmul.f32.gmra.mxu0 %v6882
    %v7090 = vpop.f32.mrf.mxu0
    %v7091 = vadd.f32 0.0, %v7090
    %7092 = vmatmul.f32.gmra.mxu0 %v6885
    %v7093 = vpop.f32.mrf.mxu0
    %v7094 = vadd.f32 0.0, %v7093
    %7095 = vmatmul.f32.gmra.mxu0 %v6888
    %v7096 = vpop.f32.mrf.mxu0
    %v7097 = vadd.f32 0.0, %v7096
    %7098 = vmatmul.f32.gmra.mxu0 %v6891
    %v7099 = vpop.f32.mrf.mxu0
    %v7100 = vadd.f32 0.0, %v7099
    %7101 = vmatmul.f32.gmra.mxu0 %v6894
    %v7102 = vpop.f32.mrf.mxu0
    %v7103 = vadd.f32 0.0, %v7102
    %7104 = vmatmul.f32.gmra.mxu0 %v6897
    %v7105 = vpop.f32.mrf.mxu0
    %v7106 = vadd.f32 0.0, %v7105
    %7107 = vmatmul.f32.gmra.mxu0 %v6900
    %v7108 = vpop.f32.mrf.mxu0
    %v7109 = vadd.f32 0.0, %v7108
    %7110 = vmatmul.f32.gmra.mxu0 %v6903
    %v7111 = vpop.f32.mrf.mxu0
    %v7112 = vadd.f32 0.0, %v7111
    %7113 = vmatmul.f32.gmra.mxu0 %v6906
    %v7114 = vpop.f32.mrf.mxu0
    %v7115 = vadd.f32 0.0, %v7114
    %7116 = vmatmul.f32.gmra.mxu0 %v6909
    %v7117 = vpop.f32.mrf.mxu0
    %v7118 = vadd.f32 0.0, %v7117
    %7119 = vmatmul.f32.gmra.mxu0 %v6912
    %v7120 = vpop.f32.mrf.mxu0
    %v7121 = vadd.f32 0.0, %v7120
    %7122 = vmatmul.f32.gmra.mxu0 %v6915
    %v7123 = vpop.f32.mrf.mxu0
    %v7124 = vadd.f32 0.0, %v7123
    %7125 = vmatmul.f32.gmra.mxu0 %v6918
    %v7126 = vpop.f32.mrf.mxu0
    %v7127 = vadd.f32 0.0, %v7126
    %7128 = vmatmul.f32.gmra.mxu0 %v6921
    %v7129 = vpop.f32.mrf.mxu0
    %v7130 = vadd.f32 0.0, %v7129
    %7131 = vmatmul.f32.gmra.mxu0 %v6924
    %v7132 = vpop.f32.mrf.mxu0
    %v7133 = vadd.f32 0.0, %v7132
    %7134 = vmatmul.f32.gmra.mxu0 %v6927
    %v7135 = vpop.f32.mrf.mxu0
    %v7136 = vadd.f32 0.0, %v7135
    %7137 = vmatmul.f32.gmra.mxu0 %v6930
    %v7138 = vpop.f32.mrf.mxu0
    %v7139 = vadd.f32 0.0, %v7138
    %7140 = vmatmul.f32.gmra.mxu0 %v6933
    %v7141 = vpop.f32.mrf.mxu0
    %v7142 = vadd.f32 0.0, %v7141
    %7143 = vmatmul.f32.gmra.mxu0 %v6936
    %v7144 = vpop.f32.mrf.mxu0
    %v7145 = vadd.f32 0.0, %v7144
    %7146 = vmatmul.f32.gmra.mxu0 %v6939
    %v7147 = vpop.f32.mrf.mxu0
    %v7148 = vadd.f32 0.0, %v7147
    %7149 = vmatmul.f32.gmra.mxu0 %v6942
    %v7150 = vpop.f32.mrf.mxu0
    %v7151 = vadd.f32 0.0, %v7150
    %7152 = vmatmul.f32.gmra.mxu0 %v6945
    %v7153 = vpop.f32.mrf.mxu0
    %v7154 = vadd.f32 0.0, %v7153
    %7155 = vdwg.mxu0
    %v7156 = vadd.f32 %v6965, %v2301
    %v7157 = vadd.f32 %v6968, %v2302
    %v7158 = vadd.f32 %v6971, %v2303
    %v7159 = vadd.f32 %v6974, %v2304
    %v7160 = vadd.f32 %v6977, %v2305
    %v7161 = vadd.f32 %v6980, %v2306
    %v7162 = vadd.f32 %v6983, %v2307
    %v7163 = vadd.f32 %v6986, %v2308
    %v7164 = vadd.f32 %v6989, %v2309
    %v7165 = vadd.f32 %v6992, %v2310
    %v7166 = vadd.f32 %v6995, %v2311
    %v7167 = vadd.f32 %v6998, %v2312
    %v7168 = vadd.f32 %v7001, %v2313
    %v7169 = vadd.f32 %v7004, %v2314
    %v7170 = vadd.f32 %v7007, %v2315
    %v7171 = vadd.f32 %v7010, %v2316
    %v7172 = vadd.f32 %v7013, %v2317
    %v7173 = vadd.f32 %v7016, %v2318
    %v7174 = vadd.f32 %v7019, %v2319
    %v7175 = vadd.f32 %v7022, %v2320
    %v7176 = vadd.f32 %v7025, %v2321
    %v7177 = vadd.f32 %v7028, %v2322
    %v7178 = vadd.f32 %v7031, %v2323
    %v7179 = vadd.f32 %v7034, %v2324
    %v7180 = vadd.f32 %v7037, %v2325
    %v7181 = vadd.f32 %v7040, %v2326
    %v7182 = vadd.f32 %v7043, %v2327
    %v7183 = vadd.f32 %v7046, %v2328
    %v7184 = vadd.f32 %v7049, %v2329
    %v7185 = vadd.f32 %v7052, %v2330
    %v7186 = vadd.f32 %v7055, %v2331
    %v7187 = vadd.f32 %v7058, %v2332
    %v7188 = vadd.f32 %v7061, %v2333
    %v7189 = vadd.f32 %v7064, %v2334
    %v7190 = vadd.f32 %v7067, %v2335
    %v7191 = vadd.f32 %v7070, %v2336
    %v7192 = vadd.f32 %v7073, %v2337
    %v7193 = vadd.f32 %v7076, %v2338
    %v7194 = vadd.f32 %v7079, %v2339
    %v7195 = vadd.f32 %v7082, %v2340
    %v7196 = vadd.f32 %v7085, %v2341
    %v7197 = vadd.f32 %v7088, %v2342
    %v7198 = vadd.f32 %v7091, %v2343
    %v7199 = vadd.f32 %v7094, %v2344
    %v7200 = vadd.f32 %v7097, %v2345
    %v7201 = vadd.f32 %v7100, %v2346
    %v7202 = vadd.f32 %v7103, %v2347
    %v7203 = vadd.f32 %v7106, %v2348
    %v7204 = vadd.f32 %v7109, %v2349
    %v7205 = vadd.f32 %v7112, %v2350
    %v7206 = vadd.f32 %v7115, %v2351
    %v7207 = vadd.f32 %v7118, %v2352
    %v7208 = vadd.f32 %v7121, %v2353
    %v7209 = vadd.f32 %v7124, %v2354
    %v7210 = vadd.f32 %v7127, %v2355
    %v7211 = vadd.f32 %v7130, %v2356
    %v7212 = vadd.f32 %v7133, %v2357
    %v7213 = vadd.f32 %v7136, %v2358
    %v7214 = vadd.f32 %v7139, %v2359
    %v7215 = vadd.f32 %v7142, %v2360
    %v7216 = vadd.f32 %v7145, %v2361
    %v7217 = vadd.f32 %v7148, %v2362
    %v7218 = vadd.f32 %v7151, %v2363
    %v7219 = vadd.f32 %v7154, %v2364
    %v7220 = vsel %vm1592, %v7156, -inf
    %v7221 = vsel %vm1592, %v7157, -inf
    %v7222 = vmax.f32 %v7220, %v7221
    %v7223 = vrot.slane %v7222, 4
    %v7224 = vmax.f32 %v7222, %v7223
    %v7225 = vrot.slane %v7224, 2
    %v7226 = vmax.f32 %v7224, %v7225
    %v7227 = vrot.slane %v7226, 1
    %v7228 = vmax.f32 %v7226, %v7227
    %v7229 = vsel %vm1592, %v7158, -inf
    %v7230 = vsel %vm1592, %v7159, -inf
    %v7231 = vmax.f32 %v7229, %v7230
    %v7232 = vrot.slane %v7231, 4
    %v7233 = vmax.f32 %v7231, %v7232
    %v7234 = vrot.slane %v7233, 2
    %v7235 = vmax.f32 %v7233, %v7234
    %v7236 = vrot.slane %v7235, 1
    %v7237 = vmax.f32 %v7235, %v7236
    %v7238 = vsel %vm1592, %v7160, -inf
    %v7239 = vsel %vm1592, %v7161, -inf
    %v7240 = vmax.f32 %v7238, %v7239
    %v7241 = vrot.slane %v7240, 4
    %v7242 = vmax.f32 %v7240, %v7241
    %v7243 = vrot.slane %v7242, 2
    %v7244 = vmax.f32 %v7242, %v7243
    %v7245 = vrot.slane %v7244, 1
    %v7246 = vmax.f32 %v7244, %v7245
    %v7247 = vsel %vm1592, %v7162, -inf
    %v7248 = vsel %vm1592, %v7163, -inf
    %v7249 = vmax.f32 %v7247, %v7248
    %v7250 = vrot.slane %v7249, 4
    %v7251 = vmax.f32 %v7249, %v7250
    %v7252 = vrot.slane %v7251, 2
    %v7253 = vmax.f32 %v7251, %v7252
    %v7254 = vrot.slane %v7253, 1
    %v7255 = vmax.f32 %v7253, %v7254
    %v7256 = vsel %vm1592, %v7164, -inf
    %v7257 = vsel %vm1592, %v7165, -inf
    %v7258 = vmax.f32 %v7256, %v7257
    %v7259 = vrot.slane %v7258, 4
    %v7260 = vmax.f32 %v7258, %v7259
    %v7261 = vrot.slane %v7260, 2
    %v7262 = vmax.f32 %v7260, %v7261
    %v7263 = vrot.slane %v7262, 1
    %v7264 = vmax.f32 %v7262, %v7263
    %v7265 = vsel %vm1592, %v7166, -inf
    %v7266 = vsel %vm1592, %v7167, -inf
    %v7267 = vmax.f32 %v7265, %v7266
    %v7268 = vrot.slane %v7267, 4
    %v7269 = vmax.f32 %v7267, %v7268
    %v7270 = vrot.slane %v7269, 2
    %v7271 = vmax.f32 %v7269, %v7270
    %v7272 = vrot.slane %v7271, 1
    %v7273 = vmax.f32 %v7271, %v7272
    %v7274 = vsel %vm1592, %v7168, -inf
    %v7275 = vsel %vm1592, %v7169, -inf
    %v7276 = vmax.f32 %v7274, %v7275
    %v7277 = vrot.slane %v7276, 4
    %v7278 = vmax.f32 %v7276, %v7277
    %v7279 = vrot.slane %v7278, 2
    %v7280 = vmax.f32 %v7278, %v7279
    %v7281 = vrot.slane %v7280, 1
    %v7282 = vmax.f32 %v7280, %v7281
    %v7283 = vsel %vm1592, %v7170, -inf
    %v7284 = vsel %vm1592, %v7171, -inf
    %v7285 = vmax.f32 %v7283, %v7284
    %v7286 = vrot.slane %v7285, 4
    %v7287 = vmax.f32 %v7285, %v7286
    %v7288 = vrot.slane %v7287, 2
    %v7289 = vmax.f32 %v7287, %v7288
    %v7290 = vrot.slane %v7289, 1
    %v7291 = vmax.f32 %v7289, %v7290
    %v7292 = vsel %vm1592, %v7172, -inf
    %v7293 = vsel %vm1592, %v7173, -inf
    %v7294 = vmax.f32 %v7292, %v7293
    %v7295 = vrot.slane %v7294, 4
    %v7296 = vmax.f32 %v7294, %v7295
    %v7297 = vrot.slane %v7296, 2
    %v7298 = vmax.f32 %v7296, %v7297
    %v7299 = vrot.slane %v7298, 1
    %v7300 = vmax.f32 %v7298, %v7299
    %v7301 = vsel %vm1592, %v7174, -inf
    %v7302 = vsel %vm1592, %v7175, -inf
    %v7303 = vmax.f32 %v7301, %v7302
    %v7304 = vrot.slane %v7303, 4
    %v7305 = vmax.f32 %v7303, %v7304
    %v7306 = vrot.slane %v7305, 2
    %v7307 = vmax.f32 %v7305, %v7306
    %v7308 = vrot.slane %v7307, 1
    %v7309 = vmax.f32 %v7307, %v7308
    %v7310 = vsel %vm1592, %v7176, -inf
    %v7311 = vsel %vm1592, %v7177, -inf
    %v7312 = vmax.f32 %v7310, %v7311
    %v7313 = vrot.slane %v7312, 4
    %v7314 = vmax.f32 %v7312, %v7313
    %v7315 = vrot.slane %v7314, 2
    %v7316 = vmax.f32 %v7314, %v7315
    %v7317 = vrot.slane %v7316, 1
    %v7318 = vmax.f32 %v7316, %v7317
    %v7319 = vsel %vm1592, %v7178, -inf
    %v7320 = vsel %vm1592, %v7179, -inf
    %v7321 = vmax.f32 %v7319, %v7320
    %v7322 = vrot.slane %v7321, 4
    %v7323 = vmax.f32 %v7321, %v7322
    %v7324 = vrot.slane %v7323, 2
    %v7325 = vmax.f32 %v7323, %v7324
    %v7326 = vrot.slane %v7325, 1
    %v7327 = vmax.f32 %v7325, %v7326
    %v7328 = vsel %vm1592, %v7180, -inf
    %v7329 = vsel %vm1592, %v7181, -inf
    %v7330 = vmax.f32 %v7328, %v7329
    %v7331 = vrot.slane %v7330, 4
    %v7332 = vmax.f32 %v7330, %v7331
    %v7333 = vrot.slane %v7332, 2
    %v7334 = vmax.f32 %v7332, %v7333
    %v7335 = vrot.slane %v7334, 1
    %v7336 = vmax.f32 %v7334, %v7335
    %v7337 = vsel %vm1592, %v7182, -inf
    %v7338 = vsel %vm1592, %v7183, -inf
    %v7339 = vmax.f32 %v7337, %v7338
    %v7340 = vrot.slane %v7339, 4
    %v7341 = vmax.f32 %v7339, %v7340
    %v7342 = vrot.slane %v7341, 2
    %v7343 = vmax.f32 %v7341, %v7342
    %v7344 = vrot.slane %v7343, 1
    %v7345 = vmax.f32 %v7343, %v7344
    %v7346 = vsel %vm1592, %v7184, -inf
    %v7347 = vsel %vm1592, %v7185, -inf
    %v7348 = vmax.f32 %v7346, %v7347
    %v7349 = vrot.slane %v7348, 4
    %v7350 = vmax.f32 %v7348, %v7349
    %v7351 = vrot.slane %v7350, 2
    %v7352 = vmax.f32 %v7350, %v7351
    %v7353 = vrot.slane %v7352, 1
    %v7354 = vmax.f32 %v7352, %v7353
    %v7355 = vsel %vm1592, %v7186, -inf
    %v7356 = vsel %vm1592, %v7187, -inf
    %v7357 = vmax.f32 %v7355, %v7356
    %v7358 = vrot.slane %v7357, 4
    %v7359 = vmax.f32 %v7357, %v7358
    %v7360 = vrot.slane %v7359, 2
    %v7361 = vmax.f32 %v7359, %v7360
    %v7362 = vrot.slane %v7361, 1
    %v7363 = vmax.f32 %v7361, %v7362
    %v7364 = vsel %vm1592, %v7188, -inf
    %v7365 = vsel %vm1592, %v7189, -inf
    %v7366 = vmax.f32 %v7364, %v7365
    %v7367 = vrot.slane %v7366, 4
    %v7368 = vmax.f32 %v7366, %v7367
    %v7369 = vrot.slane %v7368, 2
    %v7370 = vmax.f32 %v7368, %v7369
    %v7371 = vrot.slane %v7370, 1
    %v7372 = vmax.f32 %v7370, %v7371
    %v7373 = vsel %vm1592, %v7190, -inf
    %v7374 = vsel %vm1592, %v7191, -inf
    %v7375 = vmax.f32 %v7373, %v7374
    %v7376 = vrot.slane %v7375, 4
    %v7377 = vmax.f32 %v7375, %v7376
    %v7378 = vrot.slane %v7377, 2
    %v7379 = vmax.f32 %v7377, %v7378
    %v7380 = vrot.slane %v7379, 1
    %v7381 = vmax.f32 %v7379, %v7380
    %v7382 = vsel %vm1592, %v7192, -inf
    %v7383 = vsel %vm1592, %v7193, -inf
    %v7384 = vmax.f32 %v7382, %v7383
    %v7385 = vrot.slane %v7384, 4
    %v7386 = vmax.f32 %v7384, %v7385
    %v7387 = vrot.slane %v7386, 2
    %v7388 = vmax.f32 %v7386, %v7387
    %v7389 = vrot.slane %v7388, 1
    %v7390 = vmax.f32 %v7388, %v7389
    %v7391 = vsel %vm1592, %v7194, -inf
    %v7392 = vsel %vm1592, %v7195, -inf
    %v7393 = vmax.f32 %v7391, %v7392
    %v7394 = vrot.slane %v7393, 4
    %v7395 = vmax.f32 %v7393, %v7394
    %v7396 = vrot.slane %v7395, 2
    %v7397 = vmax.f32 %v7395, %v7396
    %v7398 = vrot.slane %v7397, 1
    %v7399 = vmax.f32 %v7397, %v7398
    %v7400 = vsel %vm1592, %v7196, -inf
    %v7401 = vsel %vm1592, %v7197, -inf
    %v7402 = vmax.f32 %v7400, %v7401
    %v7403 = vrot.slane %v7402, 4
    %v7404 = vmax.f32 %v7402, %v7403
    %v7405 = vrot.slane %v7404, 2
    %v7406 = vmax.f32 %v7404, %v7405
    %v7407 = vrot.slane %v7406, 1
    %v7408 = vmax.f32 %v7406, %v7407
    %v7409 = vsel %vm1592, %v7198, -inf
    %v7410 = vsel %vm1592, %v7199, -inf
    %v7411 = vmax.f32 %v7409, %v7410
    %v7412 = vrot.slane %v7411, 4
    %v7413 = vmax.f32 %v7411, %v7412
    %v7414 = vrot.slane %v7413, 2
    %v7415 = vmax.f32 %v7413, %v7414
    %v7416 = vrot.slane %v7415, 1
    %v7417 = vmax.f32 %v7415, %v7416
    %v7418 = vsel %vm1592, %v7200, -inf
    %v7419 = vsel %vm1592, %v7201, -inf
    %v7420 = vmax.f32 %v7418, %v7419
    %v7421 = vrot.slane %v7420, 4
    %v7422 = vmax.f32 %v7420, %v7421
    %v7423 = vrot.slane %v7422, 2
    %v7424 = vmax.f32 %v7422, %v7423
    %v7425 = vrot.slane %v7424, 1
    %v7426 = vmax.f32 %v7424, %v7425
    %v7427 = vsel %vm1592, %v7202, -inf
    %v7428 = vsel %vm1592, %v7203, -inf
    %v7429 = vmax.f32 %v7427, %v7428
    %v7430 = vrot.slane %v7429, 4
    %v7431 = vmax.f32 %v7429, %v7430
    %v7432 = vrot.slane %v7431, 2
    %v7433 = vmax.f32 %v7431, %v7432
    %v7434 = vrot.slane %v7433, 1
    %v7435 = vmax.f32 %v7433, %v7434
    %v7436 = vsel %vm1592, %v7204, -inf
    %v7437 = vsel %vm1592, %v7205, -inf
    %v7438 = vmax.f32 %v7436, %v7437
    %v7439 = vrot.slane %v7438, 4
    %v7440 = vmax.f32 %v7438, %v7439
    %v7441 = vrot.slane %v7440, 2
    %v7442 = vmax.f32 %v7440, %v7441
    %v7443 = vrot.slane %v7442, 1
    %v7444 = vmax.f32 %v7442, %v7443
    %v7445 = vsel %vm1592, %v7206, -inf
    %v7446 = vsel %vm1592, %v7207, -inf
    %v7447 = vmax.f32 %v7445, %v7446
    %v7448 = vrot.slane %v7447, 4
    %v7449 = vmax.f32 %v7447, %v7448
    %v7450 = vrot.slane %v7449, 2
    %v7451 = vmax.f32 %v7449, %v7450
    %v7452 = vrot.slane %v7451, 1
    %v7453 = vmax.f32 %v7451, %v7452
    %v7454 = vsel %vm1592, %v7208, -inf
    %v7455 = vsel %vm1592, %v7209, -inf
    %v7456 = vmax.f32 %v7454, %v7455
    %v7457 = vrot.slane %v7456, 4
    %v7458 = vmax.f32 %v7456, %v7457
    %v7459 = vrot.slane %v7458, 2
    %v7460 = vmax.f32 %v7458, %v7459
    %v7461 = vrot.slane %v7460, 1
    %v7462 = vmax.f32 %v7460, %v7461
    %v7463 = vsel %vm1592, %v7210, -inf
    %v7464 = vsel %vm1592, %v7211, -inf
    %v7465 = vmax.f32 %v7463, %v7464
    %v7466 = vrot.slane %v7465, 4
    %v7467 = vmax.f32 %v7465, %v7466
    %v7468 = vrot.slane %v7467, 2
    %v7469 = vmax.f32 %v7467, %v7468
    %v7470 = vrot.slane %v7469, 1
    %v7471 = vmax.f32 %v7469, %v7470
    %v7472 = vsel %vm1592, %v7212, -inf
    %v7473 = vsel %vm1592, %v7213, -inf
    %v7474 = vmax.f32 %v7472, %v7473
    %v7475 = vrot.slane %v7474, 4
    %v7476 = vmax.f32 %v7474, %v7475
    %v7477 = vrot.slane %v7476, 2
    %v7478 = vmax.f32 %v7476, %v7477
    %v7479 = vrot.slane %v7478, 1
    %v7480 = vmax.f32 %v7478, %v7479
    %v7481 = vsel %vm1592, %v7214, -inf
    %v7482 = vsel %vm1592, %v7215, -inf
    %v7483 = vmax.f32 %v7481, %v7482
    %v7484 = vrot.slane %v7483, 4
    %v7485 = vmax.f32 %v7483, %v7484
    %v7486 = vrot.slane %v7485, 2
    %v7487 = vmax.f32 %v7485, %v7486
    %v7488 = vrot.slane %v7487, 1
    %v7489 = vmax.f32 %v7487, %v7488
    %v7490 = vsel %vm1592, %v7216, -inf
    %v7491 = vsel %vm1592, %v7217, -inf
    %v7492 = vmax.f32 %v7490, %v7491
    %v7493 = vrot.slane %v7492, 4
    %v7494 = vmax.f32 %v7492, %v7493
    %v7495 = vrot.slane %v7494, 2
    %v7496 = vmax.f32 %v7494, %v7495
    %v7497 = vrot.slane %v7496, 1
    %v7498 = vmax.f32 %v7496, %v7497
    %v7499 = vsel %vm1592, %v7218, -inf
    %v7500 = vsel %vm1592, %v7219, -inf
    %v7501 = vmax.f32 %v7499, %v7500
    %v7502 = vrot.slane %v7501, 4
    %v7503 = vmax.f32 %v7501, %v7502
    %v7504 = vrot.slane %v7503, 2
    %v7505 = vmax.f32 %v7503, %v7504
    %v7506 = vrot.slane %v7505, 1
    %v7507 = vmax.f32 %v7505, %v7506
    %v7508 = vsub.f32 %v7156, %v7228
    %v7509 = vsub.f32 %v7157, %v7228
    %v7510 = vsub.f32 %v7158, %v7237
    %v7511 = vsub.f32 %v7159, %v7237
    %v7512 = vsub.f32 %v7160, %v7246
    %v7513 = vsub.f32 %v7161, %v7246
    %v7514 = vsub.f32 %v7162, %v7255
    %v7515 = vsub.f32 %v7163, %v7255
    %v7516 = vsub.f32 %v7164, %v7264
    %v7517 = vsub.f32 %v7165, %v7264
    %v7518 = vsub.f32 %v7166, %v7273
    %v7519 = vsub.f32 %v7167, %v7273
    %v7520 = vsub.f32 %v7168, %v7282
    %v7521 = vsub.f32 %v7169, %v7282
    %v7522 = vsub.f32 %v7170, %v7291
    %v7523 = vsub.f32 %v7171, %v7291
    %v7524 = vsub.f32 %v7172, %v7300
    %v7525 = vsub.f32 %v7173, %v7300
    %v7526 = vsub.f32 %v7174, %v7309
    %v7527 = vsub.f32 %v7175, %v7309
    %v7528 = vsub.f32 %v7176, %v7318
    %v7529 = vsub.f32 %v7177, %v7318
    %v7530 = vsub.f32 %v7178, %v7327
    %v7531 = vsub.f32 %v7179, %v7327
    %v7532 = vsub.f32 %v7180, %v7336
    %v7533 = vsub.f32 %v7181, %v7336
    %v7534 = vsub.f32 %v7182, %v7345
    %v7535 = vsub.f32 %v7183, %v7345
    %v7536 = vsub.f32 %v7184, %v7354
    %v7537 = vsub.f32 %v7185, %v7354
    %v7538 = vsub.f32 %v7186, %v7363
    %v7539 = vsub.f32 %v7187, %v7363
    %v7540 = vsub.f32 %v7188, %v7372
    %v7541 = vsub.f32 %v7189, %v7372
    %v7542 = vsub.f32 %v7190, %v7381
    %v7543 = vsub.f32 %v7191, %v7381
    %v7544 = vsub.f32 %v7192, %v7390
    %v7545 = vsub.f32 %v7193, %v7390
    %v7546 = vsub.f32 %v7194, %v7399
    %v7547 = vsub.f32 %v7195, %v7399
    %v7548 = vsub.f32 %v7196, %v7408
    %v7549 = vsub.f32 %v7197, %v7408
    %v7550 = vsub.f32 %v7198, %v7417
    %v7551 = vsub.f32 %v7199, %v7417
    %v7552 = vsub.f32 %v7200, %v7426
    %v7553 = vsub.f32 %v7201, %v7426
    %v7554 = vsub.f32 %v7202, %v7435
    %v7555 = vsub.f32 %v7203, %v7435
    %v7556 = vsub.f32 %v7204, %v7444
    %v7557 = vsub.f32 %v7205, %v7444
    %v7558 = vsub.f32 %v7206, %v7453
    %v7559 = vsub.f32 %v7207, %v7453
    %v7560 = vsub.f32 %v7208, %v7462
    %v7561 = vsub.f32 %v7209, %v7462
    %v7562 = vsub.f32 %v7210, %v7471
    %v7563 = vsub.f32 %v7211, %v7471
    %v7564 = vsub.f32 %v7212, %v7480
    %v7565 = vsub.f32 %v7213, %v7480
    %v7566 = vsub.f32 %v7214, %v7489
    %v7567 = vsub.f32 %v7215, %v7489
    %v7568 = vsub.f32 %v7216, %v7498
    %v7569 = vsub.f32 %v7217, %v7498
    %v7570 = vsub.f32 %v7218, %v7507
    %v7571 = vsub.f32 %v7219, %v7507
    %v7572 = vmul.f32 %v7508, 1.442695
    %v7573 = vpow.pop %v7572
    %v7574 = vmul.f32 %v7509, 1.442695
    %v7575 = vpow.pop %v7574
    %v7576 = vmul.f32 %v7510, 1.442695
    %v7577 = vpow.pop %v7576
    %v7578 = vmul.f32 %v7511, 1.442695
    %v7579 = vpow.pop %v7578
    %v7580 = vmul.f32 %v7512, 1.442695
    %v7581 = vpow.pop %v7580
    %v7582 = vmul.f32 %v7513, 1.442695
    %v7583 = vpow.pop %v7582
    %v7584 = vmul.f32 %v7514, 1.442695
    %v7585 = vpow.pop %v7584
    %v7586 = vmul.f32 %v7515, 1.442695
    %v7587 = vpow.pop %v7586
    %v7588 = vmul.f32 %v7516, 1.442695
    %v7589 = vpow.pop %v7588
    %v7590 = vmul.f32 %v7517, 1.442695
    %v7591 = vpow.pop %v7590
    %v7592 = vmul.f32 %v7518, 1.442695
    %v7593 = vpow.pop %v7592
    %v7594 = vmul.f32 %v7519, 1.442695
    %v7595 = vpow.pop %v7594
    %v7596 = vmul.f32 %v7520, 1.442695
    %v7597 = vpow.pop %v7596
    %v7598 = vmul.f32 %v7521, 1.442695
    %v7599 = vpow.pop %v7598
    %v7600 = vmul.f32 %v7522, 1.442695
    %v7601 = vpow.pop %v7600
    %v7602 = vmul.f32 %v7523, 1.442695
    %v7603 = vpow.pop %v7602
    %v7604 = vmul.f32 %v7524, 1.442695
    %v7605 = vpow.pop %v7604
    %v7606 = vmul.f32 %v7525, 1.442695
    %v7607 = vpow.pop %v7606
    %v7608 = vmul.f32 %v7526, 1.442695
    %v7609 = vpow.pop %v7608
    %v7610 = vmul.f32 %v7527, 1.442695
    %v7611 = vpow.pop %v7610
    %v7612 = vmul.f32 %v7528, 1.442695
    %v7613 = vpow.pop %v7612
    %v7614 = vmul.f32 %v7529, 1.442695
    %v7615 = vpow.pop %v7614
    %v7616 = vmul.f32 %v7530, 1.442695
    %v7617 = vpow.pop %v7616
    %v7618 = vmul.f32 %v7531, 1.442695
    %v7619 = vpow.pop %v7618
    %v7620 = vmul.f32 %v7532, 1.442695
    %v7621 = vpow.pop %v7620
    %v7622 = vmul.f32 %v7533, 1.442695
    %v7623 = vpow.pop %v7622
    %v7624 = vmul.f32 %v7534, 1.442695
    %v7625 = vpow.pop %v7624
    %v7626 = vmul.f32 %v7535, 1.442695
    %v7627 = vpow.pop %v7626
    %v7628 = vmul.f32 %v7536, 1.442695
    %v7629 = vpow.pop %v7628
    %v7630 = vmul.f32 %v7537, 1.442695
    %v7631 = vpow.pop %v7630
    %v7632 = vmul.f32 %v7538, 1.442695
    %v7633 = vpow.pop %v7632
    %v7634 = vmul.f32 %v7539, 1.442695
    %v7635 = vpow.pop %v7634
    %v7636 = vmul.f32 %v7540, 1.442695
    %v7637 = vpow.pop %v7636
    %v7638 = vmul.f32 %v7541, 1.442695
    %v7639 = vpow.pop %v7638
    %v7640 = vmul.f32 %v7542, 1.442695
    %v7641 = vpow.pop %v7640
    %v7642 = vmul.f32 %v7543, 1.442695
    %v7643 = vpow.pop %v7642
    %v7644 = vmul.f32 %v7544, 1.442695
    %v7645 = vpow.pop %v7644
    %v7646 = vmul.f32 %v7545, 1.442695
    %v7647 = vpow.pop %v7646
    %v7648 = vmul.f32 %v7546, 1.442695
    %v7649 = vpow.pop %v7648
    %v7650 = vmul.f32 %v7547, 1.442695
    %v7651 = vpow.pop %v7650
    %v7652 = vmul.f32 %v7548, 1.442695
    %v7653 = vpow.pop %v7652
    %v7654 = vmul.f32 %v7549, 1.442695
    %v7655 = vpow.pop %v7654
    %v7656 = vmul.f32 %v7550, 1.442695
    %v7657 = vpow.pop %v7656
    %v7658 = vmul.f32 %v7551, 1.442695
    %v7659 = vpow.pop %v7658
    %v7660 = vmul.f32 %v7552, 1.442695
    %v7661 = vpow.pop %v7660
    %v7662 = vmul.f32 %v7553, 1.442695
    %v7663 = vpow.pop %v7662
    %v7664 = vmul.f32 %v7554, 1.442695
    %v7665 = vpow.pop %v7664
    %v7666 = vmul.f32 %v7555, 1.442695
    %v7667 = vpow.pop %v7666
    %v7668 = vmul.f32 %v7556, 1.442695
    %v7669 = vpow.pop %v7668
    %v7670 = vmul.f32 %v7557, 1.442695
    %v7671 = vpow.pop %v7670
    %v7672 = vmul.f32 %v7558, 1.442695
    %v7673 = vpow.pop %v7672
    %v7674 = vmul.f32 %v7559, 1.442695
    %v7675 = vpow.pop %v7674
    %v7676 = vmul.f32 %v7560, 1.442695
    %v7677 = vpow.pop %v7676
    %v7678 = vmul.f32 %v7561, 1.442695
    %v7679 = vpow.pop %v7678
    %v7680 = vmul.f32 %v7562, 1.442695
    %v7681 = vpow.pop %v7680
    %v7682 = vmul.f32 %v7563, 1.442695
    %v7683 = vpow.pop %v7682
    %v7684 = vmul.f32 %v7564, 1.442695
    %v7685 = vpow.pop %v7684
    %v7686 = vmul.f32 %v7565, 1.442695
    %v7687 = vpow.pop %v7686
    %v7688 = vmul.f32 %v7566, 1.442695
    %v7689 = vpow.pop %v7688
    %v7690 = vmul.f32 %v7567, 1.442695
    %v7691 = vpow.pop %v7690
    %v7692 = vmul.f32 %v7568, 1.442695
    %v7693 = vpow.pop %v7692
    %v7694 = vmul.f32 %v7569, 1.442695
    %v7695 = vpow.pop %v7694
    %v7696 = vmul.f32 %v7570, 1.442695
    %v7697 = vpow.pop %v7696
    %v7698 = vmul.f32 %v7571, 1.442695
    %v7699 = vpow.pop %v7698
    %v7700 = vsel %vm1592, %v7573, 0.0
    %v7701 = vsel %vm1592, %v7575, 0.0
    %v7702 = vadd.f32 %v7700, %v7701
    %v7703 = vrot.slane %v7702, 4
    %v7704 = vadd.f32 %v7702, %v7703
    %v7705 = vrot.slane %v7704, 2
    %v7706 = vadd.f32 %v7704, %v7705
    %v7707 = vrot.slane %v7706, 1
    %v7708 = vadd.f32 %v7706, %v7707
    %v7709 = vsel %vm1592, %v7577, 0.0
    %v7710 = vsel %vm1592, %v7579, 0.0
    %v7711 = vadd.f32 %v7709, %v7710
    %v7712 = vrot.slane %v7711, 4
    %v7713 = vadd.f32 %v7711, %v7712
    %v7714 = vrot.slane %v7713, 2
    %v7715 = vadd.f32 %v7713, %v7714
    %v7716 = vrot.slane %v7715, 1
    %v7717 = vadd.f32 %v7715, %v7716
    %v7718 = vsel %vm1592, %v7581, 0.0
    %v7719 = vsel %vm1592, %v7583, 0.0
    %v7720 = vadd.f32 %v7718, %v7719
    %v7721 = vrot.slane %v7720, 4
    %v7722 = vadd.f32 %v7720, %v7721
    %v7723 = vrot.slane %v7722, 2
    %v7724 = vadd.f32 %v7722, %v7723
    %v7725 = vrot.slane %v7724, 1
    %v7726 = vadd.f32 %v7724, %v7725
    %v7727 = vsel %vm1592, %v7585, 0.0
    %v7728 = vsel %vm1592, %v7587, 0.0
    %v7729 = vadd.f32 %v7727, %v7728
    %v7730 = vrot.slane %v7729, 4
    %v7731 = vadd.f32 %v7729, %v7730
    %v7732 = vrot.slane %v7731, 2
    %v7733 = vadd.f32 %v7731, %v7732
    %v7734 = vrot.slane %v7733, 1
    %v7735 = vadd.f32 %v7733, %v7734
    %v7736 = vsel %vm1592, %v7589, 0.0
    %v7737 = vsel %vm1592, %v7591, 0.0
    %v7738 = vadd.f32 %v7736, %v7737
    %v7739 = vrot.slane %v7738, 4
    %v7740 = vadd.f32 %v7738, %v7739
    %v7741 = vrot.slane %v7740, 2
    %v7742 = vadd.f32 %v7740, %v7741
    %v7743 = vrot.slane %v7742, 1
    %v7744 = vadd.f32 %v7742, %v7743
    %v7745 = vsel %vm1592, %v7593, 0.0
    %v7746 = vsel %vm1592, %v7595, 0.0
    %v7747 = vadd.f32 %v7745, %v7746
    %v7748 = vrot.slane %v7747, 4
    %v7749 = vadd.f32 %v7747, %v7748
    %v7750 = vrot.slane %v7749, 2
    %v7751 = vadd.f32 %v7749, %v7750
    %v7752 = vrot.slane %v7751, 1
    %v7753 = vadd.f32 %v7751, %v7752
    %v7754 = vsel %vm1592, %v7597, 0.0
    %v7755 = vsel %vm1592, %v7599, 0.0
    %v7756 = vadd.f32 %v7754, %v7755
    %v7757 = vrot.slane %v7756, 4
    %v7758 = vadd.f32 %v7756, %v7757
    %v7759 = vrot.slane %v7758, 2
    %v7760 = vadd.f32 %v7758, %v7759
    %v7761 = vrot.slane %v7760, 1
    %v7762 = vadd.f32 %v7760, %v7761
    %v7763 = vsel %vm1592, %v7601, 0.0
    %v7764 = vsel %vm1592, %v7603, 0.0
    %v7765 = vadd.f32 %v7763, %v7764
    %v7766 = vrot.slane %v7765, 4
    %v7767 = vadd.f32 %v7765, %v7766
    %v7768 = vrot.slane %v7767, 2
    %v7769 = vadd.f32 %v7767, %v7768
    %v7770 = vrot.slane %v7769, 1
    %v7771 = vadd.f32 %v7769, %v7770
    %v7772 = vsel %vm1592, %v7605, 0.0
    %v7773 = vsel %vm1592, %v7607, 0.0
    %v7774 = vadd.f32 %v7772, %v7773
    %v7775 = vrot.slane %v7774, 4
    %v7776 = vadd.f32 %v7774, %v7775
    %v7777 = vrot.slane %v7776, 2
    %v7778 = vadd.f32 %v7776, %v7777
    %v7779 = vrot.slane %v7778, 1
    %v7780 = vadd.f32 %v7778, %v7779
    %v7781 = vsel %vm1592, %v7609, 0.0
    %v7782 = vsel %vm1592, %v7611, 0.0
    %v7783 = vadd.f32 %v7781, %v7782
    %v7784 = vrot.slane %v7783, 4
    %v7785 = vadd.f32 %v7783, %v7784
    %v7786 = vrot.slane %v7785, 2
    %v7787 = vadd.f32 %v7785, %v7786
    %v7788 = vrot.slane %v7787, 1
    %v7789 = vadd.f32 %v7787, %v7788
    %v7790 = vsel %vm1592, %v7613, 0.0
    %v7791 = vsel %vm1592, %v7615, 0.0
    %v7792 = vadd.f32 %v7790, %v7791
    %v7793 = vrot.slane %v7792, 4
    %v7794 = vadd.f32 %v7792, %v7793
    %v7795 = vrot.slane %v7794, 2
    %v7796 = vadd.f32 %v7794, %v7795
    %v7797 = vrot.slane %v7796, 1
    %v7798 = vadd.f32 %v7796, %v7797
    %v7799 = vsel %vm1592, %v7617, 0.0
    %v7800 = vsel %vm1592, %v7619, 0.0
    %v7801 = vadd.f32 %v7799, %v7800
    %v7802 = vrot.slane %v7801, 4
    %v7803 = vadd.f32 %v7801, %v7802
    %v7804 = vrot.slane %v7803, 2
    %v7805 = vadd.f32 %v7803, %v7804
    %v7806 = vrot.slane %v7805, 1
    %v7807 = vadd.f32 %v7805, %v7806
    %v7808 = vsel %vm1592, %v7621, 0.0
    %v7809 = vsel %vm1592, %v7623, 0.0
    %v7810 = vadd.f32 %v7808, %v7809
    %v7811 = vrot.slane %v7810, 4
    %v7812 = vadd.f32 %v7810, %v7811
    %v7813 = vrot.slane %v7812, 2
    %v7814 = vadd.f32 %v7812, %v7813
    %v7815 = vrot.slane %v7814, 1
    %v7816 = vadd.f32 %v7814, %v7815
    %v7817 = vsel %vm1592, %v7625, 0.0
    %v7818 = vsel %vm1592, %v7627, 0.0
    %v7819 = vadd.f32 %v7817, %v7818
    %v7820 = vrot.slane %v7819, 4
    %v7821 = vadd.f32 %v7819, %v7820
    %v7822 = vrot.slane %v7821, 2
    %v7823 = vadd.f32 %v7821, %v7822
    %v7824 = vrot.slane %v7823, 1
    %v7825 = vadd.f32 %v7823, %v7824
    %v7826 = vsel %vm1592, %v7629, 0.0
    %v7827 = vsel %vm1592, %v7631, 0.0
    %v7828 = vadd.f32 %v7826, %v7827
    %v7829 = vrot.slane %v7828, 4
    %v7830 = vadd.f32 %v7828, %v7829
    %v7831 = vrot.slane %v7830, 2
    %v7832 = vadd.f32 %v7830, %v7831
    %v7833 = vrot.slane %v7832, 1
    %v7834 = vadd.f32 %v7832, %v7833
    %v7835 = vsel %vm1592, %v7633, 0.0
    %v7836 = vsel %vm1592, %v7635, 0.0
    %v7837 = vadd.f32 %v7835, %v7836
    %v7838 = vrot.slane %v7837, 4
    %v7839 = vadd.f32 %v7837, %v7838
    %v7840 = vrot.slane %v7839, 2
    %v7841 = vadd.f32 %v7839, %v7840
    %v7842 = vrot.slane %v7841, 1
    %v7843 = vadd.f32 %v7841, %v7842
    %v7844 = vsel %vm1592, %v7637, 0.0
    %v7845 = vsel %vm1592, %v7639, 0.0
    %v7846 = vadd.f32 %v7844, %v7845
    %v7847 = vrot.slane %v7846, 4
    %v7848 = vadd.f32 %v7846, %v7847
    %v7849 = vrot.slane %v7848, 2
    %v7850 = vadd.f32 %v7848, %v7849
    %v7851 = vrot.slane %v7850, 1
    %v7852 = vadd.f32 %v7850, %v7851
    %v7853 = vsel %vm1592, %v7641, 0.0
    %v7854 = vsel %vm1592, %v7643, 0.0
    %v7855 = vadd.f32 %v7853, %v7854
    %v7856 = vrot.slane %v7855, 4
    %v7857 = vadd.f32 %v7855, %v7856
    %v7858 = vrot.slane %v7857, 2
    %v7859 = vadd.f32 %v7857, %v7858
    %v7860 = vrot.slane %v7859, 1
    %v7861 = vadd.f32 %v7859, %v7860
    %v7862 = vsel %vm1592, %v7645, 0.0
    %v7863 = vsel %vm1592, %v7647, 0.0
    %v7864 = vadd.f32 %v7862, %v7863
    %v7865 = vrot.slane %v7864, 4
    %v7866 = vadd.f32 %v7864, %v7865
    %v7867 = vrot.slane %v7866, 2
    %v7868 = vadd.f32 %v7866, %v7867
    %v7869 = vrot.slane %v7868, 1
    %v7870 = vadd.f32 %v7868, %v7869
    %v7871 = vsel %vm1592, %v7649, 0.0
    %v7872 = vsel %vm1592, %v7651, 0.0
    %v7873 = vadd.f32 %v7871, %v7872
    %v7874 = vrot.slane %v7873, 4
    %v7875 = vadd.f32 %v7873, %v7874
    %v7876 = vrot.slane %v7875, 2
    %v7877 = vadd.f32 %v7875, %v7876
    %v7878 = vrot.slane %v7877, 1
    %v7879 = vadd.f32 %v7877, %v7878
    %v7880 = vsel %vm1592, %v7653, 0.0
    %v7881 = vsel %vm1592, %v7655, 0.0
    %v7882 = vadd.f32 %v7880, %v7881
    %v7883 = vrot.slane %v7882, 4
    %v7884 = vadd.f32 %v7882, %v7883
    %v7885 = vrot.slane %v7884, 2
    %v7886 = vadd.f32 %v7884, %v7885
    %v7887 = vrot.slane %v7886, 1
    %v7888 = vadd.f32 %v7886, %v7887
    %v7889 = vsel %vm1592, %v7657, 0.0
    %v7890 = vsel %vm1592, %v7659, 0.0
    %v7891 = vadd.f32 %v7889, %v7890
    %v7892 = vrot.slane %v7891, 4
    %v7893 = vadd.f32 %v7891, %v7892
    %v7894 = vrot.slane %v7893, 2
    %v7895 = vadd.f32 %v7893, %v7894
    %v7896 = vrot.slane %v7895, 1
    %v7897 = vadd.f32 %v7895, %v7896
    %v7898 = vsel %vm1592, %v7661, 0.0
    %v7899 = vsel %vm1592, %v7663, 0.0
    %v7900 = vadd.f32 %v7898, %v7899
    %v7901 = vrot.slane %v7900, 4
    %v7902 = vadd.f32 %v7900, %v7901
    %v7903 = vrot.slane %v7902, 2
    %v7904 = vadd.f32 %v7902, %v7903
    %v7905 = vrot.slane %v7904, 1
    %v7906 = vadd.f32 %v7904, %v7905
    %v7907 = vsel %vm1592, %v7665, 0.0
    %v7908 = vsel %vm1592, %v7667, 0.0
    %v7909 = vadd.f32 %v7907, %v7908
    %v7910 = vrot.slane %v7909, 4
    %v7911 = vadd.f32 %v7909, %v7910
    %v7912 = vrot.slane %v7911, 2
    %v7913 = vadd.f32 %v7911, %v7912
    %v7914 = vrot.slane %v7913, 1
    %v7915 = vadd.f32 %v7913, %v7914
    %v7916 = vsel %vm1592, %v7669, 0.0
    %v7917 = vsel %vm1592, %v7671, 0.0
    %v7918 = vadd.f32 %v7916, %v7917
    %v7919 = vrot.slane %v7918, 4
    %v7920 = vadd.f32 %v7918, %v7919
    %v7921 = vrot.slane %v7920, 2
    %v7922 = vadd.f32 %v7920, %v7921
    %v7923 = vrot.slane %v7922, 1
    %v7924 = vadd.f32 %v7922, %v7923
    %v7925 = vsel %vm1592, %v7673, 0.0
    %v7926 = vsel %vm1592, %v7675, 0.0
    %v7927 = vadd.f32 %v7925, %v7926
    %v7928 = vrot.slane %v7927, 4
    %v7929 = vadd.f32 %v7927, %v7928
    %v7930 = vrot.slane %v7929, 2
    %v7931 = vadd.f32 %v7929, %v7930
    %v7932 = vrot.slane %v7931, 1
    %v7933 = vadd.f32 %v7931, %v7932
    %v7934 = vsel %vm1592, %v7677, 0.0
    %v7935 = vsel %vm1592, %v7679, 0.0
    %v7936 = vadd.f32 %v7934, %v7935
    %v7937 = vrot.slane %v7936, 4
    %v7938 = vadd.f32 %v7936, %v7937
    %v7939 = vrot.slane %v7938, 2
    %v7940 = vadd.f32 %v7938, %v7939
    %v7941 = vrot.slane %v7940, 1
    %v7942 = vadd.f32 %v7940, %v7941
    %v7943 = vsel %vm1592, %v7681, 0.0
    %v7944 = vsel %vm1592, %v7683, 0.0
    %v7945 = vadd.f32 %v7943, %v7944
    %v7946 = vrot.slane %v7945, 4
    %v7947 = vadd.f32 %v7945, %v7946
    %v7948 = vrot.slane %v7947, 2
    %v7949 = vadd.f32 %v7947, %v7948
    %v7950 = vrot.slane %v7949, 1
    %v7951 = vadd.f32 %v7949, %v7950
    %v7952 = vsel %vm1592, %v7685, 0.0
    %v7953 = vsel %vm1592, %v7687, 0.0
    %v7954 = vadd.f32 %v7952, %v7953
    %v7955 = vrot.slane %v7954, 4
    %v7956 = vadd.f32 %v7954, %v7955
    %v7957 = vrot.slane %v7956, 2
    %v7958 = vadd.f32 %v7956, %v7957
    %v7959 = vrot.slane %v7958, 1
    %v7960 = vadd.f32 %v7958, %v7959
    %v7961 = vsel %vm1592, %v7689, 0.0
    %v7962 = vsel %vm1592, %v7691, 0.0
    %v7963 = vadd.f32 %v7961, %v7962
    %v7964 = vrot.slane %v7963, 4
    %v7965 = vadd.f32 %v7963, %v7964
    %v7966 = vrot.slane %v7965, 2
    %v7967 = vadd.f32 %v7965, %v7966
    %v7968 = vrot.slane %v7967, 1
    %v7969 = vadd.f32 %v7967, %v7968
    %v7970 = vsel %vm1592, %v7693, 0.0
    %v7971 = vsel %vm1592, %v7695, 0.0
    %v7972 = vadd.f32 %v7970, %v7971
    %v7973 = vrot.slane %v7972, 4
    %v7974 = vadd.f32 %v7972, %v7973
    %v7975 = vrot.slane %v7974, 2
    %v7976 = vadd.f32 %v7974, %v7975
    %v7977 = vrot.slane %v7976, 1
    %v7978 = vadd.f32 %v7976, %v7977
    %v7979 = vsel %vm1592, %v7697, 0.0
    %v7980 = vsel %vm1592, %v7699, 0.0
    %v7981 = vadd.f32 %v7979, %v7980
    %v7982 = vrot.slane %v7981, 4
    %v7983 = vadd.f32 %v7981, %v7982
    %v7984 = vrot.slane %v7983, 2
    %v7985 = vadd.f32 %v7983, %v7984
    %v7986 = vrot.slane %v7985, 1
    %v7987 = vadd.f32 %v7985, %v7986
    %v7988 = vrcp.pop %v7708
    %v7989 = vrcp.pop %v7717
    %v7990 = vrcp.pop %v7726
    %v7991 = vrcp.pop %v7735
    %v7992 = vrcp.pop %v7744
    %v7993 = vrcp.pop %v7753
    %v7994 = vrcp.pop %v7762
    %v7995 = vrcp.pop %v7771
    %v7996 = vrcp.pop %v7780
    %v7997 = vrcp.pop %v7789
    %v7998 = vrcp.pop %v7798
    %v7999 = vrcp.pop %v7807
    %v8000 = vrcp.pop %v7816
    %v8001 = vrcp.pop %v7825
    %v8002 = vrcp.pop %v7834
    %v8003 = vrcp.pop %v7843
    %v8004 = vrcp.pop %v7852
    %v8005 = vrcp.pop %v7861
    %v8006 = vrcp.pop %v7870
    %v8007 = vrcp.pop %v7879
    %v8008 = vrcp.pop %v7888
    %v8009 = vrcp.pop %v7897
    %v8010 = vrcp.pop %v7906
    %v8011 = vrcp.pop %v7915
    %v8012 = vrcp.pop %v7924
    %v8013 = vrcp.pop %v7933
    %v8014 = vrcp.pop %v7942
    %v8015 = vrcp.pop %v7951
    %v8016 = vrcp.pop %v7960
    %v8017 = vrcp.pop %v7969
    %v8018 = vrcp.pop %v7978
    %v8019 = vrcp.pop %v7987
    %v8020 = vmul.f32 %v7573, %v7988
    %v8021 = vmul.f32 %v7575, %v7988
    %v8022 = vmul.f32 %v7577, %v7989
    %v8023 = vmul.f32 %v7579, %v7989
    %v8024 = vmul.f32 %v7581, %v7990
    %v8025 = vmul.f32 %v7583, %v7990
    %v8026 = vmul.f32 %v7585, %v7991
    %v8027 = vmul.f32 %v7587, %v7991
    %v8028 = vmul.f32 %v7589, %v7992
    %v8029 = vmul.f32 %v7591, %v7992
    %v8030 = vmul.f32 %v7593, %v7993
    %v8031 = vmul.f32 %v7595, %v7993
    %v8032 = vmul.f32 %v7597, %v7994
    %v8033 = vmul.f32 %v7599, %v7994
    %v8034 = vmul.f32 %v7601, %v7995
    %v8035 = vmul.f32 %v7603, %v7995
    %v8036 = vmul.f32 %v7605, %v7996
    %v8037 = vmul.f32 %v7607, %v7996
    %v8038 = vmul.f32 %v7609, %v7997
    %v8039 = vmul.f32 %v7611, %v7997
    %v8040 = vmul.f32 %v7613, %v7998
    %v8041 = vmul.f32 %v7615, %v7998
    %v8042 = vmul.f32 %v7617, %v7999
    %v8043 = vmul.f32 %v7619, %v7999
    %v8044 = vmul.f32 %v7621, %v8000
    %v8045 = vmul.f32 %v7623, %v8000
    %v8046 = vmul.f32 %v7625, %v8001
    %v8047 = vmul.f32 %v7627, %v8001
    %v8048 = vmul.f32 %v7629, %v8002
    %v8049 = vmul.f32 %v7631, %v8002
    %v8050 = vmul.f32 %v7633, %v8003
    %v8051 = vmul.f32 %v7635, %v8003
    %v8052 = vmul.f32 %v7637, %v8004
    %v8053 = vmul.f32 %v7639, %v8004
    %v8054 = vmul.f32 %v7641, %v8005
    %v8055 = vmul.f32 %v7643, %v8005
    %v8056 = vmul.f32 %v7645, %v8006
    %v8057 = vmul.f32 %v7647, %v8006
    %v8058 = vmul.f32 %v7649, %v8007
    %v8059 = vmul.f32 %v7651, %v8007
    %v8060 = vmul.f32 %v7653, %v8008
    %v8061 = vmul.f32 %v7655, %v8008
    %v8062 = vmul.f32 %v7657, %v8009
    %v8063 = vmul.f32 %v7659, %v8009
    %v8064 = vmul.f32 %v7661, %v8010
    %v8065 = vmul.f32 %v7663, %v8010
    %v8066 = vmul.f32 %v7665, %v8011
    %v8067 = vmul.f32 %v7667, %v8011
    %v8068 = vmul.f32 %v7669, %v8012
    %v8069 = vmul.f32 %v7671, %v8012
    %v8070 = vmul.f32 %v7673, %v8013
    %v8071 = vmul.f32 %v7675, %v8013
    %v8072 = vmul.f32 %v7677, %v8014
    %v8073 = vmul.f32 %v7679, %v8014
    %v8074 = vmul.f32 %v7681, %v8015
    %v8075 = vmul.f32 %v7683, %v8015
    %v8076 = vmul.f32 %v7685, %v8016
    %v8077 = vmul.f32 %v7687, %v8016
    %v8078 = vmul.f32 %v7689, %v8017
    %v8079 = vmul.f32 %v7691, %v8017
    %v8080 = vmul.f32 %v7693, %v8018
    %v8081 = vmul.f32 %v7695, %v8018
    %v8082 = vmul.f32 %v7697, %v8019
    %v8083 = vmul.f32 %v7699, %v8019
    %v8084 = vadd.f32 %v6200, %v5076
    %v8085 = vadd.f32 %v6203, %v5078
    %v8086 = vadd.f32 %v6200, %v5080
    %v8087 = vadd.f32 %v6203, %v5082
    %v8088 = vadd.f32 %v6200, %v5084
    %v8089 = vadd.f32 %v6203, %v5086
    %v8090 = vadd.f32 %v6200, %v5088
    %v8091 = vadd.f32 %v6203, %v5090
    %v8092 = vadd.f32 %v6200, %v5092
    %v8093 = vadd.f32 %v6203, %v5094
    %v8094 = vadd.f32 %v6200, %v5096
    %v8095 = vadd.f32 %v6203, %v5098
    %v8096 = vadd.f32 %v6200, %v5100
    %v8097 = vadd.f32 %v6203, %v5102
    %v8098 = vadd.f32 %v6200, %v5104
    %v8099 = vadd.f32 %v6203, %v5106
    %v8100 = vadd.f32 %v6200, %v5108
    %v8101 = vadd.f32 %v6203, %v5110
    %v8102 = vadd.f32 %v6200, %v5112
    %v8103 = vadd.f32 %v6203, %v5114
    %v8104 = vadd.f32 %v6200, %v5116
    %v8105 = vadd.f32 %v6203, %v5118
    %v8106 = vadd.f32 %v6200, %v5120
    %v8107 = vadd.f32 %v6203, %v5122
    %v8108 = vadd.f32 %v6200, %v5124
    %v8109 = vadd.f32 %v6203, %v5126
    %v8110 = vadd.f32 %v6200, %v5128
    %v8111 = vadd.f32 %v6203, %v5130
    %v8112 = vadd.f32 %v6200, %v5132
    %v8113 = vadd.f32 %v6203, %v5134
    %v8114 = vadd.f32 %v6200, %v5136
    %v8115 = vadd.f32 %v6203, %v5138
    %v8116 = vadd.f32 %v6206, %v5140
    %v8117 = vadd.f32 %v6209, %v5142
    %v8118 = vadd.f32 %v6206, %v5144
    %v8119 = vadd.f32 %v6209, %v5146
    %v8120 = vadd.f32 %v6206, %v5148
    %v8121 = vadd.f32 %v6209, %v5150
    %v8122 = vadd.f32 %v6206, %v5152
    %v8123 = vadd.f32 %v6209, %v5154
    %v8124 = vadd.f32 %v6206, %v5156
    %v8125 = vadd.f32 %v6209, %v5158
    %v8126 = vadd.f32 %v6206, %v5160
    %v8127 = vadd.f32 %v6209, %v5162
    %v8128 = vadd.f32 %v6206, %v5164
    %v8129 = vadd.f32 %v6209, %v5166
    %v8130 = vadd.f32 %v6206, %v5168
    %v8131 = vadd.f32 %v6209, %v5170
    %v8132 = vadd.f32 %v6206, %v5172
    %v8133 = vadd.f32 %v6209, %v5174
    %v8134 = vadd.f32 %v6206, %v5176
    %v8135 = vadd.f32 %v6209, %v5178
    %v8136 = vadd.f32 %v6206, %v5180
    %v8137 = vadd.f32 %v6209, %v5182
    %v8138 = vadd.f32 %v6206, %v5184
    %v8139 = vadd.f32 %v6209, %v5186
    %v8140 = vadd.f32 %v6206, %v5188
    %v8141 = vadd.f32 %v6209, %v5190
    %v8142 = vadd.f32 %v6206, %v5192
    %v8143 = vadd.f32 %v6209, %v5194
    %v8144 = vadd.f32 %v6206, %v5196
    %v8145 = vadd.f32 %v6209, %v5198
    %v8146 = vadd.f32 %v6206, %v5200
    %v8147 = vadd.f32 %v6209, %v5202
    %8212 = vrot.lane.b32.xlu0 %v8084, 64
    %v8213 = vpop.permute.xlu0 %8212
    %8214 = vrot.lane.b32.xlu0 %v8085, 64
    %v8215 = vpop.permute.xlu0 %8214
    %8216 = vrot.lane.b32.xlu0 %v8086, 64
    %v8217 = vpop.permute.xlu0 %8216
    %8218 = vrot.lane.b32.xlu0 %v8087, 64
    %v8219 = vpop.permute.xlu0 %8218
    %8220 = vrot.lane.b32.xlu0 %v8088, 64
    %v8221 = vpop.permute.xlu0 %8220
    %8222 = vrot.lane.b32.xlu0 %v8089, 64
    %v8223 = vpop.permute.xlu0 %8222
    %8224 = vrot.lane.b32.xlu0 %v8090, 64
    %v8225 = vpop.permute.xlu0 %8224
    %8226 = vrot.lane.b32.xlu0 %v8091, 64
    %v8227 = vpop.permute.xlu0 %8226
    %8228 = vrot.lane.b32.xlu0 %v8092, 64
    %v8229 = vpop.permute.xlu0 %8228
    %8230 = vrot.lane.b32.xlu0 %v8093, 64
    %v8231 = vpop.permute.xlu0 %8230
    %8232 = vrot.lane.b32.xlu0 %v8094, 64
    %v8233 = vpop.permute.xlu0 %8232
    %8234 = vrot.lane.b32.xlu0 %v8095, 64
    %v8235 = vpop.permute.xlu0 %8234
    %8236 = vrot.lane.b32.xlu0 %v8096, 64
    %v8237 = vpop.permute.xlu0 %8236
    %8238 = vrot.lane.b32.xlu0 %v8097, 64
    %v8239 = vpop.permute.xlu0 %8238
    %8240 = vrot.lane.b32.xlu0 %v8098, 64
    %v8241 = vpop.permute.xlu0 %8240
    %8242 = vrot.lane.b32.xlu0 %v8099, 64
    %v8243 = vpop.permute.xlu0 %8242
    %8244 = vrot.lane.b32.xlu0 %v8100, 64
    %v8245 = vpop.permute.xlu0 %8244
    %8246 = vrot.lane.b32.xlu0 %v8101, 64
    %v8247 = vpop.permute.xlu0 %8246
    %8248 = vrot.lane.b32.xlu0 %v8102, 64
    %v8249 = vpop.permute.xlu0 %8248
    %8250 = vrot.lane.b32.xlu0 %v8103, 64
    %v8251 = vpop.permute.xlu0 %8250
    %8252 = vrot.lane.b32.xlu0 %v8104, 64
    %v8253 = vpop.permute.xlu0 %8252
    %8254 = vrot.lane.b32.xlu0 %v8105, 64
    %v8255 = vpop.permute.xlu0 %8254
    %8256 = vrot.lane.b32.xlu0 %v8106, 64
    %v8257 = vpop.permute.xlu0 %8256
    %8258 = vrot.lane.b32.xlu0 %v8107, 64
    %v8259 = vpop.permute.xlu0 %8258
    %8260 = vrot.lane.b32.xlu0 %v8108, 64
    %v8261 = vpop.permute.xlu0 %8260
    %8262 = vrot.lane.b32.xlu0 %v8109, 64
    %v8263 = vpop.permute.xlu0 %8262
    %8264 = vrot.lane.b32.xlu0 %v8110, 64
    %v8265 = vpop.permute.xlu0 %8264
    %8266 = vrot.lane.b32.xlu0 %v8111, 64
    %v8267 = vpop.permute.xlu0 %8266
    %8268 = vrot.lane.b32.xlu0 %v8112, 64
    %v8269 = vpop.permute.xlu0 %8268
    %8270 = vrot.lane.b32.xlu0 %v8113, 64
    %v8271 = vpop.permute.xlu0 %8270
    %8272 = vrot.lane.b32.xlu0 %v8114, 64
    %v8273 = vpop.permute.xlu0 %8272
    %8274 = vrot.lane.b32.xlu0 %v8115, 64
    %v8275 = vpop.permute.xlu0 %8274
    %8276 = vrot.lane.b32.xlu0 %v8116, 64
    %v8277 = vpop.permute.xlu0 %8276
    %8278 = vrot.lane.b32.xlu0 %v8117, 64
    %v8279 = vpop.permute.xlu0 %8278
    %8280 = vrot.lane.b32.xlu0 %v8118, 64
    %v8281 = vpop.permute.xlu0 %8280
    %8282 = vrot.lane.b32.xlu0 %v8119, 64
    %v8283 = vpop.permute.xlu0 %8282
    %8284 = vrot.lane.b32.xlu0 %v8120, 64
    %v8285 = vpop.permute.xlu0 %8284
    %8286 = vrot.lane.b32.xlu0 %v8121, 64
    %v8287 = vpop.permute.xlu0 %8286
    %8288 = vrot.lane.b32.xlu0 %v8122, 64
    %v8289 = vpop.permute.xlu0 %8288
    %8290 = vrot.lane.b32.xlu0 %v8123, 64
    %v8291 = vpop.permute.xlu0 %8290
    %8292 = vrot.lane.b32.xlu0 %v8124, 64
    %v8293 = vpop.permute.xlu0 %8292
    %8294 = vrot.lane.b32.xlu0 %v8125, 64
    %v8295 = vpop.permute.xlu0 %8294
    %8296 = vrot.lane.b32.xlu0 %v8126, 64
    %v8297 = vpop.permute.xlu0 %8296
    %8298 = vrot.lane.b32.xlu0 %v8127, 64
    %v8299 = vpop.permute.xlu0 %8298
    %8300 = vrot.lane.b32.xlu0 %v8128, 64
    %v8301 = vpop.permute.xlu0 %8300
    %8302 = vrot.lane.b32.xlu0 %v8129, 64
    %v8303 = vpop.permute.xlu0 %8302
    %8304 = vrot.lane.b32.xlu0 %v8130, 64
    %v8305 = vpop.permute.xlu0 %8304
    %8306 = vrot.lane.b32.xlu0 %v8131, 64
    %v8307 = vpop.permute.xlu0 %8306
    %8308 = vrot.lane.b32.xlu0 %v8132, 64
    %v8309 = vpop.permute.xlu0 %8308
    %8310 = vrot.lane.b32.xlu0 %v8133, 64
    %v8311 = vpop.permute.xlu0 %8310
    %8312 = vrot.lane.b32.xlu0 %v8134, 64
    %v8313 = vpop.permute.xlu0 %8312
    %8314 = vrot.lane.b32.xlu0 %v8135, 64
    %v8315 = vpop.permute.xlu0 %8314
    %8316 = vrot.lane.b32.xlu0 %v8136, 64
    %v8317 = vpop.permute.xlu0 %8316
    %8318 = vrot.lane.b32.xlu0 %v8137, 64
    %v8319 = vpop.permute.xlu0 %8318
    %8320 = vrot.lane.b32.xlu0 %v8138, 64
    %v8321 = vpop.permute.xlu0 %8320
    %8322 = vrot.lane.b32.xlu0 %v8139, 64
    %v8323 = vpop.permute.xlu0 %8322
    %8324 = vrot.lane.b32.xlu0 %v8140, 64
    %v8325 = vpop.permute.xlu0 %8324
    %8326 = vrot.lane.b32.xlu0 %v8141, 64
    %v8327 = vpop.permute.xlu0 %8326
    %8328 = vrot.lane.b32.xlu0 %v8142, 64
    %v8329 = vpop.permute.xlu0 %8328
    %8330 = vrot.lane.b32.xlu0 %v8143, 64
    %v8331 = vpop.permute.xlu0 %8330
    %8332 = vrot.lane.b32.xlu0 %v8144, 64
    %v8333 = vpop.permute.xlu0 %8332
    %8334 = vrot.lane.b32.xlu0 %v8145, 64
    %v8335 = vpop.permute.xlu0 %8334
    %8336 = vrot.lane.b32.xlu0 %v8146, 64
    %v8337 = vpop.permute.xlu0 %8336
    %8338 = vrot.lane.b32.xlu0 %v8147, 64
    %v8339 = vpop.permute.xlu0 %8338
    %v8404 = vmul.f32 %v8020, %v8213
    %v8405 = vmul.f32 %v8021, %v8215
    %v8406 = vmul.f32 %v8022, %v8217
    %v8407 = vmul.f32 %v8023, %v8219
    %v8408 = vmul.f32 %v8024, %v8221
    %v8409 = vmul.f32 %v8025, %v8223
    %v8410 = vmul.f32 %v8026, %v8225
    %v8411 = vmul.f32 %v8027, %v8227
    %v8412 = vmul.f32 %v8028, %v8229
    %v8413 = vmul.f32 %v8029, %v8231
    %v8414 = vmul.f32 %v8030, %v8233
    %v8415 = vmul.f32 %v8031, %v8235
    %v8416 = vmul.f32 %v8032, %v8237
    %v8417 = vmul.f32 %v8033, %v8239
    %v8418 = vmul.f32 %v8034, %v8241
    %v8419 = vmul.f32 %v8035, %v8243
    %v8420 = vmul.f32 %v8036, %v8245
    %v8421 = vmul.f32 %v8037, %v8247
    %v8422 = vmul.f32 %v8038, %v8249
    %v8423 = vmul.f32 %v8039, %v8251
    %v8424 = vmul.f32 %v8040, %v8253
    %v8425 = vmul.f32 %v8041, %v8255
    %v8426 = vmul.f32 %v8042, %v8257
    %v8427 = vmul.f32 %v8043, %v8259
    %v8428 = vmul.f32 %v8044, %v8261
    %v8429 = vmul.f32 %v8045, %v8263
    %v8430 = vmul.f32 %v8046, %v8265
    %v8431 = vmul.f32 %v8047, %v8267
    %v8432 = vmul.f32 %v8048, %v8269
    %v8433 = vmul.f32 %v8049, %v8271
    %v8434 = vmul.f32 %v8050, %v8273
    %v8435 = vmul.f32 %v8051, %v8275
    %v8436 = vmul.f32 %v8052, %v8277
    %v8437 = vmul.f32 %v8053, %v8279
    %v8438 = vmul.f32 %v8054, %v8281
    %v8439 = vmul.f32 %v8055, %v8283
    %v8440 = vmul.f32 %v8056, %v8285
    %v8441 = vmul.f32 %v8057, %v8287
    %v8442 = vmul.f32 %v8058, %v8289
    %v8443 = vmul.f32 %v8059, %v8291
    %v8444 = vmul.f32 %v8060, %v8293
    %v8445 = vmul.f32 %v8061, %v8295
    %v8446 = vmul.f32 %v8062, %v8297
    %v8447 = vmul.f32 %v8063, %v8299
    %v8448 = vmul.f32 %v8064, %v8301
    %v8449 = vmul.f32 %v8065, %v8303
    %v8450 = vmul.f32 %v8066, %v8305
    %v8451 = vmul.f32 %v8067, %v8307
    %v8452 = vmul.f32 %v8068, %v8309
    %v8453 = vmul.f32 %v8069, %v8311
    %v8454 = vmul.f32 %v8070, %v8313
    %v8455 = vmul.f32 %v8071, %v8315
    %v8456 = vmul.f32 %v8072, %v8317
    %v8457 = vmul.f32 %v8073, %v8319
    %v8458 = vmul.f32 %v8074, %v8321
    %v8459 = vmul.f32 %v8075, %v8323
    %v8460 = vmul.f32 %v8076, %v8325
    %v8461 = vmul.f32 %v8077, %v8327
    %v8462 = vmul.f32 %v8078, %v8329
    %v8463 = vmul.f32 %v8079, %v8331
    %v8464 = vmul.f32 %v8080, %v8333
    %v8465 = vmul.f32 %v8081, %v8335
    %v8466 = vmul.f32 %v8082, %v8337
    %v8467 = vmul.f32 %v8083, %v8339
    %v8468 = vsel %vm1592, %v8404, 0.0
    %v8469 = vsel %vm1592, %v8405, 0.0
    %v8470 = vadd.f32 %v8468, %v8469
    %v8471 = vrot.slane %v8470, 4
    %v8472 = vadd.f32 %v8470, %v8471
    %v8473 = vrot.slane %v8472, 2
    %v8474 = vadd.f32 %v8472, %v8473
    %v8475 = vrot.slane %v8474, 1
    %v8476 = vadd.f32 %v8474, %v8475
    %v8477 = vsel %vm1592, %v8406, 0.0
    %v8478 = vsel %vm1592, %v8407, 0.0
    %v8479 = vadd.f32 %v8477, %v8478
    %v8480 = vrot.slane %v8479, 4
    %v8481 = vadd.f32 %v8479, %v8480
    %v8482 = vrot.slane %v8481, 2
    %v8483 = vadd.f32 %v8481, %v8482
    %v8484 = vrot.slane %v8483, 1
    %v8485 = vadd.f32 %v8483, %v8484
    %v8486 = vsel %vm1592, %v8408, 0.0
    %v8487 = vsel %vm1592, %v8409, 0.0
    %v8488 = vadd.f32 %v8486, %v8487
    %v8489 = vrot.slane %v8488, 4
    %v8490 = vadd.f32 %v8488, %v8489
    %v8491 = vrot.slane %v8490, 2
    %v8492 = vadd.f32 %v8490, %v8491
    %v8493 = vrot.slane %v8492, 1
    %v8494 = vadd.f32 %v8492, %v8493
    %v8495 = vsel %vm1592, %v8410, 0.0
    %v8496 = vsel %vm1592, %v8411, 0.0
    %v8497 = vadd.f32 %v8495, %v8496
    %v8498 = vrot.slane %v8497, 4
    %v8499 = vadd.f32 %v8497, %v8498
    %v8500 = vrot.slane %v8499, 2
    %v8501 = vadd.f32 %v8499, %v8500
    %v8502 = vrot.slane %v8501, 1
    %v8503 = vadd.f32 %v8501, %v8502
    %v8504 = vsel %vm1592, %v8412, 0.0
    %v8505 = vsel %vm1592, %v8413, 0.0
    %v8506 = vadd.f32 %v8504, %v8505
    %v8507 = vrot.slane %v8506, 4
    %v8508 = vadd.f32 %v8506, %v8507
    %v8509 = vrot.slane %v8508, 2
    %v8510 = vadd.f32 %v8508, %v8509
    %v8511 = vrot.slane %v8510, 1
    %v8512 = vadd.f32 %v8510, %v8511
    %v8513 = vsel %vm1592, %v8414, 0.0
    %v8514 = vsel %vm1592, %v8415, 0.0
    %v8515 = vadd.f32 %v8513, %v8514
    %v8516 = vrot.slane %v8515, 4
    %v8517 = vadd.f32 %v8515, %v8516
    %v8518 = vrot.slane %v8517, 2
    %v8519 = vadd.f32 %v8517, %v8518
    %v8520 = vrot.slane %v8519, 1
    %v8521 = vadd.f32 %v8519, %v8520
    %v8522 = vsel %vm1592, %v8416, 0.0
    %v8523 = vsel %vm1592, %v8417, 0.0
    %v8524 = vadd.f32 %v8522, %v8523
    %v8525 = vrot.slane %v8524, 4
    %v8526 = vadd.f32 %v8524, %v8525
    %v8527 = vrot.slane %v8526, 2
    %v8528 = vadd.f32 %v8526, %v8527
    %v8529 = vrot.slane %v8528, 1
    %v8530 = vadd.f32 %v8528, %v8529
    %v8531 = vsel %vm1592, %v8418, 0.0
    %v8532 = vsel %vm1592, %v8419, 0.0
    %v8533 = vadd.f32 %v8531, %v8532
    %v8534 = vrot.slane %v8533, 4
    %v8535 = vadd.f32 %v8533, %v8534
    %v8536 = vrot.slane %v8535, 2
    %v8537 = vadd.f32 %v8535, %v8536
    %v8538 = vrot.slane %v8537, 1
    %v8539 = vadd.f32 %v8537, %v8538
    %v8540 = vsel %vm1592, %v8420, 0.0
    %v8541 = vsel %vm1592, %v8421, 0.0
    %v8542 = vadd.f32 %v8540, %v8541
    %v8543 = vrot.slane %v8542, 4
    %v8544 = vadd.f32 %v8542, %v8543
    %v8545 = vrot.slane %v8544, 2
    %v8546 = vadd.f32 %v8544, %v8545
    %v8547 = vrot.slane %v8546, 1
    %v8548 = vadd.f32 %v8546, %v8547
    %v8549 = vsel %vm1592, %v8422, 0.0
    %v8550 = vsel %vm1592, %v8423, 0.0
    %v8551 = vadd.f32 %v8549, %v8550
    %v8552 = vrot.slane %v8551, 4
    %v8553 = vadd.f32 %v8551, %v8552
    %v8554 = vrot.slane %v8553, 2
    %v8555 = vadd.f32 %v8553, %v8554
    %v8556 = vrot.slane %v8555, 1
    %v8557 = vadd.f32 %v8555, %v8556
    %v8558 = vsel %vm1592, %v8424, 0.0
    %v8559 = vsel %vm1592, %v8425, 0.0
    %v8560 = vadd.f32 %v8558, %v8559
    %v8561 = vrot.slane %v8560, 4
    %v8562 = vadd.f32 %v8560, %v8561
    %v8563 = vrot.slane %v8562, 2
    %v8564 = vadd.f32 %v8562, %v8563
    %v8565 = vrot.slane %v8564, 1
    %v8566 = vadd.f32 %v8564, %v8565
    %v8567 = vsel %vm1592, %v8426, 0.0
    %v8568 = vsel %vm1592, %v8427, 0.0
    %v8569 = vadd.f32 %v8567, %v8568
    %v8570 = vrot.slane %v8569, 4
    %v8571 = vadd.f32 %v8569, %v8570
    %v8572 = vrot.slane %v8571, 2
    %v8573 = vadd.f32 %v8571, %v8572
    %v8574 = vrot.slane %v8573, 1
    %v8575 = vadd.f32 %v8573, %v8574
    %v8576 = vsel %vm1592, %v8428, 0.0
    %v8577 = vsel %vm1592, %v8429, 0.0
    %v8578 = vadd.f32 %v8576, %v8577
    %v8579 = vrot.slane %v8578, 4
    %v8580 = vadd.f32 %v8578, %v8579
    %v8581 = vrot.slane %v8580, 2
    %v8582 = vadd.f32 %v8580, %v8581
    %v8583 = vrot.slane %v8582, 1
    %v8584 = vadd.f32 %v8582, %v8583
    %v8585 = vsel %vm1592, %v8430, 0.0
    %v8586 = vsel %vm1592, %v8431, 0.0
    %v8587 = vadd.f32 %v8585, %v8586
    %v8588 = vrot.slane %v8587, 4
    %v8589 = vadd.f32 %v8587, %v8588
    %v8590 = vrot.slane %v8589, 2
    %v8591 = vadd.f32 %v8589, %v8590
    %v8592 = vrot.slane %v8591, 1
    %v8593 = vadd.f32 %v8591, %v8592
    %v8594 = vsel %vm1592, %v8432, 0.0
    %v8595 = vsel %vm1592, %v8433, 0.0
    %v8596 = vadd.f32 %v8594, %v8595
    %v8597 = vrot.slane %v8596, 4
    %v8598 = vadd.f32 %v8596, %v8597
    %v8599 = vrot.slane %v8598, 2
    %v8600 = vadd.f32 %v8598, %v8599
    %v8601 = vrot.slane %v8600, 1
    %v8602 = vadd.f32 %v8600, %v8601
    %v8603 = vsel %vm1592, %v8434, 0.0
    %v8604 = vsel %vm1592, %v8435, 0.0
    %v8605 = vadd.f32 %v8603, %v8604
    %v8606 = vrot.slane %v8605, 4
    %v8607 = vadd.f32 %v8605, %v8606
    %v8608 = vrot.slane %v8607, 2
    %v8609 = vadd.f32 %v8607, %v8608
    %v8610 = vrot.slane %v8609, 1
    %v8611 = vadd.f32 %v8609, %v8610
    %v8612 = vsel %vm1592, %v8436, 0.0
    %v8613 = vsel %vm1592, %v8437, 0.0
    %v8614 = vadd.f32 %v8612, %v8613
    %v8615 = vrot.slane %v8614, 4
    %v8616 = vadd.f32 %v8614, %v8615
    %v8617 = vrot.slane %v8616, 2
    %v8618 = vadd.f32 %v8616, %v8617
    %v8619 = vrot.slane %v8618, 1
    %v8620 = vadd.f32 %v8618, %v8619
    %v8621 = vsel %vm1592, %v8438, 0.0
    %v8622 = vsel %vm1592, %v8439, 0.0
    %v8623 = vadd.f32 %v8621, %v8622
    %v8624 = vrot.slane %v8623, 4
    %v8625 = vadd.f32 %v8623, %v8624
    %v8626 = vrot.slane %v8625, 2
    %v8627 = vadd.f32 %v8625, %v8626
    %v8628 = vrot.slane %v8627, 1
    %v8629 = vadd.f32 %v8627, %v8628
    %v8630 = vsel %vm1592, %v8440, 0.0
    %v8631 = vsel %vm1592, %v8441, 0.0
    %v8632 = vadd.f32 %v8630, %v8631
    %v8633 = vrot.slane %v8632, 4
    %v8634 = vadd.f32 %v8632, %v8633
    %v8635 = vrot.slane %v8634, 2
    %v8636 = vadd.f32 %v8634, %v8635
    %v8637 = vrot.slane %v8636, 1
    %v8638 = vadd.f32 %v8636, %v8637
    %v8639 = vsel %vm1592, %v8442, 0.0
    %v8640 = vsel %vm1592, %v8443, 0.0
    %v8641 = vadd.f32 %v8639, %v8640
    %v8642 = vrot.slane %v8641, 4
    %v8643 = vadd.f32 %v8641, %v8642
    %v8644 = vrot.slane %v8643, 2
    %v8645 = vadd.f32 %v8643, %v8644
    %v8646 = vrot.slane %v8645, 1
    %v8647 = vadd.f32 %v8645, %v8646
    %v8648 = vsel %vm1592, %v8444, 0.0
    %v8649 = vsel %vm1592, %v8445, 0.0
    %v8650 = vadd.f32 %v8648, %v8649
    %v8651 = vrot.slane %v8650, 4
    %v8652 = vadd.f32 %v8650, %v8651
    %v8653 = vrot.slane %v8652, 2
    %v8654 = vadd.f32 %v8652, %v8653
    %v8655 = vrot.slane %v8654, 1
    %v8656 = vadd.f32 %v8654, %v8655
    %v8657 = vsel %vm1592, %v8446, 0.0
    %v8658 = vsel %vm1592, %v8447, 0.0
    %v8659 = vadd.f32 %v8657, %v8658
    %v8660 = vrot.slane %v8659, 4
    %v8661 = vadd.f32 %v8659, %v8660
    %v8662 = vrot.slane %v8661, 2
    %v8663 = vadd.f32 %v8661, %v8662
    %v8664 = vrot.slane %v8663, 1
    %v8665 = vadd.f32 %v8663, %v8664
    %v8666 = vsel %vm1592, %v8448, 0.0
    %v8667 = vsel %vm1592, %v8449, 0.0
    %v8668 = vadd.f32 %v8666, %v8667
    %v8669 = vrot.slane %v8668, 4
    %v8670 = vadd.f32 %v8668, %v8669
    %v8671 = vrot.slane %v8670, 2
    %v8672 = vadd.f32 %v8670, %v8671
    %v8673 = vrot.slane %v8672, 1
    %v8674 = vadd.f32 %v8672, %v8673
    %v8675 = vsel %vm1592, %v8450, 0.0
    %v8676 = vsel %vm1592, %v8451, 0.0
    %v8677 = vadd.f32 %v8675, %v8676
    %v8678 = vrot.slane %v8677, 4
    %v8679 = vadd.f32 %v8677, %v8678
    %v8680 = vrot.slane %v8679, 2
    %v8681 = vadd.f32 %v8679, %v8680
    %v8682 = vrot.slane %v8681, 1
    %v8683 = vadd.f32 %v8681, %v8682
    %v8684 = vsel %vm1592, %v8452, 0.0
    %v8685 = vsel %vm1592, %v8453, 0.0
    %v8686 = vadd.f32 %v8684, %v8685
    %v8687 = vrot.slane %v8686, 4
    %v8688 = vadd.f32 %v8686, %v8687
    %v8689 = vrot.slane %v8688, 2
    %v8690 = vadd.f32 %v8688, %v8689
    %v8691 = vrot.slane %v8690, 1
    %v8692 = vadd.f32 %v8690, %v8691
    %v8693 = vsel %vm1592, %v8454, 0.0
    %v8694 = vsel %vm1592, %v8455, 0.0
    %v8695 = vadd.f32 %v8693, %v8694
    %v8696 = vrot.slane %v8695, 4
    %v8697 = vadd.f32 %v8695, %v8696
    %v8698 = vrot.slane %v8697, 2
    %v8699 = vadd.f32 %v8697, %v8698
    %v8700 = vrot.slane %v8699, 1
    %v8701 = vadd.f32 %v8699, %v8700
    %v8702 = vsel %vm1592, %v8456, 0.0
    %v8703 = vsel %vm1592, %v8457, 0.0
    %v8704 = vadd.f32 %v8702, %v8703
    %v8705 = vrot.slane %v8704, 4
    %v8706 = vadd.f32 %v8704, %v8705
    %v8707 = vrot.slane %v8706, 2
    %v8708 = vadd.f32 %v8706, %v8707
    %v8709 = vrot.slane %v8708, 1
    %v8710 = vadd.f32 %v8708, %v8709
    %v8711 = vsel %vm1592, %v8458, 0.0
    %v8712 = vsel %vm1592, %v8459, 0.0
    %v8713 = vadd.f32 %v8711, %v8712
    %v8714 = vrot.slane %v8713, 4
    %v8715 = vadd.f32 %v8713, %v8714
    %v8716 = vrot.slane %v8715, 2
    %v8717 = vadd.f32 %v8715, %v8716
    %v8718 = vrot.slane %v8717, 1
    %v8719 = vadd.f32 %v8717, %v8718
    %v8720 = vsel %vm1592, %v8460, 0.0
    %v8721 = vsel %vm1592, %v8461, 0.0
    %v8722 = vadd.f32 %v8720, %v8721
    %v8723 = vrot.slane %v8722, 4
    %v8724 = vadd.f32 %v8722, %v8723
    %v8725 = vrot.slane %v8724, 2
    %v8726 = vadd.f32 %v8724, %v8725
    %v8727 = vrot.slane %v8726, 1
    %v8728 = vadd.f32 %v8726, %v8727
    %v8729 = vsel %vm1592, %v8462, 0.0
    %v8730 = vsel %vm1592, %v8463, 0.0
    %v8731 = vadd.f32 %v8729, %v8730
    %v8732 = vrot.slane %v8731, 4
    %v8733 = vadd.f32 %v8731, %v8732
    %v8734 = vrot.slane %v8733, 2
    %v8735 = vadd.f32 %v8733, %v8734
    %v8736 = vrot.slane %v8735, 1
    %v8737 = vadd.f32 %v8735, %v8736
    %v8738 = vsel %vm1592, %v8464, 0.0
    %v8739 = vsel %vm1592, %v8465, 0.0
    %v8740 = vadd.f32 %v8738, %v8739
    %v8741 = vrot.slane %v8740, 4
    %v8742 = vadd.f32 %v8740, %v8741
    %v8743 = vrot.slane %v8742, 2
    %v8744 = vadd.f32 %v8742, %v8743
    %v8745 = vrot.slane %v8744, 1
    %v8746 = vadd.f32 %v8744, %v8745
    %v8747 = vsel %vm1592, %v8466, 0.0
    %v8748 = vsel %vm1592, %v8467, 0.0
    %v8749 = vadd.f32 %v8747, %v8748
    %v8750 = vrot.slane %v8749, 4
    %v8751 = vadd.f32 %v8749, %v8750
    %v8752 = vrot.slane %v8751, 2
    %v8753 = vadd.f32 %v8751, %v8752
    %v8754 = vrot.slane %v8753, 1
    %v8755 = vadd.f32 %v8753, %v8754
    %v8788 = vsel %vm5971, %v8485, %v8476
    %v8789 = vsel %vm5973, %v8494, %v8788
    %v8790 = vsel %vm5975, %v8503, %v8789
    %v8791 = vsel %vm5977, %v8512, %v8790
    %v8792 = vsel %vm5979, %v8521, %v8791
    %v8793 = vsel %vm5981, %v8530, %v8792
    %v8794 = vsel %vm5983, %v8539, %v8793
    %v8795 = vsel %vm5971, %v8557, %v8548
    %v8796 = vsel %vm5973, %v8566, %v8795
    %v8797 = vsel %vm5975, %v8575, %v8796
    %v8798 = vsel %vm5977, %v8584, %v8797
    %v8799 = vsel %vm5979, %v8593, %v8798
    %v8800 = vsel %vm5981, %v8602, %v8799
    %v8801 = vsel %vm5983, %v8611, %v8800
    %v8802 = vsel %vm5971, %v8629, %v8620
    %v8803 = vsel %vm5973, %v8638, %v8802
    %v8804 = vsel %vm5975, %v8647, %v8803
    %v8805 = vsel %vm5977, %v8656, %v8804
    %v8806 = vsel %vm5979, %v8665, %v8805
    %v8807 = vsel %vm5981, %v8674, %v8806
    %v8808 = vsel %vm5983, %v8683, %v8807
    %v8809 = vsel %vm5971, %v8701, %v8692
    %v8810 = vsel %vm5973, %v8710, %v8809
    %v8811 = vsel %vm5975, %v8719, %v8810
    %v8812 = vsel %vm5977, %v8728, %v8811
    %v8813 = vsel %vm5979, %v8737, %v8812
    %v8814 = vsel %vm5981, %v8746, %v8813
    %v8815 = vsel %vm5983, %v8755, %v8814
    %v8816 = vsel %vm1592, %v8794, 0
    %v8818 = vsel %vm1592, %v8801, 0
    %v8820 = vsel %vm1592, %v8808, 0
    %v8822 = vsel %vm1592, %v8815, 0
    %8824 = vmatpush.msra.mxu0 0.0
    %8825 = vmatpush.msra.mxu0 0.0
    %8826 = vmatpush.msra.mxu0 0.0
    %8827 = vmatpush.msra.mxu0 0.0
    %8828 = vmatpush.msra.mxu0 0.0
    %8829 = vmatpush.msra.mxu0 0.0
    %8830 = vmatpush.msra.mxu0 0.0
    %8831 = vmatpush.msra.mxu0 0.0
    %8832 = vmatpush.msra.mxu0 0.0
    %8833 = vmatpush.msra.mxu0 0.0
    %8834 = vmatpush.msra.mxu0 0.0
    %8835 = vmatpush.msra.mxu0 0.0
    %8836 = vmatpush.msra.mxu0 %v6017
    %8837 = vmatpush.msra.mxu0 %v6015
    %8838 = vmatpush.msra.mxu0 %v6013
    %8839 = vmatpush.msra.mxu0 %v6011
    %8840 = vmatmul.f32.gmra.mxu0 %v8816
    %v8841 = vpop.f32.mrf.mxu0
    %v8842 = vadd.f32 %v2390, %v8841
    %8843 = vmatmul.f32.gmra.mxu0 %v8818
    %v8844 = vpop.f32.mrf.mxu0
    %v8845 = vadd.f32 %v2390, %v8844
    %8846 = vmatmul.f32.gmra.mxu0 %v8820
    %v8847 = vpop.f32.mrf.mxu0
    %v8848 = vadd.f32 %v2390, %v8847
    %8849 = vmatmul.f32.gmra.mxu0 %v8822
    %v8850 = vpop.f32.mrf.mxu0
    %v8851 = vadd.f32 %v2390, %v8850
    %8852 = vdwg.mxu0
    %v8853 = vadd.f32 %v6166, %v8842
    %v8854 = vadd.f32 %v6167, %v8845
    %v8855 = vadd.f32 %v6168, %v8848
    %v8856 = vadd.f32 %v6169, %v8851
    %v8857 = vsel %vm1592, %v8853, 0.0
    %8858 = vadd.xlane.f32.xlu0 %v8857
    %v8859 = vpop.xlane.xlu0 %8858
    %v8860 = vsel %vm1592, %v8854, 0.0
    %8861 = vadd.xlane.f32.xlu0 %v8860
    %v8862 = vpop.xlane.xlu0 %8861
    %v8863 = vsel %vm1592, %v8855, 0.0
    %8864 = vadd.xlane.f32.xlu0 %v8863
    %v8865 = vpop.xlane.xlu0 %8864
    %v8866 = vsel %vm1592, %v8856, 0.0
    %8867 = vadd.xlane.f32.xlu0 %v8866
    %v8868 = vpop.xlane.xlu0 %8867
    %v8869 = vmul.f32 %v8859, %v6081
    %v8870 = vmul.f32 %v8862, %v6081
    %v8871 = vmul.f32 %v8865, %v6081
    %v8872 = vmul.f32 %v8868, %v6081
    %v8873 = vsub.f32 %v8853, %v8869
    %v8874 = vsub.f32 %v8854, %v8870
    %v8875 = vsub.f32 %v8855, %v8871
    %v8876 = vsub.f32 %v8856, %v8872
    %v8877 = vmul.f32 %v8873, %v8873
    %v8878 = vmul.f32 %v8874, %v8874
    %v8879 = vmul.f32 %v8875, %v8875
    %v8880 = vmul.f32 %v8876, %v8876
    %v8881 = vsel %vm1592, %v8877, 0.0
    %8882 = vadd.xlane.f32.xlu0 %v8881
    %v8883 = vpop.xlane.xlu0 %8882
    %v8884 = vsel %vm1592, %v8878, 0.0
    %8885 = vadd.xlane.f32.xlu0 %v8884
    %v8886 = vpop.xlane.xlu0 %8885
    %v8887 = vsel %vm1592, %v8879, 0.0
    %8888 = vadd.xlane.f32.xlu0 %v8887
    %v8889 = vpop.xlane.xlu0 %8888
    %v8890 = vsel %vm1592, %v8880, 0.0
    %8891 = vadd.xlane.f32.xlu0 %v8890
    %v8892 = vpop.xlane.xlu0 %8891
    %v8893 = vmul.f32 %v8883, %v6081
    %v8894 = vmul.f32 %v8886, %v6081
    %v8895 = vmul.f32 %v8889, %v6081
    %v8896 = vmul.f32 %v8892, %v6081
    %v8897 = vadd.f32 %v8893, 1e-05
    %v8898 = vadd.f32 %v8894, 1e-05
    %v8899 = vadd.f32 %v8895, 1e-05
    %v8900 = vadd.f32 %v8896, 1e-05
    %v8901 = vrsqrt.pop %v8897
    %v8902 = vmul.f32 %v8901, %v8897
    %v8903 = vmul.f32 %v8902, %v8901
    %v8904 = vmul.f32 0.5, %v8903
    %v8905 = vsub.f32 1.5, %v8904
    %v8906 = vmul.f32 %v8901, %v8905
    %vm8907 = vweird.f32 %v8897
    %vm8908 = vweird.f32 %v8901
    %vm8909 = vmor %vm8907, %vm8908
    %v8910 = vsel %vm8909, %v8901, %v8906
    %v8911 = vrsqrt.pop %v8898
    %v8912 = vmul.f32 %v8911, %v8898
    %v8913 = vmul.f32 %v8912, %v8911
    %v8914 = vmul.f32 0.5, %v8913
    %v8915 = vsub.f32 1.5, %v8914
    %v8916 = vmul.f32 %v8911, %v8915
    %vm8917 = vweird.f32 %v8898
    %vm8918 = vweird.f32 %v8911
    %vm8919 = vmor %vm8917, %vm8918
    %v8920 = vsel %vm8919, %v8911, %v8916
    %v8921 = vrsqrt.pop %v8899
    %v8922 = vmul.f32 %v8921, %v8899
    %v8923 = vmul.f32 %v8922, %v8921
    %v8924 = vmul.f32 0.5, %v8923
    %v8925 = vsub.f32 1.5, %v8924
    %v8926 = vmul.f32 %v8921, %v8925
    %vm8927 = vweird.f32 %v8899
    %vm8928 = vweird.f32 %v8921
    %vm8929 = vmor %vm8927, %vm8928
    %v8930 = vsel %vm8929, %v8921, %v8926
    %v8931 = vrsqrt.pop %v8900
    %v8932 = vmul.f32 %v8931, %v8900
    %v8933 = vmul.f32 %v8932, %v8931
    %v8934 = vmul.f32 0.5, %v8933
    %v8935 = vsub.f32 1.5, %v8934
    %v8936 = vmul.f32 %v8931, %v8935
    %vm8937 = vweird.f32 %v8900
    %vm8938 = vweird.f32 %v8931
    %vm8939 = vmor %vm8937, %vm8938
    %v8940 = vsel %vm8939, %v8931, %v8936
    %v8941 = vmul.f32 %v8873, %v8910
    %v8942 = vmul.f32 %v8874, %v8920
    %v8943 = vmul.f32 %v8875, %v8930
    %v8944 = vmul.f32 %v8876, %v8940
    %v8945 = vmul.f32 %v8941, %v2391
    %v8946 = vmul.f32 %v8942, %v2391
    %v8947 = vmul.f32 %v8943, %v2391
    %v8948 = vmul.f32 %v8944, %v2391
    %v8949 = vadd.f32 %v8945, %v2392
    %v8950 = vadd.f32 %v8946, %v2392
    %v8951 = vadd.f32 %v8947, %v2392
    %v8952 = vadd.f32 %v8948, %v2392
    %v8953 = vmul.f32 %v8949, %v2368
    %v8954 = vmul.f32 %v8950, %v2373
    %v8955 = vmul.f32 %v8951, %v2378
    %v8956 = vmul.f32 %v8952, %v2383
    %v8957 = vsel %vm1592, %v8953, 0.0
    %v8958 = vsel %vm1592, %v8954, 0.0
    %v8959 = vadd.f32 %v8957, %v8958
    %v8960 = vrot.slane %v8959, 4
    %v8961 = vadd.f32 %v8959, %v8960
    %v8962 = vrot.slane %v8961, 2
    %v8963 = vadd.f32 %v8961, %v8962
    %v8964 = vrot.slane %v8963, 1
    %v8965 = vadd.f32 %v8963, %v8964
    %v8966 = vsel %vm1592, %v8955, 0.0
    %v8967 = vsel %vm1592, %v8956, 0.0
    %v8968 = vadd.f32 %v8966, %v8967
    %v8969 = vrot.slane %v8968, 4
    %v8970 = vadd.f32 %v8968, %v8969
    %v8971 = vrot.slane %v8970, 2
    %v8972 = vadd.f32 %v8970, %v8971
    %v8973 = vrot.slane %v8972, 1
    %v8974 = vadd.f32 %v8972, %v8973
    %vm8975 = vcmask 7168
    %v8976 = vsel %vm8975, %v83, 0.0
    %v8977 = vsel %vm8975, %v84, 0.0
    %v8978 = vadd.f32 %v8976, %v8977
    %v8979 = vrot.slane %v8978, 4
    %v8980 = vadd.f32 %v8978, %v8979
    %v8981 = vrot.slane %v8980, 2
    %v8982 = vadd.f32 %v8980, %v8981
    %v8983 = vrot.slane %v8982, 1
    %v8984 = vadd.f32 %v8982, %v8983
    %v8985 = vsel %vm8975, %v85, 0.0
    %v8986 = vsel %vm8975, %v86, 0.0
    %v8987 = vadd.f32 %v8985, %v8986
    %v8988 = vrot.slane %v8987, 4
    %v8989 = vadd.f32 %v8987, %v8988
    %v8990 = vrot.slane %v8989, 2
    %v8991 = vadd.f32 %v8989, %v8990
    %v8992 = vrot.slane %v8991, 1
    %v8993 = vadd.f32 %v8991, %v8992
    %v8994 = vmax.f32 %v8984, 1.0
    %v8995 = vmax.f32 %v8993, 1.0
    %8997 = vset.pattern.permute.xlu0 0
    %8998 = vperm.xlu0 %8997, %v8994
    %v8999 = vpop.permute.xlu0 %8998
    %9002 = vset.pattern.permute.xlu0 0
    %9003 = vperm.xlu0 %9002, %v8995
    %v9004 = vpop.permute.xlu0 %9003
    %v9006 = vrcp.pop %v8999
    %v9007 = vmul.f32 %v8999, %v9006
    %v9008 = vsub.f32 1.0, %v9007
    %v9009 = vmul.f32 %v9006, %v9008
    %v9010 = vadd.f32 %v9006, %v9009
    %vm9011 = vweird.f32 %v8999
    %vm9012 = vweird.f32 %v9006
    %vm9013 = vmor %vm9011, %vm9012
    %v9014 = vsel %vm9013, %v9006, %v9010
    %v9015 = vand.u32 2147483647, %v8999
    %vm9016 = vcmp.eq.f32.partialorder %v9015, 8.507059e+37
    %v9017 = vand.u32 %v8999, 2147483648
    %v9018 = vor.u32 1.1754944e-38, %v9017
    %v9019 = vsel %vm9016, %v9018, %v9014
    %v9020 = vmul.f32 %v8965, %v9019
    %v9021 = vrcp.pop %v9004
    %v9022 = vmul.f32 %v9004, %v9021
    %v9023 = vsub.f32 1.0, %v9022
    %v9024 = vmul.f32 %v9021, %v9023
    %v9025 = vadd.f32 %v9021, %v9024
    %vm9026 = vweird.f32 %v9004
    %vm9027 = vweird.f32 %v9021
    %vm9028 = vmor %vm9026, %vm9027
    %v9029 = vsel %vm9028, %v9021, %v9025
    %v9030 = vand.u32 2147483647, %v9004
    %vm9031 = vcmp.eq.f32.partialorder %v9030, 8.507059e+37
    %v9032 = vand.u32 %v9004, 2147483648
    %v9033 = vor.u32 1.1754944e-38, %v9032
    %v9034 = vsel %vm9031, %v9033, %v9029
    %v9035 = vmul.f32 %v8974, %v9034
    %v9036 = vld [vmem:[%s8] sm:$0xff]
    %v9037 = vld [vmem:[%s8 + $0x8] sm:$0xff]
    %v9038 = vld [vmem:[%s8 + $0x10] sm:$0xff]
    %v9039 = vld [vmem:[%s8 + $0x18] sm:$0xff]
    %v9040 = vld [vmem:[%s8 + $0x20] sm:$0x1]
    %v9041 = vperm.slane %v9040, 0
    %v9044 = vsel %vm5971, %v9035, %v9020
    %v9045 = vsel %vm1592, %v9044, 0
    %9047 = vmatpush.msra.mxu0 0.0
    %9048 = vmatpush.msra.mxu0 0.0
    %9049 = vmatpush.msra.mxu0 0.0
    %9050 = vmatpush.msra.mxu0 0.0
    %9051 = vmatpush.msra.mxu0 0.0
    %9052 = vmatpush.msra.mxu0 0.0
    %9053 = vmatpush.msra.mxu0 0.0
    %9054 = vmatpush.msra.mxu0 0.0
    %9055 = vmatpush.msra.mxu0 0.0
    %9056 = vmatpush.msra.mxu0 0.0
    %9057 = vmatpush.msra.mxu0 0.0
    %9058 = vmatpush.msra.mxu0 0.0
    %9059 = vmatpush.msra.mxu0 %v9039
    %9060 = vmatpush.msra.mxu0 %v9038
    %9061 = vmatpush.msra.mxu0 %v9037
    %9062 = vmatpush.msra.mxu0 %v9036
    %9063 = vmatmul.f32.gmra.mxu0 %v9045
    %v9064 = vpop.f32.mrf.mxu0
    %v9065 = vadd.f32 %v9041, %v9064
    %9066 = vdwg.mxu0
    %v9067 = vmax.f32 %v9065, 0.0
    %9070 = vrot.lane.b32.xlu0 %v9036, 112
    %v9071 = vpop.permute.xlu0 %9070
    %9072 = vrot.lane.b32.xlu0 %v9037, 112
    %v9073 = vpop.permute.xlu0 %9072
    %9077 = vrot.lane.b32.xlu0 %v9041, 112
    %v9078 = vpop.permute.xlu0 %9077
    %vm9080 = vcmask 130048
    %v9082 = vsel %vm9080, %v9067, 0
    %9084 = vmatpush.msra.mxu0 0.0
    %9085 = vmatpush.msra.mxu0 0.0
    %9086 = vmatpush.msra.mxu0 0.0
    %9087 = vmatpush.msra.mxu0 0.0
    %9088 = vmatpush.msra.mxu0 0.0
    %9089 = vmatpush.msra.mxu0 0.0
    %9090 = vmatpush.msra.mxu0 0.0
    %9091 = vmatpush.msra.mxu0 0.0
    %9092 = vmatpush.msra.mxu0 0.0
    %9093 = vmatpush.msra.mxu0 0.0
    %9094 = vmatpush.msra.mxu0 0.0
    %9095 = vmatpush.msra.mxu0 0.0
    %9096 = vmatpush.msra.mxu0 0.0
    %9097 = vmatpush.msra.mxu0 0.0
    %9098 = vmatpush.msra.mxu0 %v9073
    %9099 = vmatpush.msra.mxu0 %v9071
    %9100 = vmatmul.f32.gmra.mxu0 %v9082
    %v9101 = vpop.f32.mrf.mxu0
    %v9102 = vadd.f32 %v9078, %v9101
    %9103 = vdwg.mxu0
    %v9104 = vmax.f32 %v9102, 0.0
    %9105 = vrot.lane.b32.xlu0 %v9036, 104
    %v9106 = vpop.permute.xlu0 %9105
    %9108 = vrot.lane.b32.xlu0 %v9041, 104
    %v9109 = vpop.permute.xlu0 %9108
    %vm9111 = vcmask 64512
    %v9113 = vsel %vm9111, %v9104, 0
    %9115 = vmatpush.msra.mxu0 0.0
    %9116 = vmatpush.msra.mxu0 0.0
    %9117 = vmatpush.msra.mxu0 0.0
    %9118 = vmatpush.msra.mxu0 0.0
    %9119 = vmatpush.msra.mxu0 0.0
    %9120 = vmatpush.msra.mxu0 0.0
    %9121 = vmatpush.msra.mxu0 0.0
    %9122 = vmatpush.msra.mxu0 0.0
    %9123 = vmatpush.msra.mxu0 0.0
    %9124 = vmatpush.msra.mxu0 0.0
    %9125 = vmatpush.msra.mxu0 0.0
    %9126 = vmatpush.msra.mxu0 0.0
    %9127 = vmatpush.msra.mxu0 0.0
    %9128 = vmatpush.msra.mxu0 0.0
    %9129 = vmatpush.msra.mxu0 0.0
    %9130 = vmatpush.msra.mxu0 %v9106
    %9131 = vmatmul.f32.gmra.mxu0 %v9113
    %v9132 = vpop.f32.mrf.mxu0
    %v9133 = vadd.f32 %v9109, %v9132
    %9134 = vdwg.mxu0
    %v9136 = vrot.slane %v9133, 1
    %vm9138 = vcmask 0
    %9139 = vst.msk [vmem:[%s9] sm:$0x1] %vm9138, %v9133
    %9140 = vst.msk [vmem:[%s9 + $0x1] sm:$0x1] %vm9138, %v9136
    // Predicated region
    $region50: #{tpu_custom_call.1} parent=1 // pred_check
      _
    $region51: #{tpu_custom_call.1} parent=1 // pred_check_branch
      %9142 = sbr.rel (0) target = $region53
    $region52: #{tpu_custom_call.1} parent=1 // pred_region
      _
    $region53: #{tpu_custom_call.1} parent=1 // pred_fallthru
      _
    // Predicated region
    $region54: #{tpu_custom_call.1} parent=1 // pred_check
      _
    $region55: #{tpu_custom_call.1} parent=1 // pred_check_branch
      %9144 = sbr.rel (0) target = $region57
    $region56: #{tpu_custom_call.1} parent=1 // pred_region
      _
    $region57: #{tpu_custom_call.1} parent=1 // pred_fallthru
      _
    %9145 = vsyncpa [#allocation6], 1
    %9146 = vsyncpa [#allocation8], 1

</llo_original>
